<compile_context>
chip_gen: v7x
topology: tpu7x:2x2x1
jax: 0.10.0
libtpu: 0.0.40
codegen_flags: <defaults>
</compile_context>

<pallas_src>
import functools

import jax
import jax.numpy as jnp
from jax import lax
from jax.experimental import pallas as pl
from jax.experimental.pallas import tpu as pltpu

BN_EPS = 1e-5


# ---------------------------------------------------------------------------
# In-kernel helpers (2-D ops only: sublane slices + lane-block stores, 1 matmul)
# ---------------------------------------------------------------------------
def _stage_im2col(x, col_ref, Wp):
    """x: (Q, C) padded-flat bf16 activations (zero border). Fills col_ref (Q, 9*C):
    tap t = u*3+v column block holds x shifted by s = (u-1)*Wp + (v-1) rows (zero fill)."""
    Q, C = x.shape
    col_ref[...] = jnp.zeros_like(col_ref)        # zero-fill once; taps overwrite valid rows
    for t in range(9):
        u, v = t // 3, t % 3
        s = (u - 1) * Wp + (v - 1)                # static shift in the padded-flat index
        a, b = t * C, (t + 1) * C
        if s == 0:
            col_ref[:, a:b] = x
        elif s > 0:
            col_ref[0:Q - s, a:b] = x[s:, :]
        else:
            col_ref[-s:Q, a:b] = x[:Q + s, :]


def _partial_stats(acc, mask):
    """Per-image (2, C) [sum; sum of squares] over interior pixels only (mask is 0/1)."""
    am = acc * mask
    ssum = jnp.sum(am, axis=0, keepdims=True)
    ssq = jnp.sum(am * acc, axis=0, keepdims=True)
    return jnp.concatenate([ssum, ssq], axis=0)


# ---------------------------------------------------------------------------
# Pallas kernels
# ---------------------------------------------------------------------------
def _conv1_kernel(x_ref, w_ref, mask_ref, y_ref, stats_ref, col_ref, *, Wp):
    """3x3 'same' conv on one padded-flat image: single K=9*Cin MXU matmul + partial BN stats."""
    x = x_ref[0]                                              # (Q, Cin) bf16, zero border
    _stage_im2col(x, col_ref, Wp)
    acc = jnp.dot(col_ref[...], w_ref[...],
                  preferred_element_type=jnp.float32)         # (Q, Cout) f32
    y_ref[0] = acc.astype(y_ref.dtype)                        # bf16 pre-BN conv output
    stats_ref[0] = _partial_stats(acc, mask_ref[...])


def _conv2_fused_kernel(y1_ref, scale_ref, shift_ref, w_ref, mask_ref,
                        y_ref, stats_ref, col_ref, *, Wp):
    """Fused BN1-affine + ReLU + border re-zeroing + 3x3 conv (single matmul) + partial stats."""
    mask = mask_ref[...]                                      # (Q, 1) f32, 1 = interior pixel
    h = jnp.maximum(y1_ref[0].astype(jnp.float32) * scale_ref[...] + shift_ref[...], 0.0)
    h = (h * mask).astype(jnp.bfloat16)                       # zero padded border, bf16 for MXU
    _stage_im2col(h, col_ref, Wp)
    acc = jnp.dot(col_ref[...], w_ref[...],
                  preferred_element_type=jnp.float32)         # (Q, Cout) f32
    y_ref[0] = acc.astype(y_ref.dtype)
    stats_ref[0] = _partial_stats(acc, mask)


def _bn2_res_conv_kernel(y2_ref, xp_ref, wsc_ref, scale_ref, shift_ref, bsc_ref, o_ref):
    """Folded BN2 affine + fused 1x1-conv shortcut + residual add + ReLU (padded-flat layout)."""
    yn = y2_ref[0].astype(jnp.float32) * scale_ref[...] + shift_ref[...]
    res = jnp.dot(xp_ref[0], wsc_ref[...], preferred_element_type=jnp.float32) + bsc_ref[...]
    o_ref[0] = jnp.maximum(yn + res, 0.0)


def _bn2_res_id_kernel(y2_ref, xp_ref, scale_ref, shift_ref, o_ref):
    """Folded BN2 affine + identity shortcut + residual add + ReLU (padded-flat layout)."""
    yn = y2_ref[0].astype(jnp.float32) * scale_ref[...] + shift_ref[...]
    o_ref[0] = jnp.maximum(yn + xp_ref[0].astype(jnp.float32), 0.0)


# ---------------------------------------------------------------------------
# pallas_call wrappers
# ---------------------------------------------------------------------------
def _conv1(xp, w_mat, mask, Wp):
    N, Q, Cin = xp.shape
    Cout = w_mat.shape[1]
    return pl.pallas_call(
        functools.partial(_conv1_kernel, Wp=Wp),
        grid=(N,),
        in_specs=[
            pl.BlockSpec((1, Q, Cin), lambda n: (n, 0, 0)),
            pl.BlockSpec((9 * Cin, Cout), lambda n: (0, 0)),
            pl.BlockSpec((Q, 1), lambda n: (0, 0)),
        ],
        out_specs=[
            pl.BlockSpec((1, Q, Cout), lambda n: (n, 0, 0)),
            pl.BlockSpec((1, 2, Cout), lambda n: (n, 0, 0)),
        ],
        out_shape=[
            jax.ShapeDtypeStruct((N, Q, Cout), jnp.bfloat16),
            jax.ShapeDtypeStruct((N, 2, Cout), jnp.float32),
        ],
        scratch_shapes=[pltpu.VMEM((Q, 9 * Cin), jnp.bfloat16)],
        compiler_params=pltpu.CompilerParams(dimension_semantics=("parallel",)),
    )(xp, w_mat, mask)


def _conv2_fused(y1, scale1, shift1, w_mat, mask, Wp):
    N, Q, C1 = y1.shape
    Cout = w_mat.shape[1]
    return pl.pallas_call(
        functools.partial(_conv2_fused_kernel, Wp=Wp),
        grid=(N,),
        in_specs=[
            pl.BlockSpec((1, Q, C1), lambda n: (n, 0, 0)),
            pl.BlockSpec((1, C1), lambda n: (0, 0)),
            pl.BlockSpec((1, C1), lambda n: (0, 0)),
            pl.BlockSpec((9 * C1, Cout), lambda n: (0, 0)),
            pl.BlockSpec((Q, 1), lambda n: (0, 0)),
        ],
        out_specs=[
            pl.BlockSpec((1, Q, Cout), lambda n: (n, 0, 0)),
            pl.BlockSpec((1, 2, Cout), lambda n: (n, 0, 0)),
        ],
        out_shape=[
            jax.ShapeDtypeStruct((N, Q, Cout), jnp.bfloat16),
            jax.ShapeDtypeStruct((N, 2, Cout), jnp.float32),
        ],
        scratch_shapes=[pltpu.VMEM((Q, 9 * C1), jnp.bfloat16)],
        compiler_params=pltpu.CompilerParams(dimension_semantics=("parallel",)),
    )(y1, scale1, shift1, w_mat, mask)


def _repack_conv3x3(w_oihw):
    """PyTorch (Cout, Cin, 3, 3) -> (9*Cin, Cout) bf16, row index = (u*3 + v)*Cin + ci."""
    cout, cin, kh, kw = w_oihw.shape
    return (jnp.transpose(w_oihw, (2, 3, 1, 0))
            .reshape(kh * kw * cin, cout).astype(jnp.bfloat16))


def _bn_scale_shift(stats_sum, gamma, beta, count):
    """Fold training-mode BN (biased variance) into per-channel scale/shift constants."""
    mean = stats_sum[0] / count
    var = stats_sum[1] / count - mean * mean
    scale = gamma * lax.rsqrt(var + BN_EPS)
    shift = beta - mean * scale
    C = gamma.shape[0]
    return scale.reshape(1, C).astype(jnp.float32), shift.reshape(1, C).astype(jnp.float32)


@jax.jit
def residual_block_forward(x_nchw, params):
    """Pallas implementation of ResidualBlock.forward. Input/output are NCHW float32."""
    N, Cin, H, W = x_nchw.shape
    Cout = params["w1"].shape[0]
    Hp, Wp = H + 2, W + 2
    Q = Hp * Wp
    P = N * H * W

    # One pad + cast pass over the (small) network input; everything downstream stays in the
    # padded-flat (N, Q, C) layout so no further wrapper pads/reshapes are needed between convs.
    x_nhwc = jnp.transpose(x_nchw, (0, 2, 3, 1))
    xp = jnp.pad(x_nhwc, ((0, 0), (1, 1), (1, 1), (0, 0))).astype(jnp.bfloat16).reshape(N, Q, Cin)

    # Interior mask over the padded-flat index (1 = real pixel, 0 = zero border).
    q = jnp.arange(Q, dtype=jnp.int32)
    ip, jp = q // Wp, q % Wp
    interior = ((ip >= 1) & (ip <= H) & (jp >= 1) & (jp <= W)).astype(jnp.float32).reshape(Q, 1)

    w1 = _repack_conv3x3(params["w1"])          # (9*Cin,  Cout) bf16
    w2 = _repack_conv3x3(params["w2"])          # (9*Cout, Cout) bf16

    # conv1 + per-image partial batch stats  (bias b1 dropped: cancels inside batch-stat BN)
    y1, st1 = _conv1(xp, w1, interior, Wp)
    scale1, shift1 = _bn_scale_shift(st1.sum(axis=0), params["g1"], params["be1"], P)

    # fused BN1-affine + ReLU + border-zeroing + conv2 + per-image partial stats (b2 dropped)
    y2, st2 = _conv2_fused(y1, scale1, shift1, w2, interior, Wp)
    scale2, shift2 = _bn_scale_shift(st2.sum(axis=0), params["g2"], params["be2"], P)

    # BN2 + shortcut + residual add + ReLU (shortcut re-uses the padded bf16 input xp)
    if params.get("wsc") is not None:
        wsc = jnp.transpose(params["wsc"], (2, 3, 1, 0)).reshape(Cin, Cout).astype(jnp.bfloat16)
        bsc = params["bsc"].reshape(1, Cout).astype(jnp.float32)
        out = pl.pallas_call(
            _bn2_res_conv_kernel,
            grid=(N,),
            in_specs=[
                pl.BlockSpec((1, Q, Cout), lambda n: (n, 0, 0)),
                pl.BlockSpec((1, Q, Cin), lambda n: (n, 0, 0)),
                pl.BlockSpec((Cin, Cout), lambda n: (0, 0)),
                pl.BlockSpec((1, Cout), lambda n: (0, 0)),
                pl.BlockSpec((1, Cout), lambda n: (0, 0)),
                pl.BlockSpec((1, Cout), lambda n: (0, 0)),
            ],
            out_specs=pl.BlockSpec((1, Q, Cout), lambda n: (n, 0, 0)),
            out_shape=jax.ShapeDtypeStruct((N, Q, Cout), jnp.float32),
            compiler_params=pltpu.CompilerParams(dimension_semantics=("parallel",)),
        )(y2, xp, wsc, scale2, shift2, bsc)
    else:
        out = pl.pallas_call(
            _bn2_res_id_kernel,
            grid=(N,),
            in_specs=[
                pl.BlockSpec((1, Q, Cout), lambda n: (n, 0, 0)),
                pl.BlockSpec((1, Q, Cout), lambda n: (n, 0, 0)),
                pl.BlockSpec((1, Cout), lambda n: (0, 0)),
                pl.BlockSpec((1, Cout), lambda n: (0, 0)),
            ],
            out_specs=pl.BlockSpec((1, Q, Cout), lambda n: (n, 0, 0)),
            out_shape=jax.ShapeDtypeStruct((N, Q, Cout), jnp.float32),
            compiler_params=pltpu.CompilerParams(dimension_semantics=("parallel",)),
        )(y2, xp, scale2, shift2)

    # Drop the padded border (borders hold don't-care values) and return NCHW.
    out = out.reshape(N, Hp, Wp, Cout)[:, 1:H + 1, 1:W + 1, :]
    return jnp.transpose(out, (0, 3, 1, 2))


# ---------------------------------------------------------------------------
# Pure-JAX reference (correctness check) and parameter construction
# ---------------------------------------------------------------------------
def _bn_train_ref(y_nchw, g, b):
    mean = jnp.mean(y_nchw, axis=(0, 2, 3), keepdims=True)
    var = jnp.mean(jnp.square(y_nchw - mean), axis=(0, 2, 3), keepdims=True)
    return (y_nchw - mean) * lax.rsqrt(var + BN_EPS) * g[None, :, None, None] + b[None, :, None, None]


def residual_block_reference(x, p):
    dn = ("NCHW", "OIHW", "NCHW")
    hp = lax.Precision.HIGHEST
    y = lax.conv_general_dilated(x, p["w1"], (1, 1), "SAME", dimension_numbers=dn,
                                 precision=hp) + p["b1"][None, :, None, None]
    y = jnp.maximum(_bn_train_ref(y, p["g1"], p["be1"]), 0.0)
    y2 = lax.conv_general_dilated(y, p["w2"], (1, 1), "SAME", dimension_numbers=dn,
                                  precision=hp) + p["b2"][None, :, None, None]
    y2 = _bn_train_ref(y2, p["g2"], p["be2"])
    if p.get("wsc") is not None:
        res = lax.conv_general_dilated(x, p["wsc"], (1, 1), "VALID", dimension_numbers=dn,
                                       precision=hp) + p["bsc"][None, :, None, None]
    else:
        res = x
    return jnp.maximum(y2 + res, 0.0)


def make_params(key, cin, cout):
    ks = jax.random.split(key, 10)
    p = {
        "w1": 0.2 * jax.random.normal(ks[0], (cout, cin, 3, 3), jnp.float32),
        "b1": 0.1 * jax.random.normal(ks[1], (cout,), jnp.float32),
        "g1": 1.0 + 0.1 * jax.random.normal(ks[2], (cout,), jnp.float32),
        "be1": 0.1 * jax.random.normal(ks[3], (cout,), jnp.float32),
        "w2": 0.2 * jax.random.normal(ks[4], (cout, cout, 3, 3), jnp.float32),
        "b2": 0.1 * jax.random.normal(ks[5], (cout,), jnp.float32),
        "g2": 1.0 + 0.1 * jax.random.normal(ks[6], (cout,), jnp.float32),
        "be2": 0.1 * jax.random.normal(ks[7], (cout,), jnp.float32),
    }
    if cin != cout:
        p["wsc"] = 0.2 * jax.random.normal(ks[8], (cout, cin, 1, 1), jnp.float32)
        p["bsc"] = 0.1 * jax.random.normal(ks[9], (cout,), jnp.float32)
    else:
        p["wsc"] = None
        p["bsc"] = None
    return p


if __name__ == "__main__":
    key = jax.random.PRNGKey(0)
    kx1, kp1, kx2, kp2 = jax.random.split(key, 4)

    # Case 1: in_channels != out_channels  -> 1x1-conv shortcut
    x1 = jax.random.normal(kx1, (2, 4, 16, 16), jnp.float32)
    p1 = make_params(kp1, 4, 8)
    out1 = jax.block_until_ready(residual_block_forward(x1, p1))
    ref1 = residual_block_reference(x1, p1)
    ok1 = (out1.shape == (2, 8, 16, 16)) and bool(jnp.allclose(out1, ref1, atol=5e-2, rtol=5e-2))

    # Case 2: in_channels == out_channels  -> identity shortcut
    x2 = jax.random.normal(kx2, (2, 8, 16, 16), jnp.float32)
    p2 = make_params(kp2, 8, 8)
    out2 = jax.block_until_ready(residual_block_forward(x2, p2))
    ref2 = residual_block_reference(x2, p2)
    ok2 = (out2.shape == (2, 8, 16, 16)) and bool(jnp.allclose(out2, ref2, atol=5e-2, rtol=5e-2))

    if ok1 and ok2:
        print("KERNEL_OK")
    else:
        e1 = float(jnp.max(jnp.abs(out1 - ref1)))
        e2 = float(jnp.max(jnp.abs(out2 - ref2)))
        print(f"MISMATCH max_abs_err case1={e1:.3e} case2={e2:.3e}")
</pallas_src>

<mosaic_0001>
module attributes {stable_mosaic.version = 11 : i64} {
  func.func @_conv1_kernel(%arg0: i32, %arg1: memref<1x324x4xbf16, #tpu.memory_space<vmem>>, %arg2: memref<36x8xbf16, #tpu.memory_space<vmem>>, %arg3: memref<324x1xf32, #tpu.memory_space<vmem>>, %arg4: memref<1x324x8xbf16, #tpu.memory_space<vmem>>, %arg5: memref<1x2x8xf32, #tpu.memory_space<vmem>>, %arg6: memref<324x36xbf16, #tpu.memory_space<vmem>>) attributes {dimension_semantics = [#tpu.dimension_semantics<parallel>], iteration_bounds = array<i64: 2>, scalar_prefetch = 0 : i64, scratch_operands = 1 : i64, tpu.core_type = #tpu.core_type<tc>, window_params = [{transform_indices = @transform_0, window_bounds = array<i64: 1, 324, 4>}, {pipeline_mode = #tpu.pipeline_mode<synchronous>, transform_indices = @transform_1, window_bounds = array<i64: 36, 8>}, {pipeline_mode = #tpu.pipeline_mode<synchronous>, transform_indices = @transform_2, window_bounds = array<i64: 324, 1>}, {transform_indices = @transform_3, window_bounds = array<i64: 1, 324, 8>}, {transform_indices = @transform_4, window_bounds = array<i64: 1, 2, 8>}]} {
    %c0 = arith.constant 0 : index
    %c0_0 = arith.constant 0 : index
    %c0_1 = arith.constant 0 : index
    %0 = vector.load %arg1[%c0, %c0_0, %c0_1] : memref<1x324x4xbf16, #tpu.memory_space<vmem>>, vector<1x324x4xbf16>
    %1 = vector.shape_cast %0 : vector<1x324x4xbf16> to vector<324x4xbf16>
    %cst = arith.constant 0.000000e+00 : bf16
    %2 = vector.broadcast %cst : bf16 to vector<324x36xbf16>
    %c0_2 = arith.constant 0 : index
    %c0_3 = arith.constant 0 : index
    %3 = vector.load %arg6[%c0_2, %c0_3] : memref<324x36xbf16, #tpu.memory_space<vmem>>, vector<324x36xbf16>
    tpu.vector_store %arg6[%c0_2, %c0_3], %2 {strides = array<i32>} : memref<324x36xbf16, #tpu.memory_space<vmem>>, vector<324x36xbf16>,
    %4 = vector.extract_strided_slice %1 {offsets = [0, 0], sizes = [305, 4], strides = [1, 1]} : vector<324x4xbf16> to vector<305x4xbf16>
    %c19 = arith.constant 19 : index
    %c0_4 = arith.constant 0 : index
    %5 = vector.load %arg6[%c19, %c0_4] : memref<324x36xbf16, #tpu.memory_space<vmem>>, vector<305x4xbf16>
    tpu.vector_store %arg6[%c19, %c0_4], %4 {strides = array<i32>} : memref<324x36xbf16, #tpu.memory_space<vmem>>, vector<305x4xbf16>,
    %6 = vector.extract_strided_slice %1 {offsets = [0, 0], sizes = [306, 4], strides = [1, 1]} : vector<324x4xbf16> to vector<306x4xbf16>
    %c18 = arith.constant 18 : index
    %c4 = arith.constant 4 : index
    %7 = vector.load %arg6[%c18, %c4] : memref<324x36xbf16, #tpu.memory_space<vmem>>, vector<306x4xbf16>
    tpu.vector_store %arg6[%c18, %c4], %6 {strides = array<i32>} : memref<324x36xbf16, #tpu.memory_space<vmem>>, vector<306x4xbf16>,
    %8 = vector.extract_strided_slice %1 {offsets = [0, 0], sizes = [307, 4], strides = [1, 1]} : vector<324x4xbf16> to vector<307x4xbf16>
    %c17 = arith.constant 17 : index
    %c8 = arith.constant 8 : index
    %9 = vector.load %arg6[%c17, %c8] : memref<324x36xbf16, #tpu.memory_space<vmem>>, vector<307x4xbf16>
    tpu.vector_store %arg6[%c17, %c8], %8 {strides = array<i32>} : memref<324x36xbf16, #tpu.memory_space<vmem>>, vector<307x4xbf16>,
    %10 = vector.extract_strided_slice %1 {offsets = [0, 0], sizes = [323, 4], strides = [1, 1]} : vector<324x4xbf16> to vector<323x4xbf16>
    %c1 = arith.constant 1 : index
    %c12 = arith.constant 12 : index
    %11 = vector.load %arg6[%c1, %c12] : memref<324x36xbf16, #tpu.memory_space<vmem>>, vector<323x4xbf16>
    tpu.vector_store %arg6[%c1, %c12], %10 {strides = array<i32>} : memref<324x36xbf16, #tpu.memory_space<vmem>>, vector<323x4xbf16>,
    %c0_5 = arith.constant 0 : index
    %c16 = arith.constant 16 : index
    %12 = vector.load %arg6[%c0_5, %c16] : memref<324x36xbf16, #tpu.memory_space<vmem>>, vector<324x4xbf16>
    tpu.vector_store %arg6[%c0_5, %c16], %1 {strides = array<i32>} : memref<324x36xbf16, #tpu.memory_space<vmem>>, vector<324x4xbf16>,
    %13 = vector.extract_strided_slice %1 {offsets = [1, 0], sizes = [323, 4], strides = [1, 1]} : vector<324x4xbf16> to vector<323x4xbf16>
    %c0_6 = arith.constant 0 : index
    %c20 = arith.constant 20 : index
    %14 = vector.load %arg6[%c0_6, %c20] : memref<324x36xbf16, #tpu.memory_space<vmem>>, vector<323x4xbf16>
    tpu.vector_store %arg6[%c0_6, %c20], %13 {strides = array<i32>} : memref<324x36xbf16, #tpu.memory_space<vmem>>, vector<323x4xbf16>,
    %15 = vector.extract_strided_slice %1 {offsets = [17, 0], sizes = [307, 4], strides = [1, 1]} : vector<324x4xbf16> to vector<307x4xbf16>
    %c0_7 = arith.constant 0 : index
    %c24 = arith.constant 24 : index
    %16 = vector.load %arg6[%c0_7, %c24] : memref<324x36xbf16, #tpu.memory_space<vmem>>, vector<307x4xbf16>
    tpu.vector_store %arg6[%c0_7, %c24], %15 {strides = array<i32>} : memref<324x36xbf16, #tpu.memory_space<vmem>>, vector<307x4xbf16>,
    %17 = vector.extract_strided_slice %1 {offsets = [18, 0], sizes = [306, 4], strides = [1, 1]} : vector<324x4xbf16> to vector<306x4xbf16>
    %c0_8 = arith.constant 0 : index
    %c28 = arith.constant 28 : index
    %18 = vector.load %arg6[%c0_8, %c28] : memref<324x36xbf16, #tpu.memory_space<vmem>>, vector<306x4xbf16>
    tpu.vector_store %arg6[%c0_8, %c28], %17 {strides = array<i32>} : memref<324x36xbf16, #tpu.memory_space<vmem>>, vector<306x4xbf16>,
    %19 = vector.extract_strided_slice %1 {offsets = [19, 0], sizes = [305, 4], strides = [1, 1]} : vector<324x4xbf16> to vector<305x4xbf16>
    %c0_9 = arith.constant 0 : index
    %c32 = arith.constant 32 : index
    %20 = vector.load %arg6[%c0_9, %c32] : memref<324x36xbf16, #tpu.memory_space<vmem>>, vector<305x4xbf16>
    tpu.vector_store %arg6[%c0_9, %c32], %19 {strides = array<i32>} : memref<324x36xbf16, #tpu.memory_space<vmem>>, vector<305x4xbf16>,
    %c0_10 = arith.constant 0 : index
    %c0_11 = arith.constant 0 : index
    %21 = vector.load %arg6[%c0_10, %c0_11] : memref<324x36xbf16, #tpu.memory_space<vmem>>, vector<324x36xbf16>
    %c0_12 = arith.constant 0 : index
    %c0_13 = arith.constant 0 : index
    %22 = vector.load %arg2[%c0_12, %c0_13] : memref<36x8xbf16, #tpu.memory_space<vmem>>, vector<36x8xbf16>
    %cst_14 = arith.constant dense<0.000000e+00> : vector<324x8xf32>
    %23 = tpu.matmul %21, %22, %cst_14 {dimension_numbers = #tpu.dot_dimension_numbers<[1], [0], [0], [1], [0, 0, 1, 1], [], []>} : vector<324x36xbf16>, vector<36x8xbf16>, vector<324x8xf32> -> vector<324x8xf32>
    %24 = arith.truncf %23 : vector<324x8xf32> to vector<324x8xbf16>
    %c0_15 = arith.constant 0 : index
    %c0_16 = arith.constant 0 : index
    %c0_17 = arith.constant 0 : index
    %25 = vector.load %arg4[%c0_15, %c0_16, %c0_17] : memref<1x324x8xbf16, #tpu.memory_space<vmem>>, vector<1x324x8xbf16>
    %26 = vector.shape_cast %25 : vector<1x324x8xbf16> to vector<324x8xbf16>
    %27 = vector.shape_cast %24 : vector<324x8xbf16> to vector<1x324x8xbf16>
    tpu.vector_store %arg4[%c0_15, %c0_16, %c0_17], %27 {strides = array<i32>} : memref<1x324x8xbf16, #tpu.memory_space<vmem>>, vector<1x324x8xbf16>,
    %c0_18 = arith.constant 0 : index
    %c0_19 = arith.constant 0 : index
    %28 = vector.load %arg3[%c0_18, %c0_19] : memref<324x1xf32, #tpu.memory_space<vmem>>, vector<324x1xf32>
    %29 = vector.broadcast %28 : vector<324x1xf32> to vector<324x8xf32>
    %30 = arith.mulf %23, %29 : vector<324x8xf32>
    %cst_20 = arith.constant dense<0.000000e+00> : vector<8xf32>
    %31 = vector.multi_reduction <add>, %30, %cst_20 [0] : vector<324x8xf32> to vector<8xf32>
    %32 = vector.shape_cast %31 : vector<8xf32> to vector<1x8xf32>
    %33 = arith.mulf %30, %23 : vector<324x8xf32>
    %cst_21 = arith.constant dense<0.000000e+00> : vector<8xf32>
    %34 = vector.multi_reduction <add>, %33, %cst_21 [0] : vector<324x8xf32> to vector<8xf32>
    %35 = vector.shape_cast %34 : vector<8xf32> to vector<1x8xf32>
    %36 = tpu.concatenate %32, %35 in 0 : vector<1x8xf32>, vector<1x8xf32> -> vector<2x8xf32>
    %c0_22 = arith.constant 0 : index
    %c0_23 = arith.constant 0 : index
    %c0_24 = arith.constant 0 : index
    %37 = vector.load %arg5[%c0_22, %c0_23, %c0_24] : memref<1x2x8xf32, #tpu.memory_space<vmem>>, vector<1x2x8xf32>
    %38 = vector.shape_cast %37 : vector<1x2x8xf32> to vector<2x8xf32>
    %39 = vector.shape_cast %36 : vector<2x8xf32> to vector<1x2x8xf32>
    tpu.vector_store %arg5[%c0_22, %c0_23, %c0_24], %39 {strides = array<i32>} : memref<1x2x8xf32, #tpu.memory_space<vmem>>, vector<1x2x8xf32>,
    return
  }
  func.func @transform_0(%arg0: i32) -> (i32, i32, i32) {
    %c0_i32 = arith.constant 0 : i32
    %c0_i32_0 = arith.constant 0 : i32
    %c0_i32_1 = arith.constant 0 : i32
    return %arg0, %c0_i32, %c0_i32_0 : i32, i32, i32
  }
  func.func @transform_1(%arg0: i32) -> (i32, i32) {
    %c0_i32 = arith.constant 0 : i32
    %c0_i32_0 = arith.constant 0 : i32
    %c0_i32_1 = arith.constant 0 : i32
    return %c0_i32, %c0_i32_0 : i32, i32
  }
  func.func @transform_2(%arg0: i32) -> (i32, i32) {
    %c0_i32 = arith.constant 0 : i32
    %c0_i32_0 = arith.constant 0 : i32
    %c0_i32_1 = arith.constant 0 : i32
    return %c0_i32, %c0_i32_0 : i32, i32
  }
  func.func @transform_3(%arg0: i32) -> (i32, i32, i32) {
    %c0_i32 = arith.constant 0 : i32
    %c0_i32_0 = arith.constant 0 : i32
    %c0_i32_1 = arith.constant 0 : i32
    return %arg0, %c0_i32, %c0_i32_0 : i32, i32, i32
  }
  func.func @transform_4(%arg0: i32) -> (i32, i32, i32) {
    %c0_i32 = arith.constant 0 : i32
    %c0_i32_0 = arith.constant 0 : i32
    %c0_i32_1 = arith.constant 0 : i32
    return %arg0, %c0_i32, %c0_i32_0 : i32, i32, i32
  }
}

module attributes {stable_mosaic.version = 11 : i64} {
  func.func @_conv2_fused_kernel(%arg0: i32, %arg1: memref<1x324x8xbf16, #tpu.memory_space<vmem>>, %arg2: memref<1x8xf32, #tpu.memory_space<vmem>>, %arg3: memref<1x8xf32, #tpu.memory_space<vmem>>, %arg4: memref<72x8xbf16, #tpu.memory_space<vmem>>, %arg5: memref<324x1xf32, #tpu.memory_space<vmem>>, %arg6: memref<1x324x8xbf16, #tpu.memory_space<vmem>>, %arg7: memref<1x2x8xf32, #tpu.memory_space<vmem>>, %arg8: memref<324x72xbf16, #tpu.memory_space<vmem>>) attributes {dimension_semantics = [#tpu.dimension_semantics<parallel>], iteration_bounds = array<i64: 2>, scalar_prefetch = 0 : i64, scratch_operands = 1 : i64, tpu.core_type = #tpu.core_type<tc>, window_params = [{transform_indices = @transform_0, window_bounds = array<i64: 1, 324, 8>}, {pipeline_mode = #tpu.pipeline_mode<synchronous>, transform_indices = @transform_1, window_bounds = array<i64: 1, 8>}, {pipeline_mode = #tpu.pipeline_mode<synchronous>, transform_indices = @transform_2, window_bounds = array<i64: 1, 8>}, {pipeline_mode = #tpu.pipeline_mode<synchronous>, transform_indices = @transform_3, window_bounds = array<i64: 72, 8>}, {pipeline_mode = #tpu.pipeline_mode<synchronous>, transform_indices = @transform_4, window_bounds = array<i64: 324, 1>}, {transform_indices = @transform_5, window_bounds = array<i64: 1, 324, 8>}, {transform_indices = @transform_6, window_bounds = array<i64: 1, 2, 8>}]} {
    %c0 = arith.constant 0 : index
    %c0_0 = arith.constant 0 : index
    %0 = vector.load %arg5[%c0, %c0_0] : memref<324x1xf32, #tpu.memory_space<vmem>>, vector<324x1xf32>
    %c0_1 = arith.constant 0 : index
    %c0_2 = arith.constant 0 : index
    %c0_3 = arith.constant 0 : index
    %1 = vector.load %arg1[%c0_1, %c0_2, %c0_3] : memref<1x324x8xbf16, #tpu.memory_space<vmem>>, vector<1x324x8xbf16>
    %2 = vector.shape_cast %1 : vector<1x324x8xbf16> to vector<324x8xbf16>
    %3 = arith.extf %2 : vector<324x8xbf16> to vector<324x8xf32>
    %c0_4 = arith.constant 0 : index
    %c0_5 = arith.constant 0 : index
    %4 = vector.load %arg2[%c0_4, %c0_5] : memref<1x8xf32, #tpu.memory_space<vmem>>, vector<1x8xf32>
    %5 = vector.broadcast %4 : vector<1x8xf32> to vector<324x8xf32>
    %6 = arith.mulf %3, %5 : vector<324x8xf32>
    %c0_6 = arith.constant 0 : index
    %c0_7 = arith.constant 0 : index
    %7 = vector.load %arg3[%c0_6, %c0_7] : memref<1x8xf32, #tpu.memory_space<vmem>>, vector<1x8xf32>
    %8 = vector.broadcast %7 : vector<1x8xf32> to vector<324x8xf32>
    %9 = arith.addf %6, %8 : vector<324x8xf32>
    %cst = arith.constant 0.000000e+00 : f32
    %10 = vector.broadcast %cst : f32 to vector<324x8xf32>
    %11 = arith.maximumf %9, %10 : vector<324x8xf32>
    %12 = vector.broadcast %0 : vector<324x1xf32> to vector<324x8xf32>
    %13 = arith.mulf %11, %12 : vector<324x8xf32>
    %14 = arith.truncf %13 : vector<324x8xf32> to vector<324x8xbf16>
    %cst_8 = arith.constant 0.000000e+00 : bf16
    %15 = vector.broadcast %cst_8 : bf16 to vector<324x72xbf16>
    %c0_9 = arith.constant 0 : index
    %c0_10 = arith.constant 0 : index
    %16 = vector.load %arg8[%c0_9, %c0_10] : memref<324x72xbf16, #tpu.memory_space<vmem>>, vector<324x72xbf16>
    tpu.vector_store %arg8[%c0_9, %c0_10], %15 {strides = array<i32>} : memref<324x72xbf16, #tpu.memory_space<vmem>>, vector<324x72xbf16>,
    %17 = vector.extract_strided_slice %14 {offsets = [0, 0], sizes = [305, 8], strides = [1, 1]} : vector<324x8xbf16> to vector<305x8xbf16>
    %c19 = arith.constant 19 : index
    %c0_11 = arith.constant 0 : index
    %18 = vector.load %arg8[%c19, %c0_11] : memref<324x72xbf16, #tpu.memory_space<vmem>>, vector<305x8xbf16>
    tpu.vector_store %arg8[%c19, %c0_11], %17 {strides = array<i32>} : memref<324x72xbf16, #tpu.memory_space<vmem>>, vector<305x8xbf16>,
    %19 = vector.extract_strided_slice %14 {offsets = [0, 0], sizes = [306, 8], strides = [1, 1]} : vector<324x8xbf16> to vector<306x8xbf16>
    %c18 = arith.constant 18 : index
    %c8 = arith.constant 8 : index
    %20 = vector.load %arg8[%c18, %c8] : memref<324x72xbf16, #tpu.memory_space<vmem>>, vector<306x8xbf16>
    tpu.vector_store %arg8[%c18, %c8], %19 {strides = array<i32>} : memref<324x72xbf16, #tpu.memory_space<vmem>>, vector<306x8xbf16>,
    %21 = vector.extract_strided_slice %14 {offsets = [0, 0], sizes = [307, 8], strides = [1, 1]} : vector<324x8xbf16> to vector<307x8xbf16>
    %c17 = arith.constant 17 : index
    %c16 = arith.constant 16 : index
    %22 = vector.load %arg8[%c17, %c16] : memref<324x72xbf16, #tpu.memory_space<vmem>>, vector<307x8xbf16>
    tpu.vector_store %arg8[%c17, %c16], %21 {strides = array<i32>} : memref<324x72xbf16, #tpu.memory_space<vmem>>, vector<307x8xbf16>,
    %23 = vector.extract_strided_slice %14 {offsets = [0, 0], sizes = [323, 8], strides = [1, 1]} : vector<324x8xbf16> to vector<323x8xbf16>
    %c1 = arith.constant 1 : index
    %c24 = arith.constant 24 : index
    %24 = vector.load %arg8[%c1, %c24] : memref<324x72xbf16, #tpu.memory_space<vmem>>, vector<323x8xbf16>
    tpu.vector_store %arg8[%c1, %c24], %23 {strides = array<i32>} : memref<324x72xbf16, #tpu.memory_space<vmem>>, vector<323x8xbf16>,
    %c0_12 = arith.constant 0 : index
    %c32 = arith.constant 32 : index
    %25 = vector.load %arg8[%c0_12, %c32] : memref<324x72xbf16, #tpu.memory_space<vmem>>, vector<324x8xbf16>
    tpu.vector_store %arg8[%c0_12, %c32], %14 {strides = array<i32>} : memref<324x72xbf16, #tpu.memory_space<vmem>>, vector<324x8xbf16>,
    %26 = vector.extract_strided_slice %14 {offsets = [1, 0], sizes = [323, 8], strides = [1, 1]} : vector<324x8xbf16> to vector<323x8xbf16>
    %c0_13 = arith.constant 0 : index
    %c40 = arith.constant 40 : index
    %27 = vector.load %arg8[%c0_13, %c40] : memref<324x72xbf16, #tpu.memory_space<vmem>>, vector<323x8xbf16>
    tpu.vector_store %arg8[%c0_13, %c40], %26 {strides = array<i32>} : memref<324x72xbf16, #tpu.memory_space<vmem>>, vector<323x8xbf16>,
    %28 = vector.extract_strided_slice %14 {offsets = [17, 0], sizes = [307, 8], strides = [1, 1]} : vector<324x8xbf16> to vector<307x8xbf16>
    %c0_14 = arith.constant 0 : index
    %c48 = arith.constant 48 : index
    %29 = vector.load %arg8[%c0_14, %c48] : memref<324x72xbf16, #tpu.memory_space<vmem>>, vector<307x8xbf16>
    tpu.vector_store %arg8[%c0_14, %c48], %28 {strides = array<i32>} : memref<324x72xbf16, #tpu.memory_space<vmem>>, vector<307x8xbf16>,
    %30 = vector.extract_strided_slice %14 {offsets = [18, 0], sizes = [306, 8], strides = [1, 1]} : vector<324x8xbf16> to vector<306x8xbf16>
    %c0_15 = arith.constant 0 : index
    %c56 = arith.constant 56 : index
    %31 = vector.load %arg8[%c0_15, %c56] : memref<324x72xbf16, #tpu.memory_space<vmem>>, vector<306x8xbf16>
    tpu.vector_store %arg8[%c0_15, %c56], %30 {strides = array<i32>} : memref<324x72xbf16, #tpu.memory_space<vmem>>, vector<306x8xbf16>,
    %32 = vector.extract_strided_slice %14 {offsets = [19, 0], sizes = [305, 8], strides = [1, 1]} : vector<324x8xbf16> to vector<305x8xbf16>
    %c0_16 = arith.constant 0 : index
    %c64 = arith.constant 64 : index
    %33 = vector.load %arg8[%c0_16, %c64] : memref<324x72xbf16, #tpu.memory_space<vmem>>, vector<305x8xbf16>
    tpu.vector_store %arg8[%c0_16, %c64], %32 {strides = array<i32>} : memref<324x72xbf16, #tpu.memory_space<vmem>>, vector<305x8xbf16>,
    %c0_17 = arith.constant 0 : index
    %c0_18 = arith.constant 0 : index
    %34 = vector.load %arg8[%c0_17, %c0_18] : memref<324x72xbf16, #tpu.memory_space<vmem>>, vector<324x72xbf16>
    %c0_19 = arith.constant 0 : index
    %c0_20 = arith.constant 0 : index
    %35 = vector.load %arg4[%c0_19, %c0_20] : memref<72x8xbf16, #tpu.memory_space<vmem>>, vector<72x8xbf16>
    %cst_21 = arith.constant dense<0.000000e+00> : vector<324x8xf32>
    %36 = tpu.matmul %34, %35, %cst_21 {dimension_numbers = #tpu.dot_dimension_numbers<[1], [0], [0], [1], [0, 0, 1, 1], [], []>} : vector<324x72xbf16>, vector<72x8xbf16>, vector<324x8xf32> -> vector<324x8xf32>
    %37 = arith.truncf %36 : vector<324x8xf32> to vector<324x8xbf16>
    %c0_22 = arith.constant 0 : index
    %c0_23 = arith.constant 0 : index
    %c0_24 = arith.constant 0 : index
    %38 = vector.load %arg6[%c0_22, %c0_23, %c0_24] : memref<1x324x8xbf16, #tpu.memory_space<vmem>>, vector<1x324x8xbf16>
    %39 = vector.shape_cast %38 : vector<1x324x8xbf16> to vector<324x8xbf16>
    %40 = vector.shape_cast %37 : vector<324x8xbf16> to vector<1x324x8xbf16>
    tpu.vector_store %arg6[%c0_22, %c0_23, %c0_24], %40 {strides = array<i32>} : memref<1x324x8xbf16, #tpu.memory_space<vmem>>, vector<1x324x8xbf16>,
    %41 = vector.broadcast %0 : vector<324x1xf32> to vector<324x8xf32>
    %42 = arith.mulf %36, %41 : vector<324x8xf32>
    %cst_25 = arith.constant dense<0.000000e+00> : vector<8xf32>
    %43 = vector.multi_reduction <add>, %42, %cst_25 [0] : vector<324x8xf32> to vector<8xf32>
    %44 = vector.shape_cast %43 : vector<8xf32> to vector<1x8xf32>
    %45 = arith.mulf %42, %36 : vector<324x8xf32>
    %cst_26 = arith.constant dense<0.000000e+00> : vector<8xf32>
    %46 = vector.multi_reduction <add>, %45, %cst_26 [0] : vector<324x8xf32> to vector<8xf32>
    %47 = vector.shape_cast %46 : vector<8xf32> to vector<1x8xf32>
    %48 = tpu.concatenate %44, %47 in 0 : vector<1x8xf32>, vector<1x8xf32> -> vector<2x8xf32>
    %c0_27 = arith.constant 0 : index
    %c0_28 = arith.constant 0 : index
    %c0_29 = arith.constant 0 : index
    %49 = vector.load %arg7[%c0_27, %c0_28, %c0_29] : memref<1x2x8xf32, #tpu.memory_space<vmem>>, vector<1x2x8xf32>
    %50 = vector.shape_cast %49 : vector<1x2x8xf32> to vector<2x8xf32>
    %51 = vector.shape_cast %48 : vector<2x8xf32> to vector<1x2x8xf32>
    tpu.vector_store %arg7[%c0_27, %c0_28, %c0_29], %51 {strides = array<i32>} : memref<1x2x8xf32, #tpu.memory_space<vmem>>, vector<1x2x8xf32>,
    return
  }
  func.func @transform_0(%arg0: i32) -> (i32, i32, i32) {
    %c0_i32 = arith.constant 0 : i32
    %c0_i32_0 = arith.constant 0 : i32
    %c0_i32_1 = arith.constant 0 : i32
    return %arg0, %c0_i32, %c0_i32_0 : i32, i32, i32
  }
  func.func @transform_1(%arg0: i32) -> (i32, i32) {
    %c0_i32 = arith.constant 0 : i32
    %c0_i32_0 = arith.constant 0 : i32
    %c0_i32_1 = arith.constant 0 : i32
    return %c0_i32, %c0_i32_0 : i32, i32
  }
  func.func @transform_2(%arg0: i32) -> (i32, i32) {
    %c0_i32 = arith.constant 0 : i32
    %c0_i32_0 = arith.constant 0 : i32
    %c0_i32_1 = arith.constant 0 : i32
    return %c0_i32, %c0_i32_0 : i32, i32
  }
  func.func @transform_3(%arg0: i32) -> (i32, i32) {
    %c0_i32 = arith.constant 0 : i32
    %c0_i32_0 = arith.constant 0 : i32
    %c0_i32_1 = arith.constant 0 : i32
    return %c0_i32, %c0_i32_0 : i32, i32
  }
  func.func @transform_4(%arg0: i32) -> (i32, i32) {
    %c0_i32 = arith.constant 0 : i32
    %c0_i32_0 = arith.constant 0 : i32
    %c0_i32_1 = arith.constant 0 : i32
    return %c0_i32, %c0_i32_0 : i32, i32
  }
  func.func @transform_5(%arg0: i32) -> (i32, i32, i32) {
    %c0_i32 = arith.constant 0 : i32
    %c0_i32_0 = arith.constant 0 : i32
    %c0_i32_1 = arith.constant 0 : i32
    return %arg0, %c0_i32, %c0_i32_0 : i32, i32, i32
  }
  func.func @transform_6(%arg0: i32) -> (i32, i32, i32) {
    %c0_i32 = arith.constant 0 : i32
    %c0_i32_0 = arith.constant 0 : i32
    %c0_i32_1 = arith.constant 0 : i32
    return %arg0, %c0_i32, %c0_i32_0 : i32, i32, i32
  }
}

module attributes {stable_mosaic.version = 11 : i64} {
  func.func @_bn2_res_conv_kernel(%arg0: i32, %arg1: memref<1x324x8xbf16, #tpu.memory_space<vmem>>, %arg2: memref<1x324x4xbf16, #tpu.memory_space<vmem>>, %arg3: memref<4x8xbf16, #tpu.memory_space<vmem>>, %arg4: memref<1x8xf32, #tpu.memory_space<vmem>>, %arg5: memref<1x8xf32, #tpu.memory_space<vmem>>, %arg6: memref<1x8xf32, #tpu.memory_space<vmem>>, %arg7: memref<1x324x8xf32, #tpu.memory_space<vmem>>) attributes {dimension_semantics = [#tpu.dimension_semantics<parallel>], iteration_bounds = array<i64: 2>, scalar_prefetch = 0 : i64, scratch_operands = 0 : i64, tpu.core_type = #tpu.core_type<tc>, window_params = [{transform_indices = @transform_0, window_bounds = array<i64: 1, 324, 8>}, {transform_indices = @transform_1, window_bounds = array<i64: 1, 324, 4>}, {pipeline_mode = #tpu.pipeline_mode<synchronous>, transform_indices = @transform_2, window_bounds = array<i64: 4, 8>}, {pipeline_mode = #tpu.pipeline_mode<synchronous>, transform_indices = @transform_3, window_bounds = array<i64: 1, 8>}, {pipeline_mode = #tpu.pipeline_mode<synchronous>, transform_indices = @transform_4, window_bounds = array<i64: 1, 8>}, {pipeline_mode = #tpu.pipeline_mode<synchronous>, transform_indices = @transform_5, window_bounds = array<i64: 1, 8>}, {transform_indices = @transform_6, window_bounds = array<i64: 1, 324, 8>}]} {
    %c0 = arith.constant 0 : index
    %c0_0 = arith.constant 0 : index
    %c0_1 = arith.constant 0 : index
    %0 = vector.load %arg1[%c0, %c0_0, %c0_1] : memref<1x324x8xbf16, #tpu.memory_space<vmem>>, vector<1x324x8xbf16>
    %1 = vector.shape_cast %0 : vector<1x324x8xbf16> to vector<324x8xbf16>
    %2 = arith.extf %1 : vector<324x8xbf16> to vector<324x8xf32>
    %c0_2 = arith.constant 0 : index
    %c0_3 = arith.constant 0 : index
    %3 = vector.load %arg4[%c0_2, %c0_3] : memref<1x8xf32, #tpu.memory_space<vmem>>, vector<1x8xf32>
    %4 = vector.broadcast %3 : vector<1x8xf32> to vector<324x8xf32>
    %5 = arith.mulf %2, %4 : vector<324x8xf32>
    %c0_4 = arith.constant 0 : index
    %c0_5 = arith.constant 0 : index
    %6 = vector.load %arg5[%c0_4, %c0_5] : memref<1x8xf32, #tpu.memory_space<vmem>>, vector<1x8xf32>
    %7 = vector.broadcast %6 : vector<1x8xf32> to vector<324x8xf32>
    %8 = arith.addf %5, %7 : vector<324x8xf32>
    %c0_6 = arith.constant 0 : index
    %c0_7 = arith.constant 0 : index
    %c0_8 = arith.constant 0 : index
    %9 = vector.load %arg2[%c0_6, %c0_7, %c0_8] : memref<1x324x4xbf16, #tpu.memory_space<vmem>>, vector<1x324x4xbf16>
    %10 = vector.shape_cast %9 : vector<1x324x4xbf16> to vector<324x4xbf16>
    %c0_9 = arith.constant 0 : index
    %c0_10 = arith.constant 0 : index
    %11 = vector.load %arg3[%c0_9, %c0_10] : memref<4x8xbf16, #tpu.memory_space<vmem>>, vector<4x8xbf16>
    %cst = arith.constant dense<0.000000e+00> : vector<324x8xf32>
    %12 = tpu.matmul %10, %11, %cst {dimension_numbers = #tpu.dot_dimension_numbers<[1], [0], [0], [1], [0, 0, 1, 1], [], []>} : vector<324x4xbf16>, vector<4x8xbf16>, vector<324x8xf32> -> vector<324x8xf32>
    %c0_11 = arith.constant 0 : index
    %c0_12 = arith.constant 0 : index
    %13 = vector.load %arg6[%c0_11, %c0_12] : memref<1x8xf32, #tpu.memory_space<vmem>>, vector<1x8xf32>
    %14 = vector.broadcast %13 : vector<1x8xf32> to vector<324x8xf32>
    %15 = arith.addf %12, %14 : vector<324x8xf32>
    %16 = arith.addf %8, %15 : vector<324x8xf32>
    %cst_13 = arith.constant 0.000000e+00 : f32
    %17 = vector.broadcast %cst_13 : f32 to vector<324x8xf32>
    %18 = arith.maximumf %16, %17 : vector<324x8xf32>
    %c0_14 = arith.constant 0 : index
    %c0_15 = arith.constant 0 : index
    %c0_16 = arith.constant 0 : index
    %19 = vector.load %arg7[%c0_14, %c0_15, %c0_16] : memref<1x324x8xf32, #tpu.memory_space<vmem>>, vector<1x324x8xf32>
    %20 = vector.shape_cast %19 : vector<1x324x8xf32> to vector<324x8xf32>
    %21 = vector.shape_cast %18 : vector<324x8xf32> to vector<1x324x8xf32>
    tpu.vector_store %arg7[%c0_14, %c0_15, %c0_16], %21 {strides = array<i32>} : memref<1x324x8xf32, #tpu.memory_space<vmem>>, vector<1x324x8xf32>,
    return
  }
  func.func @transform_0(%arg0: i32) -> (i32, i32, i32) {
    %c0_i32 = arith.constant 0 : i32
    %c0_i32_0 = arith.constant 0 : i32
    %c0_i32_1 = arith.constant 0 : i32
    return %arg0, %c0_i32, %c0_i32_0 : i32, i32, i32
  }
  func.func @transform_1(%arg0: i32) -> (i32, i32, i32) {
    %c0_i32 = arith.constant 0 : i32
    %c0_i32_0 = arith.constant 0 : i32
    %c0_i32_1 = arith.constant 0 : i32
    return %arg0, %c0_i32, %c0_i32_0 : i32, i32, i32
  }
  func.func @transform_2(%arg0: i32) -> (i32, i32) {
    %c0_i32 = arith.constant 0 : i32
    %c0_i32_0 = arith.constant 0 : i32
    %c0_i32_1 = arith.constant 0 : i32
    return %c0_i32, %c0_i32_0 : i32, i32
  }
  func.func @transform_3(%arg0: i32) -> (i32, i32) {
    %c0_i32 = arith.constant 0 : i32
    %c0_i32_0 = arith.constant 0 : i32
    %c0_i32_1 = arith.constant 0 : i32
    return %c0_i32, %c0_i32_0 : i32, i32
  }
  func.func @transform_4(%arg0: i32) -> (i32, i32) {
    %c0_i32 = arith.constant 0 : i32
    %c0_i32_0 = arith.constant 0 : i32
    %c0_i32_1 = arith.constant 0 : i32
    return %c0_i32, %c0_i32_0 : i32, i32
  }
  func.func @transform_5(%arg0: i32) -> (i32, i32) {
    %c0_i32 = arith.constant 0 : i32
    %c0_i32_0 = arith.constant 0 : i32
    %c0_i32_1 = arith.constant 0 : i32
    return %c0_i32, %c0_i32_0 : i32, i32
  }
  func.func @transform_6(%arg0: i32) -> (i32, i32, i32) {
    %c0_i32 = arith.constant 0 : i32
    %c0_i32_0 = arith.constant 0 : i32
    %c0_i32_1 = arith.constant 0 : i32
    return %arg0, %c0_i32, %c0_i32_0 : i32, i32, i32
  }
}

</mosaic_0001>

<llo_original>
// kernel: residual_block_forward.5
$region0: #{residual_block_forward.5}
  #allocation0 [shape = 'u32[]', space=smem, size = 0x4, offset = 0x4, fixed_abs, tag = 'smem constant byte address 0x4 - core index']
  #allocation1 [shape = 'u32[144,128]{1,0:T(1,128)}', space=vmem, size = 0x12000, scoped, tag = 'internal scratch']
  %s0 = inlined_call_operand.vmem [shape: bf16[2,324,8], index: 0, kind: input, shape index: {}]
  %s1 = inlined_call_operand.vmem [shape: bf16[2,324,4], index: 1, kind: input, shape index: {}]
  %s2 = inlined_call_operand.vmem [shape: bf16[4,8], index: 2, kind: input, shape index: {}]
  %s3 = inlined_call_operand.vmem [shape: f32[1,8], index: 3, kind: input, shape index: {}]
  %s4 = inlined_call_operand.vmem [shape: f32[1,8], index: 4, kind: input, shape index: {}]
  %s5 = inlined_call_operand.vmem [shape: f32[1,8], index: 5, kind: input, shape index: {}]
  %s6 = inlined_call_operand.vmem [shape: f32[2,324,8], index: 6, kind: output, shape index: {}]
  %s7 = sld [smem:[#allocation0]]
  $region57: #{residual_block_forward.5} parent=0
    _
  %s9 = ssub.s32 1, %s7
  %s10 = scalar_select 0, %s9, %s7
  loop: start=0, step=1, limit=4
  $region2: #{residual_block_forward.5} parent=0 // loop_pre_header
    _
  $region3: #{residual_block_forward.5} parent=0 // loop_header
    %s12 = sphi 0, %s16
    %p13 = scmp.ge.s32.totalorder %s12, 4
    %s22 = sphi 0, %s24
    %s25 = sphi 0, %s22
    %s26 = sphi 0, %s25
    %s42 = sphi 0, %s26
    %s48 = sphi 0, %s50
    %s51 = sphi 0, %s48
    %s52 = sphi 0, %s51
    %s68 = sphi 0, %s52
    %s72 = sphi 0, %s72
    %s74 = sphi 0, %s72
    %s75 = sphi 0, %s74
    %s89 = sphi 0, %s75
    %s93 = sphi 0, %s93
    %s95 = sphi 0, %s93
    %s96 = sphi 0, %s95
    %s110 = sphi 0, %s96
    %s114 = sphi 0, %s114
    %s116 = sphi 0, %s114
    %s117 = sphi 0, %s116
    %s131 = sphi 0, %s117
    %s135 = sphi 0, %s135
    %s137 = sphi 0, %s135
    %s138 = sphi 0, %s137
    %s152 = sphi 0, %s138
    %s158 = sphi 0, %s160
    %s161 = sphi 0, %s158
    %s162 = sphi 0, %s161
    %s178 = sphi 0, %s162
  $region4: #{residual_block_forward.5} parent=0 // loop_header_branch
    %15 = sbr.rel (%p13) target = $region8
  $region5: #{residual_block_forward.5} parent=0 // loop_body
    %s17 = ssub.s32 %s12, 1
    %s18 = ssub.s32 %s12, 2
    %s19 = sadd.s32 %s12, 1
    %s20 = ssub.s32 %s12, %s19
    %p21 = scmp.eq.s32.totalorder %s20, 0
    %s23 = sadd.s32 %s22, 1
    %s24 = scalar_select %p21, %s22, %s23
    %p27 = pneg %p21
    %p28 = scmp.eq.s32.totalorder %s12, 1
    %p29 = por %p27, %p28
    %p30 = scmp.ne.s32.totalorder %s22, %s25
    %p31 = scmp.eq.s32.totalorder %s12, 0
    %p32 = por %p30, %p31
    %p33 = scmp.ne.s32.totalorder %s22, %s25
    %p34 = scmp.eq.s32.totalorder %s17, 1
    %p35 = por %p33, %p34
    %p36 = scmp.ne.s32.totalorder %s25, %s26
    %p37 = scmp.eq.s32.totalorder %s17, 0
    %p38 = por %p36, %p37
    %p39 = scmp.ne.s32.totalorder %s25, %s26
    %p40 = scmp.eq.s32.totalorder %s18, 1
    %p41 = por %p39, %p40
    %p43 = scmp.ne.s32.totalorder %s26, %s42
    %p44 = scmp.eq.s32.totalorder %s18, 0
    %p45 = por %p43, %p44
    %s46 = ssub.s32 %s12, %s19
    %p47 = scmp.eq.s32.totalorder %s46, 0
    %s49 = sadd.s32 %s48, 1
    %s50 = scalar_select %p47, %s48, %s49
    %p53 = pneg %p47
    %p54 = scmp.eq.s32.totalorder %s12, 1
    %p55 = por %p53, %p54
    %p56 = scmp.ne.s32.totalorder %s48, %s51
    %p57 = scmp.eq.s32.totalorder %s12, 0
    %p58 = por %p56, %p57
    %p59 = scmp.ne.s32.totalorder %s48, %s51
    %p60 = scmp.eq.s32.totalorder %s17, 1
    %p61 = por %p59, %p60
    %p62 = scmp.ne.s32.totalorder %s51, %s52
    %p63 = scmp.eq.s32.totalorder %s17, 0
    %p64 = por %p62, %p63
    %p65 = scmp.ne.s32.totalorder %s51, %s52
    %p66 = scmp.eq.s32.totalorder %s18, 1
    %p67 = por %p65, %p66
    %p69 = scmp.ne.s32.totalorder %s52, %s68
    %p70 = scmp.eq.s32.totalorder %s18, 0
    %p71 = por %p69, %p70
    %s73 = sadd.s32 %s72, 1
    %p76 = scmp.eq.s32.totalorder %s12, 1
    %p77 = scmp.ne.s32.totalorder %s72, %s74
    %p78 = scmp.eq.s32.totalorder %s12, 0
    %p79 = por %p77, %p78
    %p80 = scmp.ne.s32.totalorder %s72, %s74
    %p81 = scmp.eq.s32.totalorder %s17, 1
    %p82 = por %p80, %p81
    %p83 = scmp.ne.s32.totalorder %s74, %s75
    %p84 = scmp.eq.s32.totalorder %s17, 0
    %p85 = por %p83, %p84
    %p86 = scmp.ne.s32.totalorder %s74, %s75
    %p87 = scmp.eq.s32.totalorder %s18, 1
    %p88 = por %p86, %p87
    %p90 = scmp.ne.s32.totalorder %s75, %s89
    %p91 = scmp.eq.s32.totalorder %s18, 0
    %p92 = por %p90, %p91
    %s94 = sadd.s32 %s93, 1
    %p97 = scmp.eq.s32.totalorder %s12, 1
    %p98 = scmp.ne.s32.totalorder %s93, %s95
    %p99 = scmp.eq.s32.totalorder %s12, 0
    %p100 = por %p98, %p99
    %p101 = scmp.ne.s32.totalorder %s93, %s95
    %p102 = scmp.eq.s32.totalorder %s17, 1
    %p103 = por %p101, %p102
    %p104 = scmp.ne.s32.totalorder %s95, %s96
    %p105 = scmp.eq.s32.totalorder %s17, 0
    %p106 = por %p104, %p105
    %p107 = scmp.ne.s32.totalorder %s95, %s96
    %p108 = scmp.eq.s32.totalorder %s18, 1
    %p109 = por %p107, %p108
    %p111 = scmp.ne.s32.totalorder %s96, %s110
    %p112 = scmp.eq.s32.totalorder %s18, 0
    %p113 = por %p111, %p112
    %s115 = sadd.s32 %s114, 1
    %p118 = scmp.eq.s32.totalorder %s12, 1
    %p119 = scmp.ne.s32.totalorder %s114, %s116
    %p120 = scmp.eq.s32.totalorder %s12, 0
    %p121 = por %p119, %p120
    %p122 = scmp.ne.s32.totalorder %s114, %s116
    %p123 = scmp.eq.s32.totalorder %s17, 1
    %p124 = por %p122, %p123
    %p125 = scmp.ne.s32.totalorder %s116, %s117
    %p126 = scmp.eq.s32.totalorder %s17, 0
    %p127 = por %p125, %p126
    %p128 = scmp.ne.s32.totalorder %s116, %s117
    %p129 = scmp.eq.s32.totalorder %s18, 1
    %p130 = por %p128, %p129
    %p132 = scmp.ne.s32.totalorder %s117, %s131
    %p133 = scmp.eq.s32.totalorder %s18, 0
    %p134 = por %p132, %p133
    %s136 = sadd.s32 %s135, 1
    %p139 = scmp.eq.s32.totalorder %s12, 1
    %p140 = scmp.ne.s32.totalorder %s135, %s137
    %p141 = scmp.eq.s32.totalorder %s12, 0
    %p142 = por %p140, %p141
    %p143 = scmp.ne.s32.totalorder %s135, %s137
    %p144 = scmp.eq.s32.totalorder %s17, 1
    %p145 = por %p143, %p144
    %p146 = scmp.ne.s32.totalorder %s137, %s138
    %p147 = scmp.eq.s32.totalorder %s17, 0
    %p148 = por %p146, %p147
    %p149 = scmp.ne.s32.totalorder %s137, %s138
    %p150 = scmp.eq.s32.totalorder %s18, 1
    %p151 = por %p149, %p150
    %p153 = scmp.ne.s32.totalorder %s138, %s152
    %p154 = scmp.eq.s32.totalorder %s18, 0
    %p155 = por %p153, %p154
    %s156 = ssub.s32 %s12, %s19
    %p157 = scmp.eq.s32.totalorder %s156, 0
    %s159 = sadd.s32 %s158, 1
    %s160 = scalar_select %p157, %s158, %s159
    %p163 = pneg %p157
    %p164 = scmp.eq.s32.totalorder %s12, 1
    %p165 = por %p163, %p164
    %p166 = scmp.ne.s32.totalorder %s158, %s161
    %p167 = scmp.eq.s32.totalorder %s12, 0
    %p168 = por %p166, %p167
    %p169 = scmp.ne.s32.totalorder %s158, %s161
    %p170 = scmp.eq.s32.totalorder %s17, 1
    %p171 = por %p169, %p170
    %p172 = scmp.ne.s32.totalorder %s161, %s162
    %p173 = scmp.eq.s32.totalorder %s17, 0
    %p174 = por %p172, %p173
    %p175 = scmp.ne.s32.totalorder %s161, %s162
    %p176 = scmp.eq.s32.totalorder %s18, 1
    %p177 = por %p175, %p176
    %p179 = scmp.ne.s32.totalorder %s162, %s178
    %p180 = scmp.eq.s32.totalorder %s18, 0
    %p181 = por %p179, %p180
    %p182 = scmp.le.s32.totalorder 1, %s12
    %p183 = scmp.lt.s32.totalorder %s12, 3
    %p184 = pnand %p182, %p183
    %p185 = pneg %p184
    // Predicated region
    $region9: #{residual_block_forward.5} parent=5 // pred_check
      _
    $region10: #{residual_block_forward.5} parent=5 // pred_check_branch
      %187 = sbr.rel (%p184) target = $region12
    $region11: #{residual_block_forward.5} parent=5 // pred_region
      %s188 = ssub.s32 %s12, 1
      // Predicated region
      $region13: #{residual_block_forward.5} parent=11 // pred_check
        %p189 = pneg %p85
      $region14: #{residual_block_forward.5} parent=11 // pred_check_branch
        %191 = sbr.rel (%p189) target = $region16
      $region15: #{residual_block_forward.5} parent=11 // pred_region
        _
      $region16: #{residual_block_forward.5} parent=11 // pred_fallthru
        _
      // Predicated region
      $region17: #{residual_block_forward.5} parent=11 // pred_check
        %p192 = pneg %p106
      $region18: #{residual_block_forward.5} parent=11 // pred_check_branch
        %194 = sbr.rel (%p192) target = $region20
      $region19: #{residual_block_forward.5} parent=11 // pred_region
        _
      $region20: #{residual_block_forward.5} parent=11 // pred_fallthru
        _
      // Predicated region
      $region21: #{residual_block_forward.5} parent=11 // pred_check
        %p195 = pneg %p127
      $region22: #{residual_block_forward.5} parent=11 // pred_check_branch
        %197 = sbr.rel (%p195) target = $region24
      $region23: #{residual_block_forward.5} parent=11 // pred_region
        _
      $region24: #{residual_block_forward.5} parent=11 // pred_fallthru
        _
      // Predicated region
      $region25: #{residual_block_forward.5} parent=11 // pred_check
        %p198 = pneg %p148
      $region26: #{residual_block_forward.5} parent=11 // pred_check_branch
        %200 = sbr.rel (%p198) target = $region28
      $region27: #{residual_block_forward.5} parent=11 // pred_region
        _
      $region28: #{residual_block_forward.5} parent=11 // pred_fallthru
        _
    $region12: #{residual_block_forward.5} parent=5 // pred_fallthru
      _
    %p201 = scmp.lt.s32.totalorder %s12, 2
    // Predicated region
    $region29: #{residual_block_forward.5} parent=5 // pred_check
      %p202 = pneg %p201
    $region30: #{residual_block_forward.5} parent=5 // pred_check_branch
      %204 = sbr.rel (%p202) target = $region32
    $region31: #{residual_block_forward.5} parent=5 // pred_region
      // Predicated region
      $region33: #{residual_block_forward.5} parent=31 // pred_check
        %p205 = pneg %p32
      $region34: #{residual_block_forward.5} parent=31 // pred_check_branch
        %207 = sbr.rel (%p205) target = $region36
      $region35: #{residual_block_forward.5} parent=31 // pred_region
        %p208 = scmp.lt.s32.totalorder %s12, 1
        %s209 = scalar_select %p208, %s12, 1
        %s210 = smul.addr %s209, 41
        %s211 = smul.addr %s210, 4
        %s212 = scalar_lea.vmem %s0, %s211
      $region36: #{residual_block_forward.5} parent=31 // pred_fallthru
        _
      // Predicated region
      $region37: #{residual_block_forward.5} parent=31 // pred_check
        %p213 = pneg %p58
      $region38: #{residual_block_forward.5} parent=31 // pred_check_branch
        %215 = sbr.rel (%p213) target = $region40
      $region39: #{residual_block_forward.5} parent=31 // pred_region
        %p216 = scmp.lt.s32.totalorder %s12, 1
        %s217 = scalar_select %p216, %s12, 1
        %s218 = smul.addr %s217, 41
        %s219 = smul.addr %s218, 4
        %s220 = scalar_lea.vmem %s1, %s219
      $region40: #{residual_block_forward.5} parent=31 // pred_fallthru
        _
    $region32: #{residual_block_forward.5} parent=5 // pred_fallthru
      _
    %p221 = scmp.le.s32.totalorder 1, %s12
    %p222 = scmp.lt.s32.totalorder %s12, 3
    %p223 = pnand %p221, %p222
    %p224 = pneg %p223
    // Predicated region
    $region41: #{residual_block_forward.5} parent=5 // pred_check
      _
    $region42: #{residual_block_forward.5} parent=5 // pred_check_branch
      %226 = sbr.rel (%p223) target = $region44
    $region43: #{residual_block_forward.5} parent=5 // pred_region
      %s227 = ssub.s32 %s12, 1
      %p228 = scmp.lt.s32.totalorder %s17, 1
      %s229 = scalar_select %p228, %s17, 1
      %s230 = smul.addr %s229, 41
      %s231 = smul.addr %s230, 4
      %s232 = scalar_lea.vmem %s0, %s231
      %p233 = pneg %p38
      %p234 = pneg %p35
      %p235 = scmp.lt.s32.totalorder %s17, 1
      %s236 = scalar_select %p235, %s17, 1
      %s237 = smul.addr %s236, 41
      %s238 = smul.addr %s237, 4
      %s239 = scalar_lea.vmem %s1, %s238
      %p240 = pneg %p64
      %p241 = pneg %p61
      %p242 = pneg %p85
      %p243 = pneg %p82
      %p244 = pneg %p106
      %p245 = pneg %p103
      %p246 = pneg %p127
      %p247 = pneg %p124
      %p248 = pneg %p148
      %p249 = pneg %p145
      %p250 = pneg %p174
      %p251 = pneg %p171
      %p252 = scmp.lt.s32.totalorder %s17, 1
      %s253 = scalar_select %p252, %s17, 1
      %s254 = smul.addr %s253, 41
      %s255 = smul.addr %s254, 8
      %s256 = scalar_lea.vmem %s6, %s255
      %p257 = scmp.lt.s32.totalorder %s17, 1
      %s258 = scalar_select %p257, %s17, 1
      %s259 = smul.addr %s258, 41
      %s260 = smul.addr %s259, 4
      %s261 = scalar_lea.vmem %s0, %s260
      %p262 = scmp.lt.s32.totalorder %s17, 1
      %s263 = scalar_select %p262, %s17, 1
      %s264 = smul.addr %s263, 41
      %s265 = smul.addr %s264, 4
      %s266 = scalar_lea.vmem %s1, %s265
      %p267 = scmp.lt.s32.totalorder %s17, 1
      %s268 = scalar_select %p267, %s17, 1
      %s269 = smul.addr %s268, 41
      %s270 = smul.addr %s269, 8
      %s271 = scalar_lea.vmem %s6, %s270
      %v273 = vld [vmem:[%s261] sm:$0xf]
      %v274 = vld [vmem:[%s261 + $0x4] sm:$0xf]
      %v275 = vld [vmem:[%s261 + $0x8] sm:$0xf]
      %v276 = vld [vmem:[%s261 + $0xc] sm:$0xf]
      %v277 = vld [vmem:[%s261 + $0x10] sm:$0xf]
      %v278 = vld [vmem:[%s261 + $0x14] sm:$0xf]
      %v279 = vld [vmem:[%s261 + $0x18] sm:$0xf]
      %v280 = vld [vmem:[%s261 + $0x1c] sm:$0xf]
      %v281 = vld [vmem:[%s261 + $0x20] sm:$0xf]
      %v282 = vld [vmem:[%s261 + $0x24] sm:$0xf]
      %v283 = vld [vmem:[%s261 + $0x28] sm:$0xf]
      %v284 = vld [vmem:[%s261 + $0x2c] sm:$0xf]
      %v285 = vld [vmem:[%s261 + $0x30] sm:$0xf]
      %v286 = vld [vmem:[%s261 + $0x34] sm:$0xf]
      %v287 = vld [vmem:[%s261 + $0x38] sm:$0xf]
      %v288 = vld [vmem:[%s261 + $0x3c] sm:$0xf]
      %v289 = vld [vmem:[%s261 + $0x40] sm:$0xf]
      %v290 = vld [vmem:[%s261 + $0x44] sm:$0xf]
      %v291 = vld [vmem:[%s261 + $0x48] sm:$0xf]
      %v292 = vld [vmem:[%s261 + $0x4c] sm:$0xf]
      %v293 = vld [vmem:[%s261 + $0x50] sm:$0xf]
      %v294 = vld [vmem:[%s261 + $0x54] sm:$0xf]
      %v295 = vld [vmem:[%s261 + $0x58] sm:$0xf]
      %v296 = vld [vmem:[%s261 + $0x5c] sm:$0xf]
      %v297 = vld [vmem:[%s261 + $0x60] sm:$0xf]
      %v298 = vld [vmem:[%s261 + $0x64] sm:$0xf]
      %v299 = vld [vmem:[%s261 + $0x68] sm:$0xf]
      %v300 = vld [vmem:[%s261 + $0x6c] sm:$0xf]
      %v301 = vld [vmem:[%s261 + $0x70] sm:$0xf]
      %v302 = vld [vmem:[%s261 + $0x74] sm:$0xf]
      %v303 = vld [vmem:[%s261 + $0x78] sm:$0xf]
      %v304 = vld [vmem:[%s261 + $0x7c] sm:$0xf]
      %v305 = vld [vmem:[%s261 + $0x80] sm:$0xf]
      %v306 = vld [vmem:[%s261 + $0x84] sm:$0xf]
      %v307 = vld [vmem:[%s261 + $0x88] sm:$0xf]
      %v308 = vld [vmem:[%s261 + $0x8c] sm:$0xf]
      %v309 = vld [vmem:[%s261 + $0x90] sm:$0xf]
      %v310 = vld [vmem:[%s261 + $0x94] sm:$0xf]
      %v311 = vld [vmem:[%s261 + $0x98] sm:$0xf]
      %v312 = vld [vmem:[%s261 + $0x9c] sm:$0xf]
      %v313 = vld [vmem:[%s261 + $0xa0] sm:$0x3]
      %v314 = vunpack.c.l.bf16 %v273
      %v315 = vunpack.c.l.bf16 %v274
      %v316 = vunpack.c.l.bf16 %v275
      %v317 = vunpack.c.l.bf16 %v276
      %v318 = vunpack.c.l.bf16 %v277
      %v319 = vunpack.c.l.bf16 %v278
      %v320 = vunpack.c.l.bf16 %v279
      %v321 = vunpack.c.l.bf16 %v280
      %v322 = vunpack.c.l.bf16 %v281
      %v323 = vunpack.c.l.bf16 %v282
      %v324 = vunpack.c.l.bf16 %v283
      %v325 = vunpack.c.l.bf16 %v284
      %v326 = vunpack.c.l.bf16 %v285
      %v327 = vunpack.c.l.bf16 %v286
      %v328 = vunpack.c.l.bf16 %v287
      %v329 = vunpack.c.l.bf16 %v288
      %v330 = vunpack.c.l.bf16 %v289
      %v331 = vunpack.c.l.bf16 %v290
      %v332 = vunpack.c.l.bf16 %v291
      %v333 = vunpack.c.l.bf16 %v292
      %v334 = vunpack.c.l.bf16 %v293
      %v335 = vunpack.c.l.bf16 %v294
      %v336 = vunpack.c.l.bf16 %v295
      %v337 = vunpack.c.l.bf16 %v296
      %v338 = vunpack.c.l.bf16 %v297
      %v339 = vunpack.c.l.bf16 %v298
      %v340 = vunpack.c.l.bf16 %v299
      %v341 = vunpack.c.l.bf16 %v300
      %v342 = vunpack.c.l.bf16 %v301
      %v343 = vunpack.c.l.bf16 %v302
      %v344 = vunpack.c.l.bf16 %v303
      %v345 = vunpack.c.l.bf16 %v304
      %v346 = vunpack.c.l.bf16 %v305
      %v347 = vunpack.c.l.bf16 %v306
      %v348 = vunpack.c.l.bf16 %v307
      %v349 = vunpack.c.l.bf16 %v308
      %v350 = vunpack.c.l.bf16 %v309
      %v351 = vunpack.c.l.bf16 %v310
      %v352 = vunpack.c.l.bf16 %v311
      %v353 = vunpack.c.l.bf16 %v312
      %v354 = vunpack.c.l.bf16 %v313
      %v355 = vld [vmem:[%s3] sm:$0x1]
      %v357 = vlaneseq
      %v358 = vshrl.u32 %v357, 7
      %v359 = vsub.s32 0, %v358
      %v360 = vrot.slane %v355, %v359
      %v362 = vmul.f32 %v314, %v360
      %v363 = vmul.f32 %v315, %v360
      %v364 = vmul.f32 %v316, %v360
      %v365 = vmul.f32 %v317, %v360
      %v366 = vmul.f32 %v318, %v360
      %v367 = vmul.f32 %v319, %v360
      %v368 = vmul.f32 %v320, %v360
      %v369 = vmul.f32 %v321, %v360
      %v370 = vmul.f32 %v322, %v360
      %v371 = vmul.f32 %v323, %v360
      %v372 = vmul.f32 %v324, %v360
      %v373 = vmul.f32 %v325, %v360
      %v374 = vmul.f32 %v326, %v360
      %v375 = vmul.f32 %v327, %v360
      %v376 = vmul.f32 %v328, %v360
      %v377 = vmul.f32 %v329, %v360
      %v378 = vmul.f32 %v330, %v360
      %v379 = vmul.f32 %v331, %v360
      %v380 = vmul.f32 %v332, %v360
      %v381 = vmul.f32 %v333, %v360
      %v382 = vmul.f32 %v334, %v360
      %v383 = vmul.f32 %v335, %v360
      %v384 = vmul.f32 %v336, %v360
      %v385 = vmul.f32 %v337, %v360
      %v386 = vmul.f32 %v338, %v360
      %v387 = vmul.f32 %v339, %v360
      %v388 = vmul.f32 %v340, %v360
      %v389 = vmul.f32 %v341, %v360
      %v390 = vmul.f32 %v342, %v360
      %v391 = vmul.f32 %v343, %v360
      %v392 = vmul.f32 %v344, %v360
      %v393 = vmul.f32 %v345, %v360
      %v394 = vmul.f32 %v346, %v360
      %v395 = vmul.f32 %v347, %v360
      %v396 = vmul.f32 %v348, %v360
      %v397 = vmul.f32 %v349, %v360
      %v398 = vmul.f32 %v350, %v360
      %v399 = vmul.f32 %v351, %v360
      %v400 = vmul.f32 %v352, %v360
      %v401 = vmul.f32 %v353, %v360
      %v402 = vmul.f32 %v354, %v360
      %v403 = vld [vmem:[%s4] sm:$0x1]
      %v405 = vlaneseq
      %v406 = vshrl.u32 %v405, 7
      %v407 = vsub.s32 0, %v406
      %v408 = vrot.slane %v403, %v407
      %v410 = vadd.f32 %v362, %v408
      %v411 = vadd.f32 %v363, %v408
      %v412 = vadd.f32 %v364, %v408
      %v413 = vadd.f32 %v365, %v408
      %v414 = vadd.f32 %v366, %v408
      %v415 = vadd.f32 %v367, %v408
      %v416 = vadd.f32 %v368, %v408
      %v417 = vadd.f32 %v369, %v408
      %v418 = vadd.f32 %v370, %v408
      %v419 = vadd.f32 %v371, %v408
      %v420 = vadd.f32 %v372, %v408
      %v421 = vadd.f32 %v373, %v408
      %v422 = vadd.f32 %v374, %v408
      %v423 = vadd.f32 %v375, %v408
      %v424 = vadd.f32 %v376, %v408
      %v425 = vadd.f32 %v377, %v408
      %v426 = vadd.f32 %v378, %v408
      %v427 = vadd.f32 %v379, %v408
      %v428 = vadd.f32 %v380, %v408
      %v429 = vadd.f32 %v381, %v408
      %v430 = vadd.f32 %v382, %v408
      %v431 = vadd.f32 %v383, %v408
      %v432 = vadd.f32 %v384, %v408
      %v433 = vadd.f32 %v385, %v408
      %v434 = vadd.f32 %v386, %v408
      %v435 = vadd.f32 %v387, %v408
      %v436 = vadd.f32 %v388, %v408
      %v437 = vadd.f32 %v389, %v408
      %v438 = vadd.f32 %v390, %v408
      %v439 = vadd.f32 %v391, %v408
      %v440 = vadd.f32 %v392, %v408
      %v441 = vadd.f32 %v393, %v408
      %v442 = vadd.f32 %v394, %v408
      %v443 = vadd.f32 %v395, %v408
      %v444 = vadd.f32 %v396, %v408
      %v445 = vadd.f32 %v397, %v408
      %v446 = vadd.f32 %v398, %v408
      %v447 = vadd.f32 %v399, %v408
      %v448 = vadd.f32 %v400, %v408
      %v449 = vadd.f32 %v401, %v408
      %v450 = vadd.f32 %v402, %v408
      %v451 = vld [vmem:[%s266] sm:$0xf]
      %v452 = vld [vmem:[%s266 + $0x4] sm:$0xf]
      %v453 = vld [vmem:[%s266 + $0x8] sm:$0xf]
      %v454 = vld [vmem:[%s266 + $0xc] sm:$0xf]
      %v455 = vld [vmem:[%s266 + $0x10] sm:$0xf]
      %v456 = vld [vmem:[%s266 + $0x14] sm:$0xf]
      %v457 = vld [vmem:[%s266 + $0x18] sm:$0xf]
      %v458 = vld [vmem:[%s266 + $0x1c] sm:$0xf]
      %v459 = vld [vmem:[%s266 + $0x20] sm:$0xf]
      %v460 = vld [vmem:[%s266 + $0x24] sm:$0xf]
      %v461 = vld [vmem:[%s266 + $0x28] sm:$0xf]
      %v462 = vld [vmem:[%s266 + $0x2c] sm:$0xf]
      %v463 = vld [vmem:[%s266 + $0x30] sm:$0xf]
      %v464 = vld [vmem:[%s266 + $0x34] sm:$0xf]
      %v465 = vld [vmem:[%s266 + $0x38] sm:$0xf]
      %v466 = vld [vmem:[%s266 + $0x3c] sm:$0xf]
      %v467 = vld [vmem:[%s266 + $0x40] sm:$0xf]
      %v468 = vld [vmem:[%s266 + $0x44] sm:$0xf]
      %v469 = vld [vmem:[%s266 + $0x48] sm:$0xf]
      %v470 = vld [vmem:[%s266 + $0x4c] sm:$0xf]
      %v471 = vld [vmem:[%s266 + $0x50] sm:$0xf]
      %v472 = vld [vmem:[%s266 + $0x54] sm:$0xf]
      %v473 = vld [vmem:[%s266 + $0x58] sm:$0xf]
      %v474 = vld [vmem:[%s266 + $0x5c] sm:$0xf]
      %v475 = vld [vmem:[%s266 + $0x60] sm:$0xf]
      %v476 = vld [vmem:[%s266 + $0x64] sm:$0xf]
      %v477 = vld [vmem:[%s266 + $0x68] sm:$0xf]
      %v478 = vld [vmem:[%s266 + $0x6c] sm:$0xf]
      %v479 = vld [vmem:[%s266 + $0x70] sm:$0xf]
      %v480 = vld [vmem:[%s266 + $0x74] sm:$0xf]
      %v481 = vld [vmem:[%s266 + $0x78] sm:$0xf]
      %v482 = vld [vmem:[%s266 + $0x7c] sm:$0xf]
      %v483 = vld [vmem:[%s266 + $0x80] sm:$0xf]
      %v484 = vld [vmem:[%s266 + $0x84] sm:$0xf]
      %v485 = vld [vmem:[%s266 + $0x88] sm:$0xf]
      %v486 = vld [vmem:[%s266 + $0x8c] sm:$0xf]
      %v487 = vld [vmem:[%s266 + $0x90] sm:$0xf]
      %v488 = vld [vmem:[%s266 + $0x94] sm:$0xf]
      %v489 = vld [vmem:[%s266 + $0x98] sm:$0xf]
      %v490 = vld [vmem:[%s266 + $0x9c] sm:$0xf]
      %v491 = vld [vmem:[%s266 + $0xa0] sm:$0x3]
      %v492 = vld [vmem:[%s2] sm:$0x3]
      %v493 = vld [vmem:[%s5] sm:$0x1]
      %v495 = vlaneseq
      %v496 = vshrl.u32 %v495, 7
      %v497 = vsub.s32 0, %v496
      %v498 = vrot.slane %v493, %v497
      %v541 = vunpack.c.l.b16 %v451
      %v542 = vunpack.c.l.b16 %v452
      %v543 = vunpack.c.l.b16 %v453
      %v544 = vunpack.c.l.b16 %v454
      %v545 = vunpack.c.l.b16 %v455
      %v546 = vunpack.c.l.b16 %v456
      %v547 = vunpack.c.l.b16 %v457
      %v548 = vunpack.c.l.b16 %v458
      %v549 = vunpack.c.l.b16 %v459
      %v550 = vunpack.c.l.b16 %v460
      %v551 = vunpack.c.l.b16 %v461
      %v552 = vunpack.c.l.b16 %v462
      %v553 = vunpack.c.l.b16 %v463
      %v554 = vunpack.c.l.b16 %v464
      %v555 = vunpack.c.l.b16 %v465
      %v556 = vunpack.c.l.b16 %v466
      %v557 = vunpack.c.l.b16 %v467
      %v558 = vunpack.c.l.b16 %v468
      %v559 = vunpack.c.l.b16 %v469
      %v560 = vunpack.c.l.b16 %v470
      %v561 = vunpack.c.l.b16 %v471
      %v562 = vunpack.c.l.b16 %v472
      %v563 = vunpack.c.l.b16 %v473
      %v564 = vunpack.c.l.b16 %v474
      %v565 = vunpack.c.l.b16 %v475
      %v566 = vunpack.c.l.b16 %v476
      %v567 = vunpack.c.l.b16 %v477
      %v568 = vunpack.c.l.b16 %v478
      %v569 = vunpack.c.l.b16 %v479
      %v570 = vunpack.c.l.b16 %v480
      %v571 = vunpack.c.l.b16 %v481
      %v572 = vunpack.c.l.b16 %v482
      %v573 = vunpack.c.l.b16 %v483
      %v574 = vunpack.c.l.b16 %v484
      %v575 = vunpack.c.l.b16 %v485
      %v576 = vunpack.c.l.b16 %v486
      %v577 = vunpack.c.l.b16 %v487
      %v578 = vunpack.c.l.b16 %v488
      %v579 = vunpack.c.l.b16 %v489
      %v580 = vunpack.c.l.b16 %v490
      %v581 = vunpack.c.l.b16 %v491
      %v582 = vpack.c.b16 %v542, %v541
      %v583 = vpack.c.b16 %v544, %v543
      %v584 = vpack.c.b16 %v546, %v545
      %v585 = vpack.c.b16 %v548, %v547
      %v586 = vpack.c.b16 %v550, %v549
      %v587 = vpack.c.b16 %v552, %v551
      %v588 = vpack.c.b16 %v554, %v553
      %v589 = vpack.c.b16 %v556, %v555
      %v590 = vpack.c.b16 %v558, %v557
      %v591 = vpack.c.b16 %v560, %v559
      %v592 = vpack.c.b16 %v562, %v561
      %v593 = vpack.c.b16 %v564, %v563
      %v594 = vpack.c.b16 %v566, %v565
      %v595 = vpack.c.b16 %v568, %v567
      %v596 = vpack.c.b16 %v570, %v569
      %v597 = vpack.c.b16 %v572, %v571
      %v598 = vpack.c.b16 %v574, %v573
      %v599 = vpack.c.b16 %v576, %v575
      %v600 = vpack.c.b16 %v578, %v577
      %v601 = vpack.c.b16 %v580, %v579
      %v602 = vpack.c.b16 %v581, %v581
      %vm603 = vcmask 31744
      %v605 = vsel %vm603, %v582, 0
      %v608 = vsel %vm603, %v583, 0
      %v611 = vsel %vm603, %v584, 0
      %v614 = vsel %vm603, %v585, 0
      %v617 = vsel %vm603, %v586, 0
      %v620 = vsel %vm603, %v587, 0
      %v623 = vsel %vm603, %v588, 0
      %v626 = vsel %vm603, %v589, 0
      %v629 = vsel %vm603, %v590, 0
      %v632 = vsel %vm603, %v591, 0
      %v635 = vsel %vm603, %v592, 0
      %v638 = vsel %vm603, %v593, 0
      %v641 = vsel %vm603, %v594, 0
      %v644 = vsel %vm603, %v595, 0
      %v647 = vsel %vm603, %v596, 0
      %v650 = vsel %vm603, %v597, 0
      %v653 = vsel %vm603, %v598, 0
      %v656 = vsel %vm603, %v599, 0
      %v659 = vsel %vm603, %v600, 0
      %v662 = vsel %vm603, %v601, 0
      %v665 = vsel %vm603, %v602, 0
      %vm667 = vcmask 1041408
      %v669 = vsel %vm667, %v492, 0
      %671 = vmatprep.subr.bf16.mxu0 0
      %672 = vmatpush1.bf16.msra.mxu0 %v669
      %673 = vmatprep.subr.bf16.mxu0 0
      %674 = vmatpush1.bf16.msra.mxu0 0
      %675 = vmatprep.subr.bf16.mxu0 0
      %676 = vmatpush1.bf16.msra.mxu0 0
      %677 = vmatprep.subr.bf16.mxu0 0
      %678 = vmatpush1.bf16.msra.mxu0 0
      %679 = vmatprep.subr.bf16.mxu0 0
      %680 = vmatpush1.bf16.msra.mxu0 0
      %681 = vmatprep.subr.bf16.mxu0 0
      %682 = vmatpush1.bf16.msra.mxu0 0
      %683 = vmatprep.subr.bf16.mxu0 0
      %684 = vmatpush1.bf16.msra.mxu0 0
      %685 = vmatprep.subr.bf16.mxu0 0
      %686 = vmatpush1.bf16.msra.mxu0 0
      %687 = vmatprep.subr.bf16.mxu0 0
      %688 = vmatpush1.bf16.msra.mxu0 0
      %689 = vmatprep.subr.bf16.mxu0 0
      %690 = vmatpush1.bf16.msra.mxu0 0
      %691 = vmatprep.subr.bf16.mxu0 0
      %692 = vmatpush1.bf16.msra.mxu0 0
      %693 = vmatprep.subr.bf16.mxu0 0
      %694 = vmatpush1.bf16.msra.mxu0 0
      %695 = vmatprep.subr.bf16.mxu0 0
      %696 = vmatpush1.bf16.msra.mxu0 0
      %697 = vmatprep.subr.bf16.mxu0 0
      %698 = vmatpush1.bf16.msra.mxu0 0
      %699 = vmatprep.subr.bf16.mxu0 0
      %700 = vmatpush1.bf16.msra.mxu0 0
      %701 = vmatprep.subr.bf16.mxu0 0
      %702 = vmatpush1.bf16.msra.mxu0 0
      %703 = vmatprep.mubr.bf16.mxu0 0
      %704 = vmatmul.mubr.bf16.gmra.mrb[0].mxu0 %v605
      %v705 = vpop.f32.mrb[0].mxu0
      %v706 = vadd.f32 %v498, %v705
      %v707 = vpop.f32.mrb[0].mxu0
      %v708 = vpop.f32.mrb[0].mxu0
      %v709 = vadd.f32 %v498, %v708
      %v710 = vpop.f32.mrb[0].mxu0
      %711 = vmatprep.mubr.bf16.mxu0 0
      %712 = vmatmul.mubr.bf16.gmra.mrb[0].mxu0 %v608
      %v713 = vpop.f32.mrb[0].mxu0
      %v714 = vadd.f32 %v498, %v713
      %v715 = vpop.f32.mrb[0].mxu0
      %v716 = vpop.f32.mrb[0].mxu0
      %v717 = vadd.f32 %v498, %v716
      %v718 = vpop.f32.mrb[0].mxu0
      %719 = vmatprep.mubr.bf16.mxu0 0
      %720 = vmatmul.mubr.bf16.gmra.mrb[0].mxu0 %v611
      %v721 = vpop.f32.mrb[0].mxu0
      %v722 = vadd.f32 %v498, %v721
      %v723 = vpop.f32.mrb[0].mxu0
      %v724 = vpop.f32.mrb[0].mxu0
      %v725 = vadd.f32 %v498, %v724
      %v726 = vpop.f32.mrb[0].mxu0
      %727 = vmatprep.mubr.bf16.mxu0 0
      %728 = vmatmul.mubr.bf16.gmra.mrb[0].mxu0 %v614
      %v729 = vpop.f32.mrb[0].mxu0
      %v730 = vadd.f32 %v498, %v729
      %v731 = vpop.f32.mrb[0].mxu0
      %v732 = vpop.f32.mrb[0].mxu0
      %v733 = vadd.f32 %v498, %v732
      %v734 = vpop.f32.mrb[0].mxu0
      %735 = vmatprep.mubr.bf16.mxu0 0
      %736 = vmatmul.mubr.bf16.gmra.mrb[0].mxu0 %v617
      %v737 = vpop.f32.mrb[0].mxu0
      %v738 = vadd.f32 %v498, %v737
      %v739 = vpop.f32.mrb[0].mxu0
      %v740 = vpop.f32.mrb[0].mxu0
      %v741 = vadd.f32 %v498, %v740
      %v742 = vpop.f32.mrb[0].mxu0
      %743 = vmatprep.mubr.bf16.mxu0 0
      %744 = vmatmul.mubr.bf16.gmra.mrb[0].mxu0 %v620
      %v745 = vpop.f32.mrb[0].mxu0
      %v746 = vadd.f32 %v498, %v745
      %v747 = vpop.f32.mrb[0].mxu0
      %v748 = vpop.f32.mrb[0].mxu0
      %v749 = vadd.f32 %v498, %v748
      %v750 = vpop.f32.mrb[0].mxu0
      %751 = vmatprep.mubr.bf16.mxu0 0
      %752 = vmatmul.mubr.bf16.gmra.mrb[0].mxu0 %v623
      %v753 = vpop.f32.mrb[0].mxu0
      %v754 = vadd.f32 %v498, %v753
      %v755 = vpop.f32.mrb[0].mxu0
      %v756 = vpop.f32.mrb[0].mxu0
      %v757 = vadd.f32 %v498, %v756
      %v758 = vpop.f32.mrb[0].mxu0
      %759 = vmatprep.mubr.bf16.mxu0 0
      %760 = vmatmul.mubr.bf16.gmra.mrb[0].mxu0 %v626
      %v761 = vpop.f32.mrb[0].mxu0
      %v762 = vadd.f32 %v498, %v761
      %v763 = vpop.f32.mrb[0].mxu0
      %v764 = vpop.f32.mrb[0].mxu0
      %v765 = vadd.f32 %v498, %v764
      %v766 = vpop.f32.mrb[0].mxu0
      %767 = vmatprep.mubr.bf16.mxu0 0
      %768 = vmatmul.mubr.bf16.gmra.mrb[0].mxu0 %v629
      %v769 = vpop.f32.mrb[0].mxu0
      %v770 = vadd.f32 %v498, %v769
      %v771 = vpop.f32.mrb[0].mxu0
      %v772 = vpop.f32.mrb[0].mxu0
      %v773 = vadd.f32 %v498, %v772
      %v774 = vpop.f32.mrb[0].mxu0
      %775 = vmatprep.mubr.bf16.mxu0 0
      %776 = vmatmul.mubr.bf16.gmra.mrb[0].mxu0 %v632
      %v777 = vpop.f32.mrb[0].mxu0
      %v778 = vadd.f32 %v498, %v777
      %v779 = vpop.f32.mrb[0].mxu0
      %v780 = vpop.f32.mrb[0].mxu0
      %v781 = vadd.f32 %v498, %v780
      %v782 = vpop.f32.mrb[0].mxu0
      %783 = vmatprep.mubr.bf16.mxu0 0
      %784 = vmatmul.mubr.bf16.gmra.mrb[0].mxu0 %v635
      %v785 = vpop.f32.mrb[0].mxu0
      %v786 = vadd.f32 %v498, %v785
      %v787 = vpop.f32.mrb[0].mxu0
      %v788 = vpop.f32.mrb[0].mxu0
      %v789 = vadd.f32 %v498, %v788
      %v790 = vpop.f32.mrb[0].mxu0
      %791 = vmatprep.mubr.bf16.mxu0 0
      %792 = vmatmul.mubr.bf16.gmra.mrb[0].mxu0 %v638
      %v793 = vpop.f32.mrb[0].mxu0
      %v794 = vadd.f32 %v498, %v793
      %v795 = vpop.f32.mrb[0].mxu0
      %v796 = vpop.f32.mrb[0].mxu0
      %v797 = vadd.f32 %v498, %v796
      %v798 = vpop.f32.mrb[0].mxu0
      %799 = vmatprep.mubr.bf16.mxu0 0
      %800 = vmatmul.mubr.bf16.gmra.mrb[0].mxu0 %v641
      %v801 = vpop.f32.mrb[0].mxu0
      %v802 = vadd.f32 %v498, %v801
      %v803 = vpop.f32.mrb[0].mxu0
      %v804 = vpop.f32.mrb[0].mxu0
      %v805 = vadd.f32 %v498, %v804
      %v806 = vpop.f32.mrb[0].mxu0
      %807 = vmatprep.mubr.bf16.mxu0 0
      %808 = vmatmul.mubr.bf16.gmra.mrb[0].mxu0 %v644
      %v809 = vpop.f32.mrb[0].mxu0
      %v810 = vadd.f32 %v498, %v809
      %v811 = vpop.f32.mrb[0].mxu0
      %v812 = vpop.f32.mrb[0].mxu0
      %v813 = vadd.f32 %v498, %v812
      %v814 = vpop.f32.mrb[0].mxu0
      %815 = vmatprep.mubr.bf16.mxu0 0
      %816 = vmatmul.mubr.bf16.gmra.mrb[0].mxu0 %v647
      %v817 = vpop.f32.mrb[0].mxu0
      %v818 = vadd.f32 %v498, %v817
      %v819 = vpop.f32.mrb[0].mxu0
      %v820 = vpop.f32.mrb[0].mxu0
      %v821 = vadd.f32 %v498, %v820
      %v822 = vpop.f32.mrb[0].mxu0
      %823 = vmatprep.mubr.bf16.mxu0 0
      %824 = vmatmul.mubr.bf16.gmra.mrb[0].mxu0 %v650
      %v825 = vpop.f32.mrb[0].mxu0
      %v826 = vadd.f32 %v498, %v825
      %v827 = vpop.f32.mrb[0].mxu0
      %v828 = vpop.f32.mrb[0].mxu0
      %v829 = vadd.f32 %v498, %v828
      %v830 = vpop.f32.mrb[0].mxu0
      %831 = vmatprep.mubr.bf16.mxu0 0
      %832 = vmatmul.mubr.bf16.gmra.mrb[0].mxu0 %v653
      %v833 = vpop.f32.mrb[0].mxu0
      %v834 = vadd.f32 %v498, %v833
      %v835 = vpop.f32.mrb[0].mxu0
      %v836 = vpop.f32.mrb[0].mxu0
      %v837 = vadd.f32 %v498, %v836
      %v838 = vpop.f32.mrb[0].mxu0
      %839 = vmatprep.mubr.bf16.mxu0 0
      %840 = vmatmul.mubr.bf16.gmra.mrb[0].mxu0 %v656
      %v841 = vpop.f32.mrb[0].mxu0
      %v842 = vadd.f32 %v498, %v841
      %v843 = vpop.f32.mrb[0].mxu0
      %v844 = vpop.f32.mrb[0].mxu0
      %v845 = vadd.f32 %v498, %v844
      %v846 = vpop.f32.mrb[0].mxu0
      %847 = vmatprep.mubr.bf16.mxu0 0
      %848 = vmatmul.mubr.bf16.gmra.mrb[0].mxu0 %v659
      %v849 = vpop.f32.mrb[0].mxu0
      %v850 = vadd.f32 %v498, %v849
      %v851 = vpop.f32.mrb[0].mxu0
      %v852 = vpop.f32.mrb[0].mxu0
      %v853 = vadd.f32 %v498, %v852
      %v854 = vpop.f32.mrb[0].mxu0
      %855 = vmatprep.mubr.bf16.mxu0 0
      %856 = vmatmul.mubr.bf16.gmra.mrb[0].mxu0 %v662
      %v857 = vpop.f32.mrb[0].mxu0
      %v858 = vadd.f32 %v498, %v857
      %v859 = vpop.f32.mrb[0].mxu0
      %v860 = vpop.f32.mrb[0].mxu0
      %v861 = vadd.f32 %v498, %v860
      %v862 = vpop.f32.mrb[0].mxu0
      %863 = vmatprep.mubr.bf16.mxu0 0
      %864 = vmatmul.mubr.bf16.gmra.mrb[0].mxu0 %v665
      %v865 = vpop.f32.mrb[0].mxu0
      %v866 = vadd.f32 %v498, %v865
      %v867 = vpop.f32.mrb[0].mxu0
      %v868 = vpop.f32.mrb[0].mxu0
      %v869 = vpop.f32.mrb[0].mxu0
      %870 = vdwg.mxu0
      %v871 = vadd.f32 %v410, %v706
      %v872 = vadd.f32 %v411, %v709
      %v873 = vadd.f32 %v412, %v714
      %v874 = vadd.f32 %v413, %v717
      %v875 = vadd.f32 %v414, %v722
      %v876 = vadd.f32 %v415, %v725
      %v877 = vadd.f32 %v416, %v730
      %v878 = vadd.f32 %v417, %v733
      %v879 = vadd.f32 %v418, %v738
      %v880 = vadd.f32 %v419, %v741
      %v881 = vadd.f32 %v420, %v746
      %v882 = vadd.f32 %v421, %v749
      %v883 = vadd.f32 %v422, %v754
      %v884 = vadd.f32 %v423, %v757
      %v885 = vadd.f32 %v424, %v762
      %v886 = vadd.f32 %v425, %v765
      %v887 = vadd.f32 %v426, %v770
      %v888 = vadd.f32 %v427, %v773
      %v889 = vadd.f32 %v428, %v778
      %v890 = vadd.f32 %v429, %v781
      %v891 = vadd.f32 %v430, %v786
      %v892 = vadd.f32 %v431, %v789
      %v893 = vadd.f32 %v432, %v794
      %v894 = vadd.f32 %v433, %v797
      %v895 = vadd.f32 %v434, %v802
      %v896 = vadd.f32 %v435, %v805
      %v897 = vadd.f32 %v436, %v810
      %v898 = vadd.f32 %v437, %v813
      %v899 = vadd.f32 %v438, %v818
      %v900 = vadd.f32 %v439, %v821
      %v901 = vadd.f32 %v440, %v826
      %v902 = vadd.f32 %v441, %v829
      %v903 = vadd.f32 %v442, %v834
      %v904 = vadd.f32 %v443, %v837
      %v905 = vadd.f32 %v444, %v842
      %v906 = vadd.f32 %v445, %v845
      %v907 = vadd.f32 %v446, %v850
      %v908 = vadd.f32 %v447, %v853
      %v909 = vadd.f32 %v448, %v858
      %v910 = vadd.f32 %v449, %v861
      %v911 = vadd.f32 %v450, %v866
      %v912 = vmax.f32 %v871, 0.0
      %v913 = vmax.f32 %v872, 0.0
      %v914 = vmax.f32 %v873, 0.0
      %v915 = vmax.f32 %v874, 0.0
      %v916 = vmax.f32 %v875, 0.0
      %v917 = vmax.f32 %v876, 0.0
      %v918 = vmax.f32 %v877, 0.0
      %v919 = vmax.f32 %v878, 0.0
      %v920 = vmax.f32 %v879, 0.0
      %v921 = vmax.f32 %v880, 0.0
      %v922 = vmax.f32 %v881, 0.0
      %v923 = vmax.f32 %v882, 0.0
      %v924 = vmax.f32 %v883, 0.0
      %v925 = vmax.f32 %v884, 0.0
      %v926 = vmax.f32 %v885, 0.0
      %v927 = vmax.f32 %v886, 0.0
      %v928 = vmax.f32 %v887, 0.0
      %v929 = vmax.f32 %v888, 0.0
      %v930 = vmax.f32 %v889, 0.0
      %v931 = vmax.f32 %v890, 0.0
      %v932 = vmax.f32 %v891, 0.0
      %v933 = vmax.f32 %v892, 0.0
      %v934 = vmax.f32 %v893, 0.0
      %v935 = vmax.f32 %v894, 0.0
      %v936 = vmax.f32 %v895, 0.0
      %v937 = vmax.f32 %v896, 0.0
      %v938 = vmax.f32 %v897, 0.0
      %v939 = vmax.f32 %v898, 0.0
      %v940 = vmax.f32 %v899, 0.0
      %v941 = vmax.f32 %v900, 0.0
      %v942 = vmax.f32 %v901, 0.0
      %v943 = vmax.f32 %v902, 0.0
      %v944 = vmax.f32 %v903, 0.0
      %v945 = vmax.f32 %v904, 0.0
      %v946 = vmax.f32 %v905, 0.0
      %v947 = vmax.f32 %v906, 0.0
      %v948 = vmax.f32 %v907, 0.0
      %v949 = vmax.f32 %v908, 0.0
      %v950 = vmax.f32 %v909, 0.0
      %v951 = vmax.f32 %v910, 0.0
      %v952 = vmax.f32 %v911, 0.0
      %vm953 = vcmask 64512
      %954 = vst.msk [vmem:[%s271] sm:$0xff] %vm953, %v912
      %955 = vst.msk [vmem:[%s271 + $0x8] sm:$0xff] %vm953, %v913
      %956 = vst.msk [vmem:[%s271 + $0x10] sm:$0xff] %vm953, %v914
      %957 = vst.msk [vmem:[%s271 + $0x18] sm:$0xff] %vm953, %v915
      %958 = vst.msk [vmem:[%s271 + $0x20] sm:$0xff] %vm953, %v916
      %959 = vst.msk [vmem:[%s271 + $0x28] sm:$0xff] %vm953, %v917
      %960 = vst.msk [vmem:[%s271 + $0x30] sm:$0xff] %vm953, %v918
      %961 = vst.msk [vmem:[%s271 + $0x38] sm:$0xff] %vm953, %v919
      %962 = vst.msk [vmem:[%s271 + $0x40] sm:$0xff] %vm953, %v920
      %963 = vst.msk [vmem:[%s271 + $0x48] sm:$0xff] %vm953, %v921
      %964 = vst.msk [vmem:[%s271 + $0x50] sm:$0xff] %vm953, %v922
      %965 = vst.msk [vmem:[%s271 + $0x58] sm:$0xff] %vm953, %v923
      %966 = vst.msk [vmem:[%s271 + $0x60] sm:$0xff] %vm953, %v924
      %967 = vst.msk [vmem:[%s271 + $0x68] sm:$0xff] %vm953, %v925
      %968 = vst.msk [vmem:[%s271 + $0x70] sm:$0xff] %vm953, %v926
      %969 = vst.msk [vmem:[%s271 + $0x78] sm:$0xff] %vm953, %v927
      %970 = vst.msk [vmem:[%s271 + $0x80] sm:$0xff] %vm953, %v928
      %971 = vst.msk [vmem:[%s271 + $0x88] sm:$0xff] %vm953, %v929
      %972 = vst.msk [vmem:[%s271 + $0x90] sm:$0xff] %vm953, %v930
      %973 = vst.msk [vmem:[%s271 + $0x98] sm:$0xff] %vm953, %v931
      %974 = vst.msk [vmem:[%s271 + $0xa0] sm:$0xff] %vm953, %v932
      %975 = vst.msk [vmem:[%s271 + $0xa8] sm:$0xff] %vm953, %v933
      %976 = vst.msk [vmem:[%s271 + $0xb0] sm:$0xff] %vm953, %v934
      %977 = vst.msk [vmem:[%s271 + $0xb8] sm:$0xff] %vm953, %v935
      %978 = vst.msk [vmem:[%s271 + $0xc0] sm:$0xff] %vm953, %v936
      %979 = vst.msk [vmem:[%s271 + $0xc8] sm:$0xff] %vm953, %v937
      %980 = vst.msk [vmem:[%s271 + $0xd0] sm:$0xff] %vm953, %v938
      %981 = vst.msk [vmem:[%s271 + $0xd8] sm:$0xff] %vm953, %v939
      %982 = vst.msk [vmem:[%s271 + $0xe0] sm:$0xff] %vm953, %v940
      %983 = vst.msk [vmem:[%s271 + $0xe8] sm:$0xff] %vm953, %v941
      %984 = vst.msk [vmem:[%s271 + $0xf0] sm:$0xff] %vm953, %v942
      %985 = vst.msk [vmem:[%s271 + $0xf8] sm:$0xff] %vm953, %v943
      %986 = vst.msk [vmem:[%s271 + $0x100] sm:$0xff] %vm953, %v944
      %987 = vst.msk [vmem:[%s271 + $0x108] sm:$0xff] %vm953, %v945
      %988 = vst.msk [vmem:[%s271 + $0x110] sm:$0xff] %vm953, %v946
      %989 = vst.msk [vmem:[%s271 + $0x118] sm:$0xff] %vm953, %v947
      %990 = vst.msk [vmem:[%s271 + $0x120] sm:$0xff] %vm953, %v948
      %991 = vst.msk [vmem:[%s271 + $0x128] sm:$0xff] %vm953, %v949
      %992 = vst.msk [vmem:[%s271 + $0x130] sm:$0xff] %vm953, %v950
      %993 = vst.msk [vmem:[%s271 + $0x138] sm:$0xff] %vm953, %v951
      %vm994 = vcmask 60416
      %995 = vst.msk [vmem:[%s271 + $0x140] sm:$0xf] %vm994, %v952
      %p996 = scmp.lt.s32.totalorder %s17, 1
      %s997 = scalar_select %p996, %s17, 1
      %s998 = smul.addr %s997, 41
      %s999 = smul.addr %s998, 8
      %s1000 = scalar_lea.vmem %s6, %s999
      // Predicated region
      $region45: #{residual_block_forward.5} parent=43 // pred_check
        %p1001 = pneg %p171
      $region46: #{residual_block_forward.5} parent=43 // pred_check_branch
        %1003 = sbr.rel (%p1001) target = $region48
      $region47: #{residual_block_forward.5} parent=43 // pred_region
        _
      $region48: #{residual_block_forward.5} parent=43 // pred_fallthru
        _
    $region44: #{residual_block_forward.5} parent=5 // pred_fallthru
      _
    %p1004 = scmp.le.s32.totalorder 2, %s12
    // Predicated region
    $region49: #{residual_block_forward.5} parent=5 // pred_check
      %p1005 = pneg %p1004
    $region50: #{residual_block_forward.5} parent=5 // pred_check_branch
      %1007 = sbr.rel (%p1005) target = $region52
    $region51: #{residual_block_forward.5} parent=5 // pred_region
      %s1008 = ssub.s32 %s12, 2
      // Predicated region
      $region53: #{residual_block_forward.5} parent=51 // pred_check
        %p1009 = pneg %p177
      $region54: #{residual_block_forward.5} parent=51 // pred_check_branch
        %1011 = sbr.rel (%p1009) target = $region56
      $region55: #{residual_block_forward.5} parent=51 // pred_region
        %p1012 = scmp.lt.s32.totalorder %s18, 1
        %s1013 = scalar_select %p1012, %s18, 1
        %s1014 = smul.addr %s1013, 41
        %s1015 = smul.addr %s1014, 8
        %s1016 = scalar_lea.vmem %s6, %s1015
      $region56: #{residual_block_forward.5} parent=51 // pred_fallthru
        _
    $region52: #{residual_block_forward.5} parent=5 // pred_fallthru
      _
  $region6: #{residual_block_forward.5} parent=0 // loop_footer
    %s16 = sadd.s32 1, %s12
  $region7: #{residual_block_forward.5} parent=0 // loop_footer_branch
    %11 = sbr.rel target = $region3
  $region8: #{residual_block_forward.5} parent=0 // loop_exit
    _

// kernel: residual_block_forward.3
$region0: #{residual_block_forward.3}
  #allocation0 [shape = 'u32[]', space=smem, size = 0x4, offset = 0x4, fixed_abs, tag = 'smem constant byte address 0x4 - core index']
  #allocation1 [shape = 'u32[144,128]{1,0:T(1,128)}', space=vmem, size = 0x12000, scoped, tag = 'internal scratch']
  #allocation2 [shape = 'bf16[324,36]{1,0:T(8,128)(2,1)}', space=vmem, size = 0x14800, scoped, tag = 'scratch operand']
  %s0 = inlined_call_operand.vmem [shape: bf16[2,324,4], index: 0, kind: input, shape index: {}]
  %s1 = inlined_call_operand.vmem [shape: bf16[36,8], index: 1, kind: input, shape index: {}]
  %s2 = inlined_call_operand.vmem [shape: f32[324,1], index: 2, kind: input, shape index: {}]
  %s3 = inlined_call_operand.vmem [shape: bf16[2,324,8], index: 3, kind: output, shape index: {0}]
  %s4 = inlined_call_operand.vmem [shape: f32[2,2,8], index: 4, kind: output, shape index: {1}]
  %5 = xla_tuple %s3, %s4
  %s6 = sld [smem:[#allocation0]]
  $region53: #{residual_block_forward.3} parent=0
    _
  %s8 = ssub.s32 1, %s6
  %s9 = scalar_select 0, %s8, %s6
  loop: start=0, step=1, limit=4
  $region2: #{residual_block_forward.3} parent=0 // loop_pre_header
    _
  $region3: #{residual_block_forward.3} parent=0 // loop_header
    %s11 = sphi 0, %s15
    %p12 = scmp.ge.s32.totalorder %s11, 4
    %s21 = sphi 0, %s23
    %s24 = sphi 0, %s21
    %s25 = sphi 0, %s24
    %s41 = sphi 0, %s25
    %s45 = sphi 0, %s45
    %s47 = sphi 0, %s45
    %s48 = sphi 0, %s47
    %s62 = sphi 0, %s48
    %s66 = sphi 0, %s66
    %s68 = sphi 0, %s66
    %s69 = sphi 0, %s68
    %s83 = sphi 0, %s69
    %s89 = sphi 0, %s91
    %s92 = sphi 0, %s89
    %s93 = sphi 0, %s92
    %s109 = sphi 0, %s93
    %s115 = sphi 0, %s117
    %s118 = sphi 0, %s115
    %s119 = sphi 0, %s118
    %s135 = sphi 0, %s119
  $region4: #{residual_block_forward.3} parent=0 // loop_header_branch
    %14 = sbr.rel (%p12) target = $region8
  $region5: #{residual_block_forward.3} parent=0 // loop_body
    %s16 = ssub.s32 %s11, 1
    %s17 = ssub.s32 %s11, 2
    %s18 = sadd.s32 %s11, 1
    %s19 = ssub.s32 %s11, %s18
    %p20 = scmp.eq.s32.totalorder %s19, 0
    %s22 = sadd.s32 %s21, 1
    %s23 = scalar_select %p20, %s21, %s22
    %p26 = pneg %p20
    %p27 = scmp.eq.s32.totalorder %s11, 1
    %p28 = por %p26, %p27
    %p29 = scmp.ne.s32.totalorder %s21, %s24
    %p30 = scmp.eq.s32.totalorder %s11, 0
    %p31 = por %p29, %p30
    %p32 = scmp.ne.s32.totalorder %s21, %s24
    %p33 = scmp.eq.s32.totalorder %s16, 1
    %p34 = por %p32, %p33
    %p35 = scmp.ne.s32.totalorder %s24, %s25
    %p36 = scmp.eq.s32.totalorder %s16, 0
    %p37 = por %p35, %p36
    %p38 = scmp.ne.s32.totalorder %s24, %s25
    %p39 = scmp.eq.s32.totalorder %s17, 1
    %p40 = por %p38, %p39
    %p42 = scmp.ne.s32.totalorder %s25, %s41
    %p43 = scmp.eq.s32.totalorder %s17, 0
    %p44 = por %p42, %p43
    %s46 = sadd.s32 %s45, 1
    %p49 = scmp.eq.s32.totalorder %s11, 1
    %p50 = scmp.ne.s32.totalorder %s45, %s47
    %p51 = scmp.eq.s32.totalorder %s11, 0
    %p52 = por %p50, %p51
    %p53 = scmp.ne.s32.totalorder %s45, %s47
    %p54 = scmp.eq.s32.totalorder %s16, 1
    %p55 = por %p53, %p54
    %p56 = scmp.ne.s32.totalorder %s47, %s48
    %p57 = scmp.eq.s32.totalorder %s16, 0
    %p58 = por %p56, %p57
    %p59 = scmp.ne.s32.totalorder %s47, %s48
    %p60 = scmp.eq.s32.totalorder %s17, 1
    %p61 = por %p59, %p60
    %p63 = scmp.ne.s32.totalorder %s48, %s62
    %p64 = scmp.eq.s32.totalorder %s17, 0
    %p65 = por %p63, %p64
    %s67 = sadd.s32 %s66, 1
    %p70 = scmp.eq.s32.totalorder %s11, 1
    %p71 = scmp.ne.s32.totalorder %s66, %s68
    %p72 = scmp.eq.s32.totalorder %s11, 0
    %p73 = por %p71, %p72
    %p74 = scmp.ne.s32.totalorder %s66, %s68
    %p75 = scmp.eq.s32.totalorder %s16, 1
    %p76 = por %p74, %p75
    %p77 = scmp.ne.s32.totalorder %s68, %s69
    %p78 = scmp.eq.s32.totalorder %s16, 0
    %p79 = por %p77, %p78
    %p80 = scmp.ne.s32.totalorder %s68, %s69
    %p81 = scmp.eq.s32.totalorder %s17, 1
    %p82 = por %p80, %p81
    %p84 = scmp.ne.s32.totalorder %s69, %s83
    %p85 = scmp.eq.s32.totalorder %s17, 0
    %p86 = por %p84, %p85
    %s87 = ssub.s32 %s11, %s18
    %p88 = scmp.eq.s32.totalorder %s87, 0
    %s90 = sadd.s32 %s89, 1
    %s91 = scalar_select %p88, %s89, %s90
    %p94 = pneg %p88
    %p95 = scmp.eq.s32.totalorder %s11, 1
    %p96 = por %p94, %p95
    %p97 = scmp.ne.s32.totalorder %s89, %s92
    %p98 = scmp.eq.s32.totalorder %s11, 0
    %p99 = por %p97, %p98
    %p100 = scmp.ne.s32.totalorder %s89, %s92
    %p101 = scmp.eq.s32.totalorder %s16, 1
    %p102 = por %p100, %p101
    %p103 = scmp.ne.s32.totalorder %s92, %s93
    %p104 = scmp.eq.s32.totalorder %s16, 0
    %p105 = por %p103, %p104
    %p106 = scmp.ne.s32.totalorder %s92, %s93
    %p107 = scmp.eq.s32.totalorder %s17, 1
    %p108 = por %p106, %p107
    %p110 = scmp.ne.s32.totalorder %s93, %s109
    %p111 = scmp.eq.s32.totalorder %s17, 0
    %p112 = por %p110, %p111
    %s113 = ssub.s32 %s11, %s18
    %p114 = scmp.eq.s32.totalorder %s113, 0
    %s116 = sadd.s32 %s115, 1
    %s117 = scalar_select %p114, %s115, %s116
    %p120 = pneg %p114
    %p121 = scmp.eq.s32.totalorder %s11, 1
    %p122 = por %p120, %p121
    %p123 = scmp.ne.s32.totalorder %s115, %s118
    %p124 = scmp.eq.s32.totalorder %s11, 0
    %p125 = por %p123, %p124
    %p126 = scmp.ne.s32.totalorder %s115, %s118
    %p127 = scmp.eq.s32.totalorder %s16, 1
    %p128 = por %p126, %p127
    %p129 = scmp.ne.s32.totalorder %s118, %s119
    %p130 = scmp.eq.s32.totalorder %s16, 0
    %p131 = por %p129, %p130
    %p132 = scmp.ne.s32.totalorder %s118, %s119
    %p133 = scmp.eq.s32.totalorder %s17, 1
    %p134 = por %p132, %p133
    %p136 = scmp.ne.s32.totalorder %s119, %s135
    %p137 = scmp.eq.s32.totalorder %s17, 0
    %p138 = por %p136, %p137
    %p139 = scmp.le.s32.totalorder 1, %s11
    %p140 = scmp.lt.s32.totalorder %s11, 3
    %p141 = pnand %p139, %p140
    %p142 = pneg %p141
    // Predicated region
    $region9: #{residual_block_forward.3} parent=5 // pred_check
      _
    $region10: #{residual_block_forward.3} parent=5 // pred_check_branch
      %144 = sbr.rel (%p141) target = $region12
    $region11: #{residual_block_forward.3} parent=5 // pred_region
      %s145 = ssub.s32 %s11, 1
      // Predicated region
      $region13: #{residual_block_forward.3} parent=11 // pred_check
        %p146 = pneg %p58
      $region14: #{residual_block_forward.3} parent=11 // pred_check_branch
        %148 = sbr.rel (%p146) target = $region16
      $region15: #{residual_block_forward.3} parent=11 // pred_region
        _
      $region16: #{residual_block_forward.3} parent=11 // pred_fallthru
        _
      // Predicated region
      $region17: #{residual_block_forward.3} parent=11 // pred_check
        %p149 = pneg %p79
      $region18: #{residual_block_forward.3} parent=11 // pred_check_branch
        %151 = sbr.rel (%p149) target = $region20
      $region19: #{residual_block_forward.3} parent=11 // pred_region
        _
      $region20: #{residual_block_forward.3} parent=11 // pred_fallthru
        _
    $region12: #{residual_block_forward.3} parent=5 // pred_fallthru
      _
    %p152 = scmp.lt.s32.totalorder %s11, 2
    // Predicated region
    $region21: #{residual_block_forward.3} parent=5 // pred_check
      %p153 = pneg %p152
    $region22: #{residual_block_forward.3} parent=5 // pred_check_branch
      %155 = sbr.rel (%p153) target = $region24
    $region23: #{residual_block_forward.3} parent=5 // pred_region
      // Predicated region
      $region25: #{residual_block_forward.3} parent=23 // pred_check
        %p156 = pneg %p31
      $region26: #{residual_block_forward.3} parent=23 // pred_check_branch
        %158 = sbr.rel (%p156) target = $region28
      $region27: #{residual_block_forward.3} parent=23 // pred_region
        %p159 = scmp.lt.s32.totalorder %s11, 1
        %s160 = scalar_select %p159, %s11, 1
        %s161 = smul.addr %s160, 41
        %s162 = smul.addr %s161, 4
        %s163 = scalar_lea.vmem %s0, %s162
      $region28: #{residual_block_forward.3} parent=23 // pred_fallthru
        _
    $region24: #{residual_block_forward.3} parent=5 // pred_fallthru
      _
    %p164 = scmp.le.s32.totalorder 1, %s11
    %p165 = scmp.lt.s32.totalorder %s11, 3
    %p166 = pnand %p164, %p165
    %p167 = pneg %p166
    // Predicated region
    $region29: #{residual_block_forward.3} parent=5 // pred_check
      _
    $region30: #{residual_block_forward.3} parent=5 // pred_check_branch
      %169 = sbr.rel (%p166) target = $region32
    $region31: #{residual_block_forward.3} parent=5 // pred_region
      %s170 = ssub.s32 %s11, 1
      %p171 = scmp.lt.s32.totalorder %s16, 1
      %s172 = scalar_select %p171, %s16, 1
      %s173 = smul.addr %s172, 41
      %s174 = smul.addr %s173, 4
      %s175 = scalar_lea.vmem %s0, %s174
      %p176 = pneg %p37
      %p177 = pneg %p34
      %p178 = pneg %p58
      %p179 = pneg %p55
      %p180 = pneg %p79
      %p181 = pneg %p76
      %p182 = pneg %p105
      %p183 = pneg %p102
      %p184 = scmp.lt.s32.totalorder %s16, 1
      %s185 = scalar_select %p184, %s16, 1
      %s186 = smul.addr %s185, 41
      %s187 = smul.addr %s186, 4
      %s188 = scalar_lea.vmem %s3, %s187
      %p189 = pneg %p131
      %p190 = pneg %p128
      %p191 = scmp.lt.s32.totalorder %s16, 1
      %s192 = scalar_select %p191, %s16, 1
      %s193 = smul.addr %s192, 2
      %s194 = scalar_lea.vmem %s4, %s193
      %p195 = scmp.lt.s32.totalorder %s16, 1
      %s196 = scalar_select %p195, %s16, 1
      %s197 = smul.addr %s196, 41
      %s198 = smul.addr %s197, 4
      %s199 = scalar_lea.vmem %s0, %s198
      %p200 = scmp.lt.s32.totalorder %s16, 1
      %s201 = scalar_select %p200, %s16, 1
      %s202 = smul.addr %s201, 41
      %s203 = smul.addr %s202, 4
      %s204 = scalar_lea.vmem %s3, %s203
      %p205 = scmp.lt.s32.totalorder %s16, 1
      %s206 = scalar_select %p205, %s16, 1
      %s207 = smul.addr %s206, 2
      %s208 = scalar_lea.vmem %s4, %s207
      %v210 = vld [vmem:[%s199] sm:$0xf]
      %v211 = vld [vmem:[%s199 + $0x4] sm:$0xf]
      %v212 = vld [vmem:[%s199 + $0x8] sm:$0xf]
      %v213 = vld [vmem:[%s199 + $0xc] sm:$0xf]
      %v214 = vld [vmem:[%s199 + $0x10] sm:$0xf]
      %v215 = vld [vmem:[%s199 + $0x14] sm:$0xf]
      %v216 = vld [vmem:[%s199 + $0x18] sm:$0xf]
      %v217 = vld [vmem:[%s199 + $0x1c] sm:$0xf]
      %v218 = vld [vmem:[%s199 + $0x20] sm:$0xf]
      %v219 = vld [vmem:[%s199 + $0x24] sm:$0xf]
      %v220 = vld [vmem:[%s199 + $0x28] sm:$0xf]
      %v221 = vld [vmem:[%s199 + $0x2c] sm:$0xf]
      %v222 = vld [vmem:[%s199 + $0x30] sm:$0xf]
      %v223 = vld [vmem:[%s199 + $0x34] sm:$0xf]
      %v224 = vld [vmem:[%s199 + $0x38] sm:$0xf]
      %v225 = vld [vmem:[%s199 + $0x3c] sm:$0xf]
      %v226 = vld [vmem:[%s199 + $0x40] sm:$0xf]
      %v227 = vld [vmem:[%s199 + $0x44] sm:$0xf]
      %v228 = vld [vmem:[%s199 + $0x48] sm:$0xf]
      %v229 = vld [vmem:[%s199 + $0x4c] sm:$0xf]
      %v230 = vld [vmem:[%s199 + $0x50] sm:$0xf]
      %v231 = vld [vmem:[%s199 + $0x54] sm:$0xf]
      %v232 = vld [vmem:[%s199 + $0x58] sm:$0xf]
      %v233 = vld [vmem:[%s199 + $0x5c] sm:$0xf]
      %v234 = vld [vmem:[%s199 + $0x60] sm:$0xf]
      %v235 = vld [vmem:[%s199 + $0x64] sm:$0xf]
      %v236 = vld [vmem:[%s199 + $0x68] sm:$0xf]
      %v237 = vld [vmem:[%s199 + $0x6c] sm:$0xf]
      %v238 = vld [vmem:[%s199 + $0x70] sm:$0xf]
      %v239 = vld [vmem:[%s199 + $0x74] sm:$0xf]
      %v240 = vld [vmem:[%s199 + $0x78] sm:$0xf]
      %v241 = vld [vmem:[%s199 + $0x7c] sm:$0xf]
      %v242 = vld [vmem:[%s199 + $0x80] sm:$0xf]
      %v243 = vld [vmem:[%s199 + $0x84] sm:$0xf]
      %v244 = vld [vmem:[%s199 + $0x88] sm:$0xf]
      %v245 = vld [vmem:[%s199 + $0x8c] sm:$0xf]
      %v246 = vld [vmem:[%s199 + $0x90] sm:$0xf]
      %v247 = vld [vmem:[%s199 + $0x94] sm:$0xf]
      %v248 = vld [vmem:[%s199 + $0x98] sm:$0xf]
      %v249 = vld [vmem:[%s199 + $0x9c] sm:$0xf]
      %v250 = vld [vmem:[%s199 + $0xa0] sm:$0x3]
      %vm251 = vcmask 289792
      %252 = vst.msk [vmem:[#allocation2] sm:$0xf] %vm251, 0
      %253 = vst.msk [vmem:[#allocation2 + $0x4] sm:$0xf] %vm251, 0
      %254 = vst.msk [vmem:[#allocation2 + $0x8] sm:$0xf] %vm251, 0
      %255 = vst.msk [vmem:[#allocation2 + $0xc] sm:$0xf] %vm251, 0
      %256 = vst.msk [vmem:[#allocation2 + $0x10] sm:$0xf] %vm251, 0
      %257 = vst.msk [vmem:[#allocation2 + $0x14] sm:$0xf] %vm251, 0
      %258 = vst.msk [vmem:[#allocation2 + $0x18] sm:$0xf] %vm251, 0
      %259 = vst.msk [vmem:[#allocation2 + $0x1c] sm:$0xf] %vm251, 0
      %260 = vst.msk [vmem:[#allocation2 + $0x20] sm:$0xf] %vm251, 0
      %261 = vst.msk [vmem:[#allocation2 + $0x24] sm:$0xf] %vm251, 0
      %262 = vst.msk [vmem:[#allocation2 + $0x28] sm:$0xf] %vm251, 0
      %263 = vst.msk [vmem:[#allocation2 + $0x2c] sm:$0xf] %vm251, 0
      %264 = vst.msk [vmem:[#allocation2 + $0x30] sm:$0xf] %vm251, 0
      %265 = vst.msk [vmem:[#allocation2 + $0x34] sm:$0xf] %vm251, 0
      %266 = vst.msk [vmem:[#allocation2 + $0x38] sm:$0xf] %vm251, 0
      %267 = vst.msk [vmem:[#allocation2 + $0x3c] sm:$0xf] %vm251, 0
      %268 = vst.msk [vmem:[#allocation2 + $0x40] sm:$0xf] %vm251, 0
      %269 = vst.msk [vmem:[#allocation2 + $0x44] sm:$0xf] %vm251, 0
      %270 = vst.msk [vmem:[#allocation2 + $0x48] sm:$0xf] %vm251, 0
      %271 = vst.msk [vmem:[#allocation2 + $0x4c] sm:$0xf] %vm251, 0
      %272 = vst.msk [vmem:[#allocation2 + $0x50] sm:$0xf] %vm251, 0
      %273 = vst.msk [vmem:[#allocation2 + $0x54] sm:$0xf] %vm251, 0
      %274 = vst.msk [vmem:[#allocation2 + $0x58] sm:$0xf] %vm251, 0
      %275 = vst.msk [vmem:[#allocation2 + $0x5c] sm:$0xf] %vm251, 0
      %276 = vst.msk [vmem:[#allocation2 + $0x60] sm:$0xf] %vm251, 0
      %277 = vst.msk [vmem:[#allocation2 + $0x64] sm:$0xf] %vm251, 0
      %278 = vst.msk [vmem:[#allocation2 + $0x68] sm:$0xf] %vm251, 0
      %279 = vst.msk [vmem:[#allocation2 + $0x6c] sm:$0xf] %vm251, 0
      %280 = vst.msk [vmem:[#allocation2 + $0x70] sm:$0xf] %vm251, 0
      %281 = vst.msk [vmem:[#allocation2 + $0x74] sm:$0xf] %vm251, 0
      %282 = vst.msk [vmem:[#allocation2 + $0x78] sm:$0xf] %vm251, 0
      %283 = vst.msk [vmem:[#allocation2 + $0x7c] sm:$0xf] %vm251, 0
      %284 = vst.msk [vmem:[#allocation2 + $0x80] sm:$0xf] %vm251, 0
      %285 = vst.msk [vmem:[#allocation2 + $0x84] sm:$0xf] %vm251, 0
      %286 = vst.msk [vmem:[#allocation2 + $0x88] sm:$0xf] %vm251, 0
      %287 = vst.msk [vmem:[#allocation2 + $0x8c] sm:$0xf] %vm251, 0
      %288 = vst.msk [vmem:[#allocation2 + $0x90] sm:$0xf] %vm251, 0
      %289 = vst.msk [vmem:[#allocation2 + $0x94] sm:$0xf] %vm251, 0
      %290 = vst.msk [vmem:[#allocation2 + $0x98] sm:$0xf] %vm251, 0
      %291 = vst.msk [vmem:[#allocation2 + $0x9c] sm:$0xf] %vm251, 0
      %vm292 = vcmask 287744
      %293 = vst.msk [vmem:[#allocation2 + $0xa0] sm:$0x3] %vm292, 0
      %vm294 = vsmask.f32 1280
      %vm295 = vsmask.f32 5392
      %vm296 = vmor %vm294, %vm295
      %v298 = vshrl.u32 %v210, 16
      %v300 = vrot.slane %v298, 6
      %v301 = vshll.u32 %v210, 16
      %v303 = vrot.slane %v301, 7
      %v304 = vor.u32 %v300, %v303
      %v305 = vrot.slane %v304, 4
      %v307 = vshrl.u32 %v211, 16
      %v309 = vrot.slane %v307, 6
      %v310 = vshll.u32 %v211, 16
      %v312 = vrot.slane %v310, 7
      %v313 = vor.u32 %v309, %v312
      %v314 = vsel %vm296, %v305, %v313
      %v315 = vrot.slane %v313, 4
      %v317 = vshrl.u32 %v212, 16
      %v319 = vrot.slane %v317, 6
      %v320 = vshll.u32 %v212, 16
      %v322 = vrot.slane %v320, 7
      %v323 = vor.u32 %v319, %v322
      %v324 = vsel %vm296, %v315, %v323
      %v325 = vrot.slane %v323, 4
      %v327 = vshrl.u32 %v213, 16
      %v329 = vrot.slane %v327, 6
      %v330 = vshll.u32 %v213, 16
      %v332 = vrot.slane %v330, 7
      %v333 = vor.u32 %v329, %v332
      %v334 = vsel %vm296, %v325, %v333
      %v335 = vrot.slane %v333, 4
      %v337 = vshrl.u32 %v214, 16
      %v339 = vrot.slane %v337, 6
      %v340 = vshll.u32 %v214, 16
      %v342 = vrot.slane %v340, 7
      %v343 = vor.u32 %v339, %v342
      %v344 = vsel %vm296, %v335, %v343
      %v345 = vrot.slane %v343, 4
      %v347 = vshrl.u32 %v215, 16
      %v349 = vrot.slane %v347, 6
      %v350 = vshll.u32 %v215, 16
      %v352 = vrot.slane %v350, 7
      %v353 = vor.u32 %v349, %v352
      %v354 = vsel %vm296, %v345, %v353
      %v355 = vrot.slane %v353, 4
      %v357 = vshrl.u32 %v216, 16
      %v359 = vrot.slane %v357, 6
      %v360 = vshll.u32 %v216, 16
      %v362 = vrot.slane %v360, 7
      %v363 = vor.u32 %v359, %v362
      %v364 = vsel %vm296, %v355, %v363
      %v365 = vrot.slane %v363, 4
      %v367 = vshrl.u32 %v217, 16
      %v369 = vrot.slane %v367, 6
      %v370 = vshll.u32 %v217, 16
      %v372 = vrot.slane %v370, 7
      %v373 = vor.u32 %v369, %v372
      %v374 = vsel %vm296, %v365, %v373
      %v375 = vrot.slane %v373, 4
      %v377 = vshrl.u32 %v218, 16
      %v379 = vrot.slane %v377, 6
      %v380 = vshll.u32 %v218, 16
      %v382 = vrot.slane %v380, 7
      %v383 = vor.u32 %v379, %v382
      %v384 = vsel %vm296, %v375, %v383
      %v385 = vrot.slane %v383, 4
      %v387 = vshrl.u32 %v219, 16
      %v389 = vrot.slane %v387, 6
      %v390 = vshll.u32 %v219, 16
      %v392 = vrot.slane %v390, 7
      %v393 = vor.u32 %v389, %v392
      %v394 = vsel %vm296, %v385, %v393
      %v395 = vrot.slane %v393, 4
      %v397 = vshrl.u32 %v220, 16
      %v399 = vrot.slane %v397, 6
      %v400 = vshll.u32 %v220, 16
      %v402 = vrot.slane %v400, 7
      %v403 = vor.u32 %v399, %v402
      %v404 = vsel %vm296, %v395, %v403
      %v405 = vrot.slane %v403, 4
      %v407 = vshrl.u32 %v221, 16
      %v409 = vrot.slane %v407, 6
      %v410 = vshll.u32 %v221, 16
      %v412 = vrot.slane %v410, 7
      %v413 = vor.u32 %v409, %v412
      %v414 = vsel %vm296, %v405, %v413
      %v415 = vrot.slane %v413, 4
      %v417 = vshrl.u32 %v222, 16
      %v419 = vrot.slane %v417, 6
      %v420 = vshll.u32 %v222, 16
      %v422 = vrot.slane %v420, 7
      %v423 = vor.u32 %v419, %v422
      %v424 = vsel %vm296, %v415, %v423
      %v425 = vrot.slane %v423, 4
      %v427 = vshrl.u32 %v223, 16
      %v429 = vrot.slane %v427, 6
      %v430 = vshll.u32 %v223, 16
      %v432 = vrot.slane %v430, 7
      %v433 = vor.u32 %v429, %v432
      %v434 = vsel %vm296, %v425, %v433
      %v435 = vrot.slane %v433, 4
      %v437 = vshrl.u32 %v224, 16
      %v439 = vrot.slane %v437, 6
      %v440 = vshll.u32 %v224, 16
      %v442 = vrot.slane %v440, 7
      %v443 = vor.u32 %v439, %v442
      %v444 = vsel %vm296, %v435, %v443
      %v445 = vrot.slane %v443, 4
      %v447 = vshrl.u32 %v225, 16
      %v449 = vrot.slane %v447, 6
      %v450 = vshll.u32 %v225, 16
      %v452 = vrot.slane %v450, 7
      %v453 = vor.u32 %v449, %v452
      %v454 = vsel %vm296, %v445, %v453
      %v455 = vrot.slane %v453, 4
      %v457 = vshrl.u32 %v226, 16
      %v459 = vrot.slane %v457, 6
      %v460 = vshll.u32 %v226, 16
      %v462 = vrot.slane %v460, 7
      %v463 = vor.u32 %v459, %v462
      %v464 = vsel %vm296, %v455, %v463
      %v465 = vrot.slane %v463, 4
      %v467 = vshrl.u32 %v227, 16
      %v469 = vrot.slane %v467, 6
      %v470 = vshll.u32 %v227, 16
      %v472 = vrot.slane %v470, 7
      %v473 = vor.u32 %v469, %v472
      %v474 = vsel %vm296, %v465, %v473
      %v475 = vrot.slane %v473, 4
      %v477 = vshrl.u32 %v228, 16
      %v479 = vrot.slane %v477, 6
      %v480 = vshll.u32 %v228, 16
      %v482 = vrot.slane %v480, 7
      %v483 = vor.u32 %v479, %v482
      %v484 = vsel %vm296, %v475, %v483
      %v485 = vrot.slane %v483, 4
      %v487 = vshrl.u32 %v229, 16
      %v489 = vrot.slane %v487, 6
      %v490 = vshll.u32 %v229, 16
      %v492 = vrot.slane %v490, 7
      %v493 = vor.u32 %v489, %v492
      %v494 = vsel %vm296, %v485, %v493
      %v495 = vrot.slane %v493, 4
      %v497 = vshrl.u32 %v230, 16
      %v499 = vrot.slane %v497, 6
      %v500 = vshll.u32 %v230, 16
      %v502 = vrot.slane %v500, 7
      %v503 = vor.u32 %v499, %v502
      %v504 = vsel %vm296, %v495, %v503
      %v505 = vrot.slane %v503, 4
      %v507 = vshrl.u32 %v231, 16
      %v509 = vrot.slane %v507, 6
      %v510 = vshll.u32 %v231, 16
      %v512 = vrot.slane %v510, 7
      %v513 = vor.u32 %v509, %v512
      %v514 = vsel %vm296, %v505, %v513
      %v515 = vrot.slane %v513, 4
      %v517 = vshrl.u32 %v232, 16
      %v519 = vrot.slane %v517, 6
      %v520 = vshll.u32 %v232, 16
      %v522 = vrot.slane %v520, 7
      %v523 = vor.u32 %v519, %v522
      %v524 = vsel %vm296, %v515, %v523
      %v525 = vrot.slane %v523, 4
      %v527 = vshrl.u32 %v233, 16
      %v529 = vrot.slane %v527, 6
      %v530 = vshll.u32 %v233, 16
      %v532 = vrot.slane %v530, 7
      %v533 = vor.u32 %v529, %v532
      %v534 = vsel %vm296, %v525, %v533
      %v535 = vrot.slane %v533, 4
      %v537 = vshrl.u32 %v234, 16
      %v539 = vrot.slane %v537, 6
      %v540 = vshll.u32 %v234, 16
      %v542 = vrot.slane %v540, 7
      %v543 = vor.u32 %v539, %v542
      %v544 = vsel %vm296, %v535, %v543
      %v545 = vrot.slane %v543, 4
      %v547 = vshrl.u32 %v235, 16
      %v549 = vrot.slane %v547, 6
      %v550 = vshll.u32 %v235, 16
      %v552 = vrot.slane %v550, 7
      %v553 = vor.u32 %v549, %v552
      %v554 = vsel %vm296, %v545, %v553
      %v555 = vrot.slane %v553, 4
      %v557 = vshrl.u32 %v236, 16
      %v559 = vrot.slane %v557, 6
      %v560 = vshll.u32 %v236, 16
      %v562 = vrot.slane %v560, 7
      %v563 = vor.u32 %v559, %v562
      %v564 = vsel %vm296, %v555, %v563
      %v565 = vrot.slane %v563, 4
      %v567 = vshrl.u32 %v237, 16
      %v569 = vrot.slane %v567, 6
      %v570 = vshll.u32 %v237, 16
      %v572 = vrot.slane %v570, 7
      %v573 = vor.u32 %v569, %v572
      %v574 = vsel %vm296, %v565, %v573
      %v575 = vrot.slane %v573, 4
      %v577 = vshrl.u32 %v238, 16
      %v579 = vrot.slane %v577, 6
      %v580 = vshll.u32 %v238, 16
      %v582 = vrot.slane %v580, 7
      %v583 = vor.u32 %v579, %v582
      %v584 = vsel %vm296, %v575, %v583
      %v585 = vrot.slane %v583, 4
      %v587 = vshrl.u32 %v239, 16
      %v589 = vrot.slane %v587, 6
      %v590 = vshll.u32 %v239, 16
      %v592 = vrot.slane %v590, 7
      %v593 = vor.u32 %v589, %v592
      %v594 = vsel %vm296, %v585, %v593
      %v595 = vrot.slane %v593, 4
      %v597 = vshrl.u32 %v240, 16
      %v599 = vrot.slane %v597, 6
      %v600 = vshll.u32 %v240, 16
      %v602 = vrot.slane %v600, 7
      %v603 = vor.u32 %v599, %v602
      %v604 = vsel %vm296, %v595, %v603
      %v605 = vrot.slane %v603, 4
      %v607 = vshrl.u32 %v241, 16
      %v609 = vrot.slane %v607, 6
      %v610 = vshll.u32 %v241, 16
      %v612 = vrot.slane %v610, 7
      %v613 = vor.u32 %v609, %v612
      %v614 = vsel %vm296, %v605, %v613
      %v615 = vrot.slane %v613, 4
      %v617 = vshrl.u32 %v242, 16
      %v619 = vrot.slane %v617, 6
      %v620 = vshll.u32 %v242, 16
      %v622 = vrot.slane %v620, 7
      %v623 = vor.u32 %v619, %v622
      %v624 = vsel %vm296, %v615, %v623
      %v625 = vrot.slane %v623, 4
      %v627 = vshrl.u32 %v243, 16
      %v629 = vrot.slane %v627, 6
      %v630 = vshll.u32 %v243, 16
      %v632 = vrot.slane %v630, 7
      %v633 = vor.u32 %v629, %v632
      %v634 = vsel %vm296, %v625, %v633
      %v635 = vrot.slane %v633, 4
      %v637 = vshrl.u32 %v244, 16
      %v639 = vrot.slane %v637, 6
      %v640 = vshll.u32 %v244, 16
      %v642 = vrot.slane %v640, 7
      %v643 = vor.u32 %v639, %v642
      %v644 = vsel %vm296, %v635, %v643
      %v645 = vrot.slane %v643, 4
      %v647 = vshrl.u32 %v245, 16
      %v649 = vrot.slane %v647, 6
      %v650 = vshll.u32 %v245, 16
      %v652 = vrot.slane %v650, 7
      %v653 = vor.u32 %v649, %v652
      %v654 = vsel %vm296, %v645, %v653
      %v655 = vrot.slane %v653, 4
      %v657 = vshrl.u32 %v246, 16
      %v659 = vrot.slane %v657, 6
      %v660 = vshll.u32 %v246, 16
      %v662 = vrot.slane %v660, 7
      %v663 = vor.u32 %v659, %v662
      %v664 = vsel %vm296, %v655, %v663
      %v665 = vrot.slane %v663, 4
      %v667 = vshrl.u32 %v247, 16
      %v669 = vrot.slane %v667, 6
      %v670 = vshll.u32 %v247, 16
      %v672 = vrot.slane %v670, 7
      %v673 = vor.u32 %v669, %v672
      %v674 = vsel %vm296, %v665, %v673
      %v675 = vrot.slane %v673, 4
      %v677 = vshll.u32 %v248, 16
      %v679 = vrot.slane %v677, 7
      %v680 = vsel %vm296, %v675, %v679
      %vm720 = vcmask 27649
      %vm721 = vsmask.f32 7942
      %vm722 = vmand %vm720, %vm721
      %v723 = vld [vmem:[#allocation2 + $0x8] sm:$0xe]
      %v724 = vsel %vm722, %v304, %v723
      %725 = vst [vmem:[#allocation2 + $0x8] sm:$0xe] %v724
      %vm726 = vcmask 27648
      %727 = vst.msk [vmem:[#allocation2 + $0xc] sm:$0xf] %vm726, %v314
      %728 = vst.msk [vmem:[#allocation2 + $0x10] sm:$0xf] %vm726, %v324
      %729 = vst.msk [vmem:[#allocation2 + $0x14] sm:$0xf] %vm726, %v334
      %730 = vst.msk [vmem:[#allocation2 + $0x18] sm:$0xf] %vm726, %v344
      %731 = vst.msk [vmem:[#allocation2 + $0x1c] sm:$0xf] %vm726, %v354
      %732 = vst.msk [vmem:[#allocation2 + $0x20] sm:$0xf] %vm726, %v364
      %733 = vst.msk [vmem:[#allocation2 + $0x24] sm:$0xf] %vm726, %v374
      %734 = vst.msk [vmem:[#allocation2 + $0x28] sm:$0xf] %vm726, %v384
      %735 = vst.msk [vmem:[#allocation2 + $0x2c] sm:$0xf] %vm726, %v394
      %736 = vst.msk [vmem:[#allocation2 + $0x30] sm:$0xf] %vm726, %v404
      %737 = vst.msk [vmem:[#allocation2 + $0x34] sm:$0xf] %vm726, %v414
      %738 = vst.msk [vmem:[#allocation2 + $0x38] sm:$0xf] %vm726, %v424
      %739 = vst.msk [vmem:[#allocation2 + $0x3c] sm:$0xf] %vm726, %v434
      %740 = vst.msk [vmem:[#allocation2 + $0x40] sm:$0xf] %vm726, %v444
      %741 = vst.msk [vmem:[#allocation2 + $0x44] sm:$0xf] %vm726, %v454
      %742 = vst.msk [vmem:[#allocation2 + $0x48] sm:$0xf] %vm726, %v464
      %743 = vst.msk [vmem:[#allocation2 + $0x4c] sm:$0xf] %vm726, %v474
      %744 = vst.msk [vmem:[#allocation2 + $0x50] sm:$0xf] %vm726, %v484
      %745 = vst.msk [vmem:[#allocation2 + $0x54] sm:$0xf] %vm726, %v494
      %746 = vst.msk [vmem:[#allocation2 + $0x58] sm:$0xf] %vm726, %v504
      %747 = vst.msk [vmem:[#allocation2 + $0x5c] sm:$0xf] %vm726, %v514
      %748 = vst.msk [vmem:[#allocation2 + $0x60] sm:$0xf] %vm726, %v524
      %749 = vst.msk [vmem:[#allocation2 + $0x64] sm:$0xf] %vm726, %v534
      %750 = vst.msk [vmem:[#allocation2 + $0x68] sm:$0xf] %vm726, %v544
      %751 = vst.msk [vmem:[#allocation2 + $0x6c] sm:$0xf] %vm726, %v554
      %752 = vst.msk [vmem:[#allocation2 + $0x70] sm:$0xf] %vm726, %v564
      %753 = vst.msk [vmem:[#allocation2 + $0x74] sm:$0xf] %vm726, %v574
      %754 = vst.msk [vmem:[#allocation2 + $0x78] sm:$0xf] %vm726, %v584
      %755 = vst.msk [vmem:[#allocation2 + $0x7c] sm:$0xf] %vm726, %v594
      %756 = vst.msk [vmem:[#allocation2 + $0x80] sm:$0xf] %vm726, %v604
      %757 = vst.msk [vmem:[#allocation2 + $0x84] sm:$0xf] %vm726, %v614
      %758 = vst.msk [vmem:[#allocation2 + $0x88] sm:$0xf] %vm726, %v624
      %759 = vst.msk [vmem:[#allocation2 + $0x8c] sm:$0xf] %vm726, %v634
      %760 = vst.msk [vmem:[#allocation2 + $0x90] sm:$0xf] %vm726, %v644
      %761 = vst.msk [vmem:[#allocation2 + $0x94] sm:$0xf] %vm726, %v654
      %762 = vst.msk [vmem:[#allocation2 + $0x98] sm:$0xf] %vm726, %v664
      %763 = vst.msk [vmem:[#allocation2 + $0x9c] sm:$0xf] %vm726, %v674
      %vm764 = vcmask 25600
      %765 = vst.msk [vmem:[#allocation2 + $0xa0] sm:$0x3] %vm764, %v680
      %vm805 = vcmask 1040384
      %vm806 = vcmask 1044484
      %vm807 = vmor %vm805, %vm806
      %v808 = vrot.slane %v210, 7
      %v809 = vrot.slane %v808, 4
      %v810 = vrot.slane %v211, 7
      %v811 = vsel %vm807, %v809, %v810
      %v812 = vrot.slane %v810, 4
      %v813 = vrot.slane %v212, 7
      %v814 = vsel %vm807, %v812, %v813
      %v815 = vrot.slane %v813, 4
      %v816 = vrot.slane %v213, 7
      %v817 = vsel %vm807, %v815, %v816
      %v818 = vrot.slane %v816, 4
      %v819 = vrot.slane %v214, 7
      %v820 = vsel %vm807, %v818, %v819
      %v821 = vrot.slane %v819, 4
      %v822 = vrot.slane %v215, 7
      %v823 = vsel %vm807, %v821, %v822
      %v824 = vrot.slane %v822, 4
      %v825 = vrot.slane %v216, 7
      %v826 = vsel %vm807, %v824, %v825
      %v827 = vrot.slane %v825, 4
      %v828 = vrot.slane %v217, 7
      %v829 = vsel %vm807, %v827, %v828
      %v830 = vrot.slane %v828, 4
      %v831 = vrot.slane %v218, 7
      %v832 = vsel %vm807, %v830, %v831
      %v833 = vrot.slane %v831, 4
      %v834 = vrot.slane %v219, 7
      %v835 = vsel %vm807, %v833, %v834
      %v836 = vrot.slane %v834, 4
      %v837 = vrot.slane %v220, 7
      %v838 = vsel %vm807, %v836, %v837
      %v839 = vrot.slane %v837, 4
      %v840 = vrot.slane %v221, 7
      %v841 = vsel %vm807, %v839, %v840
      %v842 = vrot.slane %v840, 4
      %v843 = vrot.slane %v222, 7
      %v844 = vsel %vm807, %v842, %v843
      %v845 = vrot.slane %v843, 4
      %v846 = vrot.slane %v223, 7
      %v847 = vsel %vm807, %v845, %v846
      %v848 = vrot.slane %v846, 4
      %v849 = vrot.slane %v224, 7
      %v850 = vsel %vm807, %v848, %v849
      %v851 = vrot.slane %v849, 4
      %v852 = vrot.slane %v225, 7
      %v853 = vsel %vm807, %v851, %v852
      %v854 = vrot.slane %v852, 4
      %v855 = vrot.slane %v226, 7
      %v856 = vsel %vm807, %v854, %v855
      %v857 = vrot.slane %v855, 4
      %v858 = vrot.slane %v227, 7
      %v859 = vsel %vm807, %v857, %v858
      %v860 = vrot.slane %v858, 4
      %v861 = vrot.slane %v228, 7
      %v862 = vsel %vm807, %v860, %v861
      %v863 = vrot.slane %v861, 4
      %v864 = vrot.slane %v229, 7
      %v865 = vsel %vm807, %v863, %v864
      %v866 = vrot.slane %v864, 4
      %v867 = vrot.slane %v230, 7
      %v868 = vsel %vm807, %v866, %v867
      %v869 = vrot.slane %v867, 4
      %v870 = vrot.slane %v231, 7
      %v871 = vsel %vm807, %v869, %v870
      %v872 = vrot.slane %v870, 4
      %v873 = vrot.slane %v232, 7
      %v874 = vsel %vm807, %v872, %v873
      %v875 = vrot.slane %v873, 4
      %v876 = vrot.slane %v233, 7
      %v877 = vsel %vm807, %v875, %v876
      %v878 = vrot.slane %v876, 4
      %v879 = vrot.slane %v234, 7
      %v880 = vsel %vm807, %v878, %v879
      %v881 = vrot.slane %v879, 4
      %v882 = vrot.slane %v235, 7
      %v883 = vsel %vm807, %v881, %v882
      %v884 = vrot.slane %v882, 4
      %v885 = vrot.slane %v236, 7
      %v886 = vsel %vm807, %v884, %v885
      %v887 = vrot.slane %v885, 4
      %v888 = vrot.slane %v237, 7
      %v889 = vsel %vm807, %v887, %v888
      %v890 = vrot.slane %v888, 4
      %v891 = vrot.slane %v238, 7
      %v892 = vsel %vm807, %v890, %v891
      %v893 = vrot.slane %v891, 4
      %v894 = vrot.slane %v239, 7
      %v895 = vsel %vm807, %v893, %v894
      %v896 = vrot.slane %v894, 4
      %v897 = vrot.slane %v240, 7
      %v898 = vsel %vm807, %v896, %v897
      %v899 = vrot.slane %v897, 4
      %v900 = vrot.slane %v241, 7
      %v901 = vsel %vm807, %v899, %v900
      %v902 = vrot.slane %v900, 4
      %v903 = vrot.slane %v242, 7
      %v904 = vsel %vm807, %v902, %v903
      %v905 = vrot.slane %v903, 4
      %v906 = vrot.slane %v243, 7
      %v907 = vsel %vm807, %v905, %v906
      %v908 = vrot.slane %v906, 4
      %v909 = vrot.slane %v244, 7
      %v910 = vsel %vm807, %v908, %v909
      %v911 = vrot.slane %v909, 4
      %v912 = vrot.slane %v245, 7
      %v913 = vsel %vm807, %v911, %v912
      %v914 = vrot.slane %v912, 4
      %v915 = vrot.slane %v246, 7
      %v916 = vsel %vm807, %v914, %v915
      %v917 = vrot.slane %v915, 4
      %v918 = vrot.slane %v247, 7
      %v919 = vsel %vm807, %v917, %v918
      %v920 = vrot.slane %v918, 4
      %v921 = vrot.slane %v248, 7
      %v922 = vsel %vm807, %v920, %v921
      %923 = vrot.lane.b32.xlu0 %v808, 4
      %v924 = vpop.permute.xlu0 %923
      %925 = vrot.lane.b32.xlu0 %v811, 4
      %v926 = vpop.permute.xlu0 %925
      %927 = vrot.lane.b32.xlu0 %v814, 4
      %v928 = vpop.permute.xlu0 %927
      %929 = vrot.lane.b32.xlu0 %v817, 4
      %v930 = vpop.permute.xlu0 %929
      %931 = vrot.lane.b32.xlu0 %v820, 4
      %v932 = vpop.permute.xlu0 %931
      %933 = vrot.lane.b32.xlu0 %v823, 4
      %v934 = vpop.permute.xlu0 %933
      %935 = vrot.lane.b32.xlu0 %v826, 4
      %v936 = vpop.permute.xlu0 %935
      %937 = vrot.lane.b32.xlu0 %v829, 4
      %v938 = vpop.permute.xlu0 %937
      %939 = vrot.lane.b32.xlu0 %v832, 4
      %v940 = vpop.permute.xlu0 %939
      %941 = vrot.lane.b32.xlu0 %v835, 4
      %v942 = vpop.permute.xlu0 %941
      %943 = vrot.lane.b32.xlu0 %v838, 4
      %v944 = vpop.permute.xlu0 %943
      %945 = vrot.lane.b32.xlu0 %v841, 4
      %v946 = vpop.permute.xlu0 %945
      %947 = vrot.lane.b32.xlu0 %v844, 4
      %v948 = vpop.permute.xlu0 %947
      %949 = vrot.lane.b32.xlu0 %v847, 4
      %v950 = vpop.permute.xlu0 %949
      %951 = vrot.lane.b32.xlu0 %v850, 4
      %v952 = vpop.permute.xlu0 %951
      %953 = vrot.lane.b32.xlu0 %v853, 4
      %v954 = vpop.permute.xlu0 %953
      %955 = vrot.lane.b32.xlu0 %v856, 4
      %v956 = vpop.permute.xlu0 %955
      %957 = vrot.lane.b32.xlu0 %v859, 4
      %v958 = vpop.permute.xlu0 %957
      %959 = vrot.lane.b32.xlu0 %v862, 4
      %v960 = vpop.permute.xlu0 %959
      %961 = vrot.lane.b32.xlu0 %v865, 4
      %v962 = vpop.permute.xlu0 %961
      %963 = vrot.lane.b32.xlu0 %v868, 4
      %v964 = vpop.permute.xlu0 %963
      %965 = vrot.lane.b32.xlu0 %v871, 4
      %v966 = vpop.permute.xlu0 %965
      %967 = vrot.lane.b32.xlu0 %v874, 4
      %v968 = vpop.permute.xlu0 %967
      %969 = vrot.lane.b32.xlu0 %v877, 4
      %v970 = vpop.permute.xlu0 %969
      %971 = vrot.lane.b32.xlu0 %v880, 4
      %v972 = vpop.permute.xlu0 %971
      %973 = vrot.lane.b32.xlu0 %v883, 4
      %v974 = vpop.permute.xlu0 %973
      %975 = vrot.lane.b32.xlu0 %v886, 4
      %v976 = vpop.permute.xlu0 %975
      %977 = vrot.lane.b32.xlu0 %v889, 4
      %v978 = vpop.permute.xlu0 %977
      %979 = vrot.lane.b32.xlu0 %v892, 4
      %v980 = vpop.permute.xlu0 %979
      %981 = vrot.lane.b32.xlu0 %v895, 4
      %v982 = vpop.permute.xlu0 %981
      %983 = vrot.lane.b32.xlu0 %v898, 4
      %v984 = vpop.permute.xlu0 %983
      %985 = vrot.lane.b32.xlu0 %v901, 4
      %v986 = vpop.permute.xlu0 %985
      %987 = vrot.lane.b32.xlu0 %v904, 4
      %v988 = vpop.permute.xlu0 %987
      %989 = vrot.lane.b32.xlu0 %v907, 4
      %v990 = vpop.permute.xlu0 %989
      %991 = vrot.lane.b32.xlu0 %v910, 4
      %v992 = vpop.permute.xlu0 %991
      %993 = vrot.lane.b32.xlu0 %v913, 4
      %v994 = vpop.permute.xlu0 %993
      %995 = vrot.lane.b32.xlu0 %v916, 4
      %v996 = vpop.permute.xlu0 %995
      %997 = vrot.lane.b32.xlu0 %v919, 4
      %v998 = vpop.permute.xlu0 %997
      %999 = vrot.lane.b32.xlu0 %v922, 4
      %v1000 = vpop.permute.xlu0 %999
      %vm1040 = vcmask 60449
      %1041 = vst.msk [vmem:[#allocation2 + $0x8] sm:$0xe] %vm1040, %v924
      %vm1042 = vcmask 60448
      %1043 = vst.msk [vmem:[#allocation2 + $0xc] sm:$0xf] %vm1042, %v926
      %1044 = vst.msk [vmem:[#allocation2 + $0x10] sm:$0xf] %vm1042, %v928
      %1045 = vst.msk [vmem:[#allocation2 + $0x14] sm:$0xf] %vm1042, %v930
      %1046 = vst.msk [vmem:[#allocation2 + $0x18] sm:$0xf] %vm1042, %v932
      %1047 = vst.msk [vmem:[#allocation2 + $0x1c] sm:$0xf] %vm1042, %v934
      %1048 = vst.msk [vmem:[#allocation2 + $0x20] sm:$0xf] %vm1042, %v936
      %1049 = vst.msk [vmem:[#allocation2 + $0x24] sm:$0xf] %vm1042, %v938
      %1050 = vst.msk [vmem:[#allocation2 + $0x28] sm:$0xf] %vm1042, %v940
      %1051 = vst.msk [vmem:[#allocation2 + $0x2c] sm:$0xf] %vm1042, %v942
      %1052 = vst.msk [vmem:[#allocation2 + $0x30] sm:$0xf] %vm1042, %v944
      %1053 = vst.msk [vmem:[#allocation2 + $0x34] sm:$0xf] %vm1042, %v946
      %1054 = vst.msk [vmem:[#allocation2 + $0x38] sm:$0xf] %vm1042, %v948
      %1055 = vst.msk [vmem:[#allocation2 + $0x3c] sm:$0xf] %vm1042, %v950
      %1056 = vst.msk [vmem:[#allocation2 + $0x40] sm:$0xf] %vm1042, %v952
      %1057 = vst.msk [vmem:[#allocation2 + $0x44] sm:$0xf] %vm1042, %v954
      %1058 = vst.msk [vmem:[#allocation2 + $0x48] sm:$0xf] %vm1042, %v956
      %1059 = vst.msk [vmem:[#allocation2 + $0x4c] sm:$0xf] %vm1042, %v958
      %1060 = vst.msk [vmem:[#allocation2 + $0x50] sm:$0xf] %vm1042, %v960
      %1061 = vst.msk [vmem:[#allocation2 + $0x54] sm:$0xf] %vm1042, %v962
      %1062 = vst.msk [vmem:[#allocation2 + $0x58] sm:$0xf] %vm1042, %v964
      %1063 = vst.msk [vmem:[#allocation2 + $0x5c] sm:$0xf] %vm1042, %v966
      %1064 = vst.msk [vmem:[#allocation2 + $0x60] sm:$0xf] %vm1042, %v968
      %1065 = vst.msk [vmem:[#allocation2 + $0x64] sm:$0xf] %vm1042, %v970
      %1066 = vst.msk [vmem:[#allocation2 + $0x68] sm:$0xf] %vm1042, %v972
      %1067 = vst.msk [vmem:[#allocation2 + $0x6c] sm:$0xf] %vm1042, %v974
      %1068 = vst.msk [vmem:[#allocation2 + $0x70] sm:$0xf] %vm1042, %v976
      %1069 = vst.msk [vmem:[#allocation2 + $0x74] sm:$0xf] %vm1042, %v978
      %1070 = vst.msk [vmem:[#allocation2 + $0x78] sm:$0xf] %vm1042, %v980
      %1071 = vst.msk [vmem:[#allocation2 + $0x7c] sm:$0xf] %vm1042, %v982
      %1072 = vst.msk [vmem:[#allocation2 + $0x80] sm:$0xf] %vm1042, %v984
      %1073 = vst.msk [vmem:[#allocation2 + $0x84] sm:$0xf] %vm1042, %v986
      %1074 = vst.msk [vmem:[#allocation2 + $0x88] sm:$0xf] %vm1042, %v988
      %1075 = vst.msk [vmem:[#allocation2 + $0x8c] sm:$0xf] %vm1042, %v990
      %1076 = vst.msk [vmem:[#allocation2 + $0x90] sm:$0xf] %vm1042, %v992
      %1077 = vst.msk [vmem:[#allocation2 + $0x94] sm:$0xf] %vm1042, %v994
      %1078 = vst.msk [vmem:[#allocation2 + $0x98] sm:$0xf] %vm1042, %v996
      %1079 = vst.msk [vmem:[#allocation2 + $0x9c] sm:$0xf] %vm1042, %v998
      %vm1080 = vcmask 58400
      %1081 = vst.msk [vmem:[#allocation2 + $0xa0] sm:$0x3] %vm1080, %v1000
      %vm1082 = vsmask.f32 256
      %vm1083 = vsmask.f32 4368
      %vm1084 = vmor %vm1082, %vm1083
      %v1085 = vrot.slane %v298, 7
      %v1086 = vor.u32 %v1085, %v301
      %v1087 = vrot.slane %v1085, 4
      %v1088 = vrot.slane %v307, 7
      %v1089 = vor.u32 %v1088, %v310
      %v1090 = vsel %vm1084, %v1087, %v1089
      %v1091 = vrot.slane %v1088, 4
      %v1092 = vrot.slane %v317, 7
      %v1093 = vor.u32 %v1092, %v320
      %v1094 = vsel %vm1084, %v1091, %v1093
      %v1095 = vrot.slane %v1092, 4
      %v1096 = vrot.slane %v327, 7
      %v1097 = vor.u32 %v1096, %v330
      %v1098 = vsel %vm1084, %v1095, %v1097
      %v1099 = vrot.slane %v1096, 4
      %v1100 = vrot.slane %v337, 7
      %v1101 = vor.u32 %v1100, %v340
      %v1102 = vsel %vm1084, %v1099, %v1101
      %v1103 = vrot.slane %v1100, 4
      %v1104 = vrot.slane %v347, 7
      %v1105 = vor.u32 %v1104, %v350
      %v1106 = vsel %vm1084, %v1103, %v1105
      %v1107 = vrot.slane %v1104, 4
      %v1108 = vrot.slane %v357, 7
      %v1109 = vor.u32 %v1108, %v360
      %v1110 = vsel %vm1084, %v1107, %v1109
      %v1111 = vrot.slane %v1108, 4
      %v1112 = vrot.slane %v367, 7
      %v1113 = vor.u32 %v1112, %v370
      %v1114 = vsel %vm1084, %v1111, %v1113
      %v1115 = vrot.slane %v1112, 4
      %v1116 = vrot.slane %v377, 7
      %v1117 = vor.u32 %v1116, %v380
      %v1118 = vsel %vm1084, %v1115, %v1117
      %v1119 = vrot.slane %v1116, 4
      %v1120 = vrot.slane %v387, 7
      %v1121 = vor.u32 %v1120, %v390
      %v1122 = vsel %vm1084, %v1119, %v1121
      %v1123 = vrot.slane %v1120, 4
      %v1124 = vrot.slane %v397, 7
      %v1125 = vor.u32 %v1124, %v400
      %v1126 = vsel %vm1084, %v1123, %v1125
      %v1127 = vrot.slane %v1124, 4
      %v1128 = vrot.slane %v407, 7
      %v1129 = vor.u32 %v1128, %v410
      %v1130 = vsel %vm1084, %v1127, %v1129
      %v1131 = vrot.slane %v1128, 4
      %v1132 = vrot.slane %v417, 7
      %v1133 = vor.u32 %v1132, %v420
      %v1134 = vsel %vm1084, %v1131, %v1133
      %v1135 = vrot.slane %v1132, 4
      %v1136 = vrot.slane %v427, 7
      %v1137 = vor.u32 %v1136, %v430
      %v1138 = vsel %vm1084, %v1135, %v1137
      %v1139 = vrot.slane %v1136, 4
      %v1140 = vrot.slane %v437, 7
      %v1141 = vor.u32 %v1140, %v440
      %v1142 = vsel %vm1084, %v1139, %v1141
      %v1143 = vrot.slane %v1140, 4
      %v1144 = vrot.slane %v447, 7
      %v1145 = vor.u32 %v1144, %v450
      %v1146 = vsel %vm1084, %v1143, %v1145
      %v1147 = vrot.slane %v1144, 4
      %v1148 = vrot.slane %v457, 7
      %v1149 = vor.u32 %v1148, %v460
      %v1150 = vsel %vm1084, %v1147, %v1149
      %v1151 = vrot.slane %v1148, 4
      %v1152 = vrot.slane %v467, 7
      %v1153 = vor.u32 %v1152, %v470
      %v1154 = vsel %vm1084, %v1151, %v1153
      %v1155 = vrot.slane %v1152, 4
      %v1156 = vrot.slane %v477, 7
      %v1157 = vor.u32 %v1156, %v480
      %v1158 = vsel %vm1084, %v1155, %v1157
      %v1159 = vrot.slane %v1156, 4
      %v1160 = vrot.slane %v487, 7
      %v1161 = vor.u32 %v1160, %v490
      %v1162 = vsel %vm1084, %v1159, %v1161
      %v1163 = vrot.slane %v1160, 4
      %v1164 = vrot.slane %v497, 7
      %v1165 = vor.u32 %v1164, %v500
      %v1166 = vsel %vm1084, %v1163, %v1165
      %v1167 = vrot.slane %v1164, 4
      %v1168 = vrot.slane %v507, 7
      %v1169 = vor.u32 %v1168, %v510
      %v1170 = vsel %vm1084, %v1167, %v1169
      %v1171 = vrot.slane %v1168, 4
      %v1172 = vrot.slane %v517, 7
      %v1173 = vor.u32 %v1172, %v520
      %v1174 = vsel %vm1084, %v1171, %v1173
      %v1175 = vrot.slane %v1172, 4
      %v1176 = vrot.slane %v527, 7
      %v1177 = vor.u32 %v1176, %v530
      %v1178 = vsel %vm1084, %v1175, %v1177
      %v1179 = vrot.slane %v1176, 4
      %v1180 = vrot.slane %v537, 7
      %v1181 = vor.u32 %v1180, %v540
      %v1182 = vsel %vm1084, %v1179, %v1181
      %v1183 = vrot.slane %v1180, 4
      %v1184 = vrot.slane %v547, 7
      %v1185 = vor.u32 %v1184, %v550
      %v1186 = vsel %vm1084, %v1183, %v1185
      %v1187 = vrot.slane %v1184, 4
      %v1188 = vrot.slane %v557, 7
      %v1189 = vor.u32 %v1188, %v560
      %v1190 = vsel %vm1084, %v1187, %v1189
      %v1191 = vrot.slane %v1188, 4
      %v1192 = vrot.slane %v567, 7
      %v1193 = vor.u32 %v1192, %v570
      %v1194 = vsel %vm1084, %v1191, %v1193
      %v1195 = vrot.slane %v1192, 4
      %v1196 = vrot.slane %v577, 7
      %v1197 = vor.u32 %v1196, %v580
      %v1198 = vsel %vm1084, %v1195, %v1197
      %v1199 = vrot.slane %v1196, 4
      %v1200 = vrot.slane %v587, 7
      %v1201 = vor.u32 %v1200, %v590
      %v1202 = vsel %vm1084, %v1199, %v1201
      %v1203 = vrot.slane %v1200, 4
      %v1204 = vrot.slane %v597, 7
      %v1205 = vor.u32 %v1204, %v600
      %v1206 = vsel %vm1084, %v1203, %v1205
      %v1207 = vrot.slane %v1204, 4
      %v1208 = vrot.slane %v607, 7
      %v1209 = vor.u32 %v1208, %v610
      %v1210 = vsel %vm1084, %v1207, %v1209
      %v1211 = vrot.slane %v1208, 4
      %v1212 = vrot.slane %v617, 7
      %v1213 = vor.u32 %v1212, %v620
      %v1214 = vsel %vm1084, %v1211, %v1213
      %v1215 = vrot.slane %v1212, 4
      %v1216 = vrot.slane %v627, 7
      %v1217 = vor.u32 %v1216, %v630
      %v1218 = vsel %vm1084, %v1215, %v1217
      %v1219 = vrot.slane %v1216, 4
      %v1220 = vrot.slane %v637, 7
      %v1221 = vor.u32 %v1220, %v640
      %v1222 = vsel %vm1084, %v1219, %v1221
      %v1223 = vrot.slane %v1220, 4
      %v1224 = vrot.slane %v647, 7
      %v1225 = vor.u32 %v1224, %v650
      %v1226 = vsel %vm1084, %v1223, %v1225
      %v1227 = vrot.slane %v1224, 4
      %v1228 = vrot.slane %v657, 7
      %v1229 = vor.u32 %v1228, %v660
      %v1230 = vsel %vm1084, %v1227, %v1229
      %v1231 = vrot.slane %v1228, 4
      %v1232 = vrot.slane %v667, 7
      %v1233 = vor.u32 %v1232, %v670
      %v1234 = vsel %vm1084, %v1231, %v1233
      %v1235 = vrot.slane %v1232, 4
      %v1236 = vshrl.u32 %v248, 16
      %v1238 = vrot.slane %v1236, 7
      %v1239 = vor.u32 %v1238, %v677
      %v1240 = vsel %vm1084, %v1235, %v1239
      %1241 = vrot.lane.b32.xlu0 %v1086, 8
      %v1242 = vpop.permute.xlu0 %1241
      %1243 = vrot.lane.b32.xlu0 %v1090, 8
      %v1244 = vpop.permute.xlu0 %1243
      %1245 = vrot.lane.b32.xlu0 %v1094, 8
      %v1246 = vpop.permute.xlu0 %1245
      %1247 = vrot.lane.b32.xlu0 %v1098, 8
      %v1248 = vpop.permute.xlu0 %1247
      %1249 = vrot.lane.b32.xlu0 %v1102, 8
      %v1250 = vpop.permute.xlu0 %1249
      %1251 = vrot.lane.b32.xlu0 %v1106, 8
      %v1252 = vpop.permute.xlu0 %1251
      %1253 = vrot.lane.b32.xlu0 %v1110, 8
      %v1254 = vpop.permute.xlu0 %1253
      %1255 = vrot.lane.b32.xlu0 %v1114, 8
      %v1256 = vpop.permute.xlu0 %1255
      %1257 = vrot.lane.b32.xlu0 %v1118, 8
      %v1258 = vpop.permute.xlu0 %1257
      %1259 = vrot.lane.b32.xlu0 %v1122, 8
      %v1260 = vpop.permute.xlu0 %1259
      %1261 = vrot.lane.b32.xlu0 %v1126, 8
      %v1262 = vpop.permute.xlu0 %1261
      %1263 = vrot.lane.b32.xlu0 %v1130, 8
      %v1264 = vpop.permute.xlu0 %1263
      %1265 = vrot.lane.b32.xlu0 %v1134, 8
      %v1266 = vpop.permute.xlu0 %1265
      %1267 = vrot.lane.b32.xlu0 %v1138, 8
      %v1268 = vpop.permute.xlu0 %1267
      %1269 = vrot.lane.b32.xlu0 %v1142, 8
      %v1270 = vpop.permute.xlu0 %1269
      %1271 = vrot.lane.b32.xlu0 %v1146, 8
      %v1272 = vpop.permute.xlu0 %1271
      %1273 = vrot.lane.b32.xlu0 %v1150, 8
      %v1274 = vpop.permute.xlu0 %1273
      %1275 = vrot.lane.b32.xlu0 %v1154, 8
      %v1276 = vpop.permute.xlu0 %1275
      %1277 = vrot.lane.b32.xlu0 %v1158, 8
      %v1278 = vpop.permute.xlu0 %1277
      %1279 = vrot.lane.b32.xlu0 %v1162, 8
      %v1280 = vpop.permute.xlu0 %1279
      %1281 = vrot.lane.b32.xlu0 %v1166, 8
      %v1282 = vpop.permute.xlu0 %1281
      %1283 = vrot.lane.b32.xlu0 %v1170, 8
      %v1284 = vpop.permute.xlu0 %1283
      %1285 = vrot.lane.b32.xlu0 %v1174, 8
      %v1286 = vpop.permute.xlu0 %1285
      %1287 = vrot.lane.b32.xlu0 %v1178, 8
      %v1288 = vpop.permute.xlu0 %1287
      %1289 = vrot.lane.b32.xlu0 %v1182, 8
      %v1290 = vpop.permute.xlu0 %1289
      %1291 = vrot.lane.b32.xlu0 %v1186, 8
      %v1292 = vpop.permute.xlu0 %1291
      %1293 = vrot.lane.b32.xlu0 %v1190, 8
      %v1294 = vpop.permute.xlu0 %1293
      %1295 = vrot.lane.b32.xlu0 %v1194, 8
      %v1296 = vpop.permute.xlu0 %1295
      %1297 = vrot.lane.b32.xlu0 %v1198, 8
      %v1298 = vpop.permute.xlu0 %1297
      %1299 = vrot.lane.b32.xlu0 %v1202, 8
      %v1300 = vpop.permute.xlu0 %1299
      %1301 = vrot.lane.b32.xlu0 %v1206, 8
      %v1302 = vpop.permute.xlu0 %1301
      %1303 = vrot.lane.b32.xlu0 %v1210, 8
      %v1304 = vpop.permute.xlu0 %1303
      %1305 = vrot.lane.b32.xlu0 %v1214, 8
      %v1306 = vpop.permute.xlu0 %1305
      %1307 = vrot.lane.b32.xlu0 %v1218, 8
      %v1308 = vpop.permute.xlu0 %1307
      %1309 = vrot.lane.b32.xlu0 %v1222, 8
      %v1310 = vpop.permute.xlu0 %1309
      %1311 = vrot.lane.b32.xlu0 %v1226, 8
      %v1312 = vpop.permute.xlu0 %1311
      %1313 = vrot.lane.b32.xlu0 %v1230, 8
      %v1314 = vpop.permute.xlu0 %1313
      %1315 = vrot.lane.b32.xlu0 %v1234, 8
      %v1316 = vpop.permute.xlu0 %1315
      %1317 = vrot.lane.b32.xlu0 %v1240, 8
      %v1318 = vpop.permute.xlu0 %1317
      %vm1358 = vcmask 93248
      %vm1359 = vsmask.f32 7938
      %vm1360 = vmand %vm1358, %vm1359
      %v1361 = vld [vmem:[#allocation2 + $0x8] sm:$0xf]
      %v1362 = vsel %vm1360, %v1242, %v1361
      %1363 = vst [vmem:[#allocation2 + $0x8] sm:$0xf] %v1362
      %vm1364 = vcmask 93248
      %1365 = vst.msk [vmem:[#allocation2 + $0xc] sm:$0xf] %vm1364, %v1244
      %1366 = vst.msk [vmem:[#allocation2 + $0x10] sm:$0xf] %vm1364, %v1246
      %1367 = vst.msk [vmem:[#allocation2 + $0x14] sm:$0xf] %vm1364, %v1248
      %1368 = vst.msk [vmem:[#allocation2 + $0x18] sm:$0xf] %vm1364, %v1250
      %1369 = vst.msk [vmem:[#allocation2 + $0x1c] sm:$0xf] %vm1364, %v1252
      %1370 = vst.msk [vmem:[#allocation2 + $0x20] sm:$0xf] %vm1364, %v1254
      %1371 = vst.msk [vmem:[#allocation2 + $0x24] sm:$0xf] %vm1364, %v1256
      %1372 = vst.msk [vmem:[#allocation2 + $0x28] sm:$0xf] %vm1364, %v1258
      %1373 = vst.msk [vmem:[#allocation2 + $0x2c] sm:$0xf] %vm1364, %v1260
      %1374 = vst.msk [vmem:[#allocation2 + $0x30] sm:$0xf] %vm1364, %v1262
      %1375 = vst.msk [vmem:[#allocation2 + $0x34] sm:$0xf] %vm1364, %v1264
      %1376 = vst.msk [vmem:[#allocation2 + $0x38] sm:$0xf] %vm1364, %v1266
      %1377 = vst.msk [vmem:[#allocation2 + $0x3c] sm:$0xf] %vm1364, %v1268
      %1378 = vst.msk [vmem:[#allocation2 + $0x40] sm:$0xf] %vm1364, %v1270
      %1379 = vst.msk [vmem:[#allocation2 + $0x44] sm:$0xf] %vm1364, %v1272
      %1380 = vst.msk [vmem:[#allocation2 + $0x48] sm:$0xf] %vm1364, %v1274
      %1381 = vst.msk [vmem:[#allocation2 + $0x4c] sm:$0xf] %vm1364, %v1276
      %1382 = vst.msk [vmem:[#allocation2 + $0x50] sm:$0xf] %vm1364, %v1278
      %1383 = vst.msk [vmem:[#allocation2 + $0x54] sm:$0xf] %vm1364, %v1280
      %1384 = vst.msk [vmem:[#allocation2 + $0x58] sm:$0xf] %vm1364, %v1282
      %1385 = vst.msk [vmem:[#allocation2 + $0x5c] sm:$0xf] %vm1364, %v1284
      %1386 = vst.msk [vmem:[#allocation2 + $0x60] sm:$0xf] %vm1364, %v1286
      %1387 = vst.msk [vmem:[#allocation2 + $0x64] sm:$0xf] %vm1364, %v1288
      %1388 = vst.msk [vmem:[#allocation2 + $0x68] sm:$0xf] %vm1364, %v1290
      %1389 = vst.msk [vmem:[#allocation2 + $0x6c] sm:$0xf] %vm1364, %v1292
      %1390 = vst.msk [vmem:[#allocation2 + $0x70] sm:$0xf] %vm1364, %v1294
      %1391 = vst.msk [vmem:[#allocation2 + $0x74] sm:$0xf] %vm1364, %v1296
      %1392 = vst.msk [vmem:[#allocation2 + $0x78] sm:$0xf] %vm1364, %v1298
      %1393 = vst.msk [vmem:[#allocation2 + $0x7c] sm:$0xf] %vm1364, %v1300
      %1394 = vst.msk [vmem:[#allocation2 + $0x80] sm:$0xf] %vm1364, %v1302
      %1395 = vst.msk [vmem:[#allocation2 + $0x84] sm:$0xf] %vm1364, %v1304
      %1396 = vst.msk [vmem:[#allocation2 + $0x88] sm:$0xf] %vm1364, %v1306
      %1397 = vst.msk [vmem:[#allocation2 + $0x8c] sm:$0xf] %vm1364, %v1308
      %1398 = vst.msk [vmem:[#allocation2 + $0x90] sm:$0xf] %vm1364, %v1310
      %1399 = vst.msk [vmem:[#allocation2 + $0x94] sm:$0xf] %vm1364, %v1312
      %1400 = vst.msk [vmem:[#allocation2 + $0x98] sm:$0xf] %vm1364, %v1314
      %1401 = vst.msk [vmem:[#allocation2 + $0x9c] sm:$0xf] %vm1364, %v1316
      %vm1402 = vcmask 91200
      %1403 = vst.msk [vmem:[#allocation2 + $0xa0] sm:$0x3] %vm1402, %v1318
      %v1404 = vrot.slane %v1238, 4
      %v1406 = vshrl.u32 %v249, 16
      %v1408 = vrot.slane %v1406, 7
      %v1409 = vshll.u32 %v249, 16
      %v1411 = vor.u32 %v1408, %v1409
      %v1412 = vsel %vm1084, %v1404, %v1411
      %v1413 = vrot.slane %v1408, 4
      %v1415 = vshrl.u32 %v250, 16
      %v1417 = vrot.slane %v1415, 7
      %v1418 = vshll.u32 %v250, 16
      %v1420 = vor.u32 %v1417, %v1418
      %v1421 = vsel %vm1084, %v1413, %v1420
      %1422 = vrot.lane.b32.xlu0 %v1086, 12
      %v1423 = vpop.permute.xlu0 %1422
      %1424 = vrot.lane.b32.xlu0 %v1090, 12
      %v1425 = vpop.permute.xlu0 %1424
      %1426 = vrot.lane.b32.xlu0 %v1094, 12
      %v1427 = vpop.permute.xlu0 %1426
      %1428 = vrot.lane.b32.xlu0 %v1098, 12
      %v1429 = vpop.permute.xlu0 %1428
      %1430 = vrot.lane.b32.xlu0 %v1102, 12
      %v1431 = vpop.permute.xlu0 %1430
      %1432 = vrot.lane.b32.xlu0 %v1106, 12
      %v1433 = vpop.permute.xlu0 %1432
      %1434 = vrot.lane.b32.xlu0 %v1110, 12
      %v1435 = vpop.permute.xlu0 %1434
      %1436 = vrot.lane.b32.xlu0 %v1114, 12
      %v1437 = vpop.permute.xlu0 %1436
      %1438 = vrot.lane.b32.xlu0 %v1118, 12
      %v1439 = vpop.permute.xlu0 %1438
      %1440 = vrot.lane.b32.xlu0 %v1122, 12
      %v1441 = vpop.permute.xlu0 %1440
      %1442 = vrot.lane.b32.xlu0 %v1126, 12
      %v1443 = vpop.permute.xlu0 %1442
      %1444 = vrot.lane.b32.xlu0 %v1130, 12
      %v1445 = vpop.permute.xlu0 %1444
      %1446 = vrot.lane.b32.xlu0 %v1134, 12
      %v1447 = vpop.permute.xlu0 %1446
      %1448 = vrot.lane.b32.xlu0 %v1138, 12
      %v1449 = vpop.permute.xlu0 %1448
      %1450 = vrot.lane.b32.xlu0 %v1142, 12
      %v1451 = vpop.permute.xlu0 %1450
      %1452 = vrot.lane.b32.xlu0 %v1146, 12
      %v1453 = vpop.permute.xlu0 %1452
      %1454 = vrot.lane.b32.xlu0 %v1150, 12
      %v1455 = vpop.permute.xlu0 %1454
      %1456 = vrot.lane.b32.xlu0 %v1154, 12
      %v1457 = vpop.permute.xlu0 %1456
      %1458 = vrot.lane.b32.xlu0 %v1158, 12
      %v1459 = vpop.permute.xlu0 %1458
      %1460 = vrot.lane.b32.xlu0 %v1162, 12
      %v1461 = vpop.permute.xlu0 %1460
      %1462 = vrot.lane.b32.xlu0 %v1166, 12
      %v1463 = vpop.permute.xlu0 %1462
      %1464 = vrot.lane.b32.xlu0 %v1170, 12
      %v1465 = vpop.permute.xlu0 %1464
      %1466 = vrot.lane.b32.xlu0 %v1174, 12
      %v1467 = vpop.permute.xlu0 %1466
      %1468 = vrot.lane.b32.xlu0 %v1178, 12
      %v1469 = vpop.permute.xlu0 %1468
      %1470 = vrot.lane.b32.xlu0 %v1182, 12
      %v1471 = vpop.permute.xlu0 %1470
      %1472 = vrot.lane.b32.xlu0 %v1186, 12
      %v1473 = vpop.permute.xlu0 %1472
      %1474 = vrot.lane.b32.xlu0 %v1190, 12
      %v1475 = vpop.permute.xlu0 %1474
      %1476 = vrot.lane.b32.xlu0 %v1194, 12
      %v1477 = vpop.permute.xlu0 %1476
      %1478 = vrot.lane.b32.xlu0 %v1198, 12
      %v1479 = vpop.permute.xlu0 %1478
      %1480 = vrot.lane.b32.xlu0 %v1202, 12
      %v1481 = vpop.permute.xlu0 %1480
      %1482 = vrot.lane.b32.xlu0 %v1206, 12
      %v1483 = vpop.permute.xlu0 %1482
      %1484 = vrot.lane.b32.xlu0 %v1210, 12
      %v1485 = vpop.permute.xlu0 %1484
      %1486 = vrot.lane.b32.xlu0 %v1214, 12
      %v1487 = vpop.permute.xlu0 %1486
      %1488 = vrot.lane.b32.xlu0 %v1218, 12
      %v1489 = vpop.permute.xlu0 %1488
      %1490 = vrot.lane.b32.xlu0 %v1222, 12
      %v1491 = vpop.permute.xlu0 %1490
      %1492 = vrot.lane.b32.xlu0 %v1226, 12
      %v1493 = vpop.permute.xlu0 %1492
      %1494 = vrot.lane.b32.xlu0 %v1230, 12
      %v1495 = vpop.permute.xlu0 %1494
      %1496 = vrot.lane.b32.xlu0 %v1234, 12
      %v1497 = vpop.permute.xlu0 %1496
      %1498 = vrot.lane.b32.xlu0 %v1240, 12
      %v1499 = vpop.permute.xlu0 %1498
      %1500 = vrot.lane.b32.xlu0 %v1412, 12
      %v1501 = vpop.permute.xlu0 %1500
      %1502 = vrot.lane.b32.xlu0 %v1421, 12
      %v1503 = vpop.permute.xlu0 %1502
      %vm1545 = vcmask 126048
      %vm1546 = vmand %vm1545, %vm1359
      %v1547 = vld [vmem:[#allocation2] sm:$0xf]
      %v1548 = vsel %vm1546, %v1423, %v1547
      %1549 = vst [vmem:[#allocation2] sm:$0xf] %v1548
      %vm1550 = vcmask 126048
      %1551 = vst.msk [vmem:[#allocation2 + $0x4] sm:$0xf] %vm1550, %v1425
      %1552 = vst.msk [vmem:[#allocation2 + $0x8] sm:$0xf] %vm1550, %v1427
      %1553 = vst.msk [vmem:[#allocation2 + $0xc] sm:$0xf] %vm1550, %v1429
      %1554 = vst.msk [vmem:[#allocation2 + $0x10] sm:$0xf] %vm1550, %v1431
      %1555 = vst.msk [vmem:[#allocation2 + $0x14] sm:$0xf] %vm1550, %v1433
      %1556 = vst.msk [vmem:[#allocation2 + $0x18] sm:$0xf] %vm1550, %v1435
      %1557 = vst.msk [vmem:[#allocation2 + $0x1c] sm:$0xf] %vm1550, %v1437
      %1558 = vst.msk [vmem:[#allocation2 + $0x20] sm:$0xf] %vm1550, %v1439
      %1559 = vst.msk [vmem:[#allocation2 + $0x24] sm:$0xf] %vm1550, %v1441
      %1560 = vst.msk [vmem:[#allocation2 + $0x28] sm:$0xf] %vm1550, %v1443
      %1561 = vst.msk [vmem:[#allocation2 + $0x2c] sm:$0xf] %vm1550, %v1445
      %1562 = vst.msk [vmem:[#allocation2 + $0x30] sm:$0xf] %vm1550, %v1447
      %1563 = vst.msk [vmem:[#allocation2 + $0x34] sm:$0xf] %vm1550, %v1449
      %1564 = vst.msk [vmem:[#allocation2 + $0x38] sm:$0xf] %vm1550, %v1451
      %1565 = vst.msk [vmem:[#allocation2 + $0x3c] sm:$0xf] %vm1550, %v1453
      %1566 = vst.msk [vmem:[#allocation2 + $0x40] sm:$0xf] %vm1550, %v1455
      %1567 = vst.msk [vmem:[#allocation2 + $0x44] sm:$0xf] %vm1550, %v1457
      %1568 = vst.msk [vmem:[#allocation2 + $0x48] sm:$0xf] %vm1550, %v1459
      %1569 = vst.msk [vmem:[#allocation2 + $0x4c] sm:$0xf] %vm1550, %v1461
      %1570 = vst.msk [vmem:[#allocation2 + $0x50] sm:$0xf] %vm1550, %v1463
      %1571 = vst.msk [vmem:[#allocation2 + $0x54] sm:$0xf] %vm1550, %v1465
      %1572 = vst.msk [vmem:[#allocation2 + $0x58] sm:$0xf] %vm1550, %v1467
      %1573 = vst.msk [vmem:[#allocation2 + $0x5c] sm:$0xf] %vm1550, %v1469
      %1574 = vst.msk [vmem:[#allocation2 + $0x60] sm:$0xf] %vm1550, %v1471
      %1575 = vst.msk [vmem:[#allocation2 + $0x64] sm:$0xf] %vm1550, %v1473
      %1576 = vst.msk [vmem:[#allocation2 + $0x68] sm:$0xf] %vm1550, %v1475
      %1577 = vst.msk [vmem:[#allocation2 + $0x6c] sm:$0xf] %vm1550, %v1477
      %1578 = vst.msk [vmem:[#allocation2 + $0x70] sm:$0xf] %vm1550, %v1479
      %1579 = vst.msk [vmem:[#allocation2 + $0x74] sm:$0xf] %vm1550, %v1481
      %1580 = vst.msk [vmem:[#allocation2 + $0x78] sm:$0xf] %vm1550, %v1483
      %1581 = vst.msk [vmem:[#allocation2 + $0x7c] sm:$0xf] %vm1550, %v1485
      %1582 = vst.msk [vmem:[#allocation2 + $0x80] sm:$0xf] %vm1550, %v1487
      %1583 = vst.msk [vmem:[#allocation2 + $0x84] sm:$0xf] %vm1550, %v1489
      %1584 = vst.msk [vmem:[#allocation2 + $0x88] sm:$0xf] %vm1550, %v1491
      %1585 = vst.msk [vmem:[#allocation2 + $0x8c] sm:$0xf] %vm1550, %v1493
      %1586 = vst.msk [vmem:[#allocation2 + $0x90] sm:$0xf] %vm1550, %v1495
      %1587 = vst.msk [vmem:[#allocation2 + $0x94] sm:$0xf] %vm1550, %v1497
      %1588 = vst.msk [vmem:[#allocation2 + $0x98] sm:$0xf] %vm1550, %v1499
      %1589 = vst.msk [vmem:[#allocation2 + $0x9c] sm:$0xf] %vm1550, %v1501
      %vm1590 = vcmask 124000
      %1591 = vst.msk [vmem:[#allocation2 + $0xa0] sm:$0x3] %vm1590, %v1503
      %1594 = vrot.lane.b32.xlu0 %v210, 16
      %v1595 = vpop.permute.xlu0 %1594
      %1596 = vrot.lane.b32.xlu0 %v211, 16
      %v1597 = vpop.permute.xlu0 %1596
      %1598 = vrot.lane.b32.xlu0 %v212, 16
      %v1599 = vpop.permute.xlu0 %1598
      %1600 = vrot.lane.b32.xlu0 %v213, 16
      %v1601 = vpop.permute.xlu0 %1600
      %1602 = vrot.lane.b32.xlu0 %v214, 16
      %v1603 = vpop.permute.xlu0 %1602
      %1604 = vrot.lane.b32.xlu0 %v215, 16
      %v1605 = vpop.permute.xlu0 %1604
      %1606 = vrot.lane.b32.xlu0 %v216, 16
      %v1607 = vpop.permute.xlu0 %1606
      %1608 = vrot.lane.b32.xlu0 %v217, 16
      %v1609 = vpop.permute.xlu0 %1608
      %1610 = vrot.lane.b32.xlu0 %v218, 16
      %v1611 = vpop.permute.xlu0 %1610
      %1612 = vrot.lane.b32.xlu0 %v219, 16
      %v1613 = vpop.permute.xlu0 %1612
      %1614 = vrot.lane.b32.xlu0 %v220, 16
      %v1615 = vpop.permute.xlu0 %1614
      %1616 = vrot.lane.b32.xlu0 %v221, 16
      %v1617 = vpop.permute.xlu0 %1616
      %1618 = vrot.lane.b32.xlu0 %v222, 16
      %v1619 = vpop.permute.xlu0 %1618
      %1620 = vrot.lane.b32.xlu0 %v223, 16
      %v1621 = vpop.permute.xlu0 %1620
      %1622 = vrot.lane.b32.xlu0 %v224, 16
      %v1623 = vpop.permute.xlu0 %1622
      %1624 = vrot.lane.b32.xlu0 %v225, 16
      %v1625 = vpop.permute.xlu0 %1624
      %1626 = vrot.lane.b32.xlu0 %v226, 16
      %v1627 = vpop.permute.xlu0 %1626
      %1628 = vrot.lane.b32.xlu0 %v227, 16
      %v1629 = vpop.permute.xlu0 %1628
      %1630 = vrot.lane.b32.xlu0 %v228, 16
      %v1631 = vpop.permute.xlu0 %1630
      %1632 = vrot.lane.b32.xlu0 %v229, 16
      %v1633 = vpop.permute.xlu0 %1632
      %1634 = vrot.lane.b32.xlu0 %v230, 16
      %v1635 = vpop.permute.xlu0 %1634
      %1636 = vrot.lane.b32.xlu0 %v231, 16
      %v1637 = vpop.permute.xlu0 %1636
      %1638 = vrot.lane.b32.xlu0 %v232, 16
      %v1639 = vpop.permute.xlu0 %1638
      %1640 = vrot.lane.b32.xlu0 %v233, 16
      %v1641 = vpop.permute.xlu0 %1640
      %1642 = vrot.lane.b32.xlu0 %v234, 16
      %v1643 = vpop.permute.xlu0 %1642
      %1644 = vrot.lane.b32.xlu0 %v235, 16
      %v1645 = vpop.permute.xlu0 %1644
      %1646 = vrot.lane.b32.xlu0 %v236, 16
      %v1647 = vpop.permute.xlu0 %1646
      %1648 = vrot.lane.b32.xlu0 %v237, 16
      %v1649 = vpop.permute.xlu0 %1648
      %1650 = vrot.lane.b32.xlu0 %v238, 16
      %v1651 = vpop.permute.xlu0 %1650
      %1652 = vrot.lane.b32.xlu0 %v239, 16
      %v1653 = vpop.permute.xlu0 %1652
      %1654 = vrot.lane.b32.xlu0 %v240, 16
      %v1655 = vpop.permute.xlu0 %1654
      %1656 = vrot.lane.b32.xlu0 %v241, 16
      %v1657 = vpop.permute.xlu0 %1656
      %1658 = vrot.lane.b32.xlu0 %v242, 16
      %v1659 = vpop.permute.xlu0 %1658
      %1660 = vrot.lane.b32.xlu0 %v243, 16
      %v1661 = vpop.permute.xlu0 %1660
      %1662 = vrot.lane.b32.xlu0 %v244, 16
      %v1663 = vpop.permute.xlu0 %1662
      %1664 = vrot.lane.b32.xlu0 %v245, 16
      %v1665 = vpop.permute.xlu0 %1664
      %1666 = vrot.lane.b32.xlu0 %v246, 16
      %v1667 = vpop.permute.xlu0 %1666
      %1668 = vrot.lane.b32.xlu0 %v247, 16
      %v1669 = vpop.permute.xlu0 %1668
      %1670 = vrot.lane.b32.xlu0 %v248, 16
      %v1671 = vpop.permute.xlu0 %1670
      %1672 = vrot.lane.b32.xlu0 %v249, 16
      %v1673 = vpop.permute.xlu0 %1672
      %1674 = vrot.lane.b32.xlu0 %v250, 16
      %v1675 = vpop.permute.xlu0 %1674
      %vm1717 = vcmask 158848
      %1718 = vst.msk [vmem:[#allocation2] sm:$0xf] %vm1717, %v1595
      %1719 = vst.msk [vmem:[#allocation2 + $0x4] sm:$0xf] %vm1717, %v1597
      %1720 = vst.msk [vmem:[#allocation2 + $0x8] sm:$0xf] %vm1717, %v1599
      %1721 = vst.msk [vmem:[#allocation2 + $0xc] sm:$0xf] %vm1717, %v1601
      %1722 = vst.msk [vmem:[#allocation2 + $0x10] sm:$0xf] %vm1717, %v1603
      %1723 = vst.msk [vmem:[#allocation2 + $0x14] sm:$0xf] %vm1717, %v1605
      %1724 = vst.msk [vmem:[#allocation2 + $0x18] sm:$0xf] %vm1717, %v1607
      %1725 = vst.msk [vmem:[#allocation2 + $0x1c] sm:$0xf] %vm1717, %v1609
      %1726 = vst.msk [vmem:[#allocation2 + $0x20] sm:$0xf] %vm1717, %v1611
      %1727 = vst.msk [vmem:[#allocation2 + $0x24] sm:$0xf] %vm1717, %v1613
      %1728 = vst.msk [vmem:[#allocation2 + $0x28] sm:$0xf] %vm1717, %v1615
      %1729 = vst.msk [vmem:[#allocation2 + $0x2c] sm:$0xf] %vm1717, %v1617
      %1730 = vst.msk [vmem:[#allocation2 + $0x30] sm:$0xf] %vm1717, %v1619
      %1731 = vst.msk [vmem:[#allocation2 + $0x34] sm:$0xf] %vm1717, %v1621
      %1732 = vst.msk [vmem:[#allocation2 + $0x38] sm:$0xf] %vm1717, %v1623
      %1733 = vst.msk [vmem:[#allocation2 + $0x3c] sm:$0xf] %vm1717, %v1625
      %1734 = vst.msk [vmem:[#allocation2 + $0x40] sm:$0xf] %vm1717, %v1627
      %1735 = vst.msk [vmem:[#allocation2 + $0x44] sm:$0xf] %vm1717, %v1629
      %1736 = vst.msk [vmem:[#allocation2 + $0x48] sm:$0xf] %vm1717, %v1631
      %1737 = vst.msk [vmem:[#allocation2 + $0x4c] sm:$0xf] %vm1717, %v1633
      %1738 = vst.msk [vmem:[#allocation2 + $0x50] sm:$0xf] %vm1717, %v1635
      %1739 = vst.msk [vmem:[#allocation2 + $0x54] sm:$0xf] %vm1717, %v1637
      %1740 = vst.msk [vmem:[#allocation2 + $0x58] sm:$0xf] %vm1717, %v1639
      %1741 = vst.msk [vmem:[#allocation2 + $0x5c] sm:$0xf] %vm1717, %v1641
      %1742 = vst.msk [vmem:[#allocation2 + $0x60] sm:$0xf] %vm1717, %v1643
      %1743 = vst.msk [vmem:[#allocation2 + $0x64] sm:$0xf] %vm1717, %v1645
      %1744 = vst.msk [vmem:[#allocation2 + $0x68] sm:$0xf] %vm1717, %v1647
      %1745 = vst.msk [vmem:[#allocation2 + $0x6c] sm:$0xf] %vm1717, %v1649
      %1746 = vst.msk [vmem:[#allocation2 + $0x70] sm:$0xf] %vm1717, %v1651
      %1747 = vst.msk [vmem:[#allocation2 + $0x74] sm:$0xf] %vm1717, %v1653
      %1748 = vst.msk [vmem:[#allocation2 + $0x78] sm:$0xf] %vm1717, %v1655
      %1749 = vst.msk [vmem:[#allocation2 + $0x7c] sm:$0xf] %vm1717, %v1657
      %1750 = vst.msk [vmem:[#allocation2 + $0x80] sm:$0xf] %vm1717, %v1659
      %1751 = vst.msk [vmem:[#allocation2 + $0x84] sm:$0xf] %vm1717, %v1661
      %1752 = vst.msk [vmem:[#allocation2 + $0x88] sm:$0xf] %vm1717, %v1663
      %1753 = vst.msk [vmem:[#allocation2 + $0x8c] sm:$0xf] %vm1717, %v1665
      %1754 = vst.msk [vmem:[#allocation2 + $0x90] sm:$0xf] %vm1717, %v1667
      %1755 = vst.msk [vmem:[#allocation2 + $0x94] sm:$0xf] %vm1717, %v1669
      %1756 = vst.msk [vmem:[#allocation2 + $0x98] sm:$0xf] %vm1717, %v1671
      %1757 = vst.msk [vmem:[#allocation2 + $0x9c] sm:$0xf] %vm1717, %v1673
      %vm1758 = vcmask 156800
      %1759 = vst.msk [vmem:[#allocation2 + $0xa0] sm:$0x3] %vm1758, %v1675
      %vm1760 = vsmask.f32 3328
      %vm1761 = vsmask.f32 7440
      %vm1762 = vmor %vm1760, %vm1761
      %v1763 = vrot.slane %v298, 4
      %v1764 = vrot.slane %v301, 5
      %v1765 = vor.u32 %v1763, %v1764
      %v1766 = vrot.slane %v1765, 4
      %v1767 = vrot.slane %v310, 5
      %v1768 = vsel %vm1762, %v1766, %v1767
      %v1769 = vrot.slane %v307, 4
      %v1770 = vor.u32 %v1769, %v1767
      %v1771 = vrot.slane %v1770, 4
      %v1772 = vrot.slane %v320, 5
      %v1773 = vsel %vm1762, %v1771, %v1772
      %v1774 = vrot.slane %v317, 4
      %v1775 = vor.u32 %v1774, %v1772
      %v1776 = vrot.slane %v1775, 4
      %v1777 = vrot.slane %v330, 5
      %v1778 = vsel %vm1762, %v1776, %v1777
      %v1779 = vrot.slane %v327, 4
      %v1780 = vor.u32 %v1779, %v1777
      %v1781 = vrot.slane %v1780, 4
      %v1782 = vrot.slane %v340, 5
      %v1783 = vsel %vm1762, %v1781, %v1782
      %v1784 = vrot.slane %v337, 4
      %v1785 = vor.u32 %v1784, %v1782
      %v1786 = vrot.slane %v1785, 4
      %v1787 = vrot.slane %v350, 5
      %v1788 = vsel %vm1762, %v1786, %v1787
      %v1789 = vrot.slane %v347, 4
      %v1790 = vor.u32 %v1789, %v1787
      %v1791 = vrot.slane %v1790, 4
      %v1792 = vrot.slane %v360, 5
      %v1793 = vsel %vm1762, %v1791, %v1792
      %v1794 = vrot.slane %v357, 4
      %v1795 = vor.u32 %v1794, %v1792
      %v1796 = vrot.slane %v1795, 4
      %v1797 = vrot.slane %v370, 5
      %v1798 = vsel %vm1762, %v1796, %v1797
      %v1799 = vrot.slane %v367, 4
      %v1800 = vor.u32 %v1799, %v1797
      %v1801 = vrot.slane %v1800, 4
      %v1802 = vrot.slane %v380, 5
      %v1803 = vsel %vm1762, %v1801, %v1802
      %v1804 = vrot.slane %v377, 4
      %v1805 = vor.u32 %v1804, %v1802
      %v1806 = vrot.slane %v1805, 4
      %v1807 = vrot.slane %v390, 5
      %v1808 = vsel %vm1762, %v1806, %v1807
      %v1809 = vrot.slane %v387, 4
      %v1810 = vor.u32 %v1809, %v1807
      %v1811 = vrot.slane %v1810, 4
      %v1812 = vrot.slane %v400, 5
      %v1813 = vsel %vm1762, %v1811, %v1812
      %v1814 = vrot.slane %v397, 4
      %v1815 = vor.u32 %v1814, %v1812
      %v1816 = vrot.slane %v1815, 4
      %v1817 = vrot.slane %v410, 5
      %v1818 = vsel %vm1762, %v1816, %v1817
      %v1819 = vrot.slane %v407, 4
      %v1820 = vor.u32 %v1819, %v1817
      %v1821 = vrot.slane %v1820, 4
      %v1822 = vrot.slane %v420, 5
      %v1823 = vsel %vm1762, %v1821, %v1822
      %v1824 = vrot.slane %v417, 4
      %v1825 = vor.u32 %v1824, %v1822
      %v1826 = vrot.slane %v1825, 4
      %v1827 = vrot.slane %v430, 5
      %v1828 = vsel %vm1762, %v1826, %v1827
      %v1829 = vrot.slane %v427, 4
      %v1830 = vor.u32 %v1829, %v1827
      %v1831 = vrot.slane %v1830, 4
      %v1832 = vrot.slane %v440, 5
      %v1833 = vsel %vm1762, %v1831, %v1832
      %v1834 = vrot.slane %v437, 4
      %v1835 = vor.u32 %v1834, %v1832
      %v1836 = vrot.slane %v1835, 4
      %v1837 = vrot.slane %v450, 5
      %v1838 = vsel %vm1762, %v1836, %v1837
      %v1839 = vrot.slane %v447, 4
      %v1840 = vor.u32 %v1839, %v1837
      %v1841 = vrot.slane %v1840, 4
      %v1842 = vrot.slane %v460, 5
      %v1843 = vsel %vm1762, %v1841, %v1842
      %v1844 = vrot.slane %v457, 4
      %v1845 = vor.u32 %v1844, %v1842
      %v1846 = vrot.slane %v1845, 4
      %v1847 = vrot.slane %v470, 5
      %v1848 = vsel %vm1762, %v1846, %v1847
      %v1849 = vrot.slane %v467, 4
      %v1850 = vor.u32 %v1849, %v1847
      %v1851 = vrot.slane %v1850, 4
      %v1852 = vrot.slane %v480, 5
      %v1853 = vsel %vm1762, %v1851, %v1852
      %v1854 = vrot.slane %v477, 4
      %v1855 = vor.u32 %v1854, %v1852
      %v1856 = vrot.slane %v1855, 4
      %v1857 = vrot.slane %v490, 5
      %v1858 = vsel %vm1762, %v1856, %v1857
      %v1859 = vrot.slane %v487, 4
      %v1860 = vor.u32 %v1859, %v1857
      %v1861 = vrot.slane %v1860, 4
      %v1862 = vrot.slane %v500, 5
      %v1863 = vsel %vm1762, %v1861, %v1862
      %v1864 = vrot.slane %v497, 4
      %v1865 = vor.u32 %v1864, %v1862
      %v1866 = vrot.slane %v1865, 4
      %v1867 = vrot.slane %v510, 5
      %v1868 = vsel %vm1762, %v1866, %v1867
      %v1869 = vrot.slane %v507, 4
      %v1870 = vor.u32 %v1869, %v1867
      %v1871 = vrot.slane %v1870, 4
      %v1872 = vrot.slane %v520, 5
      %v1873 = vsel %vm1762, %v1871, %v1872
      %v1874 = vrot.slane %v517, 4
      %v1875 = vor.u32 %v1874, %v1872
      %v1876 = vrot.slane %v1875, 4
      %v1877 = vrot.slane %v530, 5
      %v1878 = vsel %vm1762, %v1876, %v1877
      %v1879 = vrot.slane %v527, 4
      %v1880 = vor.u32 %v1879, %v1877
      %v1881 = vrot.slane %v1880, 4
      %v1882 = vrot.slane %v540, 5
      %v1883 = vsel %vm1762, %v1881, %v1882
      %v1884 = vrot.slane %v537, 4
      %v1885 = vor.u32 %v1884, %v1882
      %v1886 = vrot.slane %v1885, 4
      %v1887 = vrot.slane %v550, 5
      %v1888 = vsel %vm1762, %v1886, %v1887
      %v1889 = vrot.slane %v547, 4
      %v1890 = vor.u32 %v1889, %v1887
      %v1891 = vrot.slane %v1890, 4
      %v1892 = vrot.slane %v560, 5
      %v1893 = vsel %vm1762, %v1891, %v1892
      %v1894 = vrot.slane %v557, 4
      %v1895 = vor.u32 %v1894, %v1892
      %v1896 = vrot.slane %v1895, 4
      %v1897 = vrot.slane %v570, 5
      %v1898 = vsel %vm1762, %v1896, %v1897
      %v1899 = vrot.slane %v567, 4
      %v1900 = vor.u32 %v1899, %v1897
      %v1901 = vrot.slane %v1900, 4
      %v1902 = vrot.slane %v580, 5
      %v1903 = vsel %vm1762, %v1901, %v1902
      %v1904 = vrot.slane %v577, 4
      %v1905 = vor.u32 %v1904, %v1902
      %v1906 = vrot.slane %v1905, 4
      %v1907 = vrot.slane %v590, 5
      %v1908 = vsel %vm1762, %v1906, %v1907
      %v1909 = vrot.slane %v587, 4
      %v1910 = vor.u32 %v1909, %v1907
      %v1911 = vrot.slane %v1910, 4
      %v1912 = vrot.slane %v600, 5
      %v1913 = vsel %vm1762, %v1911, %v1912
      %v1914 = vrot.slane %v597, 4
      %v1915 = vor.u32 %v1914, %v1912
      %v1916 = vrot.slane %v1915, 4
      %v1917 = vrot.slane %v610, 5
      %v1918 = vsel %vm1762, %v1916, %v1917
      %v1919 = vrot.slane %v607, 4
      %v1920 = vor.u32 %v1919, %v1917
      %v1921 = vrot.slane %v1920, 4
      %v1922 = vrot.slane %v620, 5
      %v1923 = vsel %vm1762, %v1921, %v1922
      %v1924 = vrot.slane %v617, 4
      %v1925 = vor.u32 %v1924, %v1922
      %v1926 = vrot.slane %v1925, 4
      %v1927 = vrot.slane %v630, 5
      %v1928 = vsel %vm1762, %v1926, %v1927
      %v1929 = vrot.slane %v627, 4
      %v1930 = vor.u32 %v1929, %v1927
      %v1931 = vrot.slane %v1930, 4
      %v1932 = vrot.slane %v640, 5
      %v1933 = vsel %vm1762, %v1931, %v1932
      %v1934 = vrot.slane %v637, 4
      %v1935 = vor.u32 %v1934, %v1932
      %v1936 = vrot.slane %v1935, 4
      %v1937 = vrot.slane %v650, 5
      %v1938 = vsel %vm1762, %v1936, %v1937
      %v1939 = vrot.slane %v647, 4
      %v1940 = vor.u32 %v1939, %v1937
      %v1941 = vrot.slane %v1940, 4
      %v1942 = vrot.slane %v660, 5
      %v1943 = vsel %vm1762, %v1941, %v1942
      %v1944 = vrot.slane %v657, 4
      %v1945 = vor.u32 %v1944, %v1942
      %v1946 = vrot.slane %v1945, 4
      %v1947 = vrot.slane %v670, 5
      %v1948 = vsel %vm1762, %v1946, %v1947
      %v1949 = vrot.slane %v667, 4
      %v1950 = vor.u32 %v1949, %v1947
      %v1951 = vrot.slane %v1950, 4
      %v1952 = vrot.slane %v677, 5
      %v1953 = vsel %vm1762, %v1951, %v1952
      %v1954 = vrot.slane %v1236, 4
      %v1955 = vor.u32 %v1954, %v1952
      %v1956 = vrot.slane %v1955, 4
      %v1957 = vrot.slane %v1409, 5
      %v1958 = vsel %vm1762, %v1956, %v1957
      %v1959 = vrot.slane %v1406, 4
      %v1960 = vor.u32 %v1959, %v1957
      %v1961 = vrot.slane %v1960, 4
      %v1962 = vrot.slane %v1418, 5
      %v1963 = vsel %vm1762, %v1961, %v1962
      %v1964 = vrot.slane %v1415, 4
      %v1965 = vor.u32 %v1964, %v1962
      %v1966 = vrot.slane %v1965, 4
      %1967 = vrot.lane.b32.xlu0 %v1768, 20
      %v1968 = vpop.permute.xlu0 %1967
      %1969 = vrot.lane.b32.xlu0 %v1773, 20
      %v1970 = vpop.permute.xlu0 %1969
      %1971 = vrot.lane.b32.xlu0 %v1778, 20
      %v1972 = vpop.permute.xlu0 %1971
      %1973 = vrot.lane.b32.xlu0 %v1783, 20
      %v1974 = vpop.permute.xlu0 %1973
      %1975 = vrot.lane.b32.xlu0 %v1788, 20
      %v1976 = vpop.permute.xlu0 %1975
      %1977 = vrot.lane.b32.xlu0 %v1793, 20
      %v1978 = vpop.permute.xlu0 %1977
      %1979 = vrot.lane.b32.xlu0 %v1798, 20
      %v1980 = vpop.permute.xlu0 %1979
      %1981 = vrot.lane.b32.xlu0 %v1803, 20
      %v1982 = vpop.permute.xlu0 %1981
      %1983 = vrot.lane.b32.xlu0 %v1808, 20
      %v1984 = vpop.permute.xlu0 %1983
      %1985 = vrot.lane.b32.xlu0 %v1813, 20
      %v1986 = vpop.permute.xlu0 %1985
      %1987 = vrot.lane.b32.xlu0 %v1818, 20
      %v1988 = vpop.permute.xlu0 %1987
      %1989 = vrot.lane.b32.xlu0 %v1823, 20
      %v1990 = vpop.permute.xlu0 %1989
      %1991 = vrot.lane.b32.xlu0 %v1828, 20
      %v1992 = vpop.permute.xlu0 %1991
      %1993 = vrot.lane.b32.xlu0 %v1833, 20
      %v1994 = vpop.permute.xlu0 %1993
      %1995 = vrot.lane.b32.xlu0 %v1838, 20
      %v1996 = vpop.permute.xlu0 %1995
      %1997 = vrot.lane.b32.xlu0 %v1843, 20
      %v1998 = vpop.permute.xlu0 %1997
      %1999 = vrot.lane.b32.xlu0 %v1848, 20
      %v2000 = vpop.permute.xlu0 %1999
      %2001 = vrot.lane.b32.xlu0 %v1853, 20
      %v2002 = vpop.permute.xlu0 %2001
      %2003 = vrot.lane.b32.xlu0 %v1858, 20
      %v2004 = vpop.permute.xlu0 %2003
      %2005 = vrot.lane.b32.xlu0 %v1863, 20
      %v2006 = vpop.permute.xlu0 %2005
      %2007 = vrot.lane.b32.xlu0 %v1868, 20
      %v2008 = vpop.permute.xlu0 %2007
      %2009 = vrot.lane.b32.xlu0 %v1873, 20
      %v2010 = vpop.permute.xlu0 %2009
      %2011 = vrot.lane.b32.xlu0 %v1878, 20
      %v2012 = vpop.permute.xlu0 %2011
      %2013 = vrot.lane.b32.xlu0 %v1883, 20
      %v2014 = vpop.permute.xlu0 %2013
      %2015 = vrot.lane.b32.xlu0 %v1888, 20
      %v2016 = vpop.permute.xlu0 %2015
      %2017 = vrot.lane.b32.xlu0 %v1893, 20
      %v2018 = vpop.permute.xlu0 %2017
      %2019 = vrot.lane.b32.xlu0 %v1898, 20
      %v2020 = vpop.permute.xlu0 %2019
      %2021 = vrot.lane.b32.xlu0 %v1903, 20
      %v2022 = vpop.permute.xlu0 %2021
      %2023 = vrot.lane.b32.xlu0 %v1908, 20
      %v2024 = vpop.permute.xlu0 %2023
      %2025 = vrot.lane.b32.xlu0 %v1913, 20
      %v2026 = vpop.permute.xlu0 %2025
      %2027 = vrot.lane.b32.xlu0 %v1918, 20
      %v2028 = vpop.permute.xlu0 %2027
      %2029 = vrot.lane.b32.xlu0 %v1923, 20
      %v2030 = vpop.permute.xlu0 %2029
      %2031 = vrot.lane.b32.xlu0 %v1928, 20
      %v2032 = vpop.permute.xlu0 %2031
      %2033 = vrot.lane.b32.xlu0 %v1933, 20
      %v2034 = vpop.permute.xlu0 %2033
      %2035 = vrot.lane.b32.xlu0 %v1938, 20
      %v2036 = vpop.permute.xlu0 %2035
      %2037 = vrot.lane.b32.xlu0 %v1943, 20
      %v2038 = vpop.permute.xlu0 %2037
      %2039 = vrot.lane.b32.xlu0 %v1948, 20
      %v2040 = vpop.permute.xlu0 %2039
      %2041 = vrot.lane.b32.xlu0 %v1953, 20
      %v2042 = vpop.permute.xlu0 %2041
      %2043 = vrot.lane.b32.xlu0 %v1958, 20
      %v2044 = vpop.permute.xlu0 %2043
      %2045 = vrot.lane.b32.xlu0 %v1963, 20
      %v2046 = vpop.permute.xlu0 %2045
      %2047 = vrot.lane.b32.xlu0 %v1966, 20
      %v2048 = vpop.permute.xlu0 %2047
      %vm2090 = vcmask 191648
      %2091 = vst.msk [vmem:[#allocation2] sm:$0xf] %vm2090, %v1968
      %2092 = vst.msk [vmem:[#allocation2 + $0x4] sm:$0xf] %vm2090, %v1970
      %2093 = vst.msk [vmem:[#allocation2 + $0x8] sm:$0xf] %vm2090, %v1972
      %2094 = vst.msk [vmem:[#allocation2 + $0xc] sm:$0xf] %vm2090, %v1974
      %2095 = vst.msk [vmem:[#allocation2 + $0x10] sm:$0xf] %vm2090, %v1976
      %2096 = vst.msk [vmem:[#allocation2 + $0x14] sm:$0xf] %vm2090, %v1978
      %2097 = vst.msk [vmem:[#allocation2 + $0x18] sm:$0xf] %vm2090, %v1980
      %2098 = vst.msk [vmem:[#allocation2 + $0x1c] sm:$0xf] %vm2090, %v1982
      %2099 = vst.msk [vmem:[#allocation2 + $0x20] sm:$0xf] %vm2090, %v1984
      %2100 = vst.msk [vmem:[#allocation2 + $0x24] sm:$0xf] %vm2090, %v1986
      %2101 = vst.msk [vmem:[#allocation2 + $0x28] sm:$0xf] %vm2090, %v1988
      %2102 = vst.msk [vmem:[#allocation2 + $0x2c] sm:$0xf] %vm2090, %v1990
      %2103 = vst.msk [vmem:[#allocation2 + $0x30] sm:$0xf] %vm2090, %v1992
      %2104 = vst.msk [vmem:[#allocation2 + $0x34] sm:$0xf] %vm2090, %v1994
      %2105 = vst.msk [vmem:[#allocation2 + $0x38] sm:$0xf] %vm2090, %v1996
      %2106 = vst.msk [vmem:[#allocation2 + $0x3c] sm:$0xf] %vm2090, %v1998
      %2107 = vst.msk [vmem:[#allocation2 + $0x40] sm:$0xf] %vm2090, %v2000
      %2108 = vst.msk [vmem:[#allocation2 + $0x44] sm:$0xf] %vm2090, %v2002
      %2109 = vst.msk [vmem:[#allocation2 + $0x48] sm:$0xf] %vm2090, %v2004
      %2110 = vst.msk [vmem:[#allocation2 + $0x4c] sm:$0xf] %vm2090, %v2006
      %2111 = vst.msk [vmem:[#allocation2 + $0x50] sm:$0xf] %vm2090, %v2008
      %2112 = vst.msk [vmem:[#allocation2 + $0x54] sm:$0xf] %vm2090, %v2010
      %2113 = vst.msk [vmem:[#allocation2 + $0x58] sm:$0xf] %vm2090, %v2012
      %2114 = vst.msk [vmem:[#allocation2 + $0x5c] sm:$0xf] %vm2090, %v2014
      %2115 = vst.msk [vmem:[#allocation2 + $0x60] sm:$0xf] %vm2090, %v2016
      %2116 = vst.msk [vmem:[#allocation2 + $0x64] sm:$0xf] %vm2090, %v2018
      %2117 = vst.msk [vmem:[#allocation2 + $0x68] sm:$0xf] %vm2090, %v2020
      %2118 = vst.msk [vmem:[#allocation2 + $0x6c] sm:$0xf] %vm2090, %v2022
      %2119 = vst.msk [vmem:[#allocation2 + $0x70] sm:$0xf] %vm2090, %v2024
      %2120 = vst.msk [vmem:[#allocation2 + $0x74] sm:$0xf] %vm2090, %v2026
      %2121 = vst.msk [vmem:[#allocation2 + $0x78] sm:$0xf] %vm2090, %v2028
      %2122 = vst.msk [vmem:[#allocation2 + $0x7c] sm:$0xf] %vm2090, %v2030
      %2123 = vst.msk [vmem:[#allocation2 + $0x80] sm:$0xf] %vm2090, %v2032
      %2124 = vst.msk [vmem:[#allocation2 + $0x84] sm:$0xf] %vm2090, %v2034
      %2125 = vst.msk [vmem:[#allocation2 + $0x88] sm:$0xf] %vm2090, %v2036
      %2126 = vst.msk [vmem:[#allocation2 + $0x8c] sm:$0xf] %vm2090, %v2038
      %2127 = vst.msk [vmem:[#allocation2 + $0x90] sm:$0xf] %vm2090, %v2040
      %2128 = vst.msk [vmem:[#allocation2 + $0x94] sm:$0xf] %vm2090, %v2042
      %2129 = vst.msk [vmem:[#allocation2 + $0x98] sm:$0xf] %vm2090, %v2044
      %2130 = vst.msk [vmem:[#allocation2 + $0x9c] sm:$0xf] %vm2090, %v2046
      %vm2131 = vcmask 189600
      %vm2132 = vmand %vm2131, %vm294
      %v2133 = vld [vmem:[#allocation2 + $0xa0] sm:$0x3]
      %v2134 = vsel %vm2132, %v2048, %v2133
      %2135 = vst [vmem:[#allocation2 + $0xa0] sm:$0x3] %v2134
      %2136 = vrot.lane.b32.xlu0 %v1778, 24
      %v2137 = vpop.permute.xlu0 %2136
      %2138 = vrot.lane.b32.xlu0 %v1783, 24
      %v2139 = vpop.permute.xlu0 %2138
      %2140 = vrot.lane.b32.xlu0 %v1788, 24
      %v2141 = vpop.permute.xlu0 %2140
      %2142 = vrot.lane.b32.xlu0 %v1793, 24
      %v2143 = vpop.permute.xlu0 %2142
      %2144 = vrot.lane.b32.xlu0 %v1798, 24
      %v2145 = vpop.permute.xlu0 %2144
      %2146 = vrot.lane.b32.xlu0 %v1803, 24
      %v2147 = vpop.permute.xlu0 %2146
      %2148 = vrot.lane.b32.xlu0 %v1808, 24
      %v2149 = vpop.permute.xlu0 %2148
      %2150 = vrot.lane.b32.xlu0 %v1813, 24
      %v2151 = vpop.permute.xlu0 %2150
      %2152 = vrot.lane.b32.xlu0 %v1818, 24
      %v2153 = vpop.permute.xlu0 %2152
      %2154 = vrot.lane.b32.xlu0 %v1823, 24
      %v2155 = vpop.permute.xlu0 %2154
      %2156 = vrot.lane.b32.xlu0 %v1828, 24
      %v2157 = vpop.permute.xlu0 %2156
      %2158 = vrot.lane.b32.xlu0 %v1833, 24
      %v2159 = vpop.permute.xlu0 %2158
      %2160 = vrot.lane.b32.xlu0 %v1838, 24
      %v2161 = vpop.permute.xlu0 %2160
      %2162 = vrot.lane.b32.xlu0 %v1843, 24
      %v2163 = vpop.permute.xlu0 %2162
      %2164 = vrot.lane.b32.xlu0 %v1848, 24
      %v2165 = vpop.permute.xlu0 %2164
      %2166 = vrot.lane.b32.xlu0 %v1853, 24
      %v2167 = vpop.permute.xlu0 %2166
      %2168 = vrot.lane.b32.xlu0 %v1858, 24
      %v2169 = vpop.permute.xlu0 %2168
      %2170 = vrot.lane.b32.xlu0 %v1863, 24
      %v2171 = vpop.permute.xlu0 %2170
      %2172 = vrot.lane.b32.xlu0 %v1868, 24
      %v2173 = vpop.permute.xlu0 %2172
      %2174 = vrot.lane.b32.xlu0 %v1873, 24
      %v2175 = vpop.permute.xlu0 %2174
      %2176 = vrot.lane.b32.xlu0 %v1878, 24
      %v2177 = vpop.permute.xlu0 %2176
      %2178 = vrot.lane.b32.xlu0 %v1883, 24
      %v2179 = vpop.permute.xlu0 %2178
      %2180 = vrot.lane.b32.xlu0 %v1888, 24
      %v2181 = vpop.permute.xlu0 %2180
      %2182 = vrot.lane.b32.xlu0 %v1893, 24
      %v2183 = vpop.permute.xlu0 %2182
      %2184 = vrot.lane.b32.xlu0 %v1898, 24
      %v2185 = vpop.permute.xlu0 %2184
      %2186 = vrot.lane.b32.xlu0 %v1903, 24
      %v2187 = vpop.permute.xlu0 %2186
      %2188 = vrot.lane.b32.xlu0 %v1908, 24
      %v2189 = vpop.permute.xlu0 %2188
      %2190 = vrot.lane.b32.xlu0 %v1913, 24
      %v2191 = vpop.permute.xlu0 %2190
      %2192 = vrot.lane.b32.xlu0 %v1918, 24
      %v2193 = vpop.permute.xlu0 %2192
      %2194 = vrot.lane.b32.xlu0 %v1923, 24
      %v2195 = vpop.permute.xlu0 %2194
      %2196 = vrot.lane.b32.xlu0 %v1928, 24
      %v2197 = vpop.permute.xlu0 %2196
      %2198 = vrot.lane.b32.xlu0 %v1933, 24
      %v2199 = vpop.permute.xlu0 %2198
      %2200 = vrot.lane.b32.xlu0 %v1938, 24
      %v2201 = vpop.permute.xlu0 %2200
      %2202 = vrot.lane.b32.xlu0 %v1943, 24
      %v2203 = vpop.permute.xlu0 %2202
      %2204 = vrot.lane.b32.xlu0 %v1948, 24
      %v2205 = vpop.permute.xlu0 %2204
      %2206 = vrot.lane.b32.xlu0 %v1953, 24
      %v2207 = vpop.permute.xlu0 %2206
      %2208 = vrot.lane.b32.xlu0 %v1958, 24
      %v2209 = vpop.permute.xlu0 %2208
      %2210 = vrot.lane.b32.xlu0 %v1963, 24
      %v2211 = vpop.permute.xlu0 %2210
      %2212 = vrot.lane.b32.xlu0 %v1966, 24
      %v2213 = vpop.permute.xlu0 %2212
      %vm2253 = vcmask 224448
      %2254 = vst.msk [vmem:[#allocation2] sm:$0xf] %vm2253, %v2137
      %2255 = vst.msk [vmem:[#allocation2 + $0x4] sm:$0xf] %vm2253, %v2139
      %2256 = vst.msk [vmem:[#allocation2 + $0x8] sm:$0xf] %vm2253, %v2141
      %2257 = vst.msk [vmem:[#allocation2 + $0xc] sm:$0xf] %vm2253, %v2143
      %2258 = vst.msk [vmem:[#allocation2 + $0x10] sm:$0xf] %vm2253, %v2145
      %2259 = vst.msk [vmem:[#allocation2 + $0x14] sm:$0xf] %vm2253, %v2147
      %2260 = vst.msk [vmem:[#allocation2 + $0x18] sm:$0xf] %vm2253, %v2149
      %2261 = vst.msk [vmem:[#allocation2 + $0x1c] sm:$0xf] %vm2253, %v2151
      %2262 = vst.msk [vmem:[#allocation2 + $0x20] sm:$0xf] %vm2253, %v2153
      %2263 = vst.msk [vmem:[#allocation2 + $0x24] sm:$0xf] %vm2253, %v2155
      %2264 = vst.msk [vmem:[#allocation2 + $0x28] sm:$0xf] %vm2253, %v2157
      %2265 = vst.msk [vmem:[#allocation2 + $0x2c] sm:$0xf] %vm2253, %v2159
      %2266 = vst.msk [vmem:[#allocation2 + $0x30] sm:$0xf] %vm2253, %v2161
      %2267 = vst.msk [vmem:[#allocation2 + $0x34] sm:$0xf] %vm2253, %v2163
      %2268 = vst.msk [vmem:[#allocation2 + $0x38] sm:$0xf] %vm2253, %v2165
      %2269 = vst.msk [vmem:[#allocation2 + $0x3c] sm:$0xf] %vm2253, %v2167
      %2270 = vst.msk [vmem:[#allocation2 + $0x40] sm:$0xf] %vm2253, %v2169
      %2271 = vst.msk [vmem:[#allocation2 + $0x44] sm:$0xf] %vm2253, %v2171
      %2272 = vst.msk [vmem:[#allocation2 + $0x48] sm:$0xf] %vm2253, %v2173
      %2273 = vst.msk [vmem:[#allocation2 + $0x4c] sm:$0xf] %vm2253, %v2175
      %2274 = vst.msk [vmem:[#allocation2 + $0x50] sm:$0xf] %vm2253, %v2177
      %2275 = vst.msk [vmem:[#allocation2 + $0x54] sm:$0xf] %vm2253, %v2179
      %2276 = vst.msk [vmem:[#allocation2 + $0x58] sm:$0xf] %vm2253, %v2181
      %2277 = vst.msk [vmem:[#allocation2 + $0x5c] sm:$0xf] %vm2253, %v2183
      %2278 = vst.msk [vmem:[#allocation2 + $0x60] sm:$0xf] %vm2253, %v2185
      %2279 = vst.msk [vmem:[#allocation2 + $0x64] sm:$0xf] %vm2253, %v2187
      %2280 = vst.msk [vmem:[#allocation2 + $0x68] sm:$0xf] %vm2253, %v2189
      %2281 = vst.msk [vmem:[#allocation2 + $0x6c] sm:$0xf] %vm2253, %v2191
      %2282 = vst.msk [vmem:[#allocation2 + $0x70] sm:$0xf] %vm2253, %v2193
      %2283 = vst.msk [vmem:[#allocation2 + $0x74] sm:$0xf] %vm2253, %v2195
      %2284 = vst.msk [vmem:[#allocation2 + $0x78] sm:$0xf] %vm2253, %v2197
      %2285 = vst.msk [vmem:[#allocation2 + $0x7c] sm:$0xf] %vm2253, %v2199
      %2286 = vst.msk [vmem:[#allocation2 + $0x80] sm:$0xf] %vm2253, %v2201
      %2287 = vst.msk [vmem:[#allocation2 + $0x84] sm:$0xf] %vm2253, %v2203
      %2288 = vst.msk [vmem:[#allocation2 + $0x88] sm:$0xf] %vm2253, %v2205
      %2289 = vst.msk [vmem:[#allocation2 + $0x8c] sm:$0xf] %vm2253, %v2207
      %2290 = vst.msk [vmem:[#allocation2 + $0x90] sm:$0xf] %vm2253, %v2209
      %2291 = vst.msk [vmem:[#allocation2 + $0x94] sm:$0xf] %vm2253, %v2211
      %vm2292 = vcmask 222400
      %vm2293 = vmand %vm2292, %vm294
      %v2294 = vld [vmem:[#allocation2 + $0x98] sm:$0x3]
      %v2295 = vsel %vm2293, %v2213, %v2294
      %2296 = vst [vmem:[#allocation2 + $0x98] sm:$0x3] %v2295
      %vm2297 = vcmask 1042432
      %vm2298 = vcmask 1046532
      %vm2299 = vmor %vm2297, %vm2298
      %v2300 = vrot.slane %v212, 5
      %v2301 = vrot.slane %v2300, 4
      %v2302 = vrot.slane %v213, 5
      %v2303 = vsel %vm2299, %v2301, %v2302
      %v2304 = vrot.slane %v2302, 4
      %v2305 = vrot.slane %v214, 5
      %v2306 = vsel %vm2299, %v2304, %v2305
      %v2307 = vrot.slane %v2305, 4
      %v2308 = vrot.slane %v215, 5
      %v2309 = vsel %vm2299, %v2307, %v2308
      %v2310 = vrot.slane %v2308, 4
      %v2311 = vrot.slane %v216, 5
      %v2312 = vsel %vm2299, %v2310, %v2311
      %v2313 = vrot.slane %v2311, 4
      %v2314 = vrot.slane %v217, 5
      %v2315 = vsel %vm2299, %v2313, %v2314
      %v2316 = vrot.slane %v2314, 4
      %v2317 = vrot.slane %v218, 5
      %v2318 = vsel %vm2299, %v2316, %v2317
      %v2319 = vrot.slane %v2317, 4
      %v2320 = vrot.slane %v219, 5
      %v2321 = vsel %vm2299, %v2319, %v2320
      %v2322 = vrot.slane %v2320, 4
      %v2323 = vrot.slane %v220, 5
      %v2324 = vsel %vm2299, %v2322, %v2323
      %v2325 = vrot.slane %v2323, 4
      %v2326 = vrot.slane %v221, 5
      %v2327 = vsel %vm2299, %v2325, %v2326
      %v2328 = vrot.slane %v2326, 4
      %v2329 = vrot.slane %v222, 5
      %v2330 = vsel %vm2299, %v2328, %v2329
      %v2331 = vrot.slane %v2329, 4
      %v2332 = vrot.slane %v223, 5
      %v2333 = vsel %vm2299, %v2331, %v2332
      %v2334 = vrot.slane %v2332, 4
      %v2335 = vrot.slane %v224, 5
      %v2336 = vsel %vm2299, %v2334, %v2335
      %v2337 = vrot.slane %v2335, 4
      %v2338 = vrot.slane %v225, 5
      %v2339 = vsel %vm2299, %v2337, %v2338
      %v2340 = vrot.slane %v2338, 4
      %v2341 = vrot.slane %v226, 5
      %v2342 = vsel %vm2299, %v2340, %v2341
      %v2343 = vrot.slane %v2341, 4
      %v2344 = vrot.slane %v227, 5
      %v2345 = vsel %vm2299, %v2343, %v2344
      %v2346 = vrot.slane %v2344, 4
      %v2347 = vrot.slane %v228, 5
      %v2348 = vsel %vm2299, %v2346, %v2347
      %v2349 = vrot.slane %v2347, 4
      %v2350 = vrot.slane %v229, 5
      %v2351 = vsel %vm2299, %v2349, %v2350
      %v2352 = vrot.slane %v2350, 4
      %v2353 = vrot.slane %v230, 5
      %v2354 = vsel %vm2299, %v2352, %v2353
      %v2355 = vrot.slane %v2353, 4
      %v2356 = vrot.slane %v231, 5
      %v2357 = vsel %vm2299, %v2355, %v2356
      %v2358 = vrot.slane %v2356, 4
      %v2359 = vrot.slane %v232, 5
      %v2360 = vsel %vm2299, %v2358, %v2359
      %v2361 = vrot.slane %v2359, 4
      %v2362 = vrot.slane %v233, 5
      %v2363 = vsel %vm2299, %v2361, %v2362
      %v2364 = vrot.slane %v2362, 4
      %v2365 = vrot.slane %v234, 5
      %v2366 = vsel %vm2299, %v2364, %v2365
      %v2367 = vrot.slane %v2365, 4
      %v2368 = vrot.slane %v235, 5
      %v2369 = vsel %vm2299, %v2367, %v2368
      %v2370 = vrot.slane %v2368, 4
      %v2371 = vrot.slane %v236, 5
      %v2372 = vsel %vm2299, %v2370, %v2371
      %v2373 = vrot.slane %v2371, 4
      %v2374 = vrot.slane %v237, 5
      %v2375 = vsel %vm2299, %v2373, %v2374
      %v2376 = vrot.slane %v2374, 4
      %v2377 = vrot.slane %v238, 5
      %v2378 = vsel %vm2299, %v2376, %v2377
      %v2379 = vrot.slane %v2377, 4
      %v2380 = vrot.slane %v239, 5
      %v2381 = vsel %vm2299, %v2379, %v2380
      %v2382 = vrot.slane %v2380, 4
      %v2383 = vrot.slane %v240, 5
      %v2384 = vsel %vm2299, %v2382, %v2383
      %v2385 = vrot.slane %v2383, 4
      %v2386 = vrot.slane %v241, 5
      %v2387 = vsel %vm2299, %v2385, %v2386
      %v2388 = vrot.slane %v2386, 4
      %v2389 = vrot.slane %v242, 5
      %v2390 = vsel %vm2299, %v2388, %v2389
      %v2391 = vrot.slane %v2389, 4
      %v2392 = vrot.slane %v243, 5
      %v2393 = vsel %vm2299, %v2391, %v2392
      %v2394 = vrot.slane %v2392, 4
      %v2395 = vrot.slane %v244, 5
      %v2396 = vsel %vm2299, %v2394, %v2395
      %v2397 = vrot.slane %v2395, 4
      %v2398 = vrot.slane %v245, 5
      %v2399 = vsel %vm2299, %v2397, %v2398
      %v2400 = vrot.slane %v2398, 4
      %v2401 = vrot.slane %v246, 5
      %v2402 = vsel %vm2299, %v2400, %v2401
      %v2403 = vrot.slane %v2401, 4
      %v2404 = vrot.slane %v247, 5
      %v2405 = vsel %vm2299, %v2403, %v2404
      %v2406 = vrot.slane %v2404, 4
      %v2407 = vrot.slane %v248, 5
      %v2408 = vsel %vm2299, %v2406, %v2407
      %v2409 = vrot.slane %v2407, 4
      %v2410 = vrot.slane %v249, 5
      %v2411 = vsel %vm2299, %v2409, %v2410
      %v2412 = vrot.slane %v2410, 4
      %v2413 = vrot.slane %v250, 5
      %v2414 = vsel %vm2299, %v2412, %v2413
      %v2415 = vrot.slane %v2413, 4
      %2416 = vrot.lane.b32.xlu0 %v2303, 28
      %v2417 = vpop.permute.xlu0 %2416
      %2418 = vrot.lane.b32.xlu0 %v2306, 28
      %v2419 = vpop.permute.xlu0 %2418
      %2420 = vrot.lane.b32.xlu0 %v2309, 28
      %v2421 = vpop.permute.xlu0 %2420
      %2422 = vrot.lane.b32.xlu0 %v2312, 28
      %v2423 = vpop.permute.xlu0 %2422
      %2424 = vrot.lane.b32.xlu0 %v2315, 28
      %v2425 = vpop.permute.xlu0 %2424
      %2426 = vrot.lane.b32.xlu0 %v2318, 28
      %v2427 = vpop.permute.xlu0 %2426
      %2428 = vrot.lane.b32.xlu0 %v2321, 28
      %v2429 = vpop.permute.xlu0 %2428
      %2430 = vrot.lane.b32.xlu0 %v2324, 28
      %v2431 = vpop.permute.xlu0 %2430
      %2432 = vrot.lane.b32.xlu0 %v2327, 28
      %v2433 = vpop.permute.xlu0 %2432
      %2434 = vrot.lane.b32.xlu0 %v2330, 28
      %v2435 = vpop.permute.xlu0 %2434
      %2436 = vrot.lane.b32.xlu0 %v2333, 28
      %v2437 = vpop.permute.xlu0 %2436
      %2438 = vrot.lane.b32.xlu0 %v2336, 28
      %v2439 = vpop.permute.xlu0 %2438
      %2440 = vrot.lane.b32.xlu0 %v2339, 28
      %v2441 = vpop.permute.xlu0 %2440
      %2442 = vrot.lane.b32.xlu0 %v2342, 28
      %v2443 = vpop.permute.xlu0 %2442
      %2444 = vrot.lane.b32.xlu0 %v2345, 28
      %v2445 = vpop.permute.xlu0 %2444
      %2446 = vrot.lane.b32.xlu0 %v2348, 28
      %v2447 = vpop.permute.xlu0 %2446
      %2448 = vrot.lane.b32.xlu0 %v2351, 28
      %v2449 = vpop.permute.xlu0 %2448
      %2450 = vrot.lane.b32.xlu0 %v2354, 28
      %v2451 = vpop.permute.xlu0 %2450
      %2452 = vrot.lane.b32.xlu0 %v2357, 28
      %v2453 = vpop.permute.xlu0 %2452
      %2454 = vrot.lane.b32.xlu0 %v2360, 28
      %v2455 = vpop.permute.xlu0 %2454
      %2456 = vrot.lane.b32.xlu0 %v2363, 28
      %v2457 = vpop.permute.xlu0 %2456
      %2458 = vrot.lane.b32.xlu0 %v2366, 28
      %v2459 = vpop.permute.xlu0 %2458
      %2460 = vrot.lane.b32.xlu0 %v2369, 28
      %v2461 = vpop.permute.xlu0 %2460
      %2462 = vrot.lane.b32.xlu0 %v2372, 28
      %v2463 = vpop.permute.xlu0 %2462
      %2464 = vrot.lane.b32.xlu0 %v2375, 28
      %v2465 = vpop.permute.xlu0 %2464
      %2466 = vrot.lane.b32.xlu0 %v2378, 28
      %v2467 = vpop.permute.xlu0 %2466
      %2468 = vrot.lane.b32.xlu0 %v2381, 28
      %v2469 = vpop.permute.xlu0 %2468
      %2470 = vrot.lane.b32.xlu0 %v2384, 28
      %v2471 = vpop.permute.xlu0 %2470
      %2472 = vrot.lane.b32.xlu0 %v2387, 28
      %v2473 = vpop.permute.xlu0 %2472
      %2474 = vrot.lane.b32.xlu0 %v2390, 28
      %v2475 = vpop.permute.xlu0 %2474
      %2476 = vrot.lane.b32.xlu0 %v2393, 28
      %v2477 = vpop.permute.xlu0 %2476
      %2478 = vrot.lane.b32.xlu0 %v2396, 28
      %v2479 = vpop.permute.xlu0 %2478
      %2480 = vrot.lane.b32.xlu0 %v2399, 28
      %v2481 = vpop.permute.xlu0 %2480
      %2482 = vrot.lane.b32.xlu0 %v2402, 28
      %v2483 = vpop.permute.xlu0 %2482
      %2484 = vrot.lane.b32.xlu0 %v2405, 28
      %v2485 = vpop.permute.xlu0 %2484
      %2486 = vrot.lane.b32.xlu0 %v2408, 28
      %v2487 = vpop.permute.xlu0 %2486
      %2488 = vrot.lane.b32.xlu0 %v2411, 28
      %v2489 = vpop.permute.xlu0 %2488
      %2490 = vrot.lane.b32.xlu0 %v2414, 28
      %v2491 = vpop.permute.xlu0 %2490
      %2492 = vrot.lane.b32.xlu0 %v2415, 28
      %v2493 = vpop.permute.xlu0 %2492
      %vm2533 = vcmask 257248
      %2534 = vst.msk [vmem:[#allocation2] sm:$0xf] %vm2533, %v2417
      %2535 = vst.msk [vmem:[#allocation2 + $0x4] sm:$0xf] %vm2533, %v2419
      %2536 = vst.msk [vmem:[#allocation2 + $0x8] sm:$0xf] %vm2533, %v2421
      %2537 = vst.msk [vmem:[#allocation2 + $0xc] sm:$0xf] %vm2533, %v2423
      %2538 = vst.msk [vmem:[#allocation2 + $0x10] sm:$0xf] %vm2533, %v2425
      %2539 = vst.msk [vmem:[#allocation2 + $0x14] sm:$0xf] %vm2533, %v2427
      %2540 = vst.msk [vmem:[#allocation2 + $0x18] sm:$0xf] %vm2533, %v2429
      %2541 = vst.msk [vmem:[#allocation2 + $0x1c] sm:$0xf] %vm2533, %v2431
      %2542 = vst.msk [vmem:[#allocation2 + $0x20] sm:$0xf] %vm2533, %v2433
      %2543 = vst.msk [vmem:[#allocation2 + $0x24] sm:$0xf] %vm2533, %v2435
      %2544 = vst.msk [vmem:[#allocation2 + $0x28] sm:$0xf] %vm2533, %v2437
      %2545 = vst.msk [vmem:[#allocation2 + $0x2c] sm:$0xf] %vm2533, %v2439
      %2546 = vst.msk [vmem:[#allocation2 + $0x30] sm:$0xf] %vm2533, %v2441
      %2547 = vst.msk [vmem:[#allocation2 + $0x34] sm:$0xf] %vm2533, %v2443
      %2548 = vst.msk [vmem:[#allocation2 + $0x38] sm:$0xf] %vm2533, %v2445
      %2549 = vst.msk [vmem:[#allocation2 + $0x3c] sm:$0xf] %vm2533, %v2447
      %2550 = vst.msk [vmem:[#allocation2 + $0x40] sm:$0xf] %vm2533, %v2449
      %2551 = vst.msk [vmem:[#allocation2 + $0x44] sm:$0xf] %vm2533, %v2451
      %2552 = vst.msk [vmem:[#allocation2 + $0x48] sm:$0xf] %vm2533, %v2453
      %2553 = vst.msk [vmem:[#allocation2 + $0x4c] sm:$0xf] %vm2533, %v2455
      %2554 = vst.msk [vmem:[#allocation2 + $0x50] sm:$0xf] %vm2533, %v2457
      %2555 = vst.msk [vmem:[#allocation2 + $0x54] sm:$0xf] %vm2533, %v2459
      %2556 = vst.msk [vmem:[#allocation2 + $0x58] sm:$0xf] %vm2533, %v2461
      %2557 = vst.msk [vmem:[#allocation2 + $0x5c] sm:$0xf] %vm2533, %v2463
      %2558 = vst.msk [vmem:[#allocation2 + $0x60] sm:$0xf] %vm2533, %v2465
      %2559 = vst.msk [vmem:[#allocation2 + $0x64] sm:$0xf] %vm2533, %v2467
      %2560 = vst.msk [vmem:[#allocation2 + $0x68] sm:$0xf] %vm2533, %v2469
      %2561 = vst.msk [vmem:[#allocation2 + $0x6c] sm:$0xf] %vm2533, %v2471
      %2562 = vst.msk [vmem:[#allocation2 + $0x70] sm:$0xf] %vm2533, %v2473
      %2563 = vst.msk [vmem:[#allocation2 + $0x74] sm:$0xf] %vm2533, %v2475
      %2564 = vst.msk [vmem:[#allocation2 + $0x78] sm:$0xf] %vm2533, %v2477
      %2565 = vst.msk [vmem:[#allocation2 + $0x7c] sm:$0xf] %vm2533, %v2479
      %2566 = vst.msk [vmem:[#allocation2 + $0x80] sm:$0xf] %vm2533, %v2481
      %2567 = vst.msk [vmem:[#allocation2 + $0x84] sm:$0xf] %vm2533, %v2483
      %2568 = vst.msk [vmem:[#allocation2 + $0x88] sm:$0xf] %vm2533, %v2485
      %2569 = vst.msk [vmem:[#allocation2 + $0x8c] sm:$0xf] %vm2533, %v2487
      %2570 = vst.msk [vmem:[#allocation2 + $0x90] sm:$0xf] %vm2533, %v2489
      %2571 = vst.msk [vmem:[#allocation2 + $0x94] sm:$0xf] %vm2533, %v2491
      %vm2572 = vcmask 254176
      %2573 = vst.msk [vmem:[#allocation2 + $0x98] sm:$0x1] %vm2572, %v2493
      %vm2574 = vsmask.f32 2304
      %vm2575 = vsmask.f32 6416
      %vm2576 = vmor %vm2574, %vm2575
      %v2577 = vrot.slane %v317, 5
      %v2578 = vrot.slane %v320, 6
      %v2579 = vor.u32 %v2577, %v2578
      %v2580 = vrot.slane %v2579, 4
      %v2581 = vrot.slane %v327, 5
      %v2582 = vrot.slane %v330, 6
      %v2583 = vor.u32 %v2581, %v2582
      %v2584 = vsel %vm2576, %v2580, %v2583
      %v2585 = vrot.slane %v2583, 4
      %v2586 = vrot.slane %v337, 5
      %v2587 = vrot.slane %v340, 6
      %v2588 = vor.u32 %v2586, %v2587
      %v2589 = vsel %vm2576, %v2585, %v2588
      %v2590 = vrot.slane %v2588, 4
      %v2591 = vrot.slane %v347, 5
      %v2592 = vrot.slane %v350, 6
      %v2593 = vor.u32 %v2591, %v2592
      %v2594 = vsel %vm2576, %v2590, %v2593
      %v2595 = vrot.slane %v2593, 4
      %v2596 = vrot.slane %v357, 5
      %v2597 = vrot.slane %v360, 6
      %v2598 = vor.u32 %v2596, %v2597
      %v2599 = vsel %vm2576, %v2595, %v2598
      %v2600 = vrot.slane %v2598, 4
      %v2601 = vrot.slane %v367, 5
      %v2602 = vrot.slane %v370, 6
      %v2603 = vor.u32 %v2601, %v2602
      %v2604 = vsel %vm2576, %v2600, %v2603
      %v2605 = vrot.slane %v2603, 4
      %v2606 = vrot.slane %v377, 5
      %v2607 = vrot.slane %v380, 6
      %v2608 = vor.u32 %v2606, %v2607
      %v2609 = vsel %vm2576, %v2605, %v2608
      %v2610 = vrot.slane %v2608, 4
      %v2611 = vrot.slane %v387, 5
      %v2612 = vrot.slane %v390, 6
      %v2613 = vor.u32 %v2611, %v2612
      %v2614 = vsel %vm2576, %v2610, %v2613
      %v2615 = vrot.slane %v2613, 4
      %v2616 = vrot.slane %v397, 5
      %v2617 = vrot.slane %v400, 6
      %v2618 = vor.u32 %v2616, %v2617
      %v2619 = vsel %vm2576, %v2615, %v2618
      %v2620 = vrot.slane %v2618, 4
      %v2621 = vrot.slane %v407, 5
      %v2622 = vrot.slane %v410, 6
      %v2623 = vor.u32 %v2621, %v2622
      %v2624 = vsel %vm2576, %v2620, %v2623
      %v2625 = vrot.slane %v2623, 4
      %v2626 = vrot.slane %v417, 5
      %v2627 = vrot.slane %v420, 6
      %v2628 = vor.u32 %v2626, %v2627
      %v2629 = vsel %vm2576, %v2625, %v2628
      %v2630 = vrot.slane %v2628, 4
      %v2631 = vrot.slane %v427, 5
      %v2632 = vrot.slane %v430, 6
      %v2633 = vor.u32 %v2631, %v2632
      %v2634 = vsel %vm2576, %v2630, %v2633
      %v2635 = vrot.slane %v2633, 4
      %v2636 = vrot.slane %v437, 5
      %v2637 = vrot.slane %v440, 6
      %v2638 = vor.u32 %v2636, %v2637
      %v2639 = vsel %vm2576, %v2635, %v2638
      %v2640 = vrot.slane %v2638, 4
      %v2641 = vrot.slane %v447, 5
      %v2642 = vrot.slane %v450, 6
      %v2643 = vor.u32 %v2641, %v2642
      %v2644 = vsel %vm2576, %v2640, %v2643
      %v2645 = vrot.slane %v2643, 4
      %v2646 = vrot.slane %v457, 5
      %v2647 = vrot.slane %v460, 6
      %v2648 = vor.u32 %v2646, %v2647
      %v2649 = vsel %vm2576, %v2645, %v2648
      %v2650 = vrot.slane %v2648, 4
      %v2651 = vrot.slane %v467, 5
      %v2652 = vrot.slane %v470, 6
      %v2653 = vor.u32 %v2651, %v2652
      %v2654 = vsel %vm2576, %v2650, %v2653
      %v2655 = vrot.slane %v2653, 4
      %v2656 = vrot.slane %v477, 5
      %v2657 = vrot.slane %v480, 6
      %v2658 = vor.u32 %v2656, %v2657
      %v2659 = vsel %vm2576, %v2655, %v2658
      %v2660 = vrot.slane %v2658, 4
      %v2661 = vrot.slane %v487, 5
      %v2662 = vrot.slane %v490, 6
      %v2663 = vor.u32 %v2661, %v2662
      %v2664 = vsel %vm2576, %v2660, %v2663
      %v2665 = vrot.slane %v2663, 4
      %v2666 = vrot.slane %v497, 5
      %v2667 = vrot.slane %v500, 6
      %v2668 = vor.u32 %v2666, %v2667
      %v2669 = vsel %vm2576, %v2665, %v2668
      %v2670 = vrot.slane %v2668, 4
      %v2671 = vrot.slane %v507, 5
      %v2672 = vrot.slane %v510, 6
      %v2673 = vor.u32 %v2671, %v2672
      %v2674 = vsel %vm2576, %v2670, %v2673
      %v2675 = vrot.slane %v2673, 4
      %v2676 = vrot.slane %v517, 5
      %v2677 = vrot.slane %v520, 6
      %v2678 = vor.u32 %v2676, %v2677
      %v2679 = vsel %vm2576, %v2675, %v2678
      %v2680 = vrot.slane %v2678, 4
      %v2681 = vrot.slane %v527, 5
      %v2682 = vrot.slane %v530, 6
      %v2683 = vor.u32 %v2681, %v2682
      %v2684 = vsel %vm2576, %v2680, %v2683
      %v2685 = vrot.slane %v2683, 4
      %v2686 = vrot.slane %v537, 5
      %v2687 = vrot.slane %v540, 6
      %v2688 = vor.u32 %v2686, %v2687
      %v2689 = vsel %vm2576, %v2685, %v2688
      %v2690 = vrot.slane %v2688, 4
      %v2691 = vrot.slane %v547, 5
      %v2692 = vrot.slane %v550, 6
      %v2693 = vor.u32 %v2691, %v2692
      %v2694 = vsel %vm2576, %v2690, %v2693
      %v2695 = vrot.slane %v2693, 4
      %v2696 = vrot.slane %v557, 5
      %v2697 = vrot.slane %v560, 6
      %v2698 = vor.u32 %v2696, %v2697
      %v2699 = vsel %vm2576, %v2695, %v2698
      %v2700 = vrot.slane %v2698, 4
      %v2701 = vrot.slane %v567, 5
      %v2702 = vrot.slane %v570, 6
      %v2703 = vor.u32 %v2701, %v2702
      %v2704 = vsel %vm2576, %v2700, %v2703
      %v2705 = vrot.slane %v2703, 4
      %v2706 = vrot.slane %v577, 5
      %v2707 = vrot.slane %v580, 6
      %v2708 = vor.u32 %v2706, %v2707
      %v2709 = vsel %vm2576, %v2705, %v2708
      %v2710 = vrot.slane %v2708, 4
      %v2711 = vrot.slane %v587, 5
      %v2712 = vrot.slane %v590, 6
      %v2713 = vor.u32 %v2711, %v2712
      %v2714 = vsel %vm2576, %v2710, %v2713
      %v2715 = vrot.slane %v2713, 4
      %v2716 = vrot.slane %v597, 5
      %v2717 = vrot.slane %v600, 6
      %v2718 = vor.u32 %v2716, %v2717
      %v2719 = vsel %vm2576, %v2715, %v2718
      %v2720 = vrot.slane %v2718, 4
      %v2721 = vrot.slane %v607, 5
      %v2722 = vrot.slane %v610, 6
      %v2723 = vor.u32 %v2721, %v2722
      %v2724 = vsel %vm2576, %v2720, %v2723
      %v2725 = vrot.slane %v2723, 4
      %v2726 = vrot.slane %v617, 5
      %v2727 = vrot.slane %v620, 6
      %v2728 = vor.u32 %v2726, %v2727
      %v2729 = vsel %vm2576, %v2725, %v2728
      %v2730 = vrot.slane %v2728, 4
      %v2731 = vrot.slane %v627, 5
      %v2732 = vrot.slane %v630, 6
      %v2733 = vor.u32 %v2731, %v2732
      %v2734 = vsel %vm2576, %v2730, %v2733
      %v2735 = vrot.slane %v2733, 4
      %v2736 = vrot.slane %v637, 5
      %v2737 = vrot.slane %v640, 6
      %v2738 = vor.u32 %v2736, %v2737
      %v2739 = vsel %vm2576, %v2735, %v2738
      %v2740 = vrot.slane %v2738, 4
      %v2741 = vrot.slane %v647, 5
      %v2742 = vrot.slane %v650, 6
      %v2743 = vor.u32 %v2741, %v2742
      %v2744 = vsel %vm2576, %v2740, %v2743
      %v2745 = vrot.slane %v2743, 4
      %v2746 = vrot.slane %v657, 5
      %v2747 = vrot.slane %v660, 6
      %v2748 = vor.u32 %v2746, %v2747
      %v2749 = vsel %vm2576, %v2745, %v2748
      %v2750 = vrot.slane %v2748, 4
      %v2751 = vrot.slane %v667, 5
      %v2752 = vrot.slane %v670, 6
      %v2753 = vor.u32 %v2751, %v2752
      %v2754 = vsel %vm2576, %v2750, %v2753
      %v2755 = vrot.slane %v2753, 4
      %v2756 = vrot.slane %v1236, 5
      %v2757 = vrot.slane %v677, 6
      %v2758 = vor.u32 %v2756, %v2757
      %v2759 = vsel %vm2576, %v2755, %v2758
      %v2760 = vrot.slane %v2758, 4
      %v2761 = vrot.slane %v1406, 5
      %v2762 = vrot.slane %v1409, 6
      %v2763 = vor.u32 %v2761, %v2762
      %v2764 = vsel %vm2576, %v2760, %v2763
      %v2765 = vrot.slane %v2763, 4
      %v2766 = vrot.slane %v1415, 5
      %v2767 = vrot.slane %v1418, 6
      %v2768 = vor.u32 %v2766, %v2767
      %v2769 = vsel %vm2576, %v2765, %v2768
      %v2770 = vrot.slane %v2766, 4
      %2771 = vrot.lane.b32.xlu0 %v2584, 32
      %v2772 = vpop.permute.xlu0 %2771
      %2773 = vrot.lane.b32.xlu0 %v2589, 32
      %v2774 = vpop.permute.xlu0 %2773
      %2775 = vrot.lane.b32.xlu0 %v2594, 32
      %v2776 = vpop.permute.xlu0 %2775
      %2777 = vrot.lane.b32.xlu0 %v2599, 32
      %v2778 = vpop.permute.xlu0 %2777
      %2779 = vrot.lane.b32.xlu0 %v2604, 32
      %v2780 = vpop.permute.xlu0 %2779
      %2781 = vrot.lane.b32.xlu0 %v2609, 32
      %v2782 = vpop.permute.xlu0 %2781
      %2783 = vrot.lane.b32.xlu0 %v2614, 32
      %v2784 = vpop.permute.xlu0 %2783
      %2785 = vrot.lane.b32.xlu0 %v2619, 32
      %v2786 = vpop.permute.xlu0 %2785
      %2787 = vrot.lane.b32.xlu0 %v2624, 32
      %v2788 = vpop.permute.xlu0 %2787
      %2789 = vrot.lane.b32.xlu0 %v2629, 32
      %v2790 = vpop.permute.xlu0 %2789
      %2791 = vrot.lane.b32.xlu0 %v2634, 32
      %v2792 = vpop.permute.xlu0 %2791
      %2793 = vrot.lane.b32.xlu0 %v2639, 32
      %v2794 = vpop.permute.xlu0 %2793
      %2795 = vrot.lane.b32.xlu0 %v2644, 32
      %v2796 = vpop.permute.xlu0 %2795
      %2797 = vrot.lane.b32.xlu0 %v2649, 32
      %v2798 = vpop.permute.xlu0 %2797
      %2799 = vrot.lane.b32.xlu0 %v2654, 32
      %v2800 = vpop.permute.xlu0 %2799
      %2801 = vrot.lane.b32.xlu0 %v2659, 32
      %v2802 = vpop.permute.xlu0 %2801
      %2803 = vrot.lane.b32.xlu0 %v2664, 32
      %v2804 = vpop.permute.xlu0 %2803
      %2805 = vrot.lane.b32.xlu0 %v2669, 32
      %v2806 = vpop.permute.xlu0 %2805
      %2807 = vrot.lane.b32.xlu0 %v2674, 32
      %v2808 = vpop.permute.xlu0 %2807
      %2809 = vrot.lane.b32.xlu0 %v2679, 32
      %v2810 = vpop.permute.xlu0 %2809
      %2811 = vrot.lane.b32.xlu0 %v2684, 32
      %v2812 = vpop.permute.xlu0 %2811
      %2813 = vrot.lane.b32.xlu0 %v2689, 32
      %v2814 = vpop.permute.xlu0 %2813
      %2815 = vrot.lane.b32.xlu0 %v2694, 32
      %v2816 = vpop.permute.xlu0 %2815
      %2817 = vrot.lane.b32.xlu0 %v2699, 32
      %v2818 = vpop.permute.xlu0 %2817
      %2819 = vrot.lane.b32.xlu0 %v2704, 32
      %v2820 = vpop.permute.xlu0 %2819
      %2821 = vrot.lane.b32.xlu0 %v2709, 32
      %v2822 = vpop.permute.xlu0 %2821
      %2823 = vrot.lane.b32.xlu0 %v2714, 32
      %v2824 = vpop.permute.xlu0 %2823
      %2825 = vrot.lane.b32.xlu0 %v2719, 32
      %v2826 = vpop.permute.xlu0 %2825
      %2827 = vrot.lane.b32.xlu0 %v2724, 32
      %v2828 = vpop.permute.xlu0 %2827
      %2829 = vrot.lane.b32.xlu0 %v2729, 32
      %v2830 = vpop.permute.xlu0 %2829
      %2831 = vrot.lane.b32.xlu0 %v2734, 32
      %v2832 = vpop.permute.xlu0 %2831
      %2833 = vrot.lane.b32.xlu0 %v2739, 32
      %v2834 = vpop.permute.xlu0 %2833
      %2835 = vrot.lane.b32.xlu0 %v2744, 32
      %v2836 = vpop.permute.xlu0 %2835
      %2837 = vrot.lane.b32.xlu0 %v2749, 32
      %v2838 = vpop.permute.xlu0 %2837
      %2839 = vrot.lane.b32.xlu0 %v2754, 32
      %v2840 = vpop.permute.xlu0 %2839
      %2841 = vrot.lane.b32.xlu0 %v2759, 32
      %v2842 = vpop.permute.xlu0 %2841
      %2843 = vrot.lane.b32.xlu0 %v2764, 32
      %v2844 = vpop.permute.xlu0 %2843
      %2845 = vrot.lane.b32.xlu0 %v2769, 32
      %v2846 = vpop.permute.xlu0 %2845
      %2847 = vrot.lane.b32.xlu0 %v2770, 32
      %v2848 = vpop.permute.xlu0 %2847
      %vm2888 = vcmask 290048
      %2889 = vst.msk [vmem:[#allocation2] sm:$0xf] %vm2888, %v2772
      %2890 = vst.msk [vmem:[#allocation2 + $0x4] sm:$0xf] %vm2888, %v2774
      %2891 = vst.msk [vmem:[#allocation2 + $0x8] sm:$0xf] %vm2888, %v2776
      %2892 = vst.msk [vmem:[#allocation2 + $0xc] sm:$0xf] %vm2888, %v2778
      %2893 = vst.msk [vmem:[#allocation2 + $0x10] sm:$0xf] %vm2888, %v2780
      %2894 = vst.msk [vmem:[#allocation2 + $0x14] sm:$0xf] %vm2888, %v2782
      %2895 = vst.msk [vmem:[#allocation2 + $0x18] sm:$0xf] %vm2888, %v2784
      %2896 = vst.msk [vmem:[#allocation2 + $0x1c] sm:$0xf] %vm2888, %v2786
      %2897 = vst.msk [vmem:[#allocation2 + $0x20] sm:$0xf] %vm2888, %v2788
      %2898 = vst.msk [vmem:[#allocation2 + $0x24] sm:$0xf] %vm2888, %v2790
      %2899 = vst.msk [vmem:[#allocation2 + $0x28] sm:$0xf] %vm2888, %v2792
      %2900 = vst.msk [vmem:[#allocation2 + $0x2c] sm:$0xf] %vm2888, %v2794
      %2901 = vst.msk [vmem:[#allocation2 + $0x30] sm:$0xf] %vm2888, %v2796
      %2902 = vst.msk [vmem:[#allocation2 + $0x34] sm:$0xf] %vm2888, %v2798
      %2903 = vst.msk [vmem:[#allocation2 + $0x38] sm:$0xf] %vm2888, %v2800
      %2904 = vst.msk [vmem:[#allocation2 + $0x3c] sm:$0xf] %vm2888, %v2802
      %2905 = vst.msk [vmem:[#allocation2 + $0x40] sm:$0xf] %vm2888, %v2804
      %2906 = vst.msk [vmem:[#allocation2 + $0x44] sm:$0xf] %vm2888, %v2806
      %2907 = vst.msk [vmem:[#allocation2 + $0x48] sm:$0xf] %vm2888, %v2808
      %2908 = vst.msk [vmem:[#allocation2 + $0x4c] sm:$0xf] %vm2888, %v2810
      %2909 = vst.msk [vmem:[#allocation2 + $0x50] sm:$0xf] %vm2888, %v2812
      %2910 = vst.msk [vmem:[#allocation2 + $0x54] sm:$0xf] %vm2888, %v2814
      %2911 = vst.msk [vmem:[#allocation2 + $0x58] sm:$0xf] %vm2888, %v2816
      %2912 = vst.msk [vmem:[#allocation2 + $0x5c] sm:$0xf] %vm2888, %v2818
      %2913 = vst.msk [vmem:[#allocation2 + $0x60] sm:$0xf] %vm2888, %v2820
      %2914 = vst.msk [vmem:[#allocation2 + $0x64] sm:$0xf] %vm2888, %v2822
      %2915 = vst.msk [vmem:[#allocation2 + $0x68] sm:$0xf] %vm2888, %v2824
      %2916 = vst.msk [vmem:[#allocation2 + $0x6c] sm:$0xf] %vm2888, %v2826
      %2917 = vst.msk [vmem:[#allocation2 + $0x70] sm:$0xf] %vm2888, %v2828
      %2918 = vst.msk [vmem:[#allocation2 + $0x74] sm:$0xf] %vm2888, %v2830
      %2919 = vst.msk [vmem:[#allocation2 + $0x78] sm:$0xf] %vm2888, %v2832
      %2920 = vst.msk [vmem:[#allocation2 + $0x7c] sm:$0xf] %vm2888, %v2834
      %2921 = vst.msk [vmem:[#allocation2 + $0x80] sm:$0xf] %vm2888, %v2836
      %2922 = vst.msk [vmem:[#allocation2 + $0x84] sm:$0xf] %vm2888, %v2838
      %2923 = vst.msk [vmem:[#allocation2 + $0x88] sm:$0xf] %vm2888, %v2840
      %2924 = vst.msk [vmem:[#allocation2 + $0x8c] sm:$0xf] %vm2888, %v2842
      %2925 = vst.msk [vmem:[#allocation2 + $0x90] sm:$0xf] %vm2888, %v2844
      %2926 = vst.msk [vmem:[#allocation2 + $0x94] sm:$0xf] %vm2888, %v2846
      %vm2927 = vcmask 286976
      %vm2928 = vmand %vm2927, %vm1082
      %v2929 = vld [vmem:[#allocation2 + $0x98] sm:$0x1]
      %v2930 = vsel %vm2928, %v2848, %v2929
      %2931 = vst [vmem:[#allocation2 + $0x98] sm:$0x1] %v2930
      %v2932 = vld [vmem:[#allocation2] sm:$0xf]
      %v2933 = vld [vmem:[#allocation2 + $0x4] sm:$0xf]
      %v2934 = vld [vmem:[#allocation2 + $0x8] sm:$0xf]
      %v2935 = vld [vmem:[#allocation2 + $0xc] sm:$0xf]
      %v2936 = vld [vmem:[#allocation2 + $0x10] sm:$0xf]
      %v2937 = vld [vmem:[#allocation2 + $0x14] sm:$0xf]
      %v2938 = vld [vmem:[#allocation2 + $0x18] sm:$0xf]
      %v2939 = vld [vmem:[#allocation2 + $0x1c] sm:$0xf]
      %v2940 = vld [vmem:[#allocation2 + $0x20] sm:$0xf]
      %v2941 = vld [vmem:[#allocation2 + $0x24] sm:$0xf]
      %v2942 = vld [vmem:[#allocation2 + $0x28] sm:$0xf]
      %v2943 = vld [vmem:[#allocation2 + $0x2c] sm:$0xf]
      %v2944 = vld [vmem:[#allocation2 + $0x30] sm:$0xf]
      %v2945 = vld [vmem:[#allocation2 + $0x34] sm:$0xf]
      %v2946 = vld [vmem:[#allocation2 + $0x38] sm:$0xf]
      %v2947 = vld [vmem:[#allocation2 + $0x3c] sm:$0xf]
      %v2948 = vld [vmem:[#allocation2 + $0x40] sm:$0xf]
      %v2949 = vld [vmem:[#allocation2 + $0x44] sm:$0xf]
      %v2950 = vld [vmem:[#allocation2 + $0x48] sm:$0xf]
      %v2951 = vld [vmem:[#allocation2 + $0x4c] sm:$0xf]
      %v2952 = vld [vmem:[#allocation2 + $0x50] sm:$0xf]
      %v2953 = vld [vmem:[#allocation2 + $0x54] sm:$0xf]
      %v2954 = vld [vmem:[#allocation2 + $0x58] sm:$0xf]
      %v2955 = vld [vmem:[#allocation2 + $0x5c] sm:$0xf]
      %v2956 = vld [vmem:[#allocation2 + $0x60] sm:$0xf]
      %v2957 = vld [vmem:[#allocation2 + $0x64] sm:$0xf]
      %v2958 = vld [vmem:[#allocation2 + $0x68] sm:$0xf]
      %v2959 = vld [vmem:[#allocation2 + $0x6c] sm:$0xf]
      %v2960 = vld [vmem:[#allocation2 + $0x70] sm:$0xf]
      %v2961 = vld [vmem:[#allocation2 + $0x74] sm:$0xf]
      %v2962 = vld [vmem:[#allocation2 + $0x78] sm:$0xf]
      %v2963 = vld [vmem:[#allocation2 + $0x7c] sm:$0xf]
      %v2964 = vld [vmem:[#allocation2 + $0x80] sm:$0xf]
      %v2965 = vld [vmem:[#allocation2 + $0x84] sm:$0xf]
      %v2966 = vld [vmem:[#allocation2 + $0x88] sm:$0xf]
      %v2967 = vld [vmem:[#allocation2 + $0x8c] sm:$0xf]
      %v2968 = vld [vmem:[#allocation2 + $0x90] sm:$0xf]
      %v2969 = vld [vmem:[#allocation2 + $0x94] sm:$0xf]
      %v2970 = vld [vmem:[#allocation2 + $0x98] sm:$0xf]
      %v2971 = vld [vmem:[#allocation2 + $0x9c] sm:$0xf]
      %v2972 = vld [vmem:[#allocation2 + $0xa0] sm:$0x3]
      %v2973 = vld [vmem:[%s1] sm:$0xf]
      %v2974 = vld [vmem:[%s1 + $0x4] sm:$0xf]
      %v2975 = vld [vmem:[%s1 + $0x8] sm:$0xf]
      %v2976 = vld [vmem:[%s1 + $0xc] sm:$0xf]
      %v2977 = vld [vmem:[%s1 + $0x10] sm:$0x3]
      %v3019 = vunpack.c.l.b16 %v2932
      %v3020 = vunpack.c.l.b16 %v2933
      %v3021 = vunpack.c.l.b16 %v2934
      %v3022 = vunpack.c.l.b16 %v2935
      %v3023 = vunpack.c.l.b16 %v2936
      %v3024 = vunpack.c.l.b16 %v2937
      %v3025 = vunpack.c.l.b16 %v2938
      %v3026 = vunpack.c.l.b16 %v2939
      %v3027 = vunpack.c.l.b16 %v2940
      %v3028 = vunpack.c.l.b16 %v2941
      %v3029 = vunpack.c.l.b16 %v2942
      %v3030 = vunpack.c.l.b16 %v2943
      %v3031 = vunpack.c.l.b16 %v2944
      %v3032 = vunpack.c.l.b16 %v2945
      %v3033 = vunpack.c.l.b16 %v2946
      %v3034 = vunpack.c.l.b16 %v2947
      %v3035 = vunpack.c.l.b16 %v2948
      %v3036 = vunpack.c.l.b16 %v2949
      %v3037 = vunpack.c.l.b16 %v2950
      %v3038 = vunpack.c.l.b16 %v2951
      %v3039 = vunpack.c.l.b16 %v2952
      %v3040 = vunpack.c.l.b16 %v2953
      %v3041 = vunpack.c.l.b16 %v2954
      %v3042 = vunpack.c.l.b16 %v2955
      %v3043 = vunpack.c.l.b16 %v2956
      %v3044 = vunpack.c.l.b16 %v2957
      %v3045 = vunpack.c.l.b16 %v2958
      %v3046 = vunpack.c.l.b16 %v2959
      %v3047 = vunpack.c.l.b16 %v2960
      %v3048 = vunpack.c.l.b16 %v2961
      %v3049 = vunpack.c.l.b16 %v2962
      %v3050 = vunpack.c.l.b16 %v2963
      %v3051 = vunpack.c.l.b16 %v2964
      %v3052 = vunpack.c.l.b16 %v2965
      %v3053 = vunpack.c.l.b16 %v2966
      %v3054 = vunpack.c.l.b16 %v2967
      %v3055 = vunpack.c.l.b16 %v2968
      %v3056 = vunpack.c.l.b16 %v2969
      %v3057 = vunpack.c.l.b16 %v2970
      %v3058 = vunpack.c.l.b16 %v2971
      %v3059 = vunpack.c.l.b16 %v2972
      %v3060 = vpack.c.b16 %v3020, %v3019
      %v3061 = vpack.c.b16 %v3022, %v3021
      %v3062 = vpack.c.b16 %v3024, %v3023
      %v3063 = vpack.c.b16 %v3026, %v3025
      %v3064 = vpack.c.b16 %v3028, %v3027
      %v3065 = vpack.c.b16 %v3030, %v3029
      %v3066 = vpack.c.b16 %v3032, %v3031
      %v3067 = vpack.c.b16 %v3034, %v3033
      %v3068 = vpack.c.b16 %v3036, %v3035
      %v3069 = vpack.c.b16 %v3038, %v3037
      %v3070 = vpack.c.b16 %v3040, %v3039
      %v3071 = vpack.c.b16 %v3042, %v3041
      %v3072 = vpack.c.b16 %v3044, %v3043
      %v3073 = vpack.c.b16 %v3046, %v3045
      %v3074 = vpack.c.b16 %v3048, %v3047
      %v3075 = vpack.c.b16 %v3050, %v3049
      %v3076 = vpack.c.b16 %v3052, %v3051
      %v3077 = vpack.c.b16 %v3054, %v3053
      %v3078 = vpack.c.b16 %v3056, %v3055
      %v3079 = vpack.c.b16 %v3058, %v3057
      %v3080 = vpack.c.b16 %v3059, %v3059
      %v3086 = vunpack.c.l.b16 %v2973
      %v3087 = vunpack.c.l.b16 %v2974
      %v3088 = vunpack.c.l.b16 %v2975
      %v3089 = vunpack.c.l.b16 %v2976
      %v3090 = vunpack.c.l.b16 %v2977
      %v3091 = vpack.c.b16 %v3087, %v3086
      %v3092 = vpack.c.b16 %v3089, %v3088
      %v3093 = vpack.c.b16 %v3090, %v3090
      %vm3096 = vcmask 293888
      %v3098 = vsel %vm3096, %v3060, 0
      %v3101 = vsel %vm3096, %v3061, 0
      %v3104 = vsel %vm3096, %v3062, 0
      %v3107 = vsel %vm3096, %v3063, 0
      %v3110 = vsel %vm3096, %v3064, 0
      %v3113 = vsel %vm3096, %v3065, 0
      %v3116 = vsel %vm3096, %v3066, 0
      %v3119 = vsel %vm3096, %v3067, 0
      %v3122 = vsel %vm3096, %v3068, 0
      %v3125 = vsel %vm3096, %v3069, 0
      %v3128 = vsel %vm3096, %v3070, 0
      %v3131 = vsel %vm3096, %v3071, 0
      %v3134 = vsel %vm3096, %v3072, 0
      %v3137 = vsel %vm3096, %v3073, 0
      %v3140 = vsel %vm3096, %v3074, 0
      %v3143 = vsel %vm3096, %v3075, 0
      %v3146 = vsel %vm3096, %v3076, 0
      %v3149 = vsel %vm3096, %v3077, 0
      %v3152 = vsel %vm3096, %v3078, 0
      %v3155 = vsel %vm3096, %v3079, 0
      %v3158 = vsel %vm3096, %v3080, 0
      %vm3160 = vcmask 1041408
      %v3162 = vsel %vm3160, %v3093, 0
      %3164 = vmatprep.subr.bf16.mxu0 0
      %3165 = vmatpush1.bf16.msra.mxu0 %v3091
      %3166 = vmatprep.subr.bf16.mxu0 0
      %3167 = vmatpush1.bf16.msra.mxu0 %v3092
      %3168 = vmatprep.subr.bf16.mxu0 0
      %3169 = vmatpush1.bf16.msra.mxu0 %v3162
      %3170 = vmatprep.subr.bf16.mxu0 0
      %3171 = vmatpush1.bf16.msra.mxu0 0
      %3172 = vmatprep.subr.bf16.mxu0 0
      %3173 = vmatpush1.bf16.msra.mxu0 0
      %3174 = vmatprep.subr.bf16.mxu0 0
      %3175 = vmatpush1.bf16.msra.mxu0 0
      %3176 = vmatprep.subr.bf16.mxu0 0
      %3177 = vmatpush1.bf16.msra.mxu0 0
      %3178 = vmatprep.subr.bf16.mxu0 0
      %3179 = vmatpush1.bf16.msra.mxu0 0
      %3180 = vmatprep.subr.bf16.mxu0 0
      %3181 = vmatpush1.bf16.msra.mxu0 0
      %3182 = vmatprep.subr.bf16.mxu0 0
      %3183 = vmatpush1.bf16.msra.mxu0 0
      %3184 = vmatprep.subr.bf16.mxu0 0
      %3185 = vmatpush1.bf16.msra.mxu0 0
      %3186 = vmatprep.subr.bf16.mxu0 0
      %3187 = vmatpush1.bf16.msra.mxu0 0
      %3188 = vmatprep.subr.bf16.mxu0 0
      %3189 = vmatpush1.bf16.msra.mxu0 0
      %3190 = vmatprep.subr.bf16.mxu0 0
      %3191 = vmatpush1.bf16.msra.mxu0 0
      %3192 = vmatprep.subr.bf16.mxu0 0
      %3193 = vmatpush1.bf16.msra.mxu0 0
      %3194 = vmatprep.subr.bf16.mxu0 0
      %3195 = vmatpush1.bf16.msra.mxu0 0
      %3196 = vmatprep.mubr.bf16.mxu0 0
      %3197 = vmatmul.mubr.bf16.gmra.mrb[0].mxu0 %v3098
      %v3198 = vpop.f32.mrb[0].mxu0
      %v3199 = vadd.f32 0.0, %v3198
      %v3200 = vpop.f32.mrb[0].mxu0
      %v3201 = vpop.f32.mrb[0].mxu0
      %v3202 = vadd.f32 0.0, %v3201
      %v3203 = vpop.f32.mrb[0].mxu0
      %3204 = vmatprep.mubr.bf16.mxu0 0
      %3205 = vmatmul.mubr.bf16.gmra.mrb[0].mxu0 %v3101
      %v3206 = vpop.f32.mrb[0].mxu0
      %v3207 = vadd.f32 0.0, %v3206
      %v3208 = vpop.f32.mrb[0].mxu0
      %v3209 = vpop.f32.mrb[0].mxu0
      %v3210 = vadd.f32 0.0, %v3209
      %v3211 = vpop.f32.mrb[0].mxu0
      %3212 = vmatprep.mubr.bf16.mxu0 0
      %3213 = vmatmul.mubr.bf16.gmra.mrb[0].mxu0 %v3104
      %v3214 = vpop.f32.mrb[0].mxu0
      %v3215 = vadd.f32 0.0, %v3214
      %v3216 = vpop.f32.mrb[0].mxu0
      %v3217 = vpop.f32.mrb[0].mxu0
      %v3218 = vadd.f32 0.0, %v3217
      %v3219 = vpop.f32.mrb[0].mxu0
      %3220 = vmatprep.mubr.bf16.mxu0 0
      %3221 = vmatmul.mubr.bf16.gmra.mrb[0].mxu0 %v3107
      %v3222 = vpop.f32.mrb[0].mxu0
      %v3223 = vadd.f32 0.0, %v3222
      %v3224 = vpop.f32.mrb[0].mxu0
      %v3225 = vpop.f32.mrb[0].mxu0
      %v3226 = vadd.f32 0.0, %v3225
      %v3227 = vpop.f32.mrb[0].mxu0
      %3228 = vmatprep.mubr.bf16.mxu0 0
      %3229 = vmatmul.mubr.bf16.gmra.mrb[0].mxu0 %v3110
      %v3230 = vpop.f32.mrb[0].mxu0
      %v3231 = vadd.f32 0.0, %v3230
      %v3232 = vpop.f32.mrb[0].mxu0
      %v3233 = vpop.f32.mrb[0].mxu0
      %v3234 = vadd.f32 0.0, %v3233
      %v3235 = vpop.f32.mrb[0].mxu0
      %3236 = vmatprep.mubr.bf16.mxu0 0
      %3237 = vmatmul.mubr.bf16.gmra.mrb[0].mxu0 %v3113
      %v3238 = vpop.f32.mrb[0].mxu0
      %v3239 = vadd.f32 0.0, %v3238
      %v3240 = vpop.f32.mrb[0].mxu0
      %v3241 = vpop.f32.mrb[0].mxu0
      %v3242 = vadd.f32 0.0, %v3241
      %v3243 = vpop.f32.mrb[0].mxu0
      %3244 = vmatprep.mubr.bf16.mxu0 0
      %3245 = vmatmul.mubr.bf16.gmra.mrb[0].mxu0 %v3116
      %v3246 = vpop.f32.mrb[0].mxu0
      %v3247 = vadd.f32 0.0, %v3246
      %v3248 = vpop.f32.mrb[0].mxu0
      %v3249 = vpop.f32.mrb[0].mxu0
      %v3250 = vadd.f32 0.0, %v3249
      %v3251 = vpop.f32.mrb[0].mxu0
      %3252 = vmatprep.mubr.bf16.mxu0 0
      %3253 = vmatmul.mubr.bf16.gmra.mrb[0].mxu0 %v3119
      %v3254 = vpop.f32.mrb[0].mxu0
      %v3255 = vadd.f32 0.0, %v3254
      %v3256 = vpop.f32.mrb[0].mxu0
      %v3257 = vpop.f32.mrb[0].mxu0
      %v3258 = vadd.f32 0.0, %v3257
      %v3259 = vpop.f32.mrb[0].mxu0
      %3260 = vmatprep.mubr.bf16.mxu0 0
      %3261 = vmatmul.mubr.bf16.gmra.mrb[0].mxu0 %v3122
      %v3262 = vpop.f32.mrb[0].mxu0
      %v3263 = vadd.f32 0.0, %v3262
      %v3264 = vpop.f32.mrb[0].mxu0
      %v3265 = vpop.f32.mrb[0].mxu0
      %v3266 = vadd.f32 0.0, %v3265
      %v3267 = vpop.f32.mrb[0].mxu0
      %3268 = vmatprep.mubr.bf16.mxu0 0
      %3269 = vmatmul.mubr.bf16.gmra.mrb[0].mxu0 %v3125
      %v3270 = vpop.f32.mrb[0].mxu0
      %v3271 = vadd.f32 0.0, %v3270
      %v3272 = vpop.f32.mrb[0].mxu0
      %v3273 = vpop.f32.mrb[0].mxu0
      %v3274 = vadd.f32 0.0, %v3273
      %v3275 = vpop.f32.mrb[0].mxu0
      %3276 = vmatprep.mubr.bf16.mxu0 0
      %3277 = vmatmul.mubr.bf16.gmra.mrb[0].mxu0 %v3128
      %v3278 = vpop.f32.mrb[0].mxu0
      %v3279 = vadd.f32 0.0, %v3278
      %v3280 = vpop.f32.mrb[0].mxu0
      %v3281 = vpop.f32.mrb[0].mxu0
      %v3282 = vadd.f32 0.0, %v3281
      %v3283 = vpop.f32.mrb[0].mxu0
      %3284 = vmatprep.mubr.bf16.mxu0 0
      %3285 = vmatmul.mubr.bf16.gmra.mrb[0].mxu0 %v3131
      %v3286 = vpop.f32.mrb[0].mxu0
      %v3287 = vadd.f32 0.0, %v3286
      %v3288 = vpop.f32.mrb[0].mxu0
      %v3289 = vpop.f32.mrb[0].mxu0
      %v3290 = vadd.f32 0.0, %v3289
      %v3291 = vpop.f32.mrb[0].mxu0
      %3292 = vmatprep.mubr.bf16.mxu0 0
      %3293 = vmatmul.mubr.bf16.gmra.mrb[0].mxu0 %v3134
      %v3294 = vpop.f32.mrb[0].mxu0
      %v3295 = vadd.f32 0.0, %v3294
      %v3296 = vpop.f32.mrb[0].mxu0
      %v3297 = vpop.f32.mrb[0].mxu0
      %v3298 = vadd.f32 0.0, %v3297
      %v3299 = vpop.f32.mrb[0].mxu0
      %3300 = vmatprep.mubr.bf16.mxu0 0
      %3301 = vmatmul.mubr.bf16.gmra.mrb[0].mxu0 %v3137
      %v3302 = vpop.f32.mrb[0].mxu0
      %v3303 = vadd.f32 0.0, %v3302
      %v3304 = vpop.f32.mrb[0].mxu0
      %v3305 = vpop.f32.mrb[0].mxu0
      %v3306 = vadd.f32 0.0, %v3305
      %v3307 = vpop.f32.mrb[0].mxu0
      %3308 = vmatprep.mubr.bf16.mxu0 0
      %3309 = vmatmul.mubr.bf16.gmra.mrb[0].mxu0 %v3140
      %v3310 = vpop.f32.mrb[0].mxu0
      %v3311 = vadd.f32 0.0, %v3310
      %v3312 = vpop.f32.mrb[0].mxu0
      %v3313 = vpop.f32.mrb[0].mxu0
      %v3314 = vadd.f32 0.0, %v3313
      %v3315 = vpop.f32.mrb[0].mxu0
      %3316 = vmatprep.mubr.bf16.mxu0 0
      %3317 = vmatmul.mubr.bf16.gmra.mrb[0].mxu0 %v3143
      %v3318 = vpop.f32.mrb[0].mxu0
      %v3319 = vadd.f32 0.0, %v3318
      %v3320 = vpop.f32.mrb[0].mxu0
      %v3321 = vpop.f32.mrb[0].mxu0
      %v3322 = vadd.f32 0.0, %v3321
      %v3323 = vpop.f32.mrb[0].mxu0
      %3324 = vmatprep.mubr.bf16.mxu0 0
      %3325 = vmatmul.mubr.bf16.gmra.mrb[0].mxu0 %v3146
      %v3326 = vpop.f32.mrb[0].mxu0
      %v3327 = vadd.f32 0.0, %v3326
      %v3328 = vpop.f32.mrb[0].mxu0
      %v3329 = vpop.f32.mrb[0].mxu0
      %v3330 = vadd.f32 0.0, %v3329
      %v3331 = vpop.f32.mrb[0].mxu0
      %3332 = vmatprep.mubr.bf16.mxu0 0
      %3333 = vmatmul.mubr.bf16.gmra.mrb[0].mxu0 %v3149
      %v3334 = vpop.f32.mrb[0].mxu0
      %v3335 = vadd.f32 0.0, %v3334
      %v3336 = vpop.f32.mrb[0].mxu0
      %v3337 = vpop.f32.mrb[0].mxu0
      %v3338 = vadd.f32 0.0, %v3337
      %v3339 = vpop.f32.mrb[0].mxu0
      %3340 = vmatprep.mubr.bf16.mxu0 0
      %3341 = vmatmul.mubr.bf16.gmra.mrb[0].mxu0 %v3152
      %v3342 = vpop.f32.mrb[0].mxu0
      %v3343 = vadd.f32 0.0, %v3342
      %v3344 = vpop.f32.mrb[0].mxu0
      %v3345 = vpop.f32.mrb[0].mxu0
      %v3346 = vadd.f32 0.0, %v3345
      %v3347 = vpop.f32.mrb[0].mxu0
      %3348 = vmatprep.mubr.bf16.mxu0 0
      %3349 = vmatmul.mubr.bf16.gmra.mrb[0].mxu0 %v3155
      %v3350 = vpop.f32.mrb[0].mxu0
      %v3351 = vadd.f32 0.0, %v3350
      %v3352 = vpop.f32.mrb[0].mxu0
      %v3353 = vpop.f32.mrb[0].mxu0
      %v3354 = vadd.f32 0.0, %v3353
      %v3355 = vpop.f32.mrb[0].mxu0
      %3356 = vmatprep.mubr.bf16.mxu0 0
      %3357 = vmatmul.mubr.bf16.gmra.mrb[0].mxu0 %v3158
      %v3358 = vpop.f32.mrb[0].mxu0
      %v3359 = vadd.f32 0.0, %v3358
      %v3360 = vpop.f32.mrb[0].mxu0
      %v3361 = vpop.f32.mrb[0].mxu0
      %v3362 = vpop.f32.mrb[0].mxu0
      %3363 = vdwg.mxu0
      %v3364 = vpack.c.bf16 %v3202, %v3199
      %v3365 = vpack.c.bf16 %v3210, %v3207
      %v3366 = vpack.c.bf16 %v3218, %v3215
      %v3367 = vpack.c.bf16 %v3226, %v3223
      %v3368 = vpack.c.bf16 %v3234, %v3231
      %v3369 = vpack.c.bf16 %v3242, %v3239
      %v3370 = vpack.c.bf16 %v3250, %v3247
      %v3371 = vpack.c.bf16 %v3258, %v3255
      %v3372 = vpack.c.bf16 %v3266, %v3263
      %v3373 = vpack.c.bf16 %v3274, %v3271
      %v3374 = vpack.c.bf16 %v3282, %v3279
      %v3375 = vpack.c.bf16 %v3290, %v3287
      %v3376 = vpack.c.bf16 %v3298, %v3295
      %v3377 = vpack.c.bf16 %v3306, %v3303
      %v3378 = vpack.c.bf16 %v3314, %v3311
      %v3379 = vpack.c.bf16 %v3322, %v3319
      %v3380 = vpack.c.bf16 %v3330, %v3327
      %v3381 = vpack.c.bf16 %v3338, %v3335
      %v3382 = vpack.c.bf16 %v3346, %v3343
      %v3383 = vpack.c.bf16 %v3354, %v3351
      %v3384 = vpack.c.bf16 %v3359, %v3359
      %v3406 = vunpack.c.l.b16 %v3364
      %v3407 = vunpack.c.h.b16 %v3364
      %v3408 = vunpack.c.l.b16 %v3365
      %v3409 = vunpack.c.h.b16 %v3365
      %v3410 = vunpack.c.l.b16 %v3366
      %v3411 = vunpack.c.h.b16 %v3366
      %v3412 = vunpack.c.l.b16 %v3367
      %v3413 = vunpack.c.h.b16 %v3367
      %v3414 = vunpack.c.l.b16 %v3368
      %v3415 = vunpack.c.h.b16 %v3368
      %v3416 = vunpack.c.l.b16 %v3369
      %v3417 = vunpack.c.h.b16 %v3369
      %v3418 = vunpack.c.l.b16 %v3370
      %v3419 = vunpack.c.h.b16 %v3370
      %v3420 = vunpack.c.l.b16 %v3371
      %v3421 = vunpack.c.h.b16 %v3371
      %v3422 = vunpack.c.l.b16 %v3372
      %v3423 = vunpack.c.h.b16 %v3372
      %v3424 = vunpack.c.l.b16 %v3373
      %v3425 = vunpack.c.h.b16 %v3373
      %v3426 = vunpack.c.l.b16 %v3374
      %v3427 = vunpack.c.h.b16 %v3374
      %v3428 = vunpack.c.l.b16 %v3375
      %v3429 = vunpack.c.h.b16 %v3375
      %v3430 = vunpack.c.l.b16 %v3376
      %v3431 = vunpack.c.h.b16 %v3376
      %v3432 = vunpack.c.l.b16 %v3377
      %v3433 = vunpack.c.h.b16 %v3377
      %v3434 = vunpack.c.l.b16 %v3378
      %v3435 = vunpack.c.h.b16 %v3378
      %v3436 = vunpack.c.l.b16 %v3379
      %v3437 = vunpack.c.h.b16 %v3379
      %v3438 = vunpack.c.l.b16 %v3380
      %v3439 = vunpack.c.h.b16 %v3380
      %v3440 = vunpack.c.l.b16 %v3381
      %v3441 = vunpack.c.h.b16 %v3381
      %v3442 = vunpack.c.l.b16 %v3382
      %v3443 = vunpack.c.h.b16 %v3382
      %v3444 = vunpack.c.l.b16 %v3383
      %v3445 = vunpack.c.h.b16 %v3383
      %v3446 = vunpack.c.l.b16 %v3384
      %v3447 = vpack.c.b16 %v3406, %v3406
      %v3448 = vpack.c.b16 %v3407, %v3407
      %v3449 = vpack.c.b16 %v3408, %v3408
      %v3450 = vpack.c.b16 %v3409, %v3409
      %v3451 = vpack.c.b16 %v3410, %v3410
      %v3452 = vpack.c.b16 %v3411, %v3411
      %v3453 = vpack.c.b16 %v3412, %v3412
      %v3454 = vpack.c.b16 %v3413, %v3413
      %v3455 = vpack.c.b16 %v3414, %v3414
      %v3456 = vpack.c.b16 %v3415, %v3415
      %v3457 = vpack.c.b16 %v3416, %v3416
      %v3458 = vpack.c.b16 %v3417, %v3417
      %v3459 = vpack.c.b16 %v3418, %v3418
      %v3460 = vpack.c.b16 %v3419, %v3419
      %v3461 = vpack.c.b16 %v3420, %v3420
      %v3462 = vpack.c.b16 %v3421, %v3421
      %v3463 = vpack.c.b16 %v3422, %v3422
      %v3464 = vpack.c.b16 %v3423, %v3423
      %v3465 = vpack.c.b16 %v3424, %v3424
      %v3466 = vpack.c.b16 %v3425, %v3425
      %v3467 = vpack.c.b16 %v3426, %v3426
      %v3468 = vpack.c.b16 %v3427, %v3427
      %v3469 = vpack.c.b16 %v3428, %v3428
      %v3470 = vpack.c.b16 %v3429, %v3429
      %v3471 = vpack.c.b16 %v3430, %v3430
      %v3472 = vpack.c.b16 %v3431, %v3431
      %v3473 = vpack.c.b16 %v3432, %v3432
      %v3474 = vpack.c.b16 %v3433, %v3433
      %v3475 = vpack.c.b16 %v3434, %v3434
      %v3476 = vpack.c.b16 %v3435, %v3435
      %v3477 = vpack.c.b16 %v3436, %v3436
      %v3478 = vpack.c.b16 %v3437, %v3437
      %v3479 = vpack.c.b16 %v3438, %v3438
      %v3480 = vpack.c.b16 %v3439, %v3439
      %v3481 = vpack.c.b16 %v3440, %v3440
      %v3482 = vpack.c.b16 %v3441, %v3441
      %v3483 = vpack.c.b16 %v3442, %v3442
      %v3484 = vpack.c.b16 %v3443, %v3443
      %v3485 = vpack.c.b16 %v3444, %v3444
      %v3486 = vpack.c.b16 %v3445, %v3445
      %v3487 = vpack.c.b16 %v3446, %v3446
      %vm3529 = vcmask 60416
      %3530 = vst.msk [vmem:[%s204] sm:$0xf] %vm3529, %v3447
      %3531 = vst.msk [vmem:[%s204 + $0x4] sm:$0xf] %vm3529, %v3448
      %3532 = vst.msk [vmem:[%s204 + $0x8] sm:$0xf] %vm3529, %v3449
      %3533 = vst.msk [vmem:[%s204 + $0xc] sm:$0xf] %vm3529, %v3450
      %3534 = vst.msk [vmem:[%s204 + $0x10] sm:$0xf] %vm3529, %v3451
      %3535 = vst.msk [vmem:[%s204 + $0x14] sm:$0xf] %vm3529, %v3452
      %3536 = vst.msk [vmem:[%s204 + $0x18] sm:$0xf] %vm3529, %v3453
      %3537 = vst.msk [vmem:[%s204 + $0x1c] sm:$0xf] %vm3529, %v3454
      %3538 = vst.msk [vmem:[%s204 + $0x20] sm:$0xf] %vm3529, %v3455
      %3539 = vst.msk [vmem:[%s204 + $0x24] sm:$0xf] %vm3529, %v3456
      %3540 = vst.msk [vmem:[%s204 + $0x28] sm:$0xf] %vm3529, %v3457
      %3541 = vst.msk [vmem:[%s204 + $0x2c] sm:$0xf] %vm3529, %v3458
      %3542 = vst.msk [vmem:[%s204 + $0x30] sm:$0xf] %vm3529, %v3459
      %3543 = vst.msk [vmem:[%s204 + $0x34] sm:$0xf] %vm3529, %v3460
      %3544 = vst.msk [vmem:[%s204 + $0x38] sm:$0xf] %vm3529, %v3461
      %3545 = vst.msk [vmem:[%s204 + $0x3c] sm:$0xf] %vm3529, %v3462
      %3546 = vst.msk [vmem:[%s204 + $0x40] sm:$0xf] %vm3529, %v3463
      %3547 = vst.msk [vmem:[%s204 + $0x44] sm:$0xf] %vm3529, %v3464
      %3548 = vst.msk [vmem:[%s204 + $0x48] sm:$0xf] %vm3529, %v3465
      %3549 = vst.msk [vmem:[%s204 + $0x4c] sm:$0xf] %vm3529, %v3466
      %3550 = vst.msk [vmem:[%s204 + $0x50] sm:$0xf] %vm3529, %v3467
      %3551 = vst.msk [vmem:[%s204 + $0x54] sm:$0xf] %vm3529, %v3468
      %3552 = vst.msk [vmem:[%s204 + $0x58] sm:$0xf] %vm3529, %v3469
      %3553 = vst.msk [vmem:[%s204 + $0x5c] sm:$0xf] %vm3529, %v3470
      %3554 = vst.msk [vmem:[%s204 + $0x60] sm:$0xf] %vm3529, %v3471
      %3555 = vst.msk [vmem:[%s204 + $0x64] sm:$0xf] %vm3529, %v3472
      %3556 = vst.msk [vmem:[%s204 + $0x68] sm:$0xf] %vm3529, %v3473
      %3557 = vst.msk [vmem:[%s204 + $0x6c] sm:$0xf] %vm3529, %v3474
      %3558 = vst.msk [vmem:[%s204 + $0x70] sm:$0xf] %vm3529, %v3475
      %3559 = vst.msk [vmem:[%s204 + $0x74] sm:$0xf] %vm3529, %v3476
      %3560 = vst.msk [vmem:[%s204 + $0x78] sm:$0xf] %vm3529, %v3477
      %3561 = vst.msk [vmem:[%s204 + $0x7c] sm:$0xf] %vm3529, %v3478
      %3562 = vst.msk [vmem:[%s204 + $0x80] sm:$0xf] %vm3529, %v3479
      %3563 = vst.msk [vmem:[%s204 + $0x84] sm:$0xf] %vm3529, %v3480
      %3564 = vst.msk [vmem:[%s204 + $0x88] sm:$0xf] %vm3529, %v3481
      %3565 = vst.msk [vmem:[%s204 + $0x8c] sm:$0xf] %vm3529, %v3482
      %3566 = vst.msk [vmem:[%s204 + $0x90] sm:$0xf] %vm3529, %v3483
      %3567 = vst.msk [vmem:[%s204 + $0x94] sm:$0xf] %vm3529, %v3484
      %3568 = vst.msk [vmem:[%s204 + $0x98] sm:$0xf] %vm3529, %v3485
      %3569 = vst.msk [vmem:[%s204 + $0x9c] sm:$0xf] %vm3529, %v3486
      %vm3570 = vcmask 58368
      %3571 = vst.msk [vmem:[%s204 + $0xa0] sm:$0x3] %vm3570, %v3487
      %v3572 = vld [vmem:[%s2] sm:$0xff]
      %v3573 = vld [vmem:[%s2 + $0x8] sm:$0xff]
      %v3574 = vld [vmem:[%s2 + $0x10] sm:$0xff]
      %v3575 = vld [vmem:[%s2 + $0x18] sm:$0xff]
      %v3576 = vld [vmem:[%s2 + $0x20] sm:$0xff]
      %v3577 = vld [vmem:[%s2 + $0x28] sm:$0xff]
      %v3578 = vld [vmem:[%s2 + $0x30] sm:$0xff]
      %v3579 = vld [vmem:[%s2 + $0x38] sm:$0xff]
      %v3580 = vld [vmem:[%s2 + $0x40] sm:$0xff]
      %v3581 = vld [vmem:[%s2 + $0x48] sm:$0xff]
      %v3582 = vld [vmem:[%s2 + $0x50] sm:$0xff]
      %v3583 = vld [vmem:[%s2 + $0x58] sm:$0xff]
      %v3584 = vld [vmem:[%s2 + $0x60] sm:$0xff]
      %v3585 = vld [vmem:[%s2 + $0x68] sm:$0xff]
      %v3586 = vld [vmem:[%s2 + $0x70] sm:$0xff]
      %v3587 = vld [vmem:[%s2 + $0x78] sm:$0xff]
      %v3588 = vld [vmem:[%s2 + $0x80] sm:$0xff]
      %v3589 = vld [vmem:[%s2 + $0x88] sm:$0xff]
      %v3590 = vld [vmem:[%s2 + $0x90] sm:$0xff]
      %v3591 = vld [vmem:[%s2 + $0x98] sm:$0xff]
      %v3592 = vld [vmem:[%s2 + $0xa0] sm:$0xff]
      %v3593 = vld [vmem:[%s2 + $0xa8] sm:$0xff]
      %v3594 = vld [vmem:[%s2 + $0xb0] sm:$0xff]
      %v3595 = vld [vmem:[%s2 + $0xb8] sm:$0xff]
      %v3596 = vld [vmem:[%s2 + $0xc0] sm:$0xff]
      %v3597 = vld [vmem:[%s2 + $0xc8] sm:$0xff]
      %v3598 = vld [vmem:[%s2 + $0xd0] sm:$0xff]
      %v3599 = vld [vmem:[%s2 + $0xd8] sm:$0xff]
      %v3600 = vld [vmem:[%s2 + $0xe0] sm:$0xff]
      %v3601 = vld [vmem:[%s2 + $0xe8] sm:$0xff]
      %v3602 = vld [vmem:[%s2 + $0xf0] sm:$0xff]
      %v3603 = vld [vmem:[%s2 + $0xf8] sm:$0xff]
      %v3604 = vld [vmem:[%s2 + $0x100] sm:$0xff]
      %v3605 = vld [vmem:[%s2 + $0x108] sm:$0xff]
      %v3606 = vld [vmem:[%s2 + $0x110] sm:$0xff]
      %v3607 = vld [vmem:[%s2 + $0x118] sm:$0xff]
      %v3608 = vld [vmem:[%s2 + $0x120] sm:$0xff]
      %v3609 = vld [vmem:[%s2 + $0x128] sm:$0xff]
      %v3610 = vld [vmem:[%s2 + $0x130] sm:$0xff]
      %v3611 = vld [vmem:[%s2 + $0x138] sm:$0xff]
      %v3612 = vld [vmem:[%s2 + $0x140] sm:$0xf]
      %3614 = vset.pattern.permute.xlu0 0
      %3615 = vperm.xlu0 %3614, %v3572
      %v3616 = vpop.permute.xlu0 %3615
      %3619 = vset.pattern.permute.xlu0 0
      %3620 = vperm.xlu0 %3619, %v3573
      %v3621 = vpop.permute.xlu0 %3620
      %3624 = vset.pattern.permute.xlu0 0
      %3625 = vperm.xlu0 %3624, %v3574
      %v3626 = vpop.permute.xlu0 %3625
      %3629 = vset.pattern.permute.xlu0 0
      %3630 = vperm.xlu0 %3629, %v3575
      %v3631 = vpop.permute.xlu0 %3630
      %3634 = vset.pattern.permute.xlu0 0
      %3635 = vperm.xlu0 %3634, %v3576
      %v3636 = vpop.permute.xlu0 %3635
      %3639 = vset.pattern.permute.xlu0 0
      %3640 = vperm.xlu0 %3639, %v3577
      %v3641 = vpop.permute.xlu0 %3640
      %3644 = vset.pattern.permute.xlu0 0
      %3645 = vperm.xlu0 %3644, %v3578
      %v3646 = vpop.permute.xlu0 %3645
      %3649 = vset.pattern.permute.xlu0 0
      %3650 = vperm.xlu0 %3649, %v3579
      %v3651 = vpop.permute.xlu0 %3650
      %3654 = vset.pattern.permute.xlu0 0
      %3655 = vperm.xlu0 %3654, %v3580
      %v3656 = vpop.permute.xlu0 %3655
      %3659 = vset.pattern.permute.xlu0 0
      %3660 = vperm.xlu0 %3659, %v3581
      %v3661 = vpop.permute.xlu0 %3660
      %3664 = vset.pattern.permute.xlu0 0
      %3665 = vperm.xlu0 %3664, %v3582
      %v3666 = vpop.permute.xlu0 %3665
      %3669 = vset.pattern.permute.xlu0 0
      %3670 = vperm.xlu0 %3669, %v3583
      %v3671 = vpop.permute.xlu0 %3670
      %3674 = vset.pattern.permute.xlu0 0
      %3675 = vperm.xlu0 %3674, %v3584
      %v3676 = vpop.permute.xlu0 %3675
      %3679 = vset.pattern.permute.xlu0 0
      %3680 = vperm.xlu0 %3679, %v3585
      %v3681 = vpop.permute.xlu0 %3680
      %3684 = vset.pattern.permute.xlu0 0
      %3685 = vperm.xlu0 %3684, %v3586
      %v3686 = vpop.permute.xlu0 %3685
      %3689 = vset.pattern.permute.xlu0 0
      %3690 = vperm.xlu0 %3689, %v3587
      %v3691 = vpop.permute.xlu0 %3690
      %3694 = vset.pattern.permute.xlu0 0
      %3695 = vperm.xlu0 %3694, %v3588
      %v3696 = vpop.permute.xlu0 %3695
      %3699 = vset.pattern.permute.xlu0 0
      %3700 = vperm.xlu0 %3699, %v3589
      %v3701 = vpop.permute.xlu0 %3700
      %3704 = vset.pattern.permute.xlu0 0
      %3705 = vperm.xlu0 %3704, %v3590
      %v3706 = vpop.permute.xlu0 %3705
      %3709 = vset.pattern.permute.xlu0 0
      %3710 = vperm.xlu0 %3709, %v3591
      %v3711 = vpop.permute.xlu0 %3710
      %3714 = vset.pattern.permute.xlu0 0
      %3715 = vperm.xlu0 %3714, %v3592
      %v3716 = vpop.permute.xlu0 %3715
      %3719 = vset.pattern.permute.xlu0 0
      %3720 = vperm.xlu0 %3719, %v3593
      %v3721 = vpop.permute.xlu0 %3720
      %3724 = vset.pattern.permute.xlu0 0
      %3725 = vperm.xlu0 %3724, %v3594
      %v3726 = vpop.permute.xlu0 %3725
      %3729 = vset.pattern.permute.xlu0 0
      %3730 = vperm.xlu0 %3729, %v3595
      %v3731 = vpop.permute.xlu0 %3730
      %3734 = vset.pattern.permute.xlu0 0
      %3735 = vperm.xlu0 %3734, %v3596
      %v3736 = vpop.permute.xlu0 %3735
      %3739 = vset.pattern.permute.xlu0 0
      %3740 = vperm.xlu0 %3739, %v3597
      %v3741 = vpop.permute.xlu0 %3740
      %3744 = vset.pattern.permute.xlu0 0
      %3745 = vperm.xlu0 %3744, %v3598
      %v3746 = vpop.permute.xlu0 %3745
      %3749 = vset.pattern.permute.xlu0 0
      %3750 = vperm.xlu0 %3749, %v3599
      %v3751 = vpop.permute.xlu0 %3750
      %3754 = vset.pattern.permute.xlu0 0
      %3755 = vperm.xlu0 %3754, %v3600
      %v3756 = vpop.permute.xlu0 %3755
      %3759 = vset.pattern.permute.xlu0 0
      %3760 = vperm.xlu0 %3759, %v3601
      %v3761 = vpop.permute.xlu0 %3760
      %3764 = vset.pattern.permute.xlu0 0
      %3765 = vperm.xlu0 %3764, %v3602
      %v3766 = vpop.permute.xlu0 %3765
      %3769 = vset.pattern.permute.xlu0 0
      %3770 = vperm.xlu0 %3769, %v3603
      %v3771 = vpop.permute.xlu0 %3770
      %3774 = vset.pattern.permute.xlu0 0
      %3775 = vperm.xlu0 %3774, %v3604
      %v3776 = vpop.permute.xlu0 %3775
      %3779 = vset.pattern.permute.xlu0 0
      %3780 = vperm.xlu0 %3779, %v3605
      %v3781 = vpop.permute.xlu0 %3780
      %3784 = vset.pattern.permute.xlu0 0
      %3785 = vperm.xlu0 %3784, %v3606
      %v3786 = vpop.permute.xlu0 %3785
      %3789 = vset.pattern.permute.xlu0 0
      %3790 = vperm.xlu0 %3789, %v3607
      %v3791 = vpop.permute.xlu0 %3790
      %3794 = vset.pattern.permute.xlu0 0
      %3795 = vperm.xlu0 %3794, %v3608
      %v3796 = vpop.permute.xlu0 %3795
      %3799 = vset.pattern.permute.xlu0 0
      %3800 = vperm.xlu0 %3799, %v3609
      %v3801 = vpop.permute.xlu0 %3800
      %3804 = vset.pattern.permute.xlu0 0
      %3805 = vperm.xlu0 %3804, %v3610
      %v3806 = vpop.permute.xlu0 %3805
      %3809 = vset.pattern.permute.xlu0 0
      %3810 = vperm.xlu0 %3809, %v3611
      %v3811 = vpop.permute.xlu0 %3810
      %3814 = vset.pattern.permute.xlu0 0
      %3815 = vperm.xlu0 %3814, %v3612
      %v3816 = vpop.permute.xlu0 %3815
      %v3818 = vmul.f32 %v3199, %v3616
      %v3819 = vmul.f32 %v3202, %v3621
      %v3820 = vmul.f32 %v3207, %v3626
      %v3821 = vmul.f32 %v3210, %v3631
      %v3822 = vmul.f32 %v3215, %v3636
      %v3823 = vmul.f32 %v3218, %v3641
      %v3824 = vmul.f32 %v3223, %v3646
      %v3825 = vmul.f32 %v3226, %v3651
      %v3826 = vmul.f32 %v3231, %v3656
      %v3827 = vmul.f32 %v3234, %v3661
      %v3828 = vmul.f32 %v3239, %v3666
      %v3829 = vmul.f32 %v3242, %v3671
      %v3830 = vmul.f32 %v3247, %v3676
      %v3831 = vmul.f32 %v3250, %v3681
      %v3832 = vmul.f32 %v3255, %v3686
      %v3833 = vmul.f32 %v3258, %v3691
      %v3834 = vmul.f32 %v3263, %v3696
      %v3835 = vmul.f32 %v3266, %v3701
      %v3836 = vmul.f32 %v3271, %v3706
      %v3837 = vmul.f32 %v3274, %v3711
      %v3838 = vmul.f32 %v3279, %v3716
      %v3839 = vmul.f32 %v3282, %v3721
      %v3840 = vmul.f32 %v3287, %v3726
      %v3841 = vmul.f32 %v3290, %v3731
      %v3842 = vmul.f32 %v3295, %v3736
      %v3843 = vmul.f32 %v3298, %v3741
      %v3844 = vmul.f32 %v3303, %v3746
      %v3845 = vmul.f32 %v3306, %v3751
      %v3846 = vmul.f32 %v3311, %v3756
      %v3847 = vmul.f32 %v3314, %v3761
      %v3848 = vmul.f32 %v3319, %v3766
      %v3849 = vmul.f32 %v3322, %v3771
      %v3850 = vmul.f32 %v3327, %v3776
      %v3851 = vmul.f32 %v3330, %v3781
      %v3852 = vmul.f32 %v3335, %v3786
      %v3853 = vmul.f32 %v3338, %v3791
      %v3854 = vmul.f32 %v3343, %v3796
      %v3855 = vmul.f32 %v3346, %v3801
      %v3856 = vmul.f32 %v3351, %v3806
      %v3857 = vmul.f32 %v3354, %v3811
      %v3858 = vmul.f32 %v3359, %v3816
      %vm3859 = vcmask 64512
      %v3860 = vsel %vm3859, %v3818, 0.0
      %v3861 = vsel %vm3859, %v3819, 0.0
      %v3862 = vadd.f32 %v3860, %v3861
      %v3863 = vsel %vm3859, %v3820, 0.0
      %v3864 = vadd.f32 %v3862, %v3863
      %v3865 = vsel %vm3859, %v3821, 0.0
      %v3866 = vadd.f32 %v3864, %v3865
      %v3867 = vsel %vm3859, %v3822, 0.0
      %v3868 = vadd.f32 %v3866, %v3867
      %v3869 = vsel %vm3859, %v3823, 0.0
      %v3870 = vadd.f32 %v3868, %v3869
      %v3871 = vsel %vm3859, %v3824, 0.0
      %v3872 = vadd.f32 %v3870, %v3871
      %v3873 = vsel %vm3859, %v3825, 0.0
      %v3874 = vadd.f32 %v3872, %v3873
      %v3875 = vsel %vm3859, %v3826, 0.0
      %v3876 = vadd.f32 %v3874, %v3875
      %v3877 = vsel %vm3859, %v3827, 0.0
      %v3878 = vadd.f32 %v3876, %v3877
      %v3879 = vsel %vm3859, %v3828, 0.0
      %v3880 = vadd.f32 %v3878, %v3879
      %v3881 = vsel %vm3859, %v3829, 0.0
      %v3882 = vadd.f32 %v3880, %v3881
      %v3883 = vsel %vm3859, %v3830, 0.0
      %v3884 = vadd.f32 %v3882, %v3883
      %v3885 = vsel %vm3859, %v3831, 0.0
      %v3886 = vadd.f32 %v3884, %v3885
      %v3887 = vsel %vm3859, %v3832, 0.0
      %v3888 = vadd.f32 %v3886, %v3887
      %v3889 = vsel %vm3859, %v3833, 0.0
      %v3890 = vadd.f32 %v3888, %v3889
      %v3891 = vsel %vm3859, %v3834, 0.0
      %v3892 = vadd.f32 %v3890, %v3891
      %v3893 = vsel %vm3859, %v3835, 0.0
      %v3894 = vadd.f32 %v3892, %v3893
      %v3895 = vsel %vm3859, %v3836, 0.0
      %v3896 = vadd.f32 %v3894, %v3895
      %v3897 = vsel %vm3859, %v3837, 0.0
      %v3898 = vadd.f32 %v3896, %v3897
      %v3899 = vsel %vm3859, %v3838, 0.0
      %v3900 = vadd.f32 %v3898, %v3899
      %v3901 = vsel %vm3859, %v3839, 0.0
      %v3902 = vadd.f32 %v3900, %v3901
      %v3903 = vsel %vm3859, %v3840, 0.0
      %v3904 = vadd.f32 %v3902, %v3903
      %v3905 = vsel %vm3859, %v3841, 0.0
      %v3906 = vadd.f32 %v3904, %v3905
      %v3907 = vsel %vm3859, %v3842, 0.0
      %v3908 = vadd.f32 %v3906, %v3907
      %v3909 = vsel %vm3859, %v3843, 0.0
      %v3910 = vadd.f32 %v3908, %v3909
      %v3911 = vsel %vm3859, %v3844, 0.0
      %v3912 = vadd.f32 %v3910, %v3911
      %v3913 = vsel %vm3859, %v3845, 0.0
      %v3914 = vadd.f32 %v3912, %v3913
      %v3915 = vsel %vm3859, %v3846, 0.0
      %v3916 = vadd.f32 %v3914, %v3915
      %v3917 = vsel %vm3859, %v3847, 0.0
      %v3918 = vadd.f32 %v3916, %v3917
      %v3919 = vsel %vm3859, %v3848, 0.0
      %v3920 = vadd.f32 %v3918, %v3919
      %v3921 = vsel %vm3859, %v3849, 0.0
      %v3922 = vadd.f32 %v3920, %v3921
      %v3923 = vsel %vm3859, %v3850, 0.0
      %v3924 = vadd.f32 %v3922, %v3923
      %v3925 = vsel %vm3859, %v3851, 0.0
      %v3926 = vadd.f32 %v3924, %v3925
      %v3927 = vsel %vm3859, %v3852, 0.0
      %v3928 = vadd.f32 %v3926, %v3927
      %v3929 = vsel %vm3859, %v3853, 0.0
      %v3930 = vadd.f32 %v3928, %v3929
      %v3931 = vsel %vm3859, %v3854, 0.0
      %v3932 = vadd.f32 %v3930, %v3931
      %v3933 = vsel %vm3859, %v3855, 0.0
      %v3934 = vadd.f32 %v3932, %v3933
      %v3935 = vsel %vm3859, %v3856, 0.0
      %v3936 = vadd.f32 %v3934, %v3935
      %v3937 = vsel %vm3859, %v3857, 0.0
      %v3938 = vadd.f32 %v3936, %v3937
      %v3939 = vsel %vm3529, %v3858, 0.0
      %v3940 = vadd.f32 %v3938, %v3939
      %v3941 = vrot.slane %v3940, 4
      %v3942 = vadd.f32 %v3940, %v3941
      %v3943 = vrot.slane %v3942, 2
      %v3944 = vadd.f32 %v3942, %v3943
      %v3945 = vrot.slane %v3944, 1
      %v3946 = vadd.f32 %v3944, %v3945
      %v3947 = vmul.f32 %v3818, %v3199
      %v3948 = vmul.f32 %v3819, %v3202
      %v3949 = vmul.f32 %v3820, %v3207
      %v3950 = vmul.f32 %v3821, %v3210
      %v3951 = vmul.f32 %v3822, %v3215
      %v3952 = vmul.f32 %v3823, %v3218
      %v3953 = vmul.f32 %v3824, %v3223
      %v3954 = vmul.f32 %v3825, %v3226
      %v3955 = vmul.f32 %v3826, %v3231
      %v3956 = vmul.f32 %v3827, %v3234
      %v3957 = vmul.f32 %v3828, %v3239
      %v3958 = vmul.f32 %v3829, %v3242
      %v3959 = vmul.f32 %v3830, %v3247
      %v3960 = vmul.f32 %v3831, %v3250
      %v3961 = vmul.f32 %v3832, %v3255
      %v3962 = vmul.f32 %v3833, %v3258
      %v3963 = vmul.f32 %v3834, %v3263
      %v3964 = vmul.f32 %v3835, %v3266
      %v3965 = vmul.f32 %v3836, %v3271
      %v3966 = vmul.f32 %v3837, %v3274
      %v3967 = vmul.f32 %v3838, %v3279
      %v3968 = vmul.f32 %v3839, %v3282
      %v3969 = vmul.f32 %v3840, %v3287
      %v3970 = vmul.f32 %v3841, %v3290
      %v3971 = vmul.f32 %v3842, %v3295
      %v3972 = vmul.f32 %v3843, %v3298
      %v3973 = vmul.f32 %v3844, %v3303
      %v3974 = vmul.f32 %v3845, %v3306
      %v3975 = vmul.f32 %v3846, %v3311
      %v3976 = vmul.f32 %v3847, %v3314
      %v3977 = vmul.f32 %v3848, %v3319
      %v3978 = vmul.f32 %v3849, %v3322
      %v3979 = vmul.f32 %v3850, %v3327
      %v3980 = vmul.f32 %v3851, %v3330
      %v3981 = vmul.f32 %v3852, %v3335
      %v3982 = vmul.f32 %v3853, %v3338
      %v3983 = vmul.f32 %v3854, %v3343
      %v3984 = vmul.f32 %v3855, %v3346
      %v3985 = vmul.f32 %v3856, %v3351
      %v3986 = vmul.f32 %v3857, %v3354
      %v3987 = vmul.f32 %v3858, %v3359
      %v3988 = vsel %vm3859, %v3947, 0.0
      %v3989 = vsel %vm3859, %v3948, 0.0
      %v3990 = vadd.f32 %v3988, %v3989
      %v3991 = vsel %vm3859, %v3949, 0.0
      %v3992 = vadd.f32 %v3990, %v3991
      %v3993 = vsel %vm3859, %v3950, 0.0
      %v3994 = vadd.f32 %v3992, %v3993
      %v3995 = vsel %vm3859, %v3951, 0.0
      %v3996 = vadd.f32 %v3994, %v3995
      %v3997 = vsel %vm3859, %v3952, 0.0
      %v3998 = vadd.f32 %v3996, %v3997
      %v3999 = vsel %vm3859, %v3953, 0.0
      %v4000 = vadd.f32 %v3998, %v3999
      %v4001 = vsel %vm3859, %v3954, 0.0
      %v4002 = vadd.f32 %v4000, %v4001
      %v4003 = vsel %vm3859, %v3955, 0.0
      %v4004 = vadd.f32 %v4002, %v4003
      %v4005 = vsel %vm3859, %v3956, 0.0
      %v4006 = vadd.f32 %v4004, %v4005
      %v4007 = vsel %vm3859, %v3957, 0.0
      %v4008 = vadd.f32 %v4006, %v4007
      %v4009 = vsel %vm3859, %v3958, 0.0
      %v4010 = vadd.f32 %v4008, %v4009
      %v4011 = vsel %vm3859, %v3959, 0.0
      %v4012 = vadd.f32 %v4010, %v4011
      %v4013 = vsel %vm3859, %v3960, 0.0
      %v4014 = vadd.f32 %v4012, %v4013
      %v4015 = vsel %vm3859, %v3961, 0.0
      %v4016 = vadd.f32 %v4014, %v4015
      %v4017 = vsel %vm3859, %v3962, 0.0
      %v4018 = vadd.f32 %v4016, %v4017
      %v4019 = vsel %vm3859, %v3963, 0.0
      %v4020 = vadd.f32 %v4018, %v4019
      %v4021 = vsel %vm3859, %v3964, 0.0
      %v4022 = vadd.f32 %v4020, %v4021
      %v4023 = vsel %vm3859, %v3965, 0.0
      %v4024 = vadd.f32 %v4022, %v4023
      %v4025 = vsel %vm3859, %v3966, 0.0
      %v4026 = vadd.f32 %v4024, %v4025
      %v4027 = vsel %vm3859, %v3967, 0.0
      %v4028 = vadd.f32 %v4026, %v4027
      %v4029 = vsel %vm3859, %v3968, 0.0
      %v4030 = vadd.f32 %v4028, %v4029
      %v4031 = vsel %vm3859, %v3969, 0.0
      %v4032 = vadd.f32 %v4030, %v4031
      %v4033 = vsel %vm3859, %v3970, 0.0
      %v4034 = vadd.f32 %v4032, %v4033
      %v4035 = vsel %vm3859, %v3971, 0.0
      %v4036 = vadd.f32 %v4034, %v4035
      %v4037 = vsel %vm3859, %v3972, 0.0
      %v4038 = vadd.f32 %v4036, %v4037
      %v4039 = vsel %vm3859, %v3973, 0.0
      %v4040 = vadd.f32 %v4038, %v4039
      %v4041 = vsel %vm3859, %v3974, 0.0
      %v4042 = vadd.f32 %v4040, %v4041
      %v4043 = vsel %vm3859, %v3975, 0.0
      %v4044 = vadd.f32 %v4042, %v4043
      %v4045 = vsel %vm3859, %v3976, 0.0
      %v4046 = vadd.f32 %v4044, %v4045
      %v4047 = vsel %vm3859, %v3977, 0.0
      %v4048 = vadd.f32 %v4046, %v4047
      %v4049 = vsel %vm3859, %v3978, 0.0
      %v4050 = vadd.f32 %v4048, %v4049
      %v4051 = vsel %vm3859, %v3979, 0.0
      %v4052 = vadd.f32 %v4050, %v4051
      %v4053 = vsel %vm3859, %v3980, 0.0
      %v4054 = vadd.f32 %v4052, %v4053
      %v4055 = vsel %vm3859, %v3981, 0.0
      %v4056 = vadd.f32 %v4054, %v4055
      %v4057 = vsel %vm3859, %v3982, 0.0
      %v4058 = vadd.f32 %v4056, %v4057
      %v4059 = vsel %vm3859, %v3983, 0.0
      %v4060 = vadd.f32 %v4058, %v4059
      %v4061 = vsel %vm3859, %v3984, 0.0
      %v4062 = vadd.f32 %v4060, %v4061
      %v4063 = vsel %vm3859, %v3985, 0.0
      %v4064 = vadd.f32 %v4062, %v4063
      %v4065 = vsel %vm3859, %v3986, 0.0
      %v4066 = vadd.f32 %v4064, %v4065
      %v4067 = vsel %vm3529, %v3987, 0.0
      %v4068 = vadd.f32 %v4066, %v4067
      %v4069 = vrot.slane %v4068, 4
      %v4070 = vadd.f32 %v4068, %v4069
      %v4071 = vrot.slane %v4070, 2
      %v4072 = vadd.f32 %v4070, %v4071
      %v4073 = vrot.slane %v4072, 1
      %v4074 = vadd.f32 %v4072, %v4073
      %vm4075 = vcmask 1040384
      %v4076 = vsel %vm4075, %v3946, %v4074
      %4077 = vst.msk [vmem:[%s208] sm:$0x3] %vm3570, %v4076
      %p4078 = scmp.lt.s32.totalorder %s16, 1
      %s4079 = scalar_select %p4078, %s16, 1
      %s4080 = smul.addr %s4079, 41
      %s4081 = smul.addr %s4080, 4
      %s4082 = scalar_lea.vmem %s3, %s4081
      %p4083 = scmp.lt.s32.totalorder %s16, 1
      %s4084 = scalar_select %p4083, %s16, 1
      %s4085 = smul.addr %s4084, 2
      %s4086 = scalar_lea.vmem %s4, %s4085
      // Predicated region
      $region33: #{residual_block_forward.3} parent=31 // pred_check
        %p4087 = pneg %p102
      $region34: #{residual_block_forward.3} parent=31 // pred_check_branch
        %4089 = sbr.rel (%p4087) target = $region36
      $region35: #{residual_block_forward.3} parent=31 // pred_region
        _
      $region36: #{residual_block_forward.3} parent=31 // pred_fallthru
        _
      // Predicated region
      $region37: #{residual_block_forward.3} parent=31 // pred_check
        %p4090 = pneg %p128
      $region38: #{residual_block_forward.3} parent=31 // pred_check_branch
        %4092 = sbr.rel (%p4090) target = $region40
      $region39: #{residual_block_forward.3} parent=31 // pred_region
        _
      $region40: #{residual_block_forward.3} parent=31 // pred_fallthru
        _
    $region32: #{residual_block_forward.3} parent=5 // pred_fallthru
      _
    %p4093 = scmp.le.s32.totalorder 2, %s11
    // Predicated region
    $region41: #{residual_block_forward.3} parent=5 // pred_check
      %p4094 = pneg %p4093
    $region42: #{residual_block_forward.3} parent=5 // pred_check_branch
      %4096 = sbr.rel (%p4094) target = $region44
    $region43: #{residual_block_forward.3} parent=5 // pred_region
      %s4097 = ssub.s32 %s11, 2
      // Predicated region
      $region45: #{residual_block_forward.3} parent=43 // pred_check
        %p4098 = pneg %p108
      $region46: #{residual_block_forward.3} parent=43 // pred_check_branch
        %4100 = sbr.rel (%p4098) target = $region48
      $region47: #{residual_block_forward.3} parent=43 // pred_region
        %p4101 = scmp.lt.s32.totalorder %s17, 1
        %s4102 = scalar_select %p4101, %s17, 1
        %s4103 = smul.addr %s4102, 41
        %s4104 = smul.addr %s4103, 4
        %s4105 = scalar_lea.vmem %s3, %s4104
      $region48: #{residual_block_forward.3} parent=43 // pred_fallthru
        _
      // Predicated region
      $region49: #{residual_block_forward.3} parent=43 // pred_check
        %p4106 = pneg %p134
      $region50: #{residual_block_forward.3} parent=43 // pred_check_branch
        %4108 = sbr.rel (%p4106) target = $region52
      $region51: #{residual_block_forward.3} parent=43 // pred_region
        %p4109 = scmp.lt.s32.totalorder %s17, 1
        %s4110 = scalar_select %p4109, %s17, 1
        %s4111 = smul.addr %s4110, 2
        %s4112 = scalar_lea.vmem %s4, %s4111
      $region52: #{residual_block_forward.3} parent=43 // pred_fallthru
        _
    $region44: #{residual_block_forward.3} parent=5 // pred_fallthru
      _
  $region6: #{residual_block_forward.3} parent=0 // loop_footer
    %s15 = sadd.s32 1, %s11
  $region7: #{residual_block_forward.3} parent=0 // loop_footer_branch
    %10 = sbr.rel target = $region3
  $region8: #{residual_block_forward.3} parent=0 // loop_exit
    _

// kernel: residual_block_forward.4
$region0: #{residual_block_forward.4}
  #allocation0 [shape = 'u32[]', space=smem, size = 0x4, offset = 0x4, fixed_abs, tag = 'smem constant byte address 0x4 - core index']
  #allocation1 [shape = 'u32[144,128]{1,0:T(1,128)}', space=vmem, size = 0x12000, scoped, tag = 'internal scratch']
  #allocation2 [shape = 'bf16[324,72]{1,0:T(8,128)(2,1)}', space=vmem, size = 0x14800, scoped, tag = 'scratch operand']
  %s0 = inlined_call_operand.vmem [shape: bf16[2,324,8], index: 0, kind: input, shape index: {}]
  %s1 = inlined_call_operand.vmem [shape: f32[1,8], index: 1, kind: input, shape index: {}]
  %s2 = inlined_call_operand.vmem [shape: f32[1,8], index: 2, kind: input, shape index: {}]
  %s3 = inlined_call_operand.vmem [shape: bf16[72,8], index: 3, kind: input, shape index: {}]
  %s4 = inlined_call_operand.vmem [shape: f32[324,1], index: 4, kind: input, shape index: {}]
  %s5 = inlined_call_operand.vmem [shape: bf16[2,324,8], index: 5, kind: output, shape index: {0}]
  %s6 = inlined_call_operand.vmem [shape: f32[2,2,8], index: 6, kind: output, shape index: {1}]
  %7 = xla_tuple %s5, %s6
  %s8 = sld [smem:[#allocation0]]
  $region61: #{residual_block_forward.4} parent=0
    _
  %s10 = ssub.s32 1, %s8
  %s11 = scalar_select 0, %s10, %s8
  loop: start=0, step=1, limit=4
  $region2: #{residual_block_forward.4} parent=0 // loop_pre_header
    _
  $region3: #{residual_block_forward.4} parent=0 // loop_header
    %s13 = sphi 0, %s17
    %p14 = scmp.ge.s32.totalorder %s13, 4
    %s23 = sphi 0, %s25
    %s26 = sphi 0, %s23
    %s27 = sphi 0, %s26
    %s43 = sphi 0, %s27
    %s47 = sphi 0, %s47
    %s49 = sphi 0, %s47
    %s50 = sphi 0, %s49
    %s64 = sphi 0, %s50
    %s68 = sphi 0, %s68
    %s70 = sphi 0, %s68
    %s71 = sphi 0, %s70
    %s85 = sphi 0, %s71
    %s89 = sphi 0, %s89
    %s91 = sphi 0, %s89
    %s92 = sphi 0, %s91
    %s106 = sphi 0, %s92
    %s110 = sphi 0, %s110
    %s112 = sphi 0, %s110
    %s113 = sphi 0, %s112
    %s127 = sphi 0, %s113
    %s133 = sphi 0, %s135
    %s136 = sphi 0, %s133
    %s137 = sphi 0, %s136
    %s153 = sphi 0, %s137
    %s159 = sphi 0, %s161
    %s162 = sphi 0, %s159
    %s163 = sphi 0, %s162
    %s179 = sphi 0, %s163
  $region4: #{residual_block_forward.4} parent=0 // loop_header_branch
    %16 = sbr.rel (%p14) target = $region8
  $region5: #{residual_block_forward.4} parent=0 // loop_body
    %s18 = ssub.s32 %s13, 1
    %s19 = ssub.s32 %s13, 2
    %s20 = sadd.s32 %s13, 1
    %s21 = ssub.s32 %s13, %s20
    %p22 = scmp.eq.s32.totalorder %s21, 0
    %s24 = sadd.s32 %s23, 1
    %s25 = scalar_select %p22, %s23, %s24
    %p28 = pneg %p22
    %p29 = scmp.eq.s32.totalorder %s13, 1
    %p30 = por %p28, %p29
    %p31 = scmp.ne.s32.totalorder %s23, %s26
    %p32 = scmp.eq.s32.totalorder %s13, 0
    %p33 = por %p31, %p32
    %p34 = scmp.ne.s32.totalorder %s23, %s26
    %p35 = scmp.eq.s32.totalorder %s18, 1
    %p36 = por %p34, %p35
    %p37 = scmp.ne.s32.totalorder %s26, %s27
    %p38 = scmp.eq.s32.totalorder %s18, 0
    %p39 = por %p37, %p38
    %p40 = scmp.ne.s32.totalorder %s26, %s27
    %p41 = scmp.eq.s32.totalorder %s19, 1
    %p42 = por %p40, %p41
    %p44 = scmp.ne.s32.totalorder %s27, %s43
    %p45 = scmp.eq.s32.totalorder %s19, 0
    %p46 = por %p44, %p45
    %s48 = sadd.s32 %s47, 1
    %p51 = scmp.eq.s32.totalorder %s13, 1
    %p52 = scmp.ne.s32.totalorder %s47, %s49
    %p53 = scmp.eq.s32.totalorder %s13, 0
    %p54 = por %p52, %p53
    %p55 = scmp.ne.s32.totalorder %s47, %s49
    %p56 = scmp.eq.s32.totalorder %s18, 1
    %p57 = por %p55, %p56
    %p58 = scmp.ne.s32.totalorder %s49, %s50
    %p59 = scmp.eq.s32.totalorder %s18, 0
    %p60 = por %p58, %p59
    %p61 = scmp.ne.s32.totalorder %s49, %s50
    %p62 = scmp.eq.s32.totalorder %s19, 1
    %p63 = por %p61, %p62
    %p65 = scmp.ne.s32.totalorder %s50, %s64
    %p66 = scmp.eq.s32.totalorder %s19, 0
    %p67 = por %p65, %p66
    %s69 = sadd.s32 %s68, 1
    %p72 = scmp.eq.s32.totalorder %s13, 1
    %p73 = scmp.ne.s32.totalorder %s68, %s70
    %p74 = scmp.eq.s32.totalorder %s13, 0
    %p75 = por %p73, %p74
    %p76 = scmp.ne.s32.totalorder %s68, %s70
    %p77 = scmp.eq.s32.totalorder %s18, 1
    %p78 = por %p76, %p77
    %p79 = scmp.ne.s32.totalorder %s70, %s71
    %p80 = scmp.eq.s32.totalorder %s18, 0
    %p81 = por %p79, %p80
    %p82 = scmp.ne.s32.totalorder %s70, %s71
    %p83 = scmp.eq.s32.totalorder %s19, 1
    %p84 = por %p82, %p83
    %p86 = scmp.ne.s32.totalorder %s71, %s85
    %p87 = scmp.eq.s32.totalorder %s19, 0
    %p88 = por %p86, %p87
    %s90 = sadd.s32 %s89, 1
    %p93 = scmp.eq.s32.totalorder %s13, 1
    %p94 = scmp.ne.s32.totalorder %s89, %s91
    %p95 = scmp.eq.s32.totalorder %s13, 0
    %p96 = por %p94, %p95
    %p97 = scmp.ne.s32.totalorder %s89, %s91
    %p98 = scmp.eq.s32.totalorder %s18, 1
    %p99 = por %p97, %p98
    %p100 = scmp.ne.s32.totalorder %s91, %s92
    %p101 = scmp.eq.s32.totalorder %s18, 0
    %p102 = por %p100, %p101
    %p103 = scmp.ne.s32.totalorder %s91, %s92
    %p104 = scmp.eq.s32.totalorder %s19, 1
    %p105 = por %p103, %p104
    %p107 = scmp.ne.s32.totalorder %s92, %s106
    %p108 = scmp.eq.s32.totalorder %s19, 0
    %p109 = por %p107, %p108
    %s111 = sadd.s32 %s110, 1
    %p114 = scmp.eq.s32.totalorder %s13, 1
    %p115 = scmp.ne.s32.totalorder %s110, %s112
    %p116 = scmp.eq.s32.totalorder %s13, 0
    %p117 = por %p115, %p116
    %p118 = scmp.ne.s32.totalorder %s110, %s112
    %p119 = scmp.eq.s32.totalorder %s18, 1
    %p120 = por %p118, %p119
    %p121 = scmp.ne.s32.totalorder %s112, %s113
    %p122 = scmp.eq.s32.totalorder %s18, 0
    %p123 = por %p121, %p122
    %p124 = scmp.ne.s32.totalorder %s112, %s113
    %p125 = scmp.eq.s32.totalorder %s19, 1
    %p126 = por %p124, %p125
    %p128 = scmp.ne.s32.totalorder %s113, %s127
    %p129 = scmp.eq.s32.totalorder %s19, 0
    %p130 = por %p128, %p129
    %s131 = ssub.s32 %s13, %s20
    %p132 = scmp.eq.s32.totalorder %s131, 0
    %s134 = sadd.s32 %s133, 1
    %s135 = scalar_select %p132, %s133, %s134
    %p138 = pneg %p132
    %p139 = scmp.eq.s32.totalorder %s13, 1
    %p140 = por %p138, %p139
    %p141 = scmp.ne.s32.totalorder %s133, %s136
    %p142 = scmp.eq.s32.totalorder %s13, 0
    %p143 = por %p141, %p142
    %p144 = scmp.ne.s32.totalorder %s133, %s136
    %p145 = scmp.eq.s32.totalorder %s18, 1
    %p146 = por %p144, %p145
    %p147 = scmp.ne.s32.totalorder %s136, %s137
    %p148 = scmp.eq.s32.totalorder %s18, 0
    %p149 = por %p147, %p148
    %p150 = scmp.ne.s32.totalorder %s136, %s137
    %p151 = scmp.eq.s32.totalorder %s19, 1
    %p152 = por %p150, %p151
    %p154 = scmp.ne.s32.totalorder %s137, %s153
    %p155 = scmp.eq.s32.totalorder %s19, 0
    %p156 = por %p154, %p155
    %s157 = ssub.s32 %s13, %s20
    %p158 = scmp.eq.s32.totalorder %s157, 0
    %s160 = sadd.s32 %s159, 1
    %s161 = scalar_select %p158, %s159, %s160
    %p164 = pneg %p158
    %p165 = scmp.eq.s32.totalorder %s13, 1
    %p166 = por %p164, %p165
    %p167 = scmp.ne.s32.totalorder %s159, %s162
    %p168 = scmp.eq.s32.totalorder %s13, 0
    %p169 = por %p167, %p168
    %p170 = scmp.ne.s32.totalorder %s159, %s162
    %p171 = scmp.eq.s32.totalorder %s18, 1
    %p172 = por %p170, %p171
    %p173 = scmp.ne.s32.totalorder %s162, %s163
    %p174 = scmp.eq.s32.totalorder %s18, 0
    %p175 = por %p173, %p174
    %p176 = scmp.ne.s32.totalorder %s162, %s163
    %p177 = scmp.eq.s32.totalorder %s19, 1
    %p178 = por %p176, %p177
    %p180 = scmp.ne.s32.totalorder %s163, %s179
    %p181 = scmp.eq.s32.totalorder %s19, 0
    %p182 = por %p180, %p181
    %p183 = scmp.le.s32.totalorder 1, %s13
    %p184 = scmp.lt.s32.totalorder %s13, 3
    %p185 = pnand %p183, %p184
    %p186 = pneg %p185
    // Predicated region
    $region9: #{residual_block_forward.4} parent=5 // pred_check
      _
    $region10: #{residual_block_forward.4} parent=5 // pred_check_branch
      %188 = sbr.rel (%p185) target = $region12
    $region11: #{residual_block_forward.4} parent=5 // pred_region
      %s189 = ssub.s32 %s13, 1
      // Predicated region
      $region13: #{residual_block_forward.4} parent=11 // pred_check
        %p190 = pneg %p60
      $region14: #{residual_block_forward.4} parent=11 // pred_check_branch
        %192 = sbr.rel (%p190) target = $region16
      $region15: #{residual_block_forward.4} parent=11 // pred_region
        _
      $region16: #{residual_block_forward.4} parent=11 // pred_fallthru
        _
      // Predicated region
      $region17: #{residual_block_forward.4} parent=11 // pred_check
        %p193 = pneg %p81
      $region18: #{residual_block_forward.4} parent=11 // pred_check_branch
        %195 = sbr.rel (%p193) target = $region20
      $region19: #{residual_block_forward.4} parent=11 // pred_region
        _
      $region20: #{residual_block_forward.4} parent=11 // pred_fallthru
        _
      // Predicated region
      $region21: #{residual_block_forward.4} parent=11 // pred_check
        %p196 = pneg %p102
      $region22: #{residual_block_forward.4} parent=11 // pred_check_branch
        %198 = sbr.rel (%p196) target = $region24
      $region23: #{residual_block_forward.4} parent=11 // pred_region
        _
      $region24: #{residual_block_forward.4} parent=11 // pred_fallthru
        _
      // Predicated region
      $region25: #{residual_block_forward.4} parent=11 // pred_check
        %p199 = pneg %p123
      $region26: #{residual_block_forward.4} parent=11 // pred_check_branch
        %201 = sbr.rel (%p199) target = $region28
      $region27: #{residual_block_forward.4} parent=11 // pred_region
        _
      $region28: #{residual_block_forward.4} parent=11 // pred_fallthru
        _
    $region12: #{residual_block_forward.4} parent=5 // pred_fallthru
      _
    %p202 = scmp.lt.s32.totalorder %s13, 2
    // Predicated region
    $region29: #{residual_block_forward.4} parent=5 // pred_check
      %p203 = pneg %p202
    $region30: #{residual_block_forward.4} parent=5 // pred_check_branch
      %205 = sbr.rel (%p203) target = $region32
    $region31: #{residual_block_forward.4} parent=5 // pred_region
      // Predicated region
      $region33: #{residual_block_forward.4} parent=31 // pred_check
        %p206 = pneg %p33
      $region34: #{residual_block_forward.4} parent=31 // pred_check_branch
        %208 = sbr.rel (%p206) target = $region36
      $region35: #{residual_block_forward.4} parent=31 // pred_region
        %p209 = scmp.lt.s32.totalorder %s13, 1
        %s210 = scalar_select %p209, %s13, 1
        %s211 = smul.addr %s210, 41
        %s212 = smul.addr %s211, 4
        %s213 = scalar_lea.vmem %s0, %s212
      $region36: #{residual_block_forward.4} parent=31 // pred_fallthru
        _
    $region32: #{residual_block_forward.4} parent=5 // pred_fallthru
      _
    %p214 = scmp.le.s32.totalorder 1, %s13
    %p215 = scmp.lt.s32.totalorder %s13, 3
    %p216 = pnand %p214, %p215
    %p217 = pneg %p216
    // Predicated region
    $region37: #{residual_block_forward.4} parent=5 // pred_check
      _
    $region38: #{residual_block_forward.4} parent=5 // pred_check_branch
      %219 = sbr.rel (%p216) target = $region40
    $region39: #{residual_block_forward.4} parent=5 // pred_region
      %s220 = ssub.s32 %s13, 1
      %p221 = scmp.lt.s32.totalorder %s18, 1
      %s222 = scalar_select %p221, %s18, 1
      %s223 = smul.addr %s222, 41
      %s224 = smul.addr %s223, 4
      %s225 = scalar_lea.vmem %s0, %s224
      %p226 = pneg %p39
      %p227 = pneg %p36
      %p228 = pneg %p60
      %p229 = pneg %p57
      %p230 = pneg %p81
      %p231 = pneg %p78
      %p232 = pneg %p102
      %p233 = pneg %p99
      %p234 = pneg %p123
      %p235 = pneg %p120
      %p236 = pneg %p149
      %p237 = pneg %p146
      %p238 = scmp.lt.s32.totalorder %s18, 1
      %s239 = scalar_select %p238, %s18, 1
      %s240 = smul.addr %s239, 41
      %s241 = smul.addr %s240, 4
      %s242 = scalar_lea.vmem %s5, %s241
      %p243 = pneg %p175
      %p244 = pneg %p172
      %p245 = scmp.lt.s32.totalorder %s18, 1
      %s246 = scalar_select %p245, %s18, 1
      %s247 = smul.addr %s246, 2
      %s248 = scalar_lea.vmem %s6, %s247
      %p249 = scmp.lt.s32.totalorder %s18, 1
      %s250 = scalar_select %p249, %s18, 1
      %s251 = smul.addr %s250, 41
      %s252 = smul.addr %s251, 4
      %s253 = scalar_lea.vmem %s0, %s252
      %p254 = scmp.lt.s32.totalorder %s18, 1
      %s255 = scalar_select %p254, %s18, 1
      %s256 = smul.addr %s255, 41
      %s257 = smul.addr %s256, 4
      %s258 = scalar_lea.vmem %s5, %s257
      %p259 = scmp.lt.s32.totalorder %s18, 1
      %s260 = scalar_select %p259, %s18, 1
      %s261 = smul.addr %s260, 2
      %s262 = scalar_lea.vmem %s6, %s261
      %v264 = vld [vmem:[%s4] sm:$0xff]
      %v265 = vld [vmem:[%s4 + $0x8] sm:$0xff]
      %v266 = vld [vmem:[%s4 + $0x10] sm:$0xff]
      %v267 = vld [vmem:[%s4 + $0x18] sm:$0xff]
      %v268 = vld [vmem:[%s4 + $0x20] sm:$0xff]
      %v269 = vld [vmem:[%s4 + $0x28] sm:$0xff]
      %v270 = vld [vmem:[%s4 + $0x30] sm:$0xff]
      %v271 = vld [vmem:[%s4 + $0x38] sm:$0xff]
      %v272 = vld [vmem:[%s4 + $0x40] sm:$0xff]
      %v273 = vld [vmem:[%s4 + $0x48] sm:$0xff]
      %v274 = vld [vmem:[%s4 + $0x50] sm:$0xff]
      %v275 = vld [vmem:[%s4 + $0x58] sm:$0xff]
      %v276 = vld [vmem:[%s4 + $0x60] sm:$0xff]
      %v277 = vld [vmem:[%s4 + $0x68] sm:$0xff]
      %v278 = vld [vmem:[%s4 + $0x70] sm:$0xff]
      %v279 = vld [vmem:[%s4 + $0x78] sm:$0xff]
      %v280 = vld [vmem:[%s4 + $0x80] sm:$0xff]
      %v281 = vld [vmem:[%s4 + $0x88] sm:$0xff]
      %v282 = vld [vmem:[%s4 + $0x90] sm:$0xff]
      %v283 = vld [vmem:[%s4 + $0x98] sm:$0xff]
      %v284 = vld [vmem:[%s4 + $0xa0] sm:$0xff]
      %v285 = vld [vmem:[%s4 + $0xa8] sm:$0xff]
      %v286 = vld [vmem:[%s4 + $0xb0] sm:$0xff]
      %v287 = vld [vmem:[%s4 + $0xb8] sm:$0xff]
      %v288 = vld [vmem:[%s4 + $0xc0] sm:$0xff]
      %v289 = vld [vmem:[%s4 + $0xc8] sm:$0xff]
      %v290 = vld [vmem:[%s4 + $0xd0] sm:$0xff]
      %v291 = vld [vmem:[%s4 + $0xd8] sm:$0xff]
      %v292 = vld [vmem:[%s4 + $0xe0] sm:$0xff]
      %v293 = vld [vmem:[%s4 + $0xe8] sm:$0xff]
      %v294 = vld [vmem:[%s4 + $0xf0] sm:$0xff]
      %v295 = vld [vmem:[%s4 + $0xf8] sm:$0xff]
      %v296 = vld [vmem:[%s4 + $0x100] sm:$0xff]
      %v297 = vld [vmem:[%s4 + $0x108] sm:$0xff]
      %v298 = vld [vmem:[%s4 + $0x110] sm:$0xff]
      %v299 = vld [vmem:[%s4 + $0x118] sm:$0xff]
      %v300 = vld [vmem:[%s4 + $0x120] sm:$0xff]
      %v301 = vld [vmem:[%s4 + $0x128] sm:$0xff]
      %v302 = vld [vmem:[%s4 + $0x130] sm:$0xff]
      %v303 = vld [vmem:[%s4 + $0x138] sm:$0xff]
      %v304 = vld [vmem:[%s4 + $0x140] sm:$0xf]
      %v305 = vld [vmem:[%s253] sm:$0xf]
      %v306 = vld [vmem:[%s253 + $0x4] sm:$0xf]
      %v307 = vld [vmem:[%s253 + $0x8] sm:$0xf]
      %v308 = vld [vmem:[%s253 + $0xc] sm:$0xf]
      %v309 = vld [vmem:[%s253 + $0x10] sm:$0xf]
      %v310 = vld [vmem:[%s253 + $0x14] sm:$0xf]
      %v311 = vld [vmem:[%s253 + $0x18] sm:$0xf]
      %v312 = vld [vmem:[%s253 + $0x1c] sm:$0xf]
      %v313 = vld [vmem:[%s253 + $0x20] sm:$0xf]
      %v314 = vld [vmem:[%s253 + $0x24] sm:$0xf]
      %v315 = vld [vmem:[%s253 + $0x28] sm:$0xf]
      %v316 = vld [vmem:[%s253 + $0x2c] sm:$0xf]
      %v317 = vld [vmem:[%s253 + $0x30] sm:$0xf]
      %v318 = vld [vmem:[%s253 + $0x34] sm:$0xf]
      %v319 = vld [vmem:[%s253 + $0x38] sm:$0xf]
      %v320 = vld [vmem:[%s253 + $0x3c] sm:$0xf]
      %v321 = vld [vmem:[%s253 + $0x40] sm:$0xf]
      %v322 = vld [vmem:[%s253 + $0x44] sm:$0xf]
      %v323 = vld [vmem:[%s253 + $0x48] sm:$0xf]
      %v324 = vld [vmem:[%s253 + $0x4c] sm:$0xf]
      %v325 = vld [vmem:[%s253 + $0x50] sm:$0xf]
      %v326 = vld [vmem:[%s253 + $0x54] sm:$0xf]
      %v327 = vld [vmem:[%s253 + $0x58] sm:$0xf]
      %v328 = vld [vmem:[%s253 + $0x5c] sm:$0xf]
      %v329 = vld [vmem:[%s253 + $0x60] sm:$0xf]
      %v330 = vld [vmem:[%s253 + $0x64] sm:$0xf]
      %v331 = vld [vmem:[%s253 + $0x68] sm:$0xf]
      %v332 = vld [vmem:[%s253 + $0x6c] sm:$0xf]
      %v333 = vld [vmem:[%s253 + $0x70] sm:$0xf]
      %v334 = vld [vmem:[%s253 + $0x74] sm:$0xf]
      %v335 = vld [vmem:[%s253 + $0x78] sm:$0xf]
      %v336 = vld [vmem:[%s253 + $0x7c] sm:$0xf]
      %v337 = vld [vmem:[%s253 + $0x80] sm:$0xf]
      %v338 = vld [vmem:[%s253 + $0x84] sm:$0xf]
      %v339 = vld [vmem:[%s253 + $0x88] sm:$0xf]
      %v340 = vld [vmem:[%s253 + $0x8c] sm:$0xf]
      %v341 = vld [vmem:[%s253 + $0x90] sm:$0xf]
      %v342 = vld [vmem:[%s253 + $0x94] sm:$0xf]
      %v343 = vld [vmem:[%s253 + $0x98] sm:$0xf]
      %v344 = vld [vmem:[%s253 + $0x9c] sm:$0xf]
      %v345 = vld [vmem:[%s253 + $0xa0] sm:$0x3]
      %v346 = vunpack.c.l.bf16 %v305
      %v347 = vunpack.c.l.bf16 %v306
      %v348 = vunpack.c.l.bf16 %v307
      %v349 = vunpack.c.l.bf16 %v308
      %v350 = vunpack.c.l.bf16 %v309
      %v351 = vunpack.c.l.bf16 %v310
      %v352 = vunpack.c.l.bf16 %v311
      %v353 = vunpack.c.l.bf16 %v312
      %v354 = vunpack.c.l.bf16 %v313
      %v355 = vunpack.c.l.bf16 %v314
      %v356 = vunpack.c.l.bf16 %v315
      %v357 = vunpack.c.l.bf16 %v316
      %v358 = vunpack.c.l.bf16 %v317
      %v359 = vunpack.c.l.bf16 %v318
      %v360 = vunpack.c.l.bf16 %v319
      %v361 = vunpack.c.l.bf16 %v320
      %v362 = vunpack.c.l.bf16 %v321
      %v363 = vunpack.c.l.bf16 %v322
      %v364 = vunpack.c.l.bf16 %v323
      %v365 = vunpack.c.l.bf16 %v324
      %v366 = vunpack.c.l.bf16 %v325
      %v367 = vunpack.c.l.bf16 %v326
      %v368 = vunpack.c.l.bf16 %v327
      %v369 = vunpack.c.l.bf16 %v328
      %v370 = vunpack.c.l.bf16 %v329
      %v371 = vunpack.c.l.bf16 %v330
      %v372 = vunpack.c.l.bf16 %v331
      %v373 = vunpack.c.l.bf16 %v332
      %v374 = vunpack.c.l.bf16 %v333
      %v375 = vunpack.c.l.bf16 %v334
      %v376 = vunpack.c.l.bf16 %v335
      %v377 = vunpack.c.l.bf16 %v336
      %v378 = vunpack.c.l.bf16 %v337
      %v379 = vunpack.c.l.bf16 %v338
      %v380 = vunpack.c.l.bf16 %v339
      %v381 = vunpack.c.l.bf16 %v340
      %v382 = vunpack.c.l.bf16 %v341
      %v383 = vunpack.c.l.bf16 %v342
      %v384 = vunpack.c.l.bf16 %v343
      %v385 = vunpack.c.l.bf16 %v344
      %v386 = vunpack.c.l.bf16 %v345
      %v387 = vld [vmem:[%s1] sm:$0x1]
      %v389 = vlaneseq
      %v390 = vshrl.u32 %v389, 7
      %v391 = vsub.s32 0, %v390
      %v392 = vrot.slane %v387, %v391
      %v394 = vmul.f32 %v346, %v392
      %v395 = vmul.f32 %v347, %v392
      %v396 = vmul.f32 %v348, %v392
      %v397 = vmul.f32 %v349, %v392
      %v398 = vmul.f32 %v350, %v392
      %v399 = vmul.f32 %v351, %v392
      %v400 = vmul.f32 %v352, %v392
      %v401 = vmul.f32 %v353, %v392
      %v402 = vmul.f32 %v354, %v392
      %v403 = vmul.f32 %v355, %v392
      %v404 = vmul.f32 %v356, %v392
      %v405 = vmul.f32 %v357, %v392
      %v406 = vmul.f32 %v358, %v392
      %v407 = vmul.f32 %v359, %v392
      %v408 = vmul.f32 %v360, %v392
      %v409 = vmul.f32 %v361, %v392
      %v410 = vmul.f32 %v362, %v392
      %v411 = vmul.f32 %v363, %v392
      %v412 = vmul.f32 %v364, %v392
      %v413 = vmul.f32 %v365, %v392
      %v414 = vmul.f32 %v366, %v392
      %v415 = vmul.f32 %v367, %v392
      %v416 = vmul.f32 %v368, %v392
      %v417 = vmul.f32 %v369, %v392
      %v418 = vmul.f32 %v370, %v392
      %v419 = vmul.f32 %v371, %v392
      %v420 = vmul.f32 %v372, %v392
      %v421 = vmul.f32 %v373, %v392
      %v422 = vmul.f32 %v374, %v392
      %v423 = vmul.f32 %v375, %v392
      %v424 = vmul.f32 %v376, %v392
      %v425 = vmul.f32 %v377, %v392
      %v426 = vmul.f32 %v378, %v392
      %v427 = vmul.f32 %v379, %v392
      %v428 = vmul.f32 %v380, %v392
      %v429 = vmul.f32 %v381, %v392
      %v430 = vmul.f32 %v382, %v392
      %v431 = vmul.f32 %v383, %v392
      %v432 = vmul.f32 %v384, %v392
      %v433 = vmul.f32 %v385, %v392
      %v434 = vmul.f32 %v386, %v392
      %v435 = vld [vmem:[%s2] sm:$0x1]
      %v437 = vlaneseq
      %v438 = vshrl.u32 %v437, 7
      %v439 = vsub.s32 0, %v438
      %v440 = vrot.slane %v435, %v439
      %v442 = vadd.f32 %v394, %v440
      %v443 = vadd.f32 %v395, %v440
      %v444 = vadd.f32 %v396, %v440
      %v445 = vadd.f32 %v397, %v440
      %v446 = vadd.f32 %v398, %v440
      %v447 = vadd.f32 %v399, %v440
      %v448 = vadd.f32 %v400, %v440
      %v449 = vadd.f32 %v401, %v440
      %v450 = vadd.f32 %v402, %v440
      %v451 = vadd.f32 %v403, %v440
      %v452 = vadd.f32 %v404, %v440
      %v453 = vadd.f32 %v405, %v440
      %v454 = vadd.f32 %v406, %v440
      %v455 = vadd.f32 %v407, %v440
      %v456 = vadd.f32 %v408, %v440
      %v457 = vadd.f32 %v409, %v440
      %v458 = vadd.f32 %v410, %v440
      %v459 = vadd.f32 %v411, %v440
      %v460 = vadd.f32 %v412, %v440
      %v461 = vadd.f32 %v413, %v440
      %v462 = vadd.f32 %v414, %v440
      %v463 = vadd.f32 %v415, %v440
      %v464 = vadd.f32 %v416, %v440
      %v465 = vadd.f32 %v417, %v440
      %v466 = vadd.f32 %v418, %v440
      %v467 = vadd.f32 %v419, %v440
      %v468 = vadd.f32 %v420, %v440
      %v469 = vadd.f32 %v421, %v440
      %v470 = vadd.f32 %v422, %v440
      %v471 = vadd.f32 %v423, %v440
      %v472 = vadd.f32 %v424, %v440
      %v473 = vadd.f32 %v425, %v440
      %v474 = vadd.f32 %v426, %v440
      %v475 = vadd.f32 %v427, %v440
      %v476 = vadd.f32 %v428, %v440
      %v477 = vadd.f32 %v429, %v440
      %v478 = vadd.f32 %v430, %v440
      %v479 = vadd.f32 %v431, %v440
      %v480 = vadd.f32 %v432, %v440
      %v481 = vadd.f32 %v433, %v440
      %v482 = vadd.f32 %v434, %v440
      %v483 = vmax.f32 %v442, 0.0
      %v484 = vmax.f32 %v443, 0.0
      %v485 = vmax.f32 %v444, 0.0
      %v486 = vmax.f32 %v445, 0.0
      %v487 = vmax.f32 %v446, 0.0
      %v488 = vmax.f32 %v447, 0.0
      %v489 = vmax.f32 %v448, 0.0
      %v490 = vmax.f32 %v449, 0.0
      %v491 = vmax.f32 %v450, 0.0
      %v492 = vmax.f32 %v451, 0.0
      %v493 = vmax.f32 %v452, 0.0
      %v494 = vmax.f32 %v453, 0.0
      %v495 = vmax.f32 %v454, 0.0
      %v496 = vmax.f32 %v455, 0.0
      %v497 = vmax.f32 %v456, 0.0
      %v498 = vmax.f32 %v457, 0.0
      %v499 = vmax.f32 %v458, 0.0
      %v500 = vmax.f32 %v459, 0.0
      %v501 = vmax.f32 %v460, 0.0
      %v502 = vmax.f32 %v461, 0.0
      %v503 = vmax.f32 %v462, 0.0
      %v504 = vmax.f32 %v463, 0.0
      %v505 = vmax.f32 %v464, 0.0
      %v506 = vmax.f32 %v465, 0.0
      %v507 = vmax.f32 %v466, 0.0
      %v508 = vmax.f32 %v467, 0.0
      %v509 = vmax.f32 %v468, 0.0
      %v510 = vmax.f32 %v469, 0.0
      %v511 = vmax.f32 %v470, 0.0
      %v512 = vmax.f32 %v471, 0.0
      %v513 = vmax.f32 %v472, 0.0
      %v514 = vmax.f32 %v473, 0.0
      %v515 = vmax.f32 %v474, 0.0
      %v516 = vmax.f32 %v475, 0.0
      %v517 = vmax.f32 %v476, 0.0
      %v518 = vmax.f32 %v477, 0.0
      %v519 = vmax.f32 %v478, 0.0
      %v520 = vmax.f32 %v479, 0.0
      %v521 = vmax.f32 %v480, 0.0
      %v522 = vmax.f32 %v481, 0.0
      %v523 = vmax.f32 %v482, 0.0
      %525 = vset.pattern.permute.xlu0 0
      %526 = vperm.xlu0 %525, %v264
      %v527 = vpop.permute.xlu0 %526
      %530 = vset.pattern.permute.xlu0 0
      %531 = vperm.xlu0 %530, %v265
      %v532 = vpop.permute.xlu0 %531
      %535 = vset.pattern.permute.xlu0 0
      %536 = vperm.xlu0 %535, %v266
      %v537 = vpop.permute.xlu0 %536
      %540 = vset.pattern.permute.xlu0 0
      %541 = vperm.xlu0 %540, %v267
      %v542 = vpop.permute.xlu0 %541
      %545 = vset.pattern.permute.xlu0 0
      %546 = vperm.xlu0 %545, %v268
      %v547 = vpop.permute.xlu0 %546
      %550 = vset.pattern.permute.xlu0 0
      %551 = vperm.xlu0 %550, %v269
      %v552 = vpop.permute.xlu0 %551
      %555 = vset.pattern.permute.xlu0 0
      %556 = vperm.xlu0 %555, %v270
      %v557 = vpop.permute.xlu0 %556
      %560 = vset.pattern.permute.xlu0 0
      %561 = vperm.xlu0 %560, %v271
      %v562 = vpop.permute.xlu0 %561
      %565 = vset.pattern.permute.xlu0 0
      %566 = vperm.xlu0 %565, %v272
      %v567 = vpop.permute.xlu0 %566
      %570 = vset.pattern.permute.xlu0 0
      %571 = vperm.xlu0 %570, %v273
      %v572 = vpop.permute.xlu0 %571
      %575 = vset.pattern.permute.xlu0 0
      %576 = vperm.xlu0 %575, %v274
      %v577 = vpop.permute.xlu0 %576
      %580 = vset.pattern.permute.xlu0 0
      %581 = vperm.xlu0 %580, %v275
      %v582 = vpop.permute.xlu0 %581
      %585 = vset.pattern.permute.xlu0 0
      %586 = vperm.xlu0 %585, %v276
      %v587 = vpop.permute.xlu0 %586
      %590 = vset.pattern.permute.xlu0 0
      %591 = vperm.xlu0 %590, %v277
      %v592 = vpop.permute.xlu0 %591
      %595 = vset.pattern.permute.xlu0 0
      %596 = vperm.xlu0 %595, %v278
      %v597 = vpop.permute.xlu0 %596
      %600 = vset.pattern.permute.xlu0 0
      %601 = vperm.xlu0 %600, %v279
      %v602 = vpop.permute.xlu0 %601
      %605 = vset.pattern.permute.xlu0 0
      %606 = vperm.xlu0 %605, %v280
      %v607 = vpop.permute.xlu0 %606
      %610 = vset.pattern.permute.xlu0 0
      %611 = vperm.xlu0 %610, %v281
      %v612 = vpop.permute.xlu0 %611
      %615 = vset.pattern.permute.xlu0 0
      %616 = vperm.xlu0 %615, %v282
      %v617 = vpop.permute.xlu0 %616
      %620 = vset.pattern.permute.xlu0 0
      %621 = vperm.xlu0 %620, %v283
      %v622 = vpop.permute.xlu0 %621
      %625 = vset.pattern.permute.xlu0 0
      %626 = vperm.xlu0 %625, %v284
      %v627 = vpop.permute.xlu0 %626
      %630 = vset.pattern.permute.xlu0 0
      %631 = vperm.xlu0 %630, %v285
      %v632 = vpop.permute.xlu0 %631
      %635 = vset.pattern.permute.xlu0 0
      %636 = vperm.xlu0 %635, %v286
      %v637 = vpop.permute.xlu0 %636
      %640 = vset.pattern.permute.xlu0 0
      %641 = vperm.xlu0 %640, %v287
      %v642 = vpop.permute.xlu0 %641
      %645 = vset.pattern.permute.xlu0 0
      %646 = vperm.xlu0 %645, %v288
      %v647 = vpop.permute.xlu0 %646
      %650 = vset.pattern.permute.xlu0 0
      %651 = vperm.xlu0 %650, %v289
      %v652 = vpop.permute.xlu0 %651
      %655 = vset.pattern.permute.xlu0 0
      %656 = vperm.xlu0 %655, %v290
      %v657 = vpop.permute.xlu0 %656
      %660 = vset.pattern.permute.xlu0 0
      %661 = vperm.xlu0 %660, %v291
      %v662 = vpop.permute.xlu0 %661
      %665 = vset.pattern.permute.xlu0 0
      %666 = vperm.xlu0 %665, %v292
      %v667 = vpop.permute.xlu0 %666
      %670 = vset.pattern.permute.xlu0 0
      %671 = vperm.xlu0 %670, %v293
      %v672 = vpop.permute.xlu0 %671
      %675 = vset.pattern.permute.xlu0 0
      %676 = vperm.xlu0 %675, %v294
      %v677 = vpop.permute.xlu0 %676
      %680 = vset.pattern.permute.xlu0 0
      %681 = vperm.xlu0 %680, %v295
      %v682 = vpop.permute.xlu0 %681
      %685 = vset.pattern.permute.xlu0 0
      %686 = vperm.xlu0 %685, %v296
      %v687 = vpop.permute.xlu0 %686
      %690 = vset.pattern.permute.xlu0 0
      %691 = vperm.xlu0 %690, %v297
      %v692 = vpop.permute.xlu0 %691
      %695 = vset.pattern.permute.xlu0 0
      %696 = vperm.xlu0 %695, %v298
      %v697 = vpop.permute.xlu0 %696
      %700 = vset.pattern.permute.xlu0 0
      %701 = vperm.xlu0 %700, %v299
      %v702 = vpop.permute.xlu0 %701
      %705 = vset.pattern.permute.xlu0 0
      %706 = vperm.xlu0 %705, %v300
      %v707 = vpop.permute.xlu0 %706
      %710 = vset.pattern.permute.xlu0 0
      %711 = vperm.xlu0 %710, %v301
      %v712 = vpop.permute.xlu0 %711
      %715 = vset.pattern.permute.xlu0 0
      %716 = vperm.xlu0 %715, %v302
      %v717 = vpop.permute.xlu0 %716
      %720 = vset.pattern.permute.xlu0 0
      %721 = vperm.xlu0 %720, %v303
      %v722 = vpop.permute.xlu0 %721
      %725 = vset.pattern.permute.xlu0 0
      %726 = vperm.xlu0 %725, %v304
      %v727 = vpop.permute.xlu0 %726
      %v729 = vmul.f32 %v483, %v527
      %v730 = vmul.f32 %v484, %v532
      %v731 = vmul.f32 %v485, %v537
      %v732 = vmul.f32 %v486, %v542
      %v733 = vmul.f32 %v487, %v547
      %v734 = vmul.f32 %v488, %v552
      %v735 = vmul.f32 %v489, %v557
      %v736 = vmul.f32 %v490, %v562
      %v737 = vmul.f32 %v491, %v567
      %v738 = vmul.f32 %v492, %v572
      %v739 = vmul.f32 %v493, %v577
      %v740 = vmul.f32 %v494, %v582
      %v741 = vmul.f32 %v495, %v587
      %v742 = vmul.f32 %v496, %v592
      %v743 = vmul.f32 %v497, %v597
      %v744 = vmul.f32 %v498, %v602
      %v745 = vmul.f32 %v499, %v607
      %v746 = vmul.f32 %v500, %v612
      %v747 = vmul.f32 %v501, %v617
      %v748 = vmul.f32 %v502, %v622
      %v749 = vmul.f32 %v503, %v627
      %v750 = vmul.f32 %v504, %v632
      %v751 = vmul.f32 %v505, %v637
      %v752 = vmul.f32 %v506, %v642
      %v753 = vmul.f32 %v507, %v647
      %v754 = vmul.f32 %v508, %v652
      %v755 = vmul.f32 %v509, %v657
      %v756 = vmul.f32 %v510, %v662
      %v757 = vmul.f32 %v511, %v667
      %v758 = vmul.f32 %v512, %v672
      %v759 = vmul.f32 %v513, %v677
      %v760 = vmul.f32 %v514, %v682
      %v761 = vmul.f32 %v515, %v687
      %v762 = vmul.f32 %v516, %v692
      %v763 = vmul.f32 %v517, %v697
      %v764 = vmul.f32 %v518, %v702
      %v765 = vmul.f32 %v519, %v707
      %v766 = vmul.f32 %v520, %v712
      %v767 = vmul.f32 %v521, %v717
      %v768 = vmul.f32 %v522, %v722
      %v769 = vmul.f32 %v523, %v727
      %v770 = vpack.c.bf16 %v730, %v729
      %v771 = vpack.c.bf16 %v732, %v731
      %v772 = vpack.c.bf16 %v734, %v733
      %v773 = vpack.c.bf16 %v736, %v735
      %v774 = vpack.c.bf16 %v738, %v737
      %v775 = vpack.c.bf16 %v740, %v739
      %v776 = vpack.c.bf16 %v742, %v741
      %v777 = vpack.c.bf16 %v744, %v743
      %v778 = vpack.c.bf16 %v746, %v745
      %v779 = vpack.c.bf16 %v748, %v747
      %v780 = vpack.c.bf16 %v750, %v749
      %v781 = vpack.c.bf16 %v752, %v751
      %v782 = vpack.c.bf16 %v754, %v753
      %v783 = vpack.c.bf16 %v756, %v755
      %v784 = vpack.c.bf16 %v758, %v757
      %v785 = vpack.c.bf16 %v760, %v759
      %v786 = vpack.c.bf16 %v762, %v761
      %v787 = vpack.c.bf16 %v764, %v763
      %v788 = vpack.c.bf16 %v766, %v765
      %v789 = vpack.c.bf16 %v768, %v767
      %v790 = vpack.c.bf16 %v769, %v769
      %vm791 = vcmask 584704
      %792 = vst.msk [vmem:[#allocation2] sm:$0xf] %vm791, 0
      %793 = vst.msk [vmem:[#allocation2 + $0x4] sm:$0xf] %vm791, 0
      %794 = vst.msk [vmem:[#allocation2 + $0x8] sm:$0xf] %vm791, 0
      %795 = vst.msk [vmem:[#allocation2 + $0xc] sm:$0xf] %vm791, 0
      %796 = vst.msk [vmem:[#allocation2 + $0x10] sm:$0xf] %vm791, 0
      %797 = vst.msk [vmem:[#allocation2 + $0x14] sm:$0xf] %vm791, 0
      %798 = vst.msk [vmem:[#allocation2 + $0x18] sm:$0xf] %vm791, 0
      %799 = vst.msk [vmem:[#allocation2 + $0x1c] sm:$0xf] %vm791, 0
      %800 = vst.msk [vmem:[#allocation2 + $0x20] sm:$0xf] %vm791, 0
      %801 = vst.msk [vmem:[#allocation2 + $0x24] sm:$0xf] %vm791, 0
      %802 = vst.msk [vmem:[#allocation2 + $0x28] sm:$0xf] %vm791, 0
      %803 = vst.msk [vmem:[#allocation2 + $0x2c] sm:$0xf] %vm791, 0
      %804 = vst.msk [vmem:[#allocation2 + $0x30] sm:$0xf] %vm791, 0
      %805 = vst.msk [vmem:[#allocation2 + $0x34] sm:$0xf] %vm791, 0
      %806 = vst.msk [vmem:[#allocation2 + $0x38] sm:$0xf] %vm791, 0
      %807 = vst.msk [vmem:[#allocation2 + $0x3c] sm:$0xf] %vm791, 0
      %808 = vst.msk [vmem:[#allocation2 + $0x40] sm:$0xf] %vm791, 0
      %809 = vst.msk [vmem:[#allocation2 + $0x44] sm:$0xf] %vm791, 0
      %810 = vst.msk [vmem:[#allocation2 + $0x48] sm:$0xf] %vm791, 0
      %811 = vst.msk [vmem:[#allocation2 + $0x4c] sm:$0xf] %vm791, 0
      %812 = vst.msk [vmem:[#allocation2 + $0x50] sm:$0xf] %vm791, 0
      %813 = vst.msk [vmem:[#allocation2 + $0x54] sm:$0xf] %vm791, 0
      %814 = vst.msk [vmem:[#allocation2 + $0x58] sm:$0xf] %vm791, 0
      %815 = vst.msk [vmem:[#allocation2 + $0x5c] sm:$0xf] %vm791, 0
      %816 = vst.msk [vmem:[#allocation2 + $0x60] sm:$0xf] %vm791, 0
      %817 = vst.msk [vmem:[#allocation2 + $0x64] sm:$0xf] %vm791, 0
      %818 = vst.msk [vmem:[#allocation2 + $0x68] sm:$0xf] %vm791, 0
      %819 = vst.msk [vmem:[#allocation2 + $0x6c] sm:$0xf] %vm791, 0
      %820 = vst.msk [vmem:[#allocation2 + $0x70] sm:$0xf] %vm791, 0
      %821 = vst.msk [vmem:[#allocation2 + $0x74] sm:$0xf] %vm791, 0
      %822 = vst.msk [vmem:[#allocation2 + $0x78] sm:$0xf] %vm791, 0
      %823 = vst.msk [vmem:[#allocation2 + $0x7c] sm:$0xf] %vm791, 0
      %824 = vst.msk [vmem:[#allocation2 + $0x80] sm:$0xf] %vm791, 0
      %825 = vst.msk [vmem:[#allocation2 + $0x84] sm:$0xf] %vm791, 0
      %826 = vst.msk [vmem:[#allocation2 + $0x88] sm:$0xf] %vm791, 0
      %827 = vst.msk [vmem:[#allocation2 + $0x8c] sm:$0xf] %vm791, 0
      %828 = vst.msk [vmem:[#allocation2 + $0x90] sm:$0xf] %vm791, 0
      %829 = vst.msk [vmem:[#allocation2 + $0x94] sm:$0xf] %vm791, 0
      %830 = vst.msk [vmem:[#allocation2 + $0x98] sm:$0xf] %vm791, 0
      %831 = vst.msk [vmem:[#allocation2 + $0x9c] sm:$0xf] %vm791, 0
      %vm832 = vcmask 582656
      %833 = vst.msk [vmem:[#allocation2 + $0xa0] sm:$0x3] %vm832, 0
      %v854 = vunpack.c.l.b16 %v770
      %v855 = vunpack.c.h.b16 %v770
      %v856 = vunpack.c.l.b16 %v771
      %v857 = vunpack.c.h.b16 %v771
      %v858 = vunpack.c.l.b16 %v772
      %v859 = vunpack.c.h.b16 %v772
      %v860 = vunpack.c.l.b16 %v773
      %v861 = vunpack.c.h.b16 %v773
      %v862 = vunpack.c.l.b16 %v774
      %v863 = vunpack.c.h.b16 %v774
      %v864 = vunpack.c.l.b16 %v775
      %v865 = vunpack.c.h.b16 %v775
      %v866 = vunpack.c.l.b16 %v776
      %v867 = vunpack.c.h.b16 %v776
      %v868 = vunpack.c.l.b16 %v777
      %v869 = vunpack.c.h.b16 %v777
      %v870 = vunpack.c.l.b16 %v778
      %v871 = vunpack.c.h.b16 %v778
      %v872 = vunpack.c.l.b16 %v779
      %v873 = vunpack.c.h.b16 %v779
      %v874 = vunpack.c.l.b16 %v780
      %v875 = vunpack.c.h.b16 %v780
      %v876 = vunpack.c.l.b16 %v781
      %v877 = vunpack.c.h.b16 %v781
      %v878 = vunpack.c.l.b16 %v782
      %v879 = vunpack.c.h.b16 %v782
      %v880 = vunpack.c.l.b16 %v783
      %v881 = vunpack.c.h.b16 %v783
      %v882 = vunpack.c.l.b16 %v784
      %v883 = vunpack.c.h.b16 %v784
      %v884 = vunpack.c.l.b16 %v785
      %v885 = vunpack.c.h.b16 %v785
      %v886 = vunpack.c.l.b16 %v786
      %v887 = vunpack.c.h.b16 %v786
      %v888 = vunpack.c.l.b16 %v787
      %v889 = vunpack.c.h.b16 %v787
      %v890 = vunpack.c.l.b16 %v788
      %v891 = vunpack.c.h.b16 %v788
      %v892 = vunpack.c.l.b16 %v789
      %v893 = vpack.c.b16 %v854, %v854
      %v894 = vpack.c.b16 %v855, %v855
      %v895 = vpack.c.b16 %v856, %v856
      %v896 = vpack.c.b16 %v857, %v857
      %v897 = vpack.c.b16 %v858, %v858
      %v898 = vpack.c.b16 %v859, %v859
      %v899 = vpack.c.b16 %v860, %v860
      %v900 = vpack.c.b16 %v861, %v861
      %v901 = vpack.c.b16 %v862, %v862
      %v902 = vpack.c.b16 %v863, %v863
      %v903 = vpack.c.b16 %v864, %v864
      %v904 = vpack.c.b16 %v865, %v865
      %v905 = vpack.c.b16 %v866, %v866
      %v906 = vpack.c.b16 %v867, %v867
      %v907 = vpack.c.b16 %v868, %v868
      %v908 = vpack.c.b16 %v869, %v869
      %v909 = vpack.c.b16 %v870, %v870
      %v910 = vpack.c.b16 %v871, %v871
      %v911 = vpack.c.b16 %v872, %v872
      %v912 = vpack.c.b16 %v873, %v873
      %v913 = vpack.c.b16 %v874, %v874
      %v914 = vpack.c.b16 %v875, %v875
      %v915 = vpack.c.b16 %v876, %v876
      %v916 = vpack.c.b16 %v877, %v877
      %v917 = vpack.c.b16 %v878, %v878
      %v918 = vpack.c.b16 %v879, %v879
      %v919 = vpack.c.b16 %v880, %v880
      %v920 = vpack.c.b16 %v881, %v881
      %v921 = vpack.c.b16 %v882, %v882
      %v922 = vpack.c.b16 %v883, %v883
      %v923 = vpack.c.b16 %v884, %v884
      %v924 = vpack.c.b16 %v885, %v885
      %v925 = vpack.c.b16 %v886, %v886
      %v926 = vpack.c.b16 %v887, %v887
      %v927 = vpack.c.b16 %v888, %v888
      %v928 = vpack.c.b16 %v889, %v889
      %v929 = vpack.c.b16 %v890, %v890
      %v930 = vpack.c.b16 %v891, %v891
      %v931 = vpack.c.b16 %v892, %v892
      %vm932 = vsmask.f32 1280
      %vm933 = vsmask.f32 5392
      %vm934 = vmor %vm932, %vm933
      %v936 = vshrl.u32 %v893, 16
      %v938 = vrot.slane %v936, 6
      %v939 = vshll.u32 %v893, 16
      %v941 = vrot.slane %v939, 7
      %v942 = vor.u32 %v938, %v941
      %v943 = vrot.slane %v942, 4
      %v945 = vshrl.u32 %v894, 16
      %v947 = vrot.slane %v945, 6
      %v948 = vshll.u32 %v894, 16
      %v950 = vrot.slane %v948, 7
      %v951 = vor.u32 %v947, %v950
      %v952 = vsel %vm934, %v943, %v951
      %v953 = vrot.slane %v951, 4
      %v955 = vshrl.u32 %v895, 16
      %v957 = vrot.slane %v955, 6
      %v958 = vshll.u32 %v895, 16
      %v960 = vrot.slane %v958, 7
      %v961 = vor.u32 %v957, %v960
      %v962 = vsel %vm934, %v953, %v961
      %v963 = vrot.slane %v961, 4
      %v965 = vshrl.u32 %v896, 16
      %v967 = vrot.slane %v965, 6
      %v968 = vshll.u32 %v896, 16
      %v970 = vrot.slane %v968, 7
      %v971 = vor.u32 %v967, %v970
      %v972 = vsel %vm934, %v963, %v971
      %v973 = vrot.slane %v971, 4
      %v975 = vshrl.u32 %v897, 16
      %v977 = vrot.slane %v975, 6
      %v978 = vshll.u32 %v897, 16
      %v980 = vrot.slane %v978, 7
      %v981 = vor.u32 %v977, %v980
      %v982 = vsel %vm934, %v973, %v981
      %v983 = vrot.slane %v981, 4
      %v985 = vshrl.u32 %v898, 16
      %v987 = vrot.slane %v985, 6
      %v988 = vshll.u32 %v898, 16
      %v990 = vrot.slane %v988, 7
      %v991 = vor.u32 %v987, %v990
      %v992 = vsel %vm934, %v983, %v991
      %v993 = vrot.slane %v991, 4
      %v995 = vshrl.u32 %v899, 16
      %v997 = vrot.slane %v995, 6
      %v998 = vshll.u32 %v899, 16
      %v1000 = vrot.slane %v998, 7
      %v1001 = vor.u32 %v997, %v1000
      %v1002 = vsel %vm934, %v993, %v1001
      %v1003 = vrot.slane %v1001, 4
      %v1005 = vshrl.u32 %v900, 16
      %v1007 = vrot.slane %v1005, 6
      %v1008 = vshll.u32 %v900, 16
      %v1010 = vrot.slane %v1008, 7
      %v1011 = vor.u32 %v1007, %v1010
      %v1012 = vsel %vm934, %v1003, %v1011
      %v1013 = vrot.slane %v1011, 4
      %v1015 = vshrl.u32 %v901, 16
      %v1017 = vrot.slane %v1015, 6
      %v1018 = vshll.u32 %v901, 16
      %v1020 = vrot.slane %v1018, 7
      %v1021 = vor.u32 %v1017, %v1020
      %v1022 = vsel %vm934, %v1013, %v1021
      %v1023 = vrot.slane %v1021, 4
      %v1025 = vshrl.u32 %v902, 16
      %v1027 = vrot.slane %v1025, 6
      %v1028 = vshll.u32 %v902, 16
      %v1030 = vrot.slane %v1028, 7
      %v1031 = vor.u32 %v1027, %v1030
      %v1032 = vsel %vm934, %v1023, %v1031
      %v1033 = vrot.slane %v1031, 4
      %v1035 = vshrl.u32 %v903, 16
      %v1037 = vrot.slane %v1035, 6
      %v1038 = vshll.u32 %v903, 16
      %v1040 = vrot.slane %v1038, 7
      %v1041 = vor.u32 %v1037, %v1040
      %v1042 = vsel %vm934, %v1033, %v1041
      %v1043 = vrot.slane %v1041, 4
      %v1045 = vshrl.u32 %v904, 16
      %v1047 = vrot.slane %v1045, 6
      %v1048 = vshll.u32 %v904, 16
      %v1050 = vrot.slane %v1048, 7
      %v1051 = vor.u32 %v1047, %v1050
      %v1052 = vsel %vm934, %v1043, %v1051
      %v1053 = vrot.slane %v1051, 4
      %v1055 = vshrl.u32 %v905, 16
      %v1057 = vrot.slane %v1055, 6
      %v1058 = vshll.u32 %v905, 16
      %v1060 = vrot.slane %v1058, 7
      %v1061 = vor.u32 %v1057, %v1060
      %v1062 = vsel %vm934, %v1053, %v1061
      %v1063 = vrot.slane %v1061, 4
      %v1065 = vshrl.u32 %v906, 16
      %v1067 = vrot.slane %v1065, 6
      %v1068 = vshll.u32 %v906, 16
      %v1070 = vrot.slane %v1068, 7
      %v1071 = vor.u32 %v1067, %v1070
      %v1072 = vsel %vm934, %v1063, %v1071
      %v1073 = vrot.slane %v1071, 4
      %v1075 = vshrl.u32 %v907, 16
      %v1077 = vrot.slane %v1075, 6
      %v1078 = vshll.u32 %v907, 16
      %v1080 = vrot.slane %v1078, 7
      %v1081 = vor.u32 %v1077, %v1080
      %v1082 = vsel %vm934, %v1073, %v1081
      %v1083 = vrot.slane %v1081, 4
      %v1085 = vshrl.u32 %v908, 16
      %v1087 = vrot.slane %v1085, 6
      %v1088 = vshll.u32 %v908, 16
      %v1090 = vrot.slane %v1088, 7
      %v1091 = vor.u32 %v1087, %v1090
      %v1092 = vsel %vm934, %v1083, %v1091
      %v1093 = vrot.slane %v1091, 4
      %v1095 = vshrl.u32 %v909, 16
      %v1097 = vrot.slane %v1095, 6
      %v1098 = vshll.u32 %v909, 16
      %v1100 = vrot.slane %v1098, 7
      %v1101 = vor.u32 %v1097, %v1100
      %v1102 = vsel %vm934, %v1093, %v1101
      %v1103 = vrot.slane %v1101, 4
      %v1105 = vshrl.u32 %v910, 16
      %v1107 = vrot.slane %v1105, 6
      %v1108 = vshll.u32 %v910, 16
      %v1110 = vrot.slane %v1108, 7
      %v1111 = vor.u32 %v1107, %v1110
      %v1112 = vsel %vm934, %v1103, %v1111
      %v1113 = vrot.slane %v1111, 4
      %v1115 = vshrl.u32 %v911, 16
      %v1117 = vrot.slane %v1115, 6
      %v1118 = vshll.u32 %v911, 16
      %v1120 = vrot.slane %v1118, 7
      %v1121 = vor.u32 %v1117, %v1120
      %v1122 = vsel %vm934, %v1113, %v1121
      %v1123 = vrot.slane %v1121, 4
      %v1125 = vshrl.u32 %v912, 16
      %v1127 = vrot.slane %v1125, 6
      %v1128 = vshll.u32 %v912, 16
      %v1130 = vrot.slane %v1128, 7
      %v1131 = vor.u32 %v1127, %v1130
      %v1132 = vsel %vm934, %v1123, %v1131
      %v1133 = vrot.slane %v1131, 4
      %v1135 = vshrl.u32 %v913, 16
      %v1137 = vrot.slane %v1135, 6
      %v1138 = vshll.u32 %v913, 16
      %v1140 = vrot.slane %v1138, 7
      %v1141 = vor.u32 %v1137, %v1140
      %v1142 = vsel %vm934, %v1133, %v1141
      %v1143 = vrot.slane %v1141, 4
      %v1145 = vshrl.u32 %v914, 16
      %v1147 = vrot.slane %v1145, 6
      %v1148 = vshll.u32 %v914, 16
      %v1150 = vrot.slane %v1148, 7
      %v1151 = vor.u32 %v1147, %v1150
      %v1152 = vsel %vm934, %v1143, %v1151
      %v1153 = vrot.slane %v1151, 4
      %v1155 = vshrl.u32 %v915, 16
      %v1157 = vrot.slane %v1155, 6
      %v1158 = vshll.u32 %v915, 16
      %v1160 = vrot.slane %v1158, 7
      %v1161 = vor.u32 %v1157, %v1160
      %v1162 = vsel %vm934, %v1153, %v1161
      %v1163 = vrot.slane %v1161, 4
      %v1165 = vshrl.u32 %v916, 16
      %v1167 = vrot.slane %v1165, 6
      %v1168 = vshll.u32 %v916, 16
      %v1170 = vrot.slane %v1168, 7
      %v1171 = vor.u32 %v1167, %v1170
      %v1172 = vsel %vm934, %v1163, %v1171
      %v1173 = vrot.slane %v1171, 4
      %v1175 = vshrl.u32 %v917, 16
      %v1177 = vrot.slane %v1175, 6
      %v1178 = vshll.u32 %v917, 16
      %v1180 = vrot.slane %v1178, 7
      %v1181 = vor.u32 %v1177, %v1180
      %v1182 = vsel %vm934, %v1173, %v1181
      %v1183 = vrot.slane %v1181, 4
      %v1185 = vshrl.u32 %v918, 16
      %v1187 = vrot.slane %v1185, 6
      %v1188 = vshll.u32 %v918, 16
      %v1190 = vrot.slane %v1188, 7
      %v1191 = vor.u32 %v1187, %v1190
      %v1192 = vsel %vm934, %v1183, %v1191
      %v1193 = vrot.slane %v1191, 4
      %v1195 = vshrl.u32 %v919, 16
      %v1197 = vrot.slane %v1195, 6
      %v1198 = vshll.u32 %v919, 16
      %v1200 = vrot.slane %v1198, 7
      %v1201 = vor.u32 %v1197, %v1200
      %v1202 = vsel %vm934, %v1193, %v1201
      %v1203 = vrot.slane %v1201, 4
      %v1205 = vshrl.u32 %v920, 16
      %v1207 = vrot.slane %v1205, 6
      %v1208 = vshll.u32 %v920, 16
      %v1210 = vrot.slane %v1208, 7
      %v1211 = vor.u32 %v1207, %v1210
      %v1212 = vsel %vm934, %v1203, %v1211
      %v1213 = vrot.slane %v1211, 4
      %v1215 = vshrl.u32 %v921, 16
      %v1217 = vrot.slane %v1215, 6
      %v1218 = vshll.u32 %v921, 16
      %v1220 = vrot.slane %v1218, 7
      %v1221 = vor.u32 %v1217, %v1220
      %v1222 = vsel %vm934, %v1213, %v1221
      %v1223 = vrot.slane %v1221, 4
      %v1225 = vshrl.u32 %v922, 16
      %v1227 = vrot.slane %v1225, 6
      %v1228 = vshll.u32 %v922, 16
      %v1230 = vrot.slane %v1228, 7
      %v1231 = vor.u32 %v1227, %v1230
      %v1232 = vsel %vm934, %v1223, %v1231
      %v1233 = vrot.slane %v1231, 4
      %v1235 = vshrl.u32 %v923, 16
      %v1237 = vrot.slane %v1235, 6
      %v1238 = vshll.u32 %v923, 16
      %v1240 = vrot.slane %v1238, 7
      %v1241 = vor.u32 %v1237, %v1240
      %v1242 = vsel %vm934, %v1233, %v1241
      %v1243 = vrot.slane %v1241, 4
      %v1245 = vshrl.u32 %v924, 16
      %v1247 = vrot.slane %v1245, 6
      %v1248 = vshll.u32 %v924, 16
      %v1250 = vrot.slane %v1248, 7
      %v1251 = vor.u32 %v1247, %v1250
      %v1252 = vsel %vm934, %v1243, %v1251
      %v1253 = vrot.slane %v1251, 4
      %v1255 = vshrl.u32 %v925, 16
      %v1257 = vrot.slane %v1255, 6
      %v1258 = vshll.u32 %v925, 16
      %v1260 = vrot.slane %v1258, 7
      %v1261 = vor.u32 %v1257, %v1260
      %v1262 = vsel %vm934, %v1253, %v1261
      %v1263 = vrot.slane %v1261, 4
      %v1265 = vshrl.u32 %v926, 16
      %v1267 = vrot.slane %v1265, 6
      %v1268 = vshll.u32 %v926, 16
      %v1270 = vrot.slane %v1268, 7
      %v1271 = vor.u32 %v1267, %v1270
      %v1272 = vsel %vm934, %v1263, %v1271
      %v1273 = vrot.slane %v1271, 4
      %v1275 = vshrl.u32 %v927, 16
      %v1277 = vrot.slane %v1275, 6
      %v1278 = vshll.u32 %v927, 16
      %v1280 = vrot.slane %v1278, 7
      %v1281 = vor.u32 %v1277, %v1280
      %v1282 = vsel %vm934, %v1273, %v1281
      %v1283 = vrot.slane %v1281, 4
      %v1285 = vshrl.u32 %v928, 16
      %v1287 = vrot.slane %v1285, 6
      %v1288 = vshll.u32 %v928, 16
      %v1290 = vrot.slane %v1288, 7
      %v1291 = vor.u32 %v1287, %v1290
      %v1292 = vsel %vm934, %v1283, %v1291
      %v1293 = vrot.slane %v1291, 4
      %v1295 = vshrl.u32 %v929, 16
      %v1297 = vrot.slane %v1295, 6
      %v1298 = vshll.u32 %v929, 16
      %v1300 = vrot.slane %v1298, 7
      %v1301 = vor.u32 %v1297, %v1300
      %v1302 = vsel %vm934, %v1293, %v1301
      %v1303 = vrot.slane %v1301, 4
      %v1305 = vshrl.u32 %v930, 16
      %v1307 = vrot.slane %v1305, 6
      %v1308 = vshll.u32 %v930, 16
      %v1310 = vrot.slane %v1308, 7
      %v1311 = vor.u32 %v1307, %v1310
      %v1312 = vsel %vm934, %v1303, %v1311
      %v1313 = vrot.slane %v1311, 4
      %v1315 = vshll.u32 %v931, 16
      %v1317 = vrot.slane %v1315, 7
      %v1318 = vsel %vm934, %v1313, %v1317
      %vm1358 = vcmask 60417
      %vm1359 = vsmask.f32 7942
      %vm1360 = vmand %vm1358, %vm1359
      %v1361 = vld [vmem:[#allocation2 + $0x8] sm:$0xe]
      %v1362 = vsel %vm1360, %v942, %v1361
      %1363 = vst [vmem:[#allocation2 + $0x8] sm:$0xe] %v1362
      %vm1364 = vcmask 60416
      %1365 = vst.msk [vmem:[#allocation2 + $0xc] sm:$0xf] %vm1364, %v952
      %1366 = vst.msk [vmem:[#allocation2 + $0x10] sm:$0xf] %vm1364, %v962
      %1367 = vst.msk [vmem:[#allocation2 + $0x14] sm:$0xf] %vm1364, %v972
      %1368 = vst.msk [vmem:[#allocation2 + $0x18] sm:$0xf] %vm1364, %v982
      %1369 = vst.msk [vmem:[#allocation2 + $0x1c] sm:$0xf] %vm1364, %v992
      %1370 = vst.msk [vmem:[#allocation2 + $0x20] sm:$0xf] %vm1364, %v1002
      %1371 = vst.msk [vmem:[#allocation2 + $0x24] sm:$0xf] %vm1364, %v1012
      %1372 = vst.msk [vmem:[#allocation2 + $0x28] sm:$0xf] %vm1364, %v1022
      %1373 = vst.msk [vmem:[#allocation2 + $0x2c] sm:$0xf] %vm1364, %v1032
      %1374 = vst.msk [vmem:[#allocation2 + $0x30] sm:$0xf] %vm1364, %v1042
      %1375 = vst.msk [vmem:[#allocation2 + $0x34] sm:$0xf] %vm1364, %v1052
      %1376 = vst.msk [vmem:[#allocation2 + $0x38] sm:$0xf] %vm1364, %v1062
      %1377 = vst.msk [vmem:[#allocation2 + $0x3c] sm:$0xf] %vm1364, %v1072
      %1378 = vst.msk [vmem:[#allocation2 + $0x40] sm:$0xf] %vm1364, %v1082
      %1379 = vst.msk [vmem:[#allocation2 + $0x44] sm:$0xf] %vm1364, %v1092
      %1380 = vst.msk [vmem:[#allocation2 + $0x48] sm:$0xf] %vm1364, %v1102
      %1381 = vst.msk [vmem:[#allocation2 + $0x4c] sm:$0xf] %vm1364, %v1112
      %1382 = vst.msk [vmem:[#allocation2 + $0x50] sm:$0xf] %vm1364, %v1122
      %1383 = vst.msk [vmem:[#allocation2 + $0x54] sm:$0xf] %vm1364, %v1132
      %1384 = vst.msk [vmem:[#allocation2 + $0x58] sm:$0xf] %vm1364, %v1142
      %1385 = vst.msk [vmem:[#allocation2 + $0x5c] sm:$0xf] %vm1364, %v1152
      %1386 = vst.msk [vmem:[#allocation2 + $0x60] sm:$0xf] %vm1364, %v1162
      %1387 = vst.msk [vmem:[#allocation2 + $0x64] sm:$0xf] %vm1364, %v1172
      %1388 = vst.msk [vmem:[#allocation2 + $0x68] sm:$0xf] %vm1364, %v1182
      %1389 = vst.msk [vmem:[#allocation2 + $0x6c] sm:$0xf] %vm1364, %v1192
      %1390 = vst.msk [vmem:[#allocation2 + $0x70] sm:$0xf] %vm1364, %v1202
      %1391 = vst.msk [vmem:[#allocation2 + $0x74] sm:$0xf] %vm1364, %v1212
      %1392 = vst.msk [vmem:[#allocation2 + $0x78] sm:$0xf] %vm1364, %v1222
      %1393 = vst.msk [vmem:[#allocation2 + $0x7c] sm:$0xf] %vm1364, %v1232
      %1394 = vst.msk [vmem:[#allocation2 + $0x80] sm:$0xf] %vm1364, %v1242
      %1395 = vst.msk [vmem:[#allocation2 + $0x84] sm:$0xf] %vm1364, %v1252
      %1396 = vst.msk [vmem:[#allocation2 + $0x88] sm:$0xf] %vm1364, %v1262
      %1397 = vst.msk [vmem:[#allocation2 + $0x8c] sm:$0xf] %vm1364, %v1272
      %1398 = vst.msk [vmem:[#allocation2 + $0x90] sm:$0xf] %vm1364, %v1282
      %1399 = vst.msk [vmem:[#allocation2 + $0x94] sm:$0xf] %vm1364, %v1292
      %1400 = vst.msk [vmem:[#allocation2 + $0x98] sm:$0xf] %vm1364, %v1302
      %1401 = vst.msk [vmem:[#allocation2 + $0x9c] sm:$0xf] %vm1364, %v1312
      %vm1402 = vcmask 58368
      %1403 = vst.msk [vmem:[#allocation2 + $0xa0] sm:$0x3] %vm1402, %v1318
      %vm1404 = vcmask 1040384
      %vm1405 = vcmask 1044484
      %vm1406 = vmor %vm1404, %vm1405
      %v1407 = vrot.slane %v893, 7
      %v1408 = vrot.slane %v1407, 4
      %v1409 = vrot.slane %v894, 7
      %v1410 = vsel %vm1406, %v1408, %v1409
      %v1411 = vrot.slane %v1409, 4
      %v1412 = vrot.slane %v895, 7
      %v1413 = vsel %vm1406, %v1411, %v1412
      %v1414 = vrot.slane %v1412, 4
      %v1415 = vrot.slane %v896, 7
      %v1416 = vsel %vm1406, %v1414, %v1415
      %v1417 = vrot.slane %v1415, 4
      %v1418 = vrot.slane %v897, 7
      %v1419 = vsel %vm1406, %v1417, %v1418
      %v1420 = vrot.slane %v1418, 4
      %v1421 = vrot.slane %v898, 7
      %v1422 = vsel %vm1406, %v1420, %v1421
      %v1423 = vrot.slane %v1421, 4
      %v1424 = vrot.slane %v899, 7
      %v1425 = vsel %vm1406, %v1423, %v1424
      %v1426 = vrot.slane %v1424, 4
      %v1427 = vrot.slane %v900, 7
      %v1428 = vsel %vm1406, %v1426, %v1427
      %v1429 = vrot.slane %v1427, 4
      %v1430 = vrot.slane %v901, 7
      %v1431 = vsel %vm1406, %v1429, %v1430
      %v1432 = vrot.slane %v1430, 4
      %v1433 = vrot.slane %v902, 7
      %v1434 = vsel %vm1406, %v1432, %v1433
      %v1435 = vrot.slane %v1433, 4
      %v1436 = vrot.slane %v903, 7
      %v1437 = vsel %vm1406, %v1435, %v1436
      %v1438 = vrot.slane %v1436, 4
      %v1439 = vrot.slane %v904, 7
      %v1440 = vsel %vm1406, %v1438, %v1439
      %v1441 = vrot.slane %v1439, 4
      %v1442 = vrot.slane %v905, 7
      %v1443 = vsel %vm1406, %v1441, %v1442
      %v1444 = vrot.slane %v1442, 4
      %v1445 = vrot.slane %v906, 7
      %v1446 = vsel %vm1406, %v1444, %v1445
      %v1447 = vrot.slane %v1445, 4
      %v1448 = vrot.slane %v907, 7
      %v1449 = vsel %vm1406, %v1447, %v1448
      %v1450 = vrot.slane %v1448, 4
      %v1451 = vrot.slane %v908, 7
      %v1452 = vsel %vm1406, %v1450, %v1451
      %v1453 = vrot.slane %v1451, 4
      %v1454 = vrot.slane %v909, 7
      %v1455 = vsel %vm1406, %v1453, %v1454
      %v1456 = vrot.slane %v1454, 4
      %v1457 = vrot.slane %v910, 7
      %v1458 = vsel %vm1406, %v1456, %v1457
      %v1459 = vrot.slane %v1457, 4
      %v1460 = vrot.slane %v911, 7
      %v1461 = vsel %vm1406, %v1459, %v1460
      %v1462 = vrot.slane %v1460, 4
      %v1463 = vrot.slane %v912, 7
      %v1464 = vsel %vm1406, %v1462, %v1463
      %v1465 = vrot.slane %v1463, 4
      %v1466 = vrot.slane %v913, 7
      %v1467 = vsel %vm1406, %v1465, %v1466
      %v1468 = vrot.slane %v1466, 4
      %v1469 = vrot.slane %v914, 7
      %v1470 = vsel %vm1406, %v1468, %v1469
      %v1471 = vrot.slane %v1469, 4
      %v1472 = vrot.slane %v915, 7
      %v1473 = vsel %vm1406, %v1471, %v1472
      %v1474 = vrot.slane %v1472, 4
      %v1475 = vrot.slane %v916, 7
      %v1476 = vsel %vm1406, %v1474, %v1475
      %v1477 = vrot.slane %v1475, 4
      %v1478 = vrot.slane %v917, 7
      %v1479 = vsel %vm1406, %v1477, %v1478
      %v1480 = vrot.slane %v1478, 4
      %v1481 = vrot.slane %v918, 7
      %v1482 = vsel %vm1406, %v1480, %v1481
      %v1483 = vrot.slane %v1481, 4
      %v1484 = vrot.slane %v919, 7
      %v1485 = vsel %vm1406, %v1483, %v1484
      %v1486 = vrot.slane %v1484, 4
      %v1487 = vrot.slane %v920, 7
      %v1488 = vsel %vm1406, %v1486, %v1487
      %v1489 = vrot.slane %v1487, 4
      %v1490 = vrot.slane %v921, 7
      %v1491 = vsel %vm1406, %v1489, %v1490
      %v1492 = vrot.slane %v1490, 4
      %v1493 = vrot.slane %v922, 7
      %v1494 = vsel %vm1406, %v1492, %v1493
      %v1495 = vrot.slane %v1493, 4
      %v1496 = vrot.slane %v923, 7
      %v1497 = vsel %vm1406, %v1495, %v1496
      %v1498 = vrot.slane %v1496, 4
      %v1499 = vrot.slane %v924, 7
      %v1500 = vsel %vm1406, %v1498, %v1499
      %v1501 = vrot.slane %v1499, 4
      %v1502 = vrot.slane %v925, 7
      %v1503 = vsel %vm1406, %v1501, %v1502
      %v1504 = vrot.slane %v1502, 4
      %v1505 = vrot.slane %v926, 7
      %v1506 = vsel %vm1406, %v1504, %v1505
      %v1507 = vrot.slane %v1505, 4
      %v1508 = vrot.slane %v927, 7
      %v1509 = vsel %vm1406, %v1507, %v1508
      %v1510 = vrot.slane %v1508, 4
      %v1511 = vrot.slane %v928, 7
      %v1512 = vsel %vm1406, %v1510, %v1511
      %v1513 = vrot.slane %v1511, 4
      %v1514 = vrot.slane %v929, 7
      %v1515 = vsel %vm1406, %v1513, %v1514
      %v1516 = vrot.slane %v1514, 4
      %v1517 = vrot.slane %v930, 7
      %v1518 = vsel %vm1406, %v1516, %v1517
      %v1519 = vrot.slane %v1517, 4
      %v1520 = vrot.slane %v931, 7
      %v1521 = vsel %vm1406, %v1519, %v1520
      %1522 = vrot.lane.b32.xlu0 %v1407, 8
      %v1523 = vpop.permute.xlu0 %1522
      %1524 = vrot.lane.b32.xlu0 %v1410, 8
      %v1525 = vpop.permute.xlu0 %1524
      %1526 = vrot.lane.b32.xlu0 %v1413, 8
      %v1527 = vpop.permute.xlu0 %1526
      %1528 = vrot.lane.b32.xlu0 %v1416, 8
      %v1529 = vpop.permute.xlu0 %1528
      %1530 = vrot.lane.b32.xlu0 %v1419, 8
      %v1531 = vpop.permute.xlu0 %1530
      %1532 = vrot.lane.b32.xlu0 %v1422, 8
      %v1533 = vpop.permute.xlu0 %1532
      %1534 = vrot.lane.b32.xlu0 %v1425, 8
      %v1535 = vpop.permute.xlu0 %1534
      %1536 = vrot.lane.b32.xlu0 %v1428, 8
      %v1537 = vpop.permute.xlu0 %1536
      %1538 = vrot.lane.b32.xlu0 %v1431, 8
      %v1539 = vpop.permute.xlu0 %1538
      %1540 = vrot.lane.b32.xlu0 %v1434, 8
      %v1541 = vpop.permute.xlu0 %1540
      %1542 = vrot.lane.b32.xlu0 %v1437, 8
      %v1543 = vpop.permute.xlu0 %1542
      %1544 = vrot.lane.b32.xlu0 %v1440, 8
      %v1545 = vpop.permute.xlu0 %1544
      %1546 = vrot.lane.b32.xlu0 %v1443, 8
      %v1547 = vpop.permute.xlu0 %1546
      %1548 = vrot.lane.b32.xlu0 %v1446, 8
      %v1549 = vpop.permute.xlu0 %1548
      %1550 = vrot.lane.b32.xlu0 %v1449, 8
      %v1551 = vpop.permute.xlu0 %1550
      %1552 = vrot.lane.b32.xlu0 %v1452, 8
      %v1553 = vpop.permute.xlu0 %1552
      %1554 = vrot.lane.b32.xlu0 %v1455, 8
      %v1555 = vpop.permute.xlu0 %1554
      %1556 = vrot.lane.b32.xlu0 %v1458, 8
      %v1557 = vpop.permute.xlu0 %1556
      %1558 = vrot.lane.b32.xlu0 %v1461, 8
      %v1559 = vpop.permute.xlu0 %1558
      %1560 = vrot.lane.b32.xlu0 %v1464, 8
      %v1561 = vpop.permute.xlu0 %1560
      %1562 = vrot.lane.b32.xlu0 %v1467, 8
      %v1563 = vpop.permute.xlu0 %1562
      %1564 = vrot.lane.b32.xlu0 %v1470, 8
      %v1565 = vpop.permute.xlu0 %1564
      %1566 = vrot.lane.b32.xlu0 %v1473, 8
      %v1567 = vpop.permute.xlu0 %1566
      %1568 = vrot.lane.b32.xlu0 %v1476, 8
      %v1569 = vpop.permute.xlu0 %1568
      %1570 = vrot.lane.b32.xlu0 %v1479, 8
      %v1571 = vpop.permute.xlu0 %1570
      %1572 = vrot.lane.b32.xlu0 %v1482, 8
      %v1573 = vpop.permute.xlu0 %1572
      %1574 = vrot.lane.b32.xlu0 %v1485, 8
      %v1575 = vpop.permute.xlu0 %1574
      %1576 = vrot.lane.b32.xlu0 %v1488, 8
      %v1577 = vpop.permute.xlu0 %1576
      %1578 = vrot.lane.b32.xlu0 %v1491, 8
      %v1579 = vpop.permute.xlu0 %1578
      %1580 = vrot.lane.b32.xlu0 %v1494, 8
      %v1581 = vpop.permute.xlu0 %1580
      %1582 = vrot.lane.b32.xlu0 %v1497, 8
      %v1583 = vpop.permute.xlu0 %1582
      %1584 = vrot.lane.b32.xlu0 %v1500, 8
      %v1585 = vpop.permute.xlu0 %1584
      %1586 = vrot.lane.b32.xlu0 %v1503, 8
      %v1587 = vpop.permute.xlu0 %1586
      %1588 = vrot.lane.b32.xlu0 %v1506, 8
      %v1589 = vpop.permute.xlu0 %1588
      %1590 = vrot.lane.b32.xlu0 %v1509, 8
      %v1591 = vpop.permute.xlu0 %1590
      %1592 = vrot.lane.b32.xlu0 %v1512, 8
      %v1593 = vpop.permute.xlu0 %1592
      %1594 = vrot.lane.b32.xlu0 %v1515, 8
      %v1595 = vpop.permute.xlu0 %1594
      %1596 = vrot.lane.b32.xlu0 %v1518, 8
      %v1597 = vpop.permute.xlu0 %1596
      %1598 = vrot.lane.b32.xlu0 %v1521, 8
      %v1599 = vpop.permute.xlu0 %1598
      %vm1639 = vcmask 126017
      %1640 = vst.msk [vmem:[#allocation2 + $0x8] sm:$0xe] %vm1639, %v1523
      %vm1641 = vcmask 126016
      %1642 = vst.msk [vmem:[#allocation2 + $0xc] sm:$0xf] %vm1641, %v1525
      %1643 = vst.msk [vmem:[#allocation2 + $0x10] sm:$0xf] %vm1641, %v1527
      %1644 = vst.msk [vmem:[#allocation2 + $0x14] sm:$0xf] %vm1641, %v1529
      %1645 = vst.msk [vmem:[#allocation2 + $0x18] sm:$0xf] %vm1641, %v1531
      %1646 = vst.msk [vmem:[#allocation2 + $0x1c] sm:$0xf] %vm1641, %v1533
      %1647 = vst.msk [vmem:[#allocation2 + $0x20] sm:$0xf] %vm1641, %v1535
      %1648 = vst.msk [vmem:[#allocation2 + $0x24] sm:$0xf] %vm1641, %v1537
      %1649 = vst.msk [vmem:[#allocation2 + $0x28] sm:$0xf] %vm1641, %v1539
      %1650 = vst.msk [vmem:[#allocation2 + $0x2c] sm:$0xf] %vm1641, %v1541
      %1651 = vst.msk [vmem:[#allocation2 + $0x30] sm:$0xf] %vm1641, %v1543
      %1652 = vst.msk [vmem:[#allocation2 + $0x34] sm:$0xf] %vm1641, %v1545
      %1653 = vst.msk [vmem:[#allocation2 + $0x38] sm:$0xf] %vm1641, %v1547
      %1654 = vst.msk [vmem:[#allocation2 + $0x3c] sm:$0xf] %vm1641, %v1549
      %1655 = vst.msk [vmem:[#allocation2 + $0x40] sm:$0xf] %vm1641, %v1551
      %1656 = vst.msk [vmem:[#allocation2 + $0x44] sm:$0xf] %vm1641, %v1553
      %1657 = vst.msk [vmem:[#allocation2 + $0x48] sm:$0xf] %vm1641, %v1555
      %1658 = vst.msk [vmem:[#allocation2 + $0x4c] sm:$0xf] %vm1641, %v1557
      %1659 = vst.msk [vmem:[#allocation2 + $0x50] sm:$0xf] %vm1641, %v1559
      %1660 = vst.msk [vmem:[#allocation2 + $0x54] sm:$0xf] %vm1641, %v1561
      %1661 = vst.msk [vmem:[#allocation2 + $0x58] sm:$0xf] %vm1641, %v1563
      %1662 = vst.msk [vmem:[#allocation2 + $0x5c] sm:$0xf] %vm1641, %v1565
      %1663 = vst.msk [vmem:[#allocation2 + $0x60] sm:$0xf] %vm1641, %v1567
      %1664 = vst.msk [vmem:[#allocation2 + $0x64] sm:$0xf] %vm1641, %v1569
      %1665 = vst.msk [vmem:[#allocation2 + $0x68] sm:$0xf] %vm1641, %v1571
      %1666 = vst.msk [vmem:[#allocation2 + $0x6c] sm:$0xf] %vm1641, %v1573
      %1667 = vst.msk [vmem:[#allocation2 + $0x70] sm:$0xf] %vm1641, %v1575
      %1668 = vst.msk [vmem:[#allocation2 + $0x74] sm:$0xf] %vm1641, %v1577
      %1669 = vst.msk [vmem:[#allocation2 + $0x78] sm:$0xf] %vm1641, %v1579
      %1670 = vst.msk [vmem:[#allocation2 + $0x7c] sm:$0xf] %vm1641, %v1581
      %1671 = vst.msk [vmem:[#allocation2 + $0x80] sm:$0xf] %vm1641, %v1583
      %1672 = vst.msk [vmem:[#allocation2 + $0x84] sm:$0xf] %vm1641, %v1585
      %1673 = vst.msk [vmem:[#allocation2 + $0x88] sm:$0xf] %vm1641, %v1587
      %1674 = vst.msk [vmem:[#allocation2 + $0x8c] sm:$0xf] %vm1641, %v1589
      %1675 = vst.msk [vmem:[#allocation2 + $0x90] sm:$0xf] %vm1641, %v1591
      %1676 = vst.msk [vmem:[#allocation2 + $0x94] sm:$0xf] %vm1641, %v1593
      %1677 = vst.msk [vmem:[#allocation2 + $0x98] sm:$0xf] %vm1641, %v1595
      %1678 = vst.msk [vmem:[#allocation2 + $0x9c] sm:$0xf] %vm1641, %v1597
      %vm1679 = vcmask 123968
      %1680 = vst.msk [vmem:[#allocation2 + $0xa0] sm:$0x3] %vm1679, %v1599
      %vm1681 = vsmask.f32 256
      %vm1682 = vsmask.f32 4368
      %vm1683 = vmor %vm1681, %vm1682
      %v1684 = vrot.slane %v936, 7
      %v1685 = vor.u32 %v1684, %v939
      %v1686 = vrot.slane %v1684, 4
      %v1687 = vrot.slane %v945, 7
      %v1688 = vor.u32 %v1687, %v948
      %v1689 = vsel %vm1683, %v1686, %v1688
      %v1690 = vrot.slane %v1687, 4
      %v1691 = vrot.slane %v955, 7
      %v1692 = vor.u32 %v1691, %v958
      %v1693 = vsel %vm1683, %v1690, %v1692
      %v1694 = vrot.slane %v1691, 4
      %v1695 = vrot.slane %v965, 7
      %v1696 = vor.u32 %v1695, %v968
      %v1697 = vsel %vm1683, %v1694, %v1696
      %v1698 = vrot.slane %v1695, 4
      %v1699 = vrot.slane %v975, 7
      %v1700 = vor.u32 %v1699, %v978
      %v1701 = vsel %vm1683, %v1698, %v1700
      %v1702 = vrot.slane %v1699, 4
      %v1703 = vrot.slane %v985, 7
      %v1704 = vor.u32 %v1703, %v988
      %v1705 = vsel %vm1683, %v1702, %v1704
      %v1706 = vrot.slane %v1703, 4
      %v1707 = vrot.slane %v995, 7
      %v1708 = vor.u32 %v1707, %v998
      %v1709 = vsel %vm1683, %v1706, %v1708
      %v1710 = vrot.slane %v1707, 4
      %v1711 = vrot.slane %v1005, 7
      %v1712 = vor.u32 %v1711, %v1008
      %v1713 = vsel %vm1683, %v1710, %v1712
      %v1714 = vrot.slane %v1711, 4
      %v1715 = vrot.slane %v1015, 7
      %v1716 = vor.u32 %v1715, %v1018
      %v1717 = vsel %vm1683, %v1714, %v1716
      %v1718 = vrot.slane %v1715, 4
      %v1719 = vrot.slane %v1025, 7
      %v1720 = vor.u32 %v1719, %v1028
      %v1721 = vsel %vm1683, %v1718, %v1720
      %v1722 = vrot.slane %v1719, 4
      %v1723 = vrot.slane %v1035, 7
      %v1724 = vor.u32 %v1723, %v1038
      %v1725 = vsel %vm1683, %v1722, %v1724
      %v1726 = vrot.slane %v1723, 4
      %v1727 = vrot.slane %v1045, 7
      %v1728 = vor.u32 %v1727, %v1048
      %v1729 = vsel %vm1683, %v1726, %v1728
      %v1730 = vrot.slane %v1727, 4
      %v1731 = vrot.slane %v1055, 7
      %v1732 = vor.u32 %v1731, %v1058
      %v1733 = vsel %vm1683, %v1730, %v1732
      %v1734 = vrot.slane %v1731, 4
      %v1735 = vrot.slane %v1065, 7
      %v1736 = vor.u32 %v1735, %v1068
      %v1737 = vsel %vm1683, %v1734, %v1736
      %v1738 = vrot.slane %v1735, 4
      %v1739 = vrot.slane %v1075, 7
      %v1740 = vor.u32 %v1739, %v1078
      %v1741 = vsel %vm1683, %v1738, %v1740
      %v1742 = vrot.slane %v1739, 4
      %v1743 = vrot.slane %v1085, 7
      %v1744 = vor.u32 %v1743, %v1088
      %v1745 = vsel %vm1683, %v1742, %v1744
      %v1746 = vrot.slane %v1743, 4
      %v1747 = vrot.slane %v1095, 7
      %v1748 = vor.u32 %v1747, %v1098
      %v1749 = vsel %vm1683, %v1746, %v1748
      %v1750 = vrot.slane %v1747, 4
      %v1751 = vrot.slane %v1105, 7
      %v1752 = vor.u32 %v1751, %v1108
      %v1753 = vsel %vm1683, %v1750, %v1752
      %v1754 = vrot.slane %v1751, 4
      %v1755 = vrot.slane %v1115, 7
      %v1756 = vor.u32 %v1755, %v1118
      %v1757 = vsel %vm1683, %v1754, %v1756
      %v1758 = vrot.slane %v1755, 4
      %v1759 = vrot.slane %v1125, 7
      %v1760 = vor.u32 %v1759, %v1128
      %v1761 = vsel %vm1683, %v1758, %v1760
      %v1762 = vrot.slane %v1759, 4
      %v1763 = vrot.slane %v1135, 7
      %v1764 = vor.u32 %v1763, %v1138
      %v1765 = vsel %vm1683, %v1762, %v1764
      %v1766 = vrot.slane %v1763, 4
      %v1767 = vrot.slane %v1145, 7
      %v1768 = vor.u32 %v1767, %v1148
      %v1769 = vsel %vm1683, %v1766, %v1768
      %v1770 = vrot.slane %v1767, 4
      %v1771 = vrot.slane %v1155, 7
      %v1772 = vor.u32 %v1771, %v1158
      %v1773 = vsel %vm1683, %v1770, %v1772
      %v1774 = vrot.slane %v1771, 4
      %v1775 = vrot.slane %v1165, 7
      %v1776 = vor.u32 %v1775, %v1168
      %v1777 = vsel %vm1683, %v1774, %v1776
      %v1778 = vrot.slane %v1775, 4
      %v1779 = vrot.slane %v1175, 7
      %v1780 = vor.u32 %v1779, %v1178
      %v1781 = vsel %vm1683, %v1778, %v1780
      %v1782 = vrot.slane %v1779, 4
      %v1783 = vrot.slane %v1185, 7
      %v1784 = vor.u32 %v1783, %v1188
      %v1785 = vsel %vm1683, %v1782, %v1784
      %v1786 = vrot.slane %v1783, 4
      %v1787 = vrot.slane %v1195, 7
      %v1788 = vor.u32 %v1787, %v1198
      %v1789 = vsel %vm1683, %v1786, %v1788
      %v1790 = vrot.slane %v1787, 4
      %v1791 = vrot.slane %v1205, 7
      %v1792 = vor.u32 %v1791, %v1208
      %v1793 = vsel %vm1683, %v1790, %v1792
      %v1794 = vrot.slane %v1791, 4
      %v1795 = vrot.slane %v1215, 7
      %v1796 = vor.u32 %v1795, %v1218
      %v1797 = vsel %vm1683, %v1794, %v1796
      %v1798 = vrot.slane %v1795, 4
      %v1799 = vrot.slane %v1225, 7
      %v1800 = vor.u32 %v1799, %v1228
      %v1801 = vsel %vm1683, %v1798, %v1800
      %v1802 = vrot.slane %v1799, 4
      %v1803 = vrot.slane %v1235, 7
      %v1804 = vor.u32 %v1803, %v1238
      %v1805 = vsel %vm1683, %v1802, %v1804
      %v1806 = vrot.slane %v1803, 4
      %v1807 = vrot.slane %v1245, 7
      %v1808 = vor.u32 %v1807, %v1248
      %v1809 = vsel %vm1683, %v1806, %v1808
      %v1810 = vrot.slane %v1807, 4
      %v1811 = vrot.slane %v1255, 7
      %v1812 = vor.u32 %v1811, %v1258
      %v1813 = vsel %vm1683, %v1810, %v1812
      %v1814 = vrot.slane %v1811, 4
      %v1815 = vrot.slane %v1265, 7
      %v1816 = vor.u32 %v1815, %v1268
      %v1817 = vsel %vm1683, %v1814, %v1816
      %v1818 = vrot.slane %v1815, 4
      %v1819 = vrot.slane %v1275, 7
      %v1820 = vor.u32 %v1819, %v1278
      %v1821 = vsel %vm1683, %v1818, %v1820
      %v1822 = vrot.slane %v1819, 4
      %v1823 = vrot.slane %v1285, 7
      %v1824 = vor.u32 %v1823, %v1288
      %v1825 = vsel %vm1683, %v1822, %v1824
      %v1826 = vrot.slane %v1823, 4
      %v1827 = vrot.slane %v1295, 7
      %v1828 = vor.u32 %v1827, %v1298
      %v1829 = vsel %vm1683, %v1826, %v1828
      %v1830 = vrot.slane %v1827, 4
      %v1831 = vrot.slane %v1305, 7
      %v1832 = vor.u32 %v1831, %v1308
      %v1833 = vsel %vm1683, %v1830, %v1832
      %v1834 = vrot.slane %v1831, 4
      %v1835 = vshrl.u32 %v931, 16
      %v1837 = vrot.slane %v1835, 7
      %v1838 = vor.u32 %v1837, %v1315
      %v1839 = vsel %vm1683, %v1834, %v1838
      %1840 = vrot.lane.b32.xlu0 %v1685, 16
      %v1841 = vpop.permute.xlu0 %1840
      %1842 = vrot.lane.b32.xlu0 %v1689, 16
      %v1843 = vpop.permute.xlu0 %1842
      %1844 = vrot.lane.b32.xlu0 %v1693, 16
      %v1845 = vpop.permute.xlu0 %1844
      %1846 = vrot.lane.b32.xlu0 %v1697, 16
      %v1847 = vpop.permute.xlu0 %1846
      %1848 = vrot.lane.b32.xlu0 %v1701, 16
      %v1849 = vpop.permute.xlu0 %1848
      %1850 = vrot.lane.b32.xlu0 %v1705, 16
      %v1851 = vpop.permute.xlu0 %1850
      %1852 = vrot.lane.b32.xlu0 %v1709, 16
      %v1853 = vpop.permute.xlu0 %1852
      %1854 = vrot.lane.b32.xlu0 %v1713, 16
      %v1855 = vpop.permute.xlu0 %1854
      %1856 = vrot.lane.b32.xlu0 %v1717, 16
      %v1857 = vpop.permute.xlu0 %1856
      %1858 = vrot.lane.b32.xlu0 %v1721, 16
      %v1859 = vpop.permute.xlu0 %1858
      %1860 = vrot.lane.b32.xlu0 %v1725, 16
      %v1861 = vpop.permute.xlu0 %1860
      %1862 = vrot.lane.b32.xlu0 %v1729, 16
      %v1863 = vpop.permute.xlu0 %1862
      %1864 = vrot.lane.b32.xlu0 %v1733, 16
      %v1865 = vpop.permute.xlu0 %1864
      %1866 = vrot.lane.b32.xlu0 %v1737, 16
      %v1867 = vpop.permute.xlu0 %1866
      %1868 = vrot.lane.b32.xlu0 %v1741, 16
      %v1869 = vpop.permute.xlu0 %1868
      %1870 = vrot.lane.b32.xlu0 %v1745, 16
      %v1871 = vpop.permute.xlu0 %1870
      %1872 = vrot.lane.b32.xlu0 %v1749, 16
      %v1873 = vpop.permute.xlu0 %1872
      %1874 = vrot.lane.b32.xlu0 %v1753, 16
      %v1875 = vpop.permute.xlu0 %1874
      %1876 = vrot.lane.b32.xlu0 %v1757, 16
      %v1877 = vpop.permute.xlu0 %1876
      %1878 = vrot.lane.b32.xlu0 %v1761, 16
      %v1879 = vpop.permute.xlu0 %1878
      %1880 = vrot.lane.b32.xlu0 %v1765, 16
      %v1881 = vpop.permute.xlu0 %1880
      %1882 = vrot.lane.b32.xlu0 %v1769, 16
      %v1883 = vpop.permute.xlu0 %1882
      %1884 = vrot.lane.b32.xlu0 %v1773, 16
      %v1885 = vpop.permute.xlu0 %1884
      %1886 = vrot.lane.b32.xlu0 %v1777, 16
      %v1887 = vpop.permute.xlu0 %1886
      %1888 = vrot.lane.b32.xlu0 %v1781, 16
      %v1889 = vpop.permute.xlu0 %1888
      %1890 = vrot.lane.b32.xlu0 %v1785, 16
      %v1891 = vpop.permute.xlu0 %1890
      %1892 = vrot.lane.b32.xlu0 %v1789, 16
      %v1893 = vpop.permute.xlu0 %1892
      %1894 = vrot.lane.b32.xlu0 %v1793, 16
      %v1895 = vpop.permute.xlu0 %1894
      %1896 = vrot.lane.b32.xlu0 %v1797, 16
      %v1897 = vpop.permute.xlu0 %1896
      %1898 = vrot.lane.b32.xlu0 %v1801, 16
      %v1899 = vpop.permute.xlu0 %1898
      %1900 = vrot.lane.b32.xlu0 %v1805, 16
      %v1901 = vpop.permute.xlu0 %1900
      %1902 = vrot.lane.b32.xlu0 %v1809, 16
      %v1903 = vpop.permute.xlu0 %1902
      %1904 = vrot.lane.b32.xlu0 %v1813, 16
      %v1905 = vpop.permute.xlu0 %1904
      %1906 = vrot.lane.b32.xlu0 %v1817, 16
      %v1907 = vpop.permute.xlu0 %1906
      %1908 = vrot.lane.b32.xlu0 %v1821, 16
      %v1909 = vpop.permute.xlu0 %1908
      %1910 = vrot.lane.b32.xlu0 %v1825, 16
      %v1911 = vpop.permute.xlu0 %1910
      %1912 = vrot.lane.b32.xlu0 %v1829, 16
      %v1913 = vpop.permute.xlu0 %1912
      %1914 = vrot.lane.b32.xlu0 %v1833, 16
      %v1915 = vpop.permute.xlu0 %1914
      %1916 = vrot.lane.b32.xlu0 %v1839, 16
      %v1917 = vpop.permute.xlu0 %1916
      %vm1957 = vcmask 191616
      %vm1958 = vsmask.f32 7938
      %vm1959 = vmand %vm1957, %vm1958
      %v1960 = vld [vmem:[#allocation2 + $0x8] sm:$0xf]
      %v1961 = vsel %vm1959, %v1841, %v1960
      %1962 = vst [vmem:[#allocation2 + $0x8] sm:$0xf] %v1961
      %vm1963 = vcmask 191616
      %1964 = vst.msk [vmem:[#allocation2 + $0xc] sm:$0xf] %vm1963, %v1843
      %1965 = vst.msk [vmem:[#allocation2 + $0x10] sm:$0xf] %vm1963, %v1845
      %1966 = vst.msk [vmem:[#allocation2 + $0x14] sm:$0xf] %vm1963, %v1847
      %1967 = vst.msk [vmem:[#allocation2 + $0x18] sm:$0xf] %vm1963, %v1849
      %1968 = vst.msk [vmem:[#allocation2 + $0x1c] sm:$0xf] %vm1963, %v1851
      %1969 = vst.msk [vmem:[#allocation2 + $0x20] sm:$0xf] %vm1963, %v1853
      %1970 = vst.msk [vmem:[#allocation2 + $0x24] sm:$0xf] %vm1963, %v1855
      %1971 = vst.msk [vmem:[#allocation2 + $0x28] sm:$0xf] %vm1963, %v1857
      %1972 = vst.msk [vmem:[#allocation2 + $0x2c] sm:$0xf] %vm1963, %v1859
      %1973 = vst.msk [vmem:[#allocation2 + $0x30] sm:$0xf] %vm1963, %v1861
      %1974 = vst.msk [vmem:[#allocation2 + $0x34] sm:$0xf] %vm1963, %v1863
      %1975 = vst.msk [vmem:[#allocation2 + $0x38] sm:$0xf] %vm1963, %v1865
      %1976 = vst.msk [vmem:[#allocation2 + $0x3c] sm:$0xf] %vm1963, %v1867
      %1977 = vst.msk [vmem:[#allocation2 + $0x40] sm:$0xf] %vm1963, %v1869
      %1978 = vst.msk [vmem:[#allocation2 + $0x44] sm:$0xf] %vm1963, %v1871
      %1979 = vst.msk [vmem:[#allocation2 + $0x48] sm:$0xf] %vm1963, %v1873
      %1980 = vst.msk [vmem:[#allocation2 + $0x4c] sm:$0xf] %vm1963, %v1875
      %1981 = vst.msk [vmem:[#allocation2 + $0x50] sm:$0xf] %vm1963, %v1877
      %1982 = vst.msk [vmem:[#allocation2 + $0x54] sm:$0xf] %vm1963, %v1879
      %1983 = vst.msk [vmem:[#allocation2 + $0x58] sm:$0xf] %vm1963, %v1881
      %1984 = vst.msk [vmem:[#allocation2 + $0x5c] sm:$0xf] %vm1963, %v1883
      %1985 = vst.msk [vmem:[#allocation2 + $0x60] sm:$0xf] %vm1963, %v1885
      %1986 = vst.msk [vmem:[#allocation2 + $0x64] sm:$0xf] %vm1963, %v1887
      %1987 = vst.msk [vmem:[#allocation2 + $0x68] sm:$0xf] %vm1963, %v1889
      %1988 = vst.msk [vmem:[#allocation2 + $0x6c] sm:$0xf] %vm1963, %v1891
      %1989 = vst.msk [vmem:[#allocation2 + $0x70] sm:$0xf] %vm1963, %v1893
      %1990 = vst.msk [vmem:[#allocation2 + $0x74] sm:$0xf] %vm1963, %v1895
      %1991 = vst.msk [vmem:[#allocation2 + $0x78] sm:$0xf] %vm1963, %v1897
      %1992 = vst.msk [vmem:[#allocation2 + $0x7c] sm:$0xf] %vm1963, %v1899
      %1993 = vst.msk [vmem:[#allocation2 + $0x80] sm:$0xf] %vm1963, %v1901
      %1994 = vst.msk [vmem:[#allocation2 + $0x84] sm:$0xf] %vm1963, %v1903
      %1995 = vst.msk [vmem:[#allocation2 + $0x88] sm:$0xf] %vm1963, %v1905
      %1996 = vst.msk [vmem:[#allocation2 + $0x8c] sm:$0xf] %vm1963, %v1907
      %1997 = vst.msk [vmem:[#allocation2 + $0x90] sm:$0xf] %vm1963, %v1909
      %1998 = vst.msk [vmem:[#allocation2 + $0x94] sm:$0xf] %vm1963, %v1911
      %1999 = vst.msk [vmem:[#allocation2 + $0x98] sm:$0xf] %vm1963, %v1913
      %2000 = vst.msk [vmem:[#allocation2 + $0x9c] sm:$0xf] %vm1963, %v1915
      %vm2001 = vcmask 189568
      %2002 = vst.msk [vmem:[#allocation2 + $0xa0] sm:$0x3] %vm2001, %v1917
      %v2004 = vunpack.c.h.b16 %v789
      %v2005 = vunpack.c.l.b16 %v790
      %v2006 = vpack.c.b16 %v2004, %v2004
      %v2007 = vpack.c.b16 %v2005, %v2005
      %v2008 = vrot.slane %v1837, 4
      %v2010 = vshrl.u32 %v2006, 16
      %v2012 = vrot.slane %v2010, 7
      %v2013 = vshll.u32 %v2006, 16
      %v2015 = vor.u32 %v2012, %v2013
      %v2016 = vsel %vm1683, %v2008, %v2015
      %v2017 = vrot.slane %v2012, 4
      %v2019 = vshrl.u32 %v2007, 16
      %v2021 = vrot.slane %v2019, 7
      %v2022 = vshll.u32 %v2007, 16
      %v2024 = vor.u32 %v2021, %v2022
      %v2025 = vsel %vm1683, %v2017, %v2024
      %2026 = vrot.lane.b32.xlu0 %v1685, 24
      %v2027 = vpop.permute.xlu0 %2026
      %2028 = vrot.lane.b32.xlu0 %v1689, 24
      %v2029 = vpop.permute.xlu0 %2028
      %2030 = vrot.lane.b32.xlu0 %v1693, 24
      %v2031 = vpop.permute.xlu0 %2030
      %2032 = vrot.lane.b32.xlu0 %v1697, 24
      %v2033 = vpop.permute.xlu0 %2032
      %2034 = vrot.lane.b32.xlu0 %v1701, 24
      %v2035 = vpop.permute.xlu0 %2034
      %2036 = vrot.lane.b32.xlu0 %v1705, 24
      %v2037 = vpop.permute.xlu0 %2036
      %2038 = vrot.lane.b32.xlu0 %v1709, 24
      %v2039 = vpop.permute.xlu0 %2038
      %2040 = vrot.lane.b32.xlu0 %v1713, 24
      %v2041 = vpop.permute.xlu0 %2040
      %2042 = vrot.lane.b32.xlu0 %v1717, 24
      %v2043 = vpop.permute.xlu0 %2042
      %2044 = vrot.lane.b32.xlu0 %v1721, 24
      %v2045 = vpop.permute.xlu0 %2044
      %2046 = vrot.lane.b32.xlu0 %v1725, 24
      %v2047 = vpop.permute.xlu0 %2046
      %2048 = vrot.lane.b32.xlu0 %v1729, 24
      %v2049 = vpop.permute.xlu0 %2048
      %2050 = vrot.lane.b32.xlu0 %v1733, 24
      %v2051 = vpop.permute.xlu0 %2050
      %2052 = vrot.lane.b32.xlu0 %v1737, 24
      %v2053 = vpop.permute.xlu0 %2052
      %2054 = vrot.lane.b32.xlu0 %v1741, 24
      %v2055 = vpop.permute.xlu0 %2054
      %2056 = vrot.lane.b32.xlu0 %v1745, 24
      %v2057 = vpop.permute.xlu0 %2056
      %2058 = vrot.lane.b32.xlu0 %v1749, 24
      %v2059 = vpop.permute.xlu0 %2058
      %2060 = vrot.lane.b32.xlu0 %v1753, 24
      %v2061 = vpop.permute.xlu0 %2060
      %2062 = vrot.lane.b32.xlu0 %v1757, 24
      %v2063 = vpop.permute.xlu0 %2062
      %2064 = vrot.lane.b32.xlu0 %v1761, 24
      %v2065 = vpop.permute.xlu0 %2064
      %2066 = vrot.lane.b32.xlu0 %v1765, 24
      %v2067 = vpop.permute.xlu0 %2066
      %2068 = vrot.lane.b32.xlu0 %v1769, 24
      %v2069 = vpop.permute.xlu0 %2068
      %2070 = vrot.lane.b32.xlu0 %v1773, 24
      %v2071 = vpop.permute.xlu0 %2070
      %2072 = vrot.lane.b32.xlu0 %v1777, 24
      %v2073 = vpop.permute.xlu0 %2072
      %2074 = vrot.lane.b32.xlu0 %v1781, 24
      %v2075 = vpop.permute.xlu0 %2074
      %2076 = vrot.lane.b32.xlu0 %v1785, 24
      %v2077 = vpop.permute.xlu0 %2076
      %2078 = vrot.lane.b32.xlu0 %v1789, 24
      %v2079 = vpop.permute.xlu0 %2078
      %2080 = vrot.lane.b32.xlu0 %v1793, 24
      %v2081 = vpop.permute.xlu0 %2080
      %2082 = vrot.lane.b32.xlu0 %v1797, 24
      %v2083 = vpop.permute.xlu0 %2082
      %2084 = vrot.lane.b32.xlu0 %v1801, 24
      %v2085 = vpop.permute.xlu0 %2084
      %2086 = vrot.lane.b32.xlu0 %v1805, 24
      %v2087 = vpop.permute.xlu0 %2086
      %2088 = vrot.lane.b32.xlu0 %v1809, 24
      %v2089 = vpop.permute.xlu0 %2088
      %2090 = vrot.lane.b32.xlu0 %v1813, 24
      %v2091 = vpop.permute.xlu0 %2090
      %2092 = vrot.lane.b32.xlu0 %v1817, 24
      %v2093 = vpop.permute.xlu0 %2092
      %2094 = vrot.lane.b32.xlu0 %v1821, 24
      %v2095 = vpop.permute.xlu0 %2094
      %2096 = vrot.lane.b32.xlu0 %v1825, 24
      %v2097 = vpop.permute.xlu0 %2096
      %2098 = vrot.lane.b32.xlu0 %v1829, 24
      %v2099 = vpop.permute.xlu0 %2098
      %2100 = vrot.lane.b32.xlu0 %v1833, 24
      %v2101 = vpop.permute.xlu0 %2100
      %2102 = vrot.lane.b32.xlu0 %v1839, 24
      %v2103 = vpop.permute.xlu0 %2102
      %2104 = vrot.lane.b32.xlu0 %v2016, 24
      %v2105 = vpop.permute.xlu0 %2104
      %2106 = vrot.lane.b32.xlu0 %v2025, 24
      %v2107 = vpop.permute.xlu0 %2106
      %vm2149 = vcmask 257216
      %vm2150 = vmand %vm2149, %vm1958
      %v2151 = vld [vmem:[#allocation2] sm:$0xf]
      %v2152 = vsel %vm2150, %v2027, %v2151
      %2153 = vst [vmem:[#allocation2] sm:$0xf] %v2152
      %vm2154 = vcmask 257216
      %2155 = vst.msk [vmem:[#allocation2 + $0x4] sm:$0xf] %vm2154, %v2029
      %2156 = vst.msk [vmem:[#allocation2 + $0x8] sm:$0xf] %vm2154, %v2031
      %2157 = vst.msk [vmem:[#allocation2 + $0xc] sm:$0xf] %vm2154, %v2033
      %2158 = vst.msk [vmem:[#allocation2 + $0x10] sm:$0xf] %vm2154, %v2035
      %2159 = vst.msk [vmem:[#allocation2 + $0x14] sm:$0xf] %vm2154, %v2037
      %2160 = vst.msk [vmem:[#allocation2 + $0x18] sm:$0xf] %vm2154, %v2039
      %2161 = vst.msk [vmem:[#allocation2 + $0x1c] sm:$0xf] %vm2154, %v2041
      %2162 = vst.msk [vmem:[#allocation2 + $0x20] sm:$0xf] %vm2154, %v2043
      %2163 = vst.msk [vmem:[#allocation2 + $0x24] sm:$0xf] %vm2154, %v2045
      %2164 = vst.msk [vmem:[#allocation2 + $0x28] sm:$0xf] %vm2154, %v2047
      %2165 = vst.msk [vmem:[#allocation2 + $0x2c] sm:$0xf] %vm2154, %v2049
      %2166 = vst.msk [vmem:[#allocation2 + $0x30] sm:$0xf] %vm2154, %v2051
      %2167 = vst.msk [vmem:[#allocation2 + $0x34] sm:$0xf] %vm2154, %v2053
      %2168 = vst.msk [vmem:[#allocation2 + $0x38] sm:$0xf] %vm2154, %v2055
      %2169 = vst.msk [vmem:[#allocation2 + $0x3c] sm:$0xf] %vm2154, %v2057
      %2170 = vst.msk [vmem:[#allocation2 + $0x40] sm:$0xf] %vm2154, %v2059
      %2171 = vst.msk [vmem:[#allocation2 + $0x44] sm:$0xf] %vm2154, %v2061
      %2172 = vst.msk [vmem:[#allocation2 + $0x48] sm:$0xf] %vm2154, %v2063
      %2173 = vst.msk [vmem:[#allocation2 + $0x4c] sm:$0xf] %vm2154, %v2065
      %2174 = vst.msk [vmem:[#allocation2 + $0x50] sm:$0xf] %vm2154, %v2067
      %2175 = vst.msk [vmem:[#allocation2 + $0x54] sm:$0xf] %vm2154, %v2069
      %2176 = vst.msk [vmem:[#allocation2 + $0x58] sm:$0xf] %vm2154, %v2071
      %2177 = vst.msk [vmem:[#allocation2 + $0x5c] sm:$0xf] %vm2154, %v2073
      %2178 = vst.msk [vmem:[#allocation2 + $0x60] sm:$0xf] %vm2154, %v2075
      %2179 = vst.msk [vmem:[#allocation2 + $0x64] sm:$0xf] %vm2154, %v2077
      %2180 = vst.msk [vmem:[#allocation2 + $0x68] sm:$0xf] %vm2154, %v2079
      %2181 = vst.msk [vmem:[#allocation2 + $0x6c] sm:$0xf] %vm2154, %v2081
      %2182 = vst.msk [vmem:[#allocation2 + $0x70] sm:$0xf] %vm2154, %v2083
      %2183 = vst.msk [vmem:[#allocation2 + $0x74] sm:$0xf] %vm2154, %v2085
      %2184 = vst.msk [vmem:[#allocation2 + $0x78] sm:$0xf] %vm2154, %v2087
      %2185 = vst.msk [vmem:[#allocation2 + $0x7c] sm:$0xf] %vm2154, %v2089
      %2186 = vst.msk [vmem:[#allocation2 + $0x80] sm:$0xf] %vm2154, %v2091
      %2187 = vst.msk [vmem:[#allocation2 + $0x84] sm:$0xf] %vm2154, %v2093
      %2188 = vst.msk [vmem:[#allocation2 + $0x88] sm:$0xf] %vm2154, %v2095
      %2189 = vst.msk [vmem:[#allocation2 + $0x8c] sm:$0xf] %vm2154, %v2097
      %2190 = vst.msk [vmem:[#allocation2 + $0x90] sm:$0xf] %vm2154, %v2099
      %2191 = vst.msk [vmem:[#allocation2 + $0x94] sm:$0xf] %vm2154, %v2101
      %2192 = vst.msk [vmem:[#allocation2 + $0x98] sm:$0xf] %vm2154, %v2103
      %2193 = vst.msk [vmem:[#allocation2 + $0x9c] sm:$0xf] %vm2154, %v2105
      %vm2194 = vcmask 255168
      %2195 = vst.msk [vmem:[#allocation2 + $0xa0] sm:$0x3] %vm2194, %v2107
      %2196 = vrot.lane.b32.xlu0 %v893, 32
      %v2197 = vpop.permute.xlu0 %2196
      %2198 = vrot.lane.b32.xlu0 %v894, 32
      %v2199 = vpop.permute.xlu0 %2198
      %2200 = vrot.lane.b32.xlu0 %v895, 32
      %v2201 = vpop.permute.xlu0 %2200
      %2202 = vrot.lane.b32.xlu0 %v896, 32
      %v2203 = vpop.permute.xlu0 %2202
      %2204 = vrot.lane.b32.xlu0 %v897, 32
      %v2205 = vpop.permute.xlu0 %2204
      %2206 = vrot.lane.b32.xlu0 %v898, 32
      %v2207 = vpop.permute.xlu0 %2206
      %2208 = vrot.lane.b32.xlu0 %v899, 32
      %v2209 = vpop.permute.xlu0 %2208
      %2210 = vrot.lane.b32.xlu0 %v900, 32
      %v2211 = vpop.permute.xlu0 %2210
      %2212 = vrot.lane.b32.xlu0 %v901, 32
      %v2213 = vpop.permute.xlu0 %2212
      %2214 = vrot.lane.b32.xlu0 %v902, 32
      %v2215 = vpop.permute.xlu0 %2214
      %2216 = vrot.lane.b32.xlu0 %v903, 32
      %v2217 = vpop.permute.xlu0 %2216
      %2218 = vrot.lane.b32.xlu0 %v904, 32
      %v2219 = vpop.permute.xlu0 %2218
      %2220 = vrot.lane.b32.xlu0 %v905, 32
      %v2221 = vpop.permute.xlu0 %2220
      %2222 = vrot.lane.b32.xlu0 %v906, 32
      %v2223 = vpop.permute.xlu0 %2222
      %2224 = vrot.lane.b32.xlu0 %v907, 32
      %v2225 = vpop.permute.xlu0 %2224
      %2226 = vrot.lane.b32.xlu0 %v908, 32
      %v2227 = vpop.permute.xlu0 %2226
      %2228 = vrot.lane.b32.xlu0 %v909, 32
      %v2229 = vpop.permute.xlu0 %2228
      %2230 = vrot.lane.b32.xlu0 %v910, 32
      %v2231 = vpop.permute.xlu0 %2230
      %2232 = vrot.lane.b32.xlu0 %v911, 32
      %v2233 = vpop.permute.xlu0 %2232
      %2234 = vrot.lane.b32.xlu0 %v912, 32
      %v2235 = vpop.permute.xlu0 %2234
      %2236 = vrot.lane.b32.xlu0 %v913, 32
      %v2237 = vpop.permute.xlu0 %2236
      %2238 = vrot.lane.b32.xlu0 %v914, 32
      %v2239 = vpop.permute.xlu0 %2238
      %2240 = vrot.lane.b32.xlu0 %v915, 32
      %v2241 = vpop.permute.xlu0 %2240
      %2242 = vrot.lane.b32.xlu0 %v916, 32
      %v2243 = vpop.permute.xlu0 %2242
      %2244 = vrot.lane.b32.xlu0 %v917, 32
      %v2245 = vpop.permute.xlu0 %2244
      %2246 = vrot.lane.b32.xlu0 %v918, 32
      %v2247 = vpop.permute.xlu0 %2246
      %2248 = vrot.lane.b32.xlu0 %v919, 32
      %v2249 = vpop.permute.xlu0 %2248
      %2250 = vrot.lane.b32.xlu0 %v920, 32
      %v2251 = vpop.permute.xlu0 %2250
      %2252 = vrot.lane.b32.xlu0 %v921, 32
      %v2253 = vpop.permute.xlu0 %2252
      %2254 = vrot.lane.b32.xlu0 %v922, 32
      %v2255 = vpop.permute.xlu0 %2254
      %2256 = vrot.lane.b32.xlu0 %v923, 32
      %v2257 = vpop.permute.xlu0 %2256
      %2258 = vrot.lane.b32.xlu0 %v924, 32
      %v2259 = vpop.permute.xlu0 %2258
      %2260 = vrot.lane.b32.xlu0 %v925, 32
      %v2261 = vpop.permute.xlu0 %2260
      %2262 = vrot.lane.b32.xlu0 %v926, 32
      %v2263 = vpop.permute.xlu0 %2262
      %2264 = vrot.lane.b32.xlu0 %v927, 32
      %v2265 = vpop.permute.xlu0 %2264
      %2266 = vrot.lane.b32.xlu0 %v928, 32
      %v2267 = vpop.permute.xlu0 %2266
      %2268 = vrot.lane.b32.xlu0 %v929, 32
      %v2269 = vpop.permute.xlu0 %2268
      %2270 = vrot.lane.b32.xlu0 %v930, 32
      %v2271 = vpop.permute.xlu0 %2270
      %2272 = vrot.lane.b32.xlu0 %v931, 32
      %v2273 = vpop.permute.xlu0 %2272
      %2274 = vrot.lane.b32.xlu0 %v2006, 32
      %v2275 = vpop.permute.xlu0 %2274
      %2276 = vrot.lane.b32.xlu0 %v2007, 32
      %v2277 = vpop.permute.xlu0 %2276
      %vm2319 = vcmask 322816
      %2320 = vst.msk [vmem:[#allocation2] sm:$0xf] %vm2319, %v2197
      %2321 = vst.msk [vmem:[#allocation2 + $0x4] sm:$0xf] %vm2319, %v2199
      %2322 = vst.msk [vmem:[#allocation2 + $0x8] sm:$0xf] %vm2319, %v2201
      %2323 = vst.msk [vmem:[#allocation2 + $0xc] sm:$0xf] %vm2319, %v2203
      %2324 = vst.msk [vmem:[#allocation2 + $0x10] sm:$0xf] %vm2319, %v2205
      %2325 = vst.msk [vmem:[#allocation2 + $0x14] sm:$0xf] %vm2319, %v2207
      %2326 = vst.msk [vmem:[#allocation2 + $0x18] sm:$0xf] %vm2319, %v2209
      %2327 = vst.msk [vmem:[#allocation2 + $0x1c] sm:$0xf] %vm2319, %v2211
      %2328 = vst.msk [vmem:[#allocation2 + $0x20] sm:$0xf] %vm2319, %v2213
      %2329 = vst.msk [vmem:[#allocation2 + $0x24] sm:$0xf] %vm2319, %v2215
      %2330 = vst.msk [vmem:[#allocation2 + $0x28] sm:$0xf] %vm2319, %v2217
      %2331 = vst.msk [vmem:[#allocation2 + $0x2c] sm:$0xf] %vm2319, %v2219
      %2332 = vst.msk [vmem:[#allocation2 + $0x30] sm:$0xf] %vm2319, %v2221
      %2333 = vst.msk [vmem:[#allocation2 + $0x34] sm:$0xf] %vm2319, %v2223
      %2334 = vst.msk [vmem:[#allocation2 + $0x38] sm:$0xf] %vm2319, %v2225
      %2335 = vst.msk [vmem:[#allocation2 + $0x3c] sm:$0xf] %vm2319, %v2227
      %2336 = vst.msk [vmem:[#allocation2 + $0x40] sm:$0xf] %vm2319, %v2229
      %2337 = vst.msk [vmem:[#allocation2 + $0x44] sm:$0xf] %vm2319, %v2231
      %2338 = vst.msk [vmem:[#allocation2 + $0x48] sm:$0xf] %vm2319, %v2233
      %2339 = vst.msk [vmem:[#allocation2 + $0x4c] sm:$0xf] %vm2319, %v2235
      %2340 = vst.msk [vmem:[#allocation2 + $0x50] sm:$0xf] %vm2319, %v2237
      %2341 = vst.msk [vmem:[#allocation2 + $0x54] sm:$0xf] %vm2319, %v2239
      %2342 = vst.msk [vmem:[#allocation2 + $0x58] sm:$0xf] %vm2319, %v2241
      %2343 = vst.msk [vmem:[#allocation2 + $0x5c] sm:$0xf] %vm2319, %v2243
      %2344 = vst.msk [vmem:[#allocation2 + $0x60] sm:$0xf] %vm2319, %v2245
      %2345 = vst.msk [vmem:[#allocation2 + $0x64] sm:$0xf] %vm2319, %v2247
      %2346 = vst.msk [vmem:[#allocation2 + $0x68] sm:$0xf] %vm2319, %v2249
      %2347 = vst.msk [vmem:[#allocation2 + $0x6c] sm:$0xf] %vm2319, %v2251
      %2348 = vst.msk [vmem:[#allocation2 + $0x70] sm:$0xf] %vm2319, %v2253
      %2349 = vst.msk [vmem:[#allocation2 + $0x74] sm:$0xf] %vm2319, %v2255
      %2350 = vst.msk [vmem:[#allocation2 + $0x78] sm:$0xf] %vm2319, %v2257
      %2351 = vst.msk [vmem:[#allocation2 + $0x7c] sm:$0xf] %vm2319, %v2259
      %2352 = vst.msk [vmem:[#allocation2 + $0x80] sm:$0xf] %vm2319, %v2261
      %2353 = vst.msk [vmem:[#allocation2 + $0x84] sm:$0xf] %vm2319, %v2263
      %2354 = vst.msk [vmem:[#allocation2 + $0x88] sm:$0xf] %vm2319, %v2265
      %2355 = vst.msk [vmem:[#allocation2 + $0x8c] sm:$0xf] %vm2319, %v2267
      %2356 = vst.msk [vmem:[#allocation2 + $0x90] sm:$0xf] %vm2319, %v2269
      %2357 = vst.msk [vmem:[#allocation2 + $0x94] sm:$0xf] %vm2319, %v2271
      %2358 = vst.msk [vmem:[#allocation2 + $0x98] sm:$0xf] %vm2319, %v2273
      %2359 = vst.msk [vmem:[#allocation2 + $0x9c] sm:$0xf] %vm2319, %v2275
      %vm2360 = vcmask 320768
      %2361 = vst.msk [vmem:[#allocation2 + $0xa0] sm:$0x3] %vm2360, %v2277
      %vm2362 = vsmask.f32 3328
      %vm2363 = vsmask.f32 7440
      %vm2364 = vmor %vm2362, %vm2363
      %v2365 = vrot.slane %v936, 4
      %v2366 = vrot.slane %v939, 5
      %v2367 = vor.u32 %v2365, %v2366
      %v2368 = vrot.slane %v2367, 4
      %v2369 = vrot.slane %v948, 5
      %v2370 = vsel %vm2364, %v2368, %v2369
      %v2371 = vrot.slane %v945, 4
      %v2372 = vor.u32 %v2371, %v2369
      %v2373 = vrot.slane %v2372, 4
      %v2374 = vrot.slane %v958, 5
      %v2375 = vsel %vm2364, %v2373, %v2374
      %v2376 = vrot.slane %v955, 4
      %v2377 = vor.u32 %v2376, %v2374
      %v2378 = vrot.slane %v2377, 4
      %v2379 = vrot.slane %v968, 5
      %v2380 = vsel %vm2364, %v2378, %v2379
      %v2381 = vrot.slane %v965, 4
      %v2382 = vor.u32 %v2381, %v2379
      %v2383 = vrot.slane %v2382, 4
      %v2384 = vrot.slane %v978, 5
      %v2385 = vsel %vm2364, %v2383, %v2384
      %v2386 = vrot.slane %v975, 4
      %v2387 = vor.u32 %v2386, %v2384
      %v2388 = vrot.slane %v2387, 4
      %v2389 = vrot.slane %v988, 5
      %v2390 = vsel %vm2364, %v2388, %v2389
      %v2391 = vrot.slane %v985, 4
      %v2392 = vor.u32 %v2391, %v2389
      %v2393 = vrot.slane %v2392, 4
      %v2394 = vrot.slane %v998, 5
      %v2395 = vsel %vm2364, %v2393, %v2394
      %v2396 = vrot.slane %v995, 4
      %v2397 = vor.u32 %v2396, %v2394
      %v2398 = vrot.slane %v2397, 4
      %v2399 = vrot.slane %v1008, 5
      %v2400 = vsel %vm2364, %v2398, %v2399
      %v2401 = vrot.slane %v1005, 4
      %v2402 = vor.u32 %v2401, %v2399
      %v2403 = vrot.slane %v2402, 4
      %v2404 = vrot.slane %v1018, 5
      %v2405 = vsel %vm2364, %v2403, %v2404
      %v2406 = vrot.slane %v1015, 4
      %v2407 = vor.u32 %v2406, %v2404
      %v2408 = vrot.slane %v2407, 4
      %v2409 = vrot.slane %v1028, 5
      %v2410 = vsel %vm2364, %v2408, %v2409
      %v2411 = vrot.slane %v1025, 4
      %v2412 = vor.u32 %v2411, %v2409
      %v2413 = vrot.slane %v2412, 4
      %v2414 = vrot.slane %v1038, 5
      %v2415 = vsel %vm2364, %v2413, %v2414
      %v2416 = vrot.slane %v1035, 4
      %v2417 = vor.u32 %v2416, %v2414
      %v2418 = vrot.slane %v2417, 4
      %v2419 = vrot.slane %v1048, 5
      %v2420 = vsel %vm2364, %v2418, %v2419
      %v2421 = vrot.slane %v1045, 4
      %v2422 = vor.u32 %v2421, %v2419
      %v2423 = vrot.slane %v2422, 4
      %v2424 = vrot.slane %v1058, 5
      %v2425 = vsel %vm2364, %v2423, %v2424
      %v2426 = vrot.slane %v1055, 4
      %v2427 = vor.u32 %v2426, %v2424
      %v2428 = vrot.slane %v2427, 4
      %v2429 = vrot.slane %v1068, 5
      %v2430 = vsel %vm2364, %v2428, %v2429
      %v2431 = vrot.slane %v1065, 4
      %v2432 = vor.u32 %v2431, %v2429
      %v2433 = vrot.slane %v2432, 4
      %v2434 = vrot.slane %v1078, 5
      %v2435 = vsel %vm2364, %v2433, %v2434
      %v2436 = vrot.slane %v1075, 4
      %v2437 = vor.u32 %v2436, %v2434
      %v2438 = vrot.slane %v2437, 4
      %v2439 = vrot.slane %v1088, 5
      %v2440 = vsel %vm2364, %v2438, %v2439
      %v2441 = vrot.slane %v1085, 4
      %v2442 = vor.u32 %v2441, %v2439
      %v2443 = vrot.slane %v2442, 4
      %v2444 = vrot.slane %v1098, 5
      %v2445 = vsel %vm2364, %v2443, %v2444
      %v2446 = vrot.slane %v1095, 4
      %v2447 = vor.u32 %v2446, %v2444
      %v2448 = vrot.slane %v2447, 4
      %v2449 = vrot.slane %v1108, 5
      %v2450 = vsel %vm2364, %v2448, %v2449
      %v2451 = vrot.slane %v1105, 4
      %v2452 = vor.u32 %v2451, %v2449
      %v2453 = vrot.slane %v2452, 4
      %v2454 = vrot.slane %v1118, 5
      %v2455 = vsel %vm2364, %v2453, %v2454
      %v2456 = vrot.slane %v1115, 4
      %v2457 = vor.u32 %v2456, %v2454
      %v2458 = vrot.slane %v2457, 4
      %v2459 = vrot.slane %v1128, 5
      %v2460 = vsel %vm2364, %v2458, %v2459
      %v2461 = vrot.slane %v1125, 4
      %v2462 = vor.u32 %v2461, %v2459
      %v2463 = vrot.slane %v2462, 4
      %v2464 = vrot.slane %v1138, 5
      %v2465 = vsel %vm2364, %v2463, %v2464
      %v2466 = vrot.slane %v1135, 4
      %v2467 = vor.u32 %v2466, %v2464
      %v2468 = vrot.slane %v2467, 4
      %v2469 = vrot.slane %v1148, 5
      %v2470 = vsel %vm2364, %v2468, %v2469
      %v2471 = vrot.slane %v1145, 4
      %v2472 = vor.u32 %v2471, %v2469
      %v2473 = vrot.slane %v2472, 4
      %v2474 = vrot.slane %v1158, 5
      %v2475 = vsel %vm2364, %v2473, %v2474
      %v2476 = vrot.slane %v1155, 4
      %v2477 = vor.u32 %v2476, %v2474
      %v2478 = vrot.slane %v2477, 4
      %v2479 = vrot.slane %v1168, 5
      %v2480 = vsel %vm2364, %v2478, %v2479
      %v2481 = vrot.slane %v1165, 4
      %v2482 = vor.u32 %v2481, %v2479
      %v2483 = vrot.slane %v2482, 4
      %v2484 = vrot.slane %v1178, 5
      %v2485 = vsel %vm2364, %v2483, %v2484
      %v2486 = vrot.slane %v1175, 4
      %v2487 = vor.u32 %v2486, %v2484
      %v2488 = vrot.slane %v2487, 4
      %v2489 = vrot.slane %v1188, 5
      %v2490 = vsel %vm2364, %v2488, %v2489
      %v2491 = vrot.slane %v1185, 4
      %v2492 = vor.u32 %v2491, %v2489
      %v2493 = vrot.slane %v2492, 4
      %v2494 = vrot.slane %v1198, 5
      %v2495 = vsel %vm2364, %v2493, %v2494
      %v2496 = vrot.slane %v1195, 4
      %v2497 = vor.u32 %v2496, %v2494
      %v2498 = vrot.slane %v2497, 4
      %v2499 = vrot.slane %v1208, 5
      %v2500 = vsel %vm2364, %v2498, %v2499
      %v2501 = vrot.slane %v1205, 4
      %v2502 = vor.u32 %v2501, %v2499
      %v2503 = vrot.slane %v2502, 4
      %v2504 = vrot.slane %v1218, 5
      %v2505 = vsel %vm2364, %v2503, %v2504
      %v2506 = vrot.slane %v1215, 4
      %v2507 = vor.u32 %v2506, %v2504
      %v2508 = vrot.slane %v2507, 4
      %v2509 = vrot.slane %v1228, 5
      %v2510 = vsel %vm2364, %v2508, %v2509
      %v2511 = vrot.slane %v1225, 4
      %v2512 = vor.u32 %v2511, %v2509
      %v2513 = vrot.slane %v2512, 4
      %v2514 = vrot.slane %v1238, 5
      %v2515 = vsel %vm2364, %v2513, %v2514
      %v2516 = vrot.slane %v1235, 4
      %v2517 = vor.u32 %v2516, %v2514
      %v2518 = vrot.slane %v2517, 4
      %v2519 = vrot.slane %v1248, 5
      %v2520 = vsel %vm2364, %v2518, %v2519
      %v2521 = vrot.slane %v1245, 4
      %v2522 = vor.u32 %v2521, %v2519
      %v2523 = vrot.slane %v2522, 4
      %v2524 = vrot.slane %v1258, 5
      %v2525 = vsel %vm2364, %v2523, %v2524
      %v2526 = vrot.slane %v1255, 4
      %v2527 = vor.u32 %v2526, %v2524
      %v2528 = vrot.slane %v2527, 4
      %v2529 = vrot.slane %v1268, 5
      %v2530 = vsel %vm2364, %v2528, %v2529
      %v2531 = vrot.slane %v1265, 4
      %v2532 = vor.u32 %v2531, %v2529
      %v2533 = vrot.slane %v2532, 4
      %v2534 = vrot.slane %v1278, 5
      %v2535 = vsel %vm2364, %v2533, %v2534
      %v2536 = vrot.slane %v1275, 4
      %v2537 = vor.u32 %v2536, %v2534
      %v2538 = vrot.slane %v2537, 4
      %v2539 = vrot.slane %v1288, 5
      %v2540 = vsel %vm2364, %v2538, %v2539
      %v2541 = vrot.slane %v1285, 4
      %v2542 = vor.u32 %v2541, %v2539
      %v2543 = vrot.slane %v2542, 4
      %v2544 = vrot.slane %v1298, 5
      %v2545 = vsel %vm2364, %v2543, %v2544
      %v2546 = vrot.slane %v1295, 4
      %v2547 = vor.u32 %v2546, %v2544
      %v2548 = vrot.slane %v2547, 4
      %v2549 = vrot.slane %v1308, 5
      %v2550 = vsel %vm2364, %v2548, %v2549
      %v2551 = vrot.slane %v1305, 4
      %v2552 = vor.u32 %v2551, %v2549
      %v2553 = vrot.slane %v2552, 4
      %v2554 = vrot.slane %v1315, 5
      %v2555 = vsel %vm2364, %v2553, %v2554
      %v2556 = vrot.slane %v1835, 4
      %v2557 = vor.u32 %v2556, %v2554
      %v2558 = vrot.slane %v2557, 4
      %v2559 = vrot.slane %v2013, 5
      %v2560 = vsel %vm2364, %v2558, %v2559
      %v2561 = vrot.slane %v2010, 4
      %v2562 = vor.u32 %v2561, %v2559
      %v2563 = vrot.slane %v2562, 4
      %v2564 = vrot.slane %v2022, 5
      %v2565 = vsel %vm2364, %v2563, %v2564
      %v2566 = vrot.slane %v2019, 4
      %v2567 = vor.u32 %v2566, %v2564
      %v2568 = vrot.slane %v2567, 4
      %2569 = vrot.lane.b32.xlu0 %v2370, 40
      %v2570 = vpop.permute.xlu0 %2569
      %2571 = vrot.lane.b32.xlu0 %v2375, 40
      %v2572 = vpop.permute.xlu0 %2571
      %2573 = vrot.lane.b32.xlu0 %v2380, 40
      %v2574 = vpop.permute.xlu0 %2573
      %2575 = vrot.lane.b32.xlu0 %v2385, 40
      %v2576 = vpop.permute.xlu0 %2575
      %2577 = vrot.lane.b32.xlu0 %v2390, 40
      %v2578 = vpop.permute.xlu0 %2577
      %2579 = vrot.lane.b32.xlu0 %v2395, 40
      %v2580 = vpop.permute.xlu0 %2579
      %2581 = vrot.lane.b32.xlu0 %v2400, 40
      %v2582 = vpop.permute.xlu0 %2581
      %2583 = vrot.lane.b32.xlu0 %v2405, 40
      %v2584 = vpop.permute.xlu0 %2583
      %2585 = vrot.lane.b32.xlu0 %v2410, 40
      %v2586 = vpop.permute.xlu0 %2585
      %2587 = vrot.lane.b32.xlu0 %v2415, 40
      %v2588 = vpop.permute.xlu0 %2587
      %2589 = vrot.lane.b32.xlu0 %v2420, 40
      %v2590 = vpop.permute.xlu0 %2589
      %2591 = vrot.lane.b32.xlu0 %v2425, 40
      %v2592 = vpop.permute.xlu0 %2591
      %2593 = vrot.lane.b32.xlu0 %v2430, 40
      %v2594 = vpop.permute.xlu0 %2593
      %2595 = vrot.lane.b32.xlu0 %v2435, 40
      %v2596 = vpop.permute.xlu0 %2595
      %2597 = vrot.lane.b32.xlu0 %v2440, 40
      %v2598 = vpop.permute.xlu0 %2597
      %2599 = vrot.lane.b32.xlu0 %v2445, 40
      %v2600 = vpop.permute.xlu0 %2599
      %2601 = vrot.lane.b32.xlu0 %v2450, 40
      %v2602 = vpop.permute.xlu0 %2601
      %2603 = vrot.lane.b32.xlu0 %v2455, 40
      %v2604 = vpop.permute.xlu0 %2603
      %2605 = vrot.lane.b32.xlu0 %v2460, 40
      %v2606 = vpop.permute.xlu0 %2605
      %2607 = vrot.lane.b32.xlu0 %v2465, 40
      %v2608 = vpop.permute.xlu0 %2607
      %2609 = vrot.lane.b32.xlu0 %v2470, 40
      %v2610 = vpop.permute.xlu0 %2609
      %2611 = vrot.lane.b32.xlu0 %v2475, 40
      %v2612 = vpop.permute.xlu0 %2611
      %2613 = vrot.lane.b32.xlu0 %v2480, 40
      %v2614 = vpop.permute.xlu0 %2613
      %2615 = vrot.lane.b32.xlu0 %v2485, 40
      %v2616 = vpop.permute.xlu0 %2615
      %2617 = vrot.lane.b32.xlu0 %v2490, 40
      %v2618 = vpop.permute.xlu0 %2617
      %2619 = vrot.lane.b32.xlu0 %v2495, 40
      %v2620 = vpop.permute.xlu0 %2619
      %2621 = vrot.lane.b32.xlu0 %v2500, 40
      %v2622 = vpop.permute.xlu0 %2621
      %2623 = vrot.lane.b32.xlu0 %v2505, 40
      %v2624 = vpop.permute.xlu0 %2623
      %2625 = vrot.lane.b32.xlu0 %v2510, 40
      %v2626 = vpop.permute.xlu0 %2625
      %2627 = vrot.lane.b32.xlu0 %v2515, 40
      %v2628 = vpop.permute.xlu0 %2627
      %2629 = vrot.lane.b32.xlu0 %v2520, 40
      %v2630 = vpop.permute.xlu0 %2629
      %2631 = vrot.lane.b32.xlu0 %v2525, 40
      %v2632 = vpop.permute.xlu0 %2631
      %2633 = vrot.lane.b32.xlu0 %v2530, 40
      %v2634 = vpop.permute.xlu0 %2633
      %2635 = vrot.lane.b32.xlu0 %v2535, 40
      %v2636 = vpop.permute.xlu0 %2635
      %2637 = vrot.lane.b32.xlu0 %v2540, 40
      %v2638 = vpop.permute.xlu0 %2637
      %2639 = vrot.lane.b32.xlu0 %v2545, 40
      %v2640 = vpop.permute.xlu0 %2639
      %2641 = vrot.lane.b32.xlu0 %v2550, 40
      %v2642 = vpop.permute.xlu0 %2641
      %2643 = vrot.lane.b32.xlu0 %v2555, 40
      %v2644 = vpop.permute.xlu0 %2643
      %2645 = vrot.lane.b32.xlu0 %v2560, 40
      %v2646 = vpop.permute.xlu0 %2645
      %2647 = vrot.lane.b32.xlu0 %v2565, 40
      %v2648 = vpop.permute.xlu0 %2647
      %2649 = vrot.lane.b32.xlu0 %v2568, 40
      %v2650 = vpop.permute.xlu0 %2649
      %vm2692 = vcmask 388416
      %2693 = vst.msk [vmem:[#allocation2] sm:$0xf] %vm2692, %v2570
      %2694 = vst.msk [vmem:[#allocation2 + $0x4] sm:$0xf] %vm2692, %v2572
      %2695 = vst.msk [vmem:[#allocation2 + $0x8] sm:$0xf] %vm2692, %v2574
      %2696 = vst.msk [vmem:[#allocation2 + $0xc] sm:$0xf] %vm2692, %v2576
      %2697 = vst.msk [vmem:[#allocation2 + $0x10] sm:$0xf] %vm2692, %v2578
      %2698 = vst.msk [vmem:[#allocation2 + $0x14] sm:$0xf] %vm2692, %v2580
      %2699 = vst.msk [vmem:[#allocation2 + $0x18] sm:$0xf] %vm2692, %v2582
      %2700 = vst.msk [vmem:[#allocation2 + $0x1c] sm:$0xf] %vm2692, %v2584
      %2701 = vst.msk [vmem:[#allocation2 + $0x20] sm:$0xf] %vm2692, %v2586
      %2702 = vst.msk [vmem:[#allocation2 + $0x24] sm:$0xf] %vm2692, %v2588
      %2703 = vst.msk [vmem:[#allocation2 + $0x28] sm:$0xf] %vm2692, %v2590
      %2704 = vst.msk [vmem:[#allocation2 + $0x2c] sm:$0xf] %vm2692, %v2592
      %2705 = vst.msk [vmem:[#allocation2 + $0x30] sm:$0xf] %vm2692, %v2594
      %2706 = vst.msk [vmem:[#allocation2 + $0x34] sm:$0xf] %vm2692, %v2596
      %2707 = vst.msk [vmem:[#allocation2 + $0x38] sm:$0xf] %vm2692, %v2598
      %2708 = vst.msk [vmem:[#allocation2 + $0x3c] sm:$0xf] %vm2692, %v2600
      %2709 = vst.msk [vmem:[#allocation2 + $0x40] sm:$0xf] %vm2692, %v2602
      %2710 = vst.msk [vmem:[#allocation2 + $0x44] sm:$0xf] %vm2692, %v2604
      %2711 = vst.msk [vmem:[#allocation2 + $0x48] sm:$0xf] %vm2692, %v2606
      %2712 = vst.msk [vmem:[#allocation2 + $0x4c] sm:$0xf] %vm2692, %v2608
      %2713 = vst.msk [vmem:[#allocation2 + $0x50] sm:$0xf] %vm2692, %v2610
      %2714 = vst.msk [vmem:[#allocation2 + $0x54] sm:$0xf] %vm2692, %v2612
      %2715 = vst.msk [vmem:[#allocation2 + $0x58] sm:$0xf] %vm2692, %v2614
      %2716 = vst.msk [vmem:[#allocation2 + $0x5c] sm:$0xf] %vm2692, %v2616
      %2717 = vst.msk [vmem:[#allocation2 + $0x60] sm:$0xf] %vm2692, %v2618
      %2718 = vst.msk [vmem:[#allocation2 + $0x64] sm:$0xf] %vm2692, %v2620
      %2719 = vst.msk [vmem:[#allocation2 + $0x68] sm:$0xf] %vm2692, %v2622
      %2720 = vst.msk [vmem:[#allocation2 + $0x6c] sm:$0xf] %vm2692, %v2624
      %2721 = vst.msk [vmem:[#allocation2 + $0x70] sm:$0xf] %vm2692, %v2626
      %2722 = vst.msk [vmem:[#allocation2 + $0x74] sm:$0xf] %vm2692, %v2628
      %2723 = vst.msk [vmem:[#allocation2 + $0x78] sm:$0xf] %vm2692, %v2630
      %2724 = vst.msk [vmem:[#allocation2 + $0x7c] sm:$0xf] %vm2692, %v2632
      %2725 = vst.msk [vmem:[#allocation2 + $0x80] sm:$0xf] %vm2692, %v2634
      %2726 = vst.msk [vmem:[#allocation2 + $0x84] sm:$0xf] %vm2692, %v2636
      %2727 = vst.msk [vmem:[#allocation2 + $0x88] sm:$0xf] %vm2692, %v2638
      %2728 = vst.msk [vmem:[#allocation2 + $0x8c] sm:$0xf] %vm2692, %v2640
      %2729 = vst.msk [vmem:[#allocation2 + $0x90] sm:$0xf] %vm2692, %v2642
      %2730 = vst.msk [vmem:[#allocation2 + $0x94] sm:$0xf] %vm2692, %v2644
      %2731 = vst.msk [vmem:[#allocation2 + $0x98] sm:$0xf] %vm2692, %v2646
      %2732 = vst.msk [vmem:[#allocation2 + $0x9c] sm:$0xf] %vm2692, %v2648
      %vm2733 = vcmask 386368
      %vm2734 = vmand %vm2733, %vm932
      %v2735 = vld [vmem:[#allocation2 + $0xa0] sm:$0x3]
      %v2736 = vsel %vm2734, %v2650, %v2735
      %2737 = vst [vmem:[#allocation2 + $0xa0] sm:$0x3] %v2736
      %2738 = vrot.lane.b32.xlu0 %v2380, 48
      %v2739 = vpop.permute.xlu0 %2738
      %2740 = vrot.lane.b32.xlu0 %v2385, 48
      %v2741 = vpop.permute.xlu0 %2740
      %2742 = vrot.lane.b32.xlu0 %v2390, 48
      %v2743 = vpop.permute.xlu0 %2742
      %2744 = vrot.lane.b32.xlu0 %v2395, 48
      %v2745 = vpop.permute.xlu0 %2744
      %2746 = vrot.lane.b32.xlu0 %v2400, 48
      %v2747 = vpop.permute.xlu0 %2746
      %2748 = vrot.lane.b32.xlu0 %v2405, 48
      %v2749 = vpop.permute.xlu0 %2748
      %2750 = vrot.lane.b32.xlu0 %v2410, 48
      %v2751 = vpop.permute.xlu0 %2750
      %2752 = vrot.lane.b32.xlu0 %v2415, 48
      %v2753 = vpop.permute.xlu0 %2752
      %2754 = vrot.lane.b32.xlu0 %v2420, 48
      %v2755 = vpop.permute.xlu0 %2754
      %2756 = vrot.lane.b32.xlu0 %v2425, 48
      %v2757 = vpop.permute.xlu0 %2756
      %2758 = vrot.lane.b32.xlu0 %v2430, 48
      %v2759 = vpop.permute.xlu0 %2758
      %2760 = vrot.lane.b32.xlu0 %v2435, 48
      %v2761 = vpop.permute.xlu0 %2760
      %2762 = vrot.lane.b32.xlu0 %v2440, 48
      %v2763 = vpop.permute.xlu0 %2762
      %2764 = vrot.lane.b32.xlu0 %v2445, 48
      %v2765 = vpop.permute.xlu0 %2764
      %2766 = vrot.lane.b32.xlu0 %v2450, 48
      %v2767 = vpop.permute.xlu0 %2766
      %2768 = vrot.lane.b32.xlu0 %v2455, 48
      %v2769 = vpop.permute.xlu0 %2768
      %2770 = vrot.lane.b32.xlu0 %v2460, 48
      %v2771 = vpop.permute.xlu0 %2770
      %2772 = vrot.lane.b32.xlu0 %v2465, 48
      %v2773 = vpop.permute.xlu0 %2772
      %2774 = vrot.lane.b32.xlu0 %v2470, 48
      %v2775 = vpop.permute.xlu0 %2774
      %2776 = vrot.lane.b32.xlu0 %v2475, 48
      %v2777 = vpop.permute.xlu0 %2776
      %2778 = vrot.lane.b32.xlu0 %v2480, 48
      %v2779 = vpop.permute.xlu0 %2778
      %2780 = vrot.lane.b32.xlu0 %v2485, 48
      %v2781 = vpop.permute.xlu0 %2780
      %2782 = vrot.lane.b32.xlu0 %v2490, 48
      %v2783 = vpop.permute.xlu0 %2782
      %2784 = vrot.lane.b32.xlu0 %v2495, 48
      %v2785 = vpop.permute.xlu0 %2784
      %2786 = vrot.lane.b32.xlu0 %v2500, 48
      %v2787 = vpop.permute.xlu0 %2786
      %2788 = vrot.lane.b32.xlu0 %v2505, 48
      %v2789 = vpop.permute.xlu0 %2788
      %2790 = vrot.lane.b32.xlu0 %v2510, 48
      %v2791 = vpop.permute.xlu0 %2790
      %2792 = vrot.lane.b32.xlu0 %v2515, 48
      %v2793 = vpop.permute.xlu0 %2792
      %2794 = vrot.lane.b32.xlu0 %v2520, 48
      %v2795 = vpop.permute.xlu0 %2794
      %2796 = vrot.lane.b32.xlu0 %v2525, 48
      %v2797 = vpop.permute.xlu0 %2796
      %2798 = vrot.lane.b32.xlu0 %v2530, 48
      %v2799 = vpop.permute.xlu0 %2798
      %2800 = vrot.lane.b32.xlu0 %v2535, 48
      %v2801 = vpop.permute.xlu0 %2800
      %2802 = vrot.lane.b32.xlu0 %v2540, 48
      %v2803 = vpop.permute.xlu0 %2802
      %2804 = vrot.lane.b32.xlu0 %v2545, 48
      %v2805 = vpop.permute.xlu0 %2804
      %2806 = vrot.lane.b32.xlu0 %v2550, 48
      %v2807 = vpop.permute.xlu0 %2806
      %2808 = vrot.lane.b32.xlu0 %v2555, 48
      %v2809 = vpop.permute.xlu0 %2808
      %2810 = vrot.lane.b32.xlu0 %v2560, 48
      %v2811 = vpop.permute.xlu0 %2810
      %2812 = vrot.lane.b32.xlu0 %v2565, 48
      %v2813 = vpop.permute.xlu0 %2812
      %2814 = vrot.lane.b32.xlu0 %v2568, 48
      %v2815 = vpop.permute.xlu0 %2814
      %vm2855 = vcmask 454016
      %2856 = vst.msk [vmem:[#allocation2] sm:$0xf] %vm2855, %v2739
      %2857 = vst.msk [vmem:[#allocation2 + $0x4] sm:$0xf] %vm2855, %v2741
      %2858 = vst.msk [vmem:[#allocation2 + $0x8] sm:$0xf] %vm2855, %v2743
      %2859 = vst.msk [vmem:[#allocation2 + $0xc] sm:$0xf] %vm2855, %v2745
      %2860 = vst.msk [vmem:[#allocation2 + $0x10] sm:$0xf] %vm2855, %v2747
      %2861 = vst.msk [vmem:[#allocation2 + $0x14] sm:$0xf] %vm2855, %v2749
      %2862 = vst.msk [vmem:[#allocation2 + $0x18] sm:$0xf] %vm2855, %v2751
      %2863 = vst.msk [vmem:[#allocation2 + $0x1c] sm:$0xf] %vm2855, %v2753
      %2864 = vst.msk [vmem:[#allocation2 + $0x20] sm:$0xf] %vm2855, %v2755
      %2865 = vst.msk [vmem:[#allocation2 + $0x24] sm:$0xf] %vm2855, %v2757
      %2866 = vst.msk [vmem:[#allocation2 + $0x28] sm:$0xf] %vm2855, %v2759
      %2867 = vst.msk [vmem:[#allocation2 + $0x2c] sm:$0xf] %vm2855, %v2761
      %2868 = vst.msk [vmem:[#allocation2 + $0x30] sm:$0xf] %vm2855, %v2763
      %2869 = vst.msk [vmem:[#allocation2 + $0x34] sm:$0xf] %vm2855, %v2765
      %2870 = vst.msk [vmem:[#allocation2 + $0x38] sm:$0xf] %vm2855, %v2767
      %2871 = vst.msk [vmem:[#allocation2 + $0x3c] sm:$0xf] %vm2855, %v2769
      %2872 = vst.msk [vmem:[#allocation2 + $0x40] sm:$0xf] %vm2855, %v2771
      %2873 = vst.msk [vmem:[#allocation2 + $0x44] sm:$0xf] %vm2855, %v2773
      %2874 = vst.msk [vmem:[#allocation2 + $0x48] sm:$0xf] %vm2855, %v2775
      %2875 = vst.msk [vmem:[#allocation2 + $0x4c] sm:$0xf] %vm2855, %v2777
      %2876 = vst.msk [vmem:[#allocation2 + $0x50] sm:$0xf] %vm2855, %v2779
      %2877 = vst.msk [vmem:[#allocation2 + $0x54] sm:$0xf] %vm2855, %v2781
      %2878 = vst.msk [vmem:[#allocation2 + $0x58] sm:$0xf] %vm2855, %v2783
      %2879 = vst.msk [vmem:[#allocation2 + $0x5c] sm:$0xf] %vm2855, %v2785
      %2880 = vst.msk [vmem:[#allocation2 + $0x60] sm:$0xf] %vm2855, %v2787
      %2881 = vst.msk [vmem:[#allocation2 + $0x64] sm:$0xf] %vm2855, %v2789
      %2882 = vst.msk [vmem:[#allocation2 + $0x68] sm:$0xf] %vm2855, %v2791
      %2883 = vst.msk [vmem:[#allocation2 + $0x6c] sm:$0xf] %vm2855, %v2793
      %2884 = vst.msk [vmem:[#allocation2 + $0x70] sm:$0xf] %vm2855, %v2795
      %2885 = vst.msk [vmem:[#allocation2 + $0x74] sm:$0xf] %vm2855, %v2797
      %2886 = vst.msk [vmem:[#allocation2 + $0x78] sm:$0xf] %vm2855, %v2799
      %2887 = vst.msk [vmem:[#allocation2 + $0x7c] sm:$0xf] %vm2855, %v2801
      %2888 = vst.msk [vmem:[#allocation2 + $0x80] sm:$0xf] %vm2855, %v2803
      %2889 = vst.msk [vmem:[#allocation2 + $0x84] sm:$0xf] %vm2855, %v2805
      %2890 = vst.msk [vmem:[#allocation2 + $0x88] sm:$0xf] %vm2855, %v2807
      %2891 = vst.msk [vmem:[#allocation2 + $0x8c] sm:$0xf] %vm2855, %v2809
      %2892 = vst.msk [vmem:[#allocation2 + $0x90] sm:$0xf] %vm2855, %v2811
      %2893 = vst.msk [vmem:[#allocation2 + $0x94] sm:$0xf] %vm2855, %v2813
      %vm2894 = vcmask 451968
      %vm2895 = vmand %vm2894, %vm932
      %v2896 = vld [vmem:[#allocation2 + $0x98] sm:$0x3]
      %v2897 = vsel %vm2895, %v2815, %v2896
      %2898 = vst [vmem:[#allocation2 + $0x98] sm:$0x3] %v2897
      %vm2899 = vcmask 1042432
      %vm2900 = vcmask 1046532
      %vm2901 = vmor %vm2899, %vm2900
      %v2902 = vrot.slane %v895, 5
      %v2903 = vrot.slane %v2902, 4
      %v2904 = vrot.slane %v896, 5
      %v2905 = vsel %vm2901, %v2903, %v2904
      %v2906 = vrot.slane %v2904, 4
      %v2907 = vrot.slane %v897, 5
      %v2908 = vsel %vm2901, %v2906, %v2907
      %v2909 = vrot.slane %v2907, 4
      %v2910 = vrot.slane %v898, 5
      %v2911 = vsel %vm2901, %v2909, %v2910
      %v2912 = vrot.slane %v2910, 4
      %v2913 = vrot.slane %v899, 5
      %v2914 = vsel %vm2901, %v2912, %v2913
      %v2915 = vrot.slane %v2913, 4
      %v2916 = vrot.slane %v900, 5
      %v2917 = vsel %vm2901, %v2915, %v2916
      %v2918 = vrot.slane %v2916, 4
      %v2919 = vrot.slane %v901, 5
      %v2920 = vsel %vm2901, %v2918, %v2919
      %v2921 = vrot.slane %v2919, 4
      %v2922 = vrot.slane %v902, 5
      %v2923 = vsel %vm2901, %v2921, %v2922
      %v2924 = vrot.slane %v2922, 4
      %v2925 = vrot.slane %v903, 5
      %v2926 = vsel %vm2901, %v2924, %v2925
      %v2927 = vrot.slane %v2925, 4
      %v2928 = vrot.slane %v904, 5
      %v2929 = vsel %vm2901, %v2927, %v2928
      %v2930 = vrot.slane %v2928, 4
      %v2931 = vrot.slane %v905, 5
      %v2932 = vsel %vm2901, %v2930, %v2931
      %v2933 = vrot.slane %v2931, 4
      %v2934 = vrot.slane %v906, 5
      %v2935 = vsel %vm2901, %v2933, %v2934
      %v2936 = vrot.slane %v2934, 4
      %v2937 = vrot.slane %v907, 5
      %v2938 = vsel %vm2901, %v2936, %v2937
      %v2939 = vrot.slane %v2937, 4
      %v2940 = vrot.slane %v908, 5
      %v2941 = vsel %vm2901, %v2939, %v2940
      %v2942 = vrot.slane %v2940, 4
      %v2943 = vrot.slane %v909, 5
      %v2944 = vsel %vm2901, %v2942, %v2943
      %v2945 = vrot.slane %v2943, 4
      %v2946 = vrot.slane %v910, 5
      %v2947 = vsel %vm2901, %v2945, %v2946
      %v2948 = vrot.slane %v2946, 4
      %v2949 = vrot.slane %v911, 5
      %v2950 = vsel %vm2901, %v2948, %v2949
      %v2951 = vrot.slane %v2949, 4
      %v2952 = vrot.slane %v912, 5
      %v2953 = vsel %vm2901, %v2951, %v2952
      %v2954 = vrot.slane %v2952, 4
      %v2955 = vrot.slane %v913, 5
      %v2956 = vsel %vm2901, %v2954, %v2955
      %v2957 = vrot.slane %v2955, 4
      %v2958 = vrot.slane %v914, 5
      %v2959 = vsel %vm2901, %v2957, %v2958
      %v2960 = vrot.slane %v2958, 4
      %v2961 = vrot.slane %v915, 5
      %v2962 = vsel %vm2901, %v2960, %v2961
      %v2963 = vrot.slane %v2961, 4
      %v2964 = vrot.slane %v916, 5
      %v2965 = vsel %vm2901, %v2963, %v2964
      %v2966 = vrot.slane %v2964, 4
      %v2967 = vrot.slane %v917, 5
      %v2968 = vsel %vm2901, %v2966, %v2967
      %v2969 = vrot.slane %v2967, 4
      %v2970 = vrot.slane %v918, 5
      %v2971 = vsel %vm2901, %v2969, %v2970
      %v2972 = vrot.slane %v2970, 4
      %v2973 = vrot.slane %v919, 5
      %v2974 = vsel %vm2901, %v2972, %v2973
      %v2975 = vrot.slane %v2973, 4
      %v2976 = vrot.slane %v920, 5
      %v2977 = vsel %vm2901, %v2975, %v2976
      %v2978 = vrot.slane %v2976, 4
      %v2979 = vrot.slane %v921, 5
      %v2980 = vsel %vm2901, %v2978, %v2979
      %v2981 = vrot.slane %v2979, 4
      %v2982 = vrot.slane %v922, 5
      %v2983 = vsel %vm2901, %v2981, %v2982
      %v2984 = vrot.slane %v2982, 4
      %v2985 = vrot.slane %v923, 5
      %v2986 = vsel %vm2901, %v2984, %v2985
      %v2987 = vrot.slane %v2985, 4
      %v2988 = vrot.slane %v924, 5
      %v2989 = vsel %vm2901, %v2987, %v2988
      %v2990 = vrot.slane %v2988, 4
      %v2991 = vrot.slane %v925, 5
      %v2992 = vsel %vm2901, %v2990, %v2991
      %v2993 = vrot.slane %v2991, 4
      %v2994 = vrot.slane %v926, 5
      %v2995 = vsel %vm2901, %v2993, %v2994
      %v2996 = vrot.slane %v2994, 4
      %v2997 = vrot.slane %v927, 5
      %v2998 = vsel %vm2901, %v2996, %v2997
      %v2999 = vrot.slane %v2997, 4
      %v3000 = vrot.slane %v928, 5
      %v3001 = vsel %vm2901, %v2999, %v3000
      %v3002 = vrot.slane %v3000, 4
      %v3003 = vrot.slane %v929, 5
      %v3004 = vsel %vm2901, %v3002, %v3003
      %v3005 = vrot.slane %v3003, 4
      %v3006 = vrot.slane %v930, 5
      %v3007 = vsel %vm2901, %v3005, %v3006
      %v3008 = vrot.slane %v3006, 4
      %v3009 = vrot.slane %v931, 5
      %v3010 = vsel %vm2901, %v3008, %v3009
      %v3011 = vrot.slane %v3009, 4
      %v3012 = vrot.slane %v2006, 5
      %v3013 = vsel %vm2901, %v3011, %v3012
      %v3014 = vrot.slane %v3012, 4
      %v3015 = vrot.slane %v2007, 5
      %v3016 = vsel %vm2901, %v3014, %v3015
      %v3017 = vrot.slane %v3015, 4
      %3018 = vrot.lane.b32.xlu0 %v2905, 56
      %v3019 = vpop.permute.xlu0 %3018
      %3020 = vrot.lane.b32.xlu0 %v2908, 56
      %v3021 = vpop.permute.xlu0 %3020
      %3022 = vrot.lane.b32.xlu0 %v2911, 56
      %v3023 = vpop.permute.xlu0 %3022
      %3024 = vrot.lane.b32.xlu0 %v2914, 56
      %v3025 = vpop.permute.xlu0 %3024
      %3026 = vrot.lane.b32.xlu0 %v2917, 56
      %v3027 = vpop.permute.xlu0 %3026
      %3028 = vrot.lane.b32.xlu0 %v2920, 56
      %v3029 = vpop.permute.xlu0 %3028
      %3030 = vrot.lane.b32.xlu0 %v2923, 56
      %v3031 = vpop.permute.xlu0 %3030
      %3032 = vrot.lane.b32.xlu0 %v2926, 56
      %v3033 = vpop.permute.xlu0 %3032
      %3034 = vrot.lane.b32.xlu0 %v2929, 56
      %v3035 = vpop.permute.xlu0 %3034
      %3036 = vrot.lane.b32.xlu0 %v2932, 56
      %v3037 = vpop.permute.xlu0 %3036
      %3038 = vrot.lane.b32.xlu0 %v2935, 56
      %v3039 = vpop.permute.xlu0 %3038
      %3040 = vrot.lane.b32.xlu0 %v2938, 56
      %v3041 = vpop.permute.xlu0 %3040
      %3042 = vrot.lane.b32.xlu0 %v2941, 56
      %v3043 = vpop.permute.xlu0 %3042
      %3044 = vrot.lane.b32.xlu0 %v2944, 56
      %v3045 = vpop.permute.xlu0 %3044
      %3046 = vrot.lane.b32.xlu0 %v2947, 56
      %v3047 = vpop.permute.xlu0 %3046
      %3048 = vrot.lane.b32.xlu0 %v2950, 56
      %v3049 = vpop.permute.xlu0 %3048
      %3050 = vrot.lane.b32.xlu0 %v2953, 56
      %v3051 = vpop.permute.xlu0 %3050
      %3052 = vrot.lane.b32.xlu0 %v2956, 56
      %v3053 = vpop.permute.xlu0 %3052
      %3054 = vrot.lane.b32.xlu0 %v2959, 56
      %v3055 = vpop.permute.xlu0 %3054
      %3056 = vrot.lane.b32.xlu0 %v2962, 56
      %v3057 = vpop.permute.xlu0 %3056
      %3058 = vrot.lane.b32.xlu0 %v2965, 56
      %v3059 = vpop.permute.xlu0 %3058
      %3060 = vrot.lane.b32.xlu0 %v2968, 56
      %v3061 = vpop.permute.xlu0 %3060
      %3062 = vrot.lane.b32.xlu0 %v2971, 56
      %v3063 = vpop.permute.xlu0 %3062
      %3064 = vrot.lane.b32.xlu0 %v2974, 56
      %v3065 = vpop.permute.xlu0 %3064
      %3066 = vrot.lane.b32.xlu0 %v2977, 56
      %v3067 = vpop.permute.xlu0 %3066
      %3068 = vrot.lane.b32.xlu0 %v2980, 56
      %v3069 = vpop.permute.xlu0 %3068
      %3070 = vrot.lane.b32.xlu0 %v2983, 56
      %v3071 = vpop.permute.xlu0 %3070
      %3072 = vrot.lane.b32.xlu0 %v2986, 56
      %v3073 = vpop.permute.xlu0 %3072
      %3074 = vrot.lane.b32.xlu0 %v2989, 56
      %v3075 = vpop.permute.xlu0 %3074
      %3076 = vrot.lane.b32.xlu0 %v2992, 56
      %v3077 = vpop.permute.xlu0 %3076
      %3078 = vrot.lane.b32.xlu0 %v2995, 56
      %v3079 = vpop.permute.xlu0 %3078
      %3080 = vrot.lane.b32.xlu0 %v2998, 56
      %v3081 = vpop.permute.xlu0 %3080
      %3082 = vrot.lane.b32.xlu0 %v3001, 56
      %v3083 = vpop.permute.xlu0 %3082
      %3084 = vrot.lane.b32.xlu0 %v3004, 56
      %v3085 = vpop.permute.xlu0 %3084
      %3086 = vrot.lane.b32.xlu0 %v3007, 56
      %v3087 = vpop.permute.xlu0 %3086
      %3088 = vrot.lane.b32.xlu0 %v3010, 56
      %v3089 = vpop.permute.xlu0 %3088
      %3090 = vrot.lane.b32.xlu0 %v3013, 56
      %v3091 = vpop.permute.xlu0 %3090
      %3092 = vrot.lane.b32.xlu0 %v3016, 56
      %v3093 = vpop.permute.xlu0 %3092
      %3094 = vrot.lane.b32.xlu0 %v3017, 56
      %v3095 = vpop.permute.xlu0 %3094
      %vm3135 = vcmask 519616
      %3136 = vst.msk [vmem:[#allocation2] sm:$0xf] %vm3135, %v3019
      %3137 = vst.msk [vmem:[#allocation2 + $0x4] sm:$0xf] %vm3135, %v3021
      %3138 = vst.msk [vmem:[#allocation2 + $0x8] sm:$0xf] %vm3135, %v3023
      %3139 = vst.msk [vmem:[#allocation2 + $0xc] sm:$0xf] %vm3135, %v3025
      %3140 = vst.msk [vmem:[#allocation2 + $0x10] sm:$0xf] %vm3135, %v3027
      %3141 = vst.msk [vmem:[#allocation2 + $0x14] sm:$0xf] %vm3135, %v3029
      %3142 = vst.msk [vmem:[#allocation2 + $0x18] sm:$0xf] %vm3135, %v3031
      %3143 = vst.msk [vmem:[#allocation2 + $0x1c] sm:$0xf] %vm3135, %v3033
      %3144 = vst.msk [vmem:[#allocation2 + $0x20] sm:$0xf] %vm3135, %v3035
      %3145 = vst.msk [vmem:[#allocation2 + $0x24] sm:$0xf] %vm3135, %v3037
      %3146 = vst.msk [vmem:[#allocation2 + $0x28] sm:$0xf] %vm3135, %v3039
      %3147 = vst.msk [vmem:[#allocation2 + $0x2c] sm:$0xf] %vm3135, %v3041
      %3148 = vst.msk [vmem:[#allocation2 + $0x30] sm:$0xf] %vm3135, %v3043
      %3149 = vst.msk [vmem:[#allocation2 + $0x34] sm:$0xf] %vm3135, %v3045
      %3150 = vst.msk [vmem:[#allocation2 + $0x38] sm:$0xf] %vm3135, %v3047
      %3151 = vst.msk [vmem:[#allocation2 + $0x3c] sm:$0xf] %vm3135, %v3049
      %3152 = vst.msk [vmem:[#allocation2 + $0x40] sm:$0xf] %vm3135, %v3051
      %3153 = vst.msk [vmem:[#allocation2 + $0x44] sm:$0xf] %vm3135, %v3053
      %3154 = vst.msk [vmem:[#allocation2 + $0x48] sm:$0xf] %vm3135, %v3055
      %3155 = vst.msk [vmem:[#allocation2 + $0x4c] sm:$0xf] %vm3135, %v3057
      %3156 = vst.msk [vmem:[#allocation2 + $0x50] sm:$0xf] %vm3135, %v3059
      %3157 = vst.msk [vmem:[#allocation2 + $0x54] sm:$0xf] %vm3135, %v3061
      %3158 = vst.msk [vmem:[#allocation2 + $0x58] sm:$0xf] %vm3135, %v3063
      %3159 = vst.msk [vmem:[#allocation2 + $0x5c] sm:$0xf] %vm3135, %v3065
      %3160 = vst.msk [vmem:[#allocation2 + $0x60] sm:$0xf] %vm3135, %v3067
      %3161 = vst.msk [vmem:[#allocation2 + $0x64] sm:$0xf] %vm3135, %v3069
      %3162 = vst.msk [vmem:[#allocation2 + $0x68] sm:$0xf] %vm3135, %v3071
      %3163 = vst.msk [vmem:[#allocation2 + $0x6c] sm:$0xf] %vm3135, %v3073
      %3164 = vst.msk [vmem:[#allocation2 + $0x70] sm:$0xf] %vm3135, %v3075
      %3165 = vst.msk [vmem:[#allocation2 + $0x74] sm:$0xf] %vm3135, %v3077
      %3166 = vst.msk [vmem:[#allocation2 + $0x78] sm:$0xf] %vm3135, %v3079
      %3167 = vst.msk [vmem:[#allocation2 + $0x7c] sm:$0xf] %vm3135, %v3081
      %3168 = vst.msk [vmem:[#allocation2 + $0x80] sm:$0xf] %vm3135, %v3083
      %3169 = vst.msk [vmem:[#allocation2 + $0x84] sm:$0xf] %vm3135, %v3085
      %3170 = vst.msk [vmem:[#allocation2 + $0x88] sm:$0xf] %vm3135, %v3087
      %3171 = vst.msk [vmem:[#allocation2 + $0x8c] sm:$0xf] %vm3135, %v3089
      %3172 = vst.msk [vmem:[#allocation2 + $0x90] sm:$0xf] %vm3135, %v3091
      %3173 = vst.msk [vmem:[#allocation2 + $0x94] sm:$0xf] %vm3135, %v3093
      %vm3174 = vcmask 516544
      %3175 = vst.msk [vmem:[#allocation2 + $0x98] sm:$0x1] %vm3174, %v3095
      %vm3176 = vsmask.f32 2304
      %vm3177 = vsmask.f32 6416
      %vm3178 = vmor %vm3176, %vm3177
      %v3179 = vrot.slane %v955, 5
      %v3180 = vrot.slane %v958, 6
      %v3181 = vor.u32 %v3179, %v3180
      %v3182 = vrot.slane %v3181, 4
      %v3183 = vrot.slane %v965, 5
      %v3184 = vrot.slane %v968, 6
      %v3185 = vor.u32 %v3183, %v3184
      %v3186 = vsel %vm3178, %v3182, %v3185
      %v3187 = vrot.slane %v3185, 4
      %v3188 = vrot.slane %v975, 5
      %v3189 = vrot.slane %v978, 6
      %v3190 = vor.u32 %v3188, %v3189
      %v3191 = vsel %vm3178, %v3187, %v3190
      %v3192 = vrot.slane %v3190, 4
      %v3193 = vrot.slane %v985, 5
      %v3194 = vrot.slane %v988, 6
      %v3195 = vor.u32 %v3193, %v3194
      %v3196 = vsel %vm3178, %v3192, %v3195
      %v3197 = vrot.slane %v3195, 4
      %v3198 = vrot.slane %v995, 5
      %v3199 = vrot.slane %v998, 6
      %v3200 = vor.u32 %v3198, %v3199
      %v3201 = vsel %vm3178, %v3197, %v3200
      %v3202 = vrot.slane %v3200, 4
      %v3203 = vrot.slane %v1005, 5
      %v3204 = vrot.slane %v1008, 6
      %v3205 = vor.u32 %v3203, %v3204
      %v3206 = vsel %vm3178, %v3202, %v3205
      %v3207 = vrot.slane %v3205, 4
      %v3208 = vrot.slane %v1015, 5
      %v3209 = vrot.slane %v1018, 6
      %v3210 = vor.u32 %v3208, %v3209
      %v3211 = vsel %vm3178, %v3207, %v3210
      %v3212 = vrot.slane %v3210, 4
      %v3213 = vrot.slane %v1025, 5
      %v3214 = vrot.slane %v1028, 6
      %v3215 = vor.u32 %v3213, %v3214
      %v3216 = vsel %vm3178, %v3212, %v3215
      %v3217 = vrot.slane %v3215, 4
      %v3218 = vrot.slane %v1035, 5
      %v3219 = vrot.slane %v1038, 6
      %v3220 = vor.u32 %v3218, %v3219
      %v3221 = vsel %vm3178, %v3217, %v3220
      %v3222 = vrot.slane %v3220, 4
      %v3223 = vrot.slane %v1045, 5
      %v3224 = vrot.slane %v1048, 6
      %v3225 = vor.u32 %v3223, %v3224
      %v3226 = vsel %vm3178, %v3222, %v3225
      %v3227 = vrot.slane %v3225, 4
      %v3228 = vrot.slane %v1055, 5
      %v3229 = vrot.slane %v1058, 6
      %v3230 = vor.u32 %v3228, %v3229
      %v3231 = vsel %vm3178, %v3227, %v3230
      %v3232 = vrot.slane %v3230, 4
      %v3233 = vrot.slane %v1065, 5
      %v3234 = vrot.slane %v1068, 6
      %v3235 = vor.u32 %v3233, %v3234
      %v3236 = vsel %vm3178, %v3232, %v3235
      %v3237 = vrot.slane %v3235, 4
      %v3238 = vrot.slane %v1075, 5
      %v3239 = vrot.slane %v1078, 6
      %v3240 = vor.u32 %v3238, %v3239
      %v3241 = vsel %vm3178, %v3237, %v3240
      %v3242 = vrot.slane %v3240, 4
      %v3243 = vrot.slane %v1085, 5
      %v3244 = vrot.slane %v1088, 6
      %v3245 = vor.u32 %v3243, %v3244
      %v3246 = vsel %vm3178, %v3242, %v3245
      %v3247 = vrot.slane %v3245, 4
      %v3248 = vrot.slane %v1095, 5
      %v3249 = vrot.slane %v1098, 6
      %v3250 = vor.u32 %v3248, %v3249
      %v3251 = vsel %vm3178, %v3247, %v3250
      %v3252 = vrot.slane %v3250, 4
      %v3253 = vrot.slane %v1105, 5
      %v3254 = vrot.slane %v1108, 6
      %v3255 = vor.u32 %v3253, %v3254
      %v3256 = vsel %vm3178, %v3252, %v3255
      %v3257 = vrot.slane %v3255, 4
      %v3258 = vrot.slane %v1115, 5
      %v3259 = vrot.slane %v1118, 6
      %v3260 = vor.u32 %v3258, %v3259
      %v3261 = vsel %vm3178, %v3257, %v3260
      %v3262 = vrot.slane %v3260, 4
      %v3263 = vrot.slane %v1125, 5
      %v3264 = vrot.slane %v1128, 6
      %v3265 = vor.u32 %v3263, %v3264
      %v3266 = vsel %vm3178, %v3262, %v3265
      %v3267 = vrot.slane %v3265, 4
      %v3268 = vrot.slane %v1135, 5
      %v3269 = vrot.slane %v1138, 6
      %v3270 = vor.u32 %v3268, %v3269
      %v3271 = vsel %vm3178, %v3267, %v3270
      %v3272 = vrot.slane %v3270, 4
      %v3273 = vrot.slane %v1145, 5
      %v3274 = vrot.slane %v1148, 6
      %v3275 = vor.u32 %v3273, %v3274
      %v3276 = vsel %vm3178, %v3272, %v3275
      %v3277 = vrot.slane %v3275, 4
      %v3278 = vrot.slane %v1155, 5
      %v3279 = vrot.slane %v1158, 6
      %v3280 = vor.u32 %v3278, %v3279
      %v3281 = vsel %vm3178, %v3277, %v3280
      %v3282 = vrot.slane %v3280, 4
      %v3283 = vrot.slane %v1165, 5
      %v3284 = vrot.slane %v1168, 6
      %v3285 = vor.u32 %v3283, %v3284
      %v3286 = vsel %vm3178, %v3282, %v3285
      %v3287 = vrot.slane %v3285, 4
      %v3288 = vrot.slane %v1175, 5
      %v3289 = vrot.slane %v1178, 6
      %v3290 = vor.u32 %v3288, %v3289
      %v3291 = vsel %vm3178, %v3287, %v3290
      %v3292 = vrot.slane %v3290, 4
      %v3293 = vrot.slane %v1185, 5
      %v3294 = vrot.slane %v1188, 6
      %v3295 = vor.u32 %v3293, %v3294
      %v3296 = vsel %vm3178, %v3292, %v3295
      %v3297 = vrot.slane %v3295, 4
      %v3298 = vrot.slane %v1195, 5
      %v3299 = vrot.slane %v1198, 6
      %v3300 = vor.u32 %v3298, %v3299
      %v3301 = vsel %vm3178, %v3297, %v3300
      %v3302 = vrot.slane %v3300, 4
      %v3303 = vrot.slane %v1205, 5
      %v3304 = vrot.slane %v1208, 6
      %v3305 = vor.u32 %v3303, %v3304
      %v3306 = vsel %vm3178, %v3302, %v3305
      %v3307 = vrot.slane %v3305, 4
      %v3308 = vrot.slane %v1215, 5
      %v3309 = vrot.slane %v1218, 6
      %v3310 = vor.u32 %v3308, %v3309
      %v3311 = vsel %vm3178, %v3307, %v3310
      %v3312 = vrot.slane %v3310, 4
      %v3313 = vrot.slane %v1225, 5
      %v3314 = vrot.slane %v1228, 6
      %v3315 = vor.u32 %v3313, %v3314
      %v3316 = vsel %vm3178, %v3312, %v3315
      %v3317 = vrot.slane %v3315, 4
      %v3318 = vrot.slane %v1235, 5
      %v3319 = vrot.slane %v1238, 6
      %v3320 = vor.u32 %v3318, %v3319
      %v3321 = vsel %vm3178, %v3317, %v3320
      %v3322 = vrot.slane %v3320, 4
      %v3323 = vrot.slane %v1245, 5
      %v3324 = vrot.slane %v1248, 6
      %v3325 = vor.u32 %v3323, %v3324
      %v3326 = vsel %vm3178, %v3322, %v3325
      %v3327 = vrot.slane %v3325, 4
      %v3328 = vrot.slane %v1255, 5
      %v3329 = vrot.slane %v1258, 6
      %v3330 = vor.u32 %v3328, %v3329
      %v3331 = vsel %vm3178, %v3327, %v3330
      %v3332 = vrot.slane %v3330, 4
      %v3333 = vrot.slane %v1265, 5
      %v3334 = vrot.slane %v1268, 6
      %v3335 = vor.u32 %v3333, %v3334
      %v3336 = vsel %vm3178, %v3332, %v3335
      %v3337 = vrot.slane %v3335, 4
      %v3338 = vrot.slane %v1275, 5
      %v3339 = vrot.slane %v1278, 6
      %v3340 = vor.u32 %v3338, %v3339
      %v3341 = vsel %vm3178, %v3337, %v3340
      %v3342 = vrot.slane %v3340, 4
      %v3343 = vrot.slane %v1285, 5
      %v3344 = vrot.slane %v1288, 6
      %v3345 = vor.u32 %v3343, %v3344
      %v3346 = vsel %vm3178, %v3342, %v3345
      %v3347 = vrot.slane %v3345, 4
      %v3348 = vrot.slane %v1295, 5
      %v3349 = vrot.slane %v1298, 6
      %v3350 = vor.u32 %v3348, %v3349
      %v3351 = vsel %vm3178, %v3347, %v3350
      %v3352 = vrot.slane %v3350, 4
      %v3353 = vrot.slane %v1305, 5
      %v3354 = vrot.slane %v1308, 6
      %v3355 = vor.u32 %v3353, %v3354
      %v3356 = vsel %vm3178, %v3352, %v3355
      %v3357 = vrot.slane %v3355, 4
      %v3358 = vrot.slane %v1835, 5
      %v3359 = vrot.slane %v1315, 6
      %v3360 = vor.u32 %v3358, %v3359
      %v3361 = vsel %vm3178, %v3357, %v3360
      %v3362 = vrot.slane %v3360, 4
      %v3363 = vrot.slane %v2010, 5
      %v3364 = vrot.slane %v2013, 6
      %v3365 = vor.u32 %v3363, %v3364
      %v3366 = vsel %vm3178, %v3362, %v3365
      %v3367 = vrot.slane %v3365, 4
      %v3368 = vrot.slane %v2019, 5
      %v3369 = vrot.slane %v2022, 6
      %v3370 = vor.u32 %v3368, %v3369
      %v3371 = vsel %vm3178, %v3367, %v3370
      %v3372 = vrot.slane %v3368, 4
      %3373 = vrot.lane.b32.xlu0 %v3186, 64
      %v3374 = vpop.permute.xlu0 %3373
      %3375 = vrot.lane.b32.xlu0 %v3191, 64
      %v3376 = vpop.permute.xlu0 %3375
      %3377 = vrot.lane.b32.xlu0 %v3196, 64
      %v3378 = vpop.permute.xlu0 %3377
      %3379 = vrot.lane.b32.xlu0 %v3201, 64
      %v3380 = vpop.permute.xlu0 %3379
      %3381 = vrot.lane.b32.xlu0 %v3206, 64
      %v3382 = vpop.permute.xlu0 %3381
      %3383 = vrot.lane.b32.xlu0 %v3211, 64
      %v3384 = vpop.permute.xlu0 %3383
      %3385 = vrot.lane.b32.xlu0 %v3216, 64
      %v3386 = vpop.permute.xlu0 %3385
      %3387 = vrot.lane.b32.xlu0 %v3221, 64
      %v3388 = vpop.permute.xlu0 %3387
      %3389 = vrot.lane.b32.xlu0 %v3226, 64
      %v3390 = vpop.permute.xlu0 %3389
      %3391 = vrot.lane.b32.xlu0 %v3231, 64
      %v3392 = vpop.permute.xlu0 %3391
      %3393 = vrot.lane.b32.xlu0 %v3236, 64
      %v3394 = vpop.permute.xlu0 %3393
      %3395 = vrot.lane.b32.xlu0 %v3241, 64
      %v3396 = vpop.permute.xlu0 %3395
      %3397 = vrot.lane.b32.xlu0 %v3246, 64
      %v3398 = vpop.permute.xlu0 %3397
      %3399 = vrot.lane.b32.xlu0 %v3251, 64
      %v3400 = vpop.permute.xlu0 %3399
      %3401 = vrot.lane.b32.xlu0 %v3256, 64
      %v3402 = vpop.permute.xlu0 %3401
      %3403 = vrot.lane.b32.xlu0 %v3261, 64
      %v3404 = vpop.permute.xlu0 %3403
      %3405 = vrot.lane.b32.xlu0 %v3266, 64
      %v3406 = vpop.permute.xlu0 %3405
      %3407 = vrot.lane.b32.xlu0 %v3271, 64
      %v3408 = vpop.permute.xlu0 %3407
      %3409 = vrot.lane.b32.xlu0 %v3276, 64
      %v3410 = vpop.permute.xlu0 %3409
      %3411 = vrot.lane.b32.xlu0 %v3281, 64
      %v3412 = vpop.permute.xlu0 %3411
      %3413 = vrot.lane.b32.xlu0 %v3286, 64
      %v3414 = vpop.permute.xlu0 %3413
      %3415 = vrot.lane.b32.xlu0 %v3291, 64
      %v3416 = vpop.permute.xlu0 %3415
      %3417 = vrot.lane.b32.xlu0 %v3296, 64
      %v3418 = vpop.permute.xlu0 %3417
      %3419 = vrot.lane.b32.xlu0 %v3301, 64
      %v3420 = vpop.permute.xlu0 %3419
      %3421 = vrot.lane.b32.xlu0 %v3306, 64
      %v3422 = vpop.permute.xlu0 %3421
      %3423 = vrot.lane.b32.xlu0 %v3311, 64
      %v3424 = vpop.permute.xlu0 %3423
      %3425 = vrot.lane.b32.xlu0 %v3316, 64
      %v3426 = vpop.permute.xlu0 %3425
      %3427 = vrot.lane.b32.xlu0 %v3321, 64
      %v3428 = vpop.permute.xlu0 %3427
      %3429 = vrot.lane.b32.xlu0 %v3326, 64
      %v3430 = vpop.permute.xlu0 %3429
      %3431 = vrot.lane.b32.xlu0 %v3331, 64
      %v3432 = vpop.permute.xlu0 %3431
      %3433 = vrot.lane.b32.xlu0 %v3336, 64
      %v3434 = vpop.permute.xlu0 %3433
      %3435 = vrot.lane.b32.xlu0 %v3341, 64
      %v3436 = vpop.permute.xlu0 %3435
      %3437 = vrot.lane.b32.xlu0 %v3346, 64
      %v3438 = vpop.permute.xlu0 %3437
      %3439 = vrot.lane.b32.xlu0 %v3351, 64
      %v3440 = vpop.permute.xlu0 %3439
      %3441 = vrot.lane.b32.xlu0 %v3356, 64
      %v3442 = vpop.permute.xlu0 %3441
      %3443 = vrot.lane.b32.xlu0 %v3361, 64
      %v3444 = vpop.permute.xlu0 %3443
      %3445 = vrot.lane.b32.xlu0 %v3366, 64
      %v3446 = vpop.permute.xlu0 %3445
      %3447 = vrot.lane.b32.xlu0 %v3371, 64
      %v3448 = vpop.permute.xlu0 %3447
      %3449 = vrot.lane.b32.xlu0 %v3372, 64
      %v3450 = vpop.permute.xlu0 %3449
      %vm3490 = vcmask 585216
      %3491 = vst.msk [vmem:[#allocation2] sm:$0xf] %vm3490, %v3374
      %3492 = vst.msk [vmem:[#allocation2 + $0x4] sm:$0xf] %vm3490, %v3376
      %3493 = vst.msk [vmem:[#allocation2 + $0x8] sm:$0xf] %vm3490, %v3378
      %3494 = vst.msk [vmem:[#allocation2 + $0xc] sm:$0xf] %vm3490, %v3380
      %3495 = vst.msk [vmem:[#allocation2 + $0x10] sm:$0xf] %vm3490, %v3382
      %3496 = vst.msk [vmem:[#allocation2 + $0x14] sm:$0xf] %vm3490, %v3384
      %3497 = vst.msk [vmem:[#allocation2 + $0x18] sm:$0xf] %vm3490, %v3386
      %3498 = vst.msk [vmem:[#allocation2 + $0x1c] sm:$0xf] %vm3490, %v3388
      %3499 = vst.msk [vmem:[#allocation2 + $0x20] sm:$0xf] %vm3490, %v3390
      %3500 = vst.msk [vmem:[#allocation2 + $0x24] sm:$0xf] %vm3490, %v3392
      %3501 = vst.msk [vmem:[#allocation2 + $0x28] sm:$0xf] %vm3490, %v3394
      %3502 = vst.msk [vmem:[#allocation2 + $0x2c] sm:$0xf] %vm3490, %v3396
      %3503 = vst.msk [vmem:[#allocation2 + $0x30] sm:$0xf] %vm3490, %v3398
      %3504 = vst.msk [vmem:[#allocation2 + $0x34] sm:$0xf] %vm3490, %v3400
      %3505 = vst.msk [vmem:[#allocation2 + $0x38] sm:$0xf] %vm3490, %v3402
      %3506 = vst.msk [vmem:[#allocation2 + $0x3c] sm:$0xf] %vm3490, %v3404
      %3507 = vst.msk [vmem:[#allocation2 + $0x40] sm:$0xf] %vm3490, %v3406
      %3508 = vst.msk [vmem:[#allocation2 + $0x44] sm:$0xf] %vm3490, %v3408
      %3509 = vst.msk [vmem:[#allocation2 + $0x48] sm:$0xf] %vm3490, %v3410
      %3510 = vst.msk [vmem:[#allocation2 + $0x4c] sm:$0xf] %vm3490, %v3412
      %3511 = vst.msk [vmem:[#allocation2 + $0x50] sm:$0xf] %vm3490, %v3414
      %3512 = vst.msk [vmem:[#allocation2 + $0x54] sm:$0xf] %vm3490, %v3416
      %3513 = vst.msk [vmem:[#allocation2 + $0x58] sm:$0xf] %vm3490, %v3418
      %3514 = vst.msk [vmem:[#allocation2 + $0x5c] sm:$0xf] %vm3490, %v3420
      %3515 = vst.msk [vmem:[#allocation2 + $0x60] sm:$0xf] %vm3490, %v3422
      %3516 = vst.msk [vmem:[#allocation2 + $0x64] sm:$0xf] %vm3490, %v3424
      %3517 = vst.msk [vmem:[#allocation2 + $0x68] sm:$0xf] %vm3490, %v3426
      %3518 = vst.msk [vmem:[#allocation2 + $0x6c] sm:$0xf] %vm3490, %v3428
      %3519 = vst.msk [vmem:[#allocation2 + $0x70] sm:$0xf] %vm3490, %v3430
      %3520 = vst.msk [vmem:[#allocation2 + $0x74] sm:$0xf] %vm3490, %v3432
      %3521 = vst.msk [vmem:[#allocation2 + $0x78] sm:$0xf] %vm3490, %v3434
      %3522 = vst.msk [vmem:[#allocation2 + $0x7c] sm:$0xf] %vm3490, %v3436
      %3523 = vst.msk [vmem:[#allocation2 + $0x80] sm:$0xf] %vm3490, %v3438
      %3524 = vst.msk [vmem:[#allocation2 + $0x84] sm:$0xf] %vm3490, %v3440
      %3525 = vst.msk [vmem:[#allocation2 + $0x88] sm:$0xf] %vm3490, %v3442
      %3526 = vst.msk [vmem:[#allocation2 + $0x8c] sm:$0xf] %vm3490, %v3444
      %3527 = vst.msk [vmem:[#allocation2 + $0x90] sm:$0xf] %vm3490, %v3446
      %3528 = vst.msk [vmem:[#allocation2 + $0x94] sm:$0xf] %vm3490, %v3448
      %vm3529 = vcmask 582144
      %vm3530 = vmand %vm3529, %vm1681
      %v3531 = vld [vmem:[#allocation2 + $0x98] sm:$0x1]
      %v3532 = vsel %vm3530, %v3450, %v3531
      %3533 = vst [vmem:[#allocation2 + $0x98] sm:$0x1] %v3532
      %v3534 = vld [vmem:[#allocation2] sm:$0xf]
      %v3535 = vld [vmem:[#allocation2 + $0x4] sm:$0xf]
      %v3536 = vld [vmem:[#allocation2 + $0x8] sm:$0xf]
      %v3537 = vld [vmem:[#allocation2 + $0xc] sm:$0xf]
      %v3538 = vld [vmem:[#allocation2 + $0x10] sm:$0xf]
      %v3539 = vld [vmem:[#allocation2 + $0x14] sm:$0xf]
      %v3540 = vld [vmem:[#allocation2 + $0x18] sm:$0xf]
      %v3541 = vld [vmem:[#allocation2 + $0x1c] sm:$0xf]
      %v3542 = vld [vmem:[#allocation2 + $0x20] sm:$0xf]
      %v3543 = vld [vmem:[#allocation2 + $0x24] sm:$0xf]
      %v3544 = vld [vmem:[#allocation2 + $0x28] sm:$0xf]
      %v3545 = vld [vmem:[#allocation2 + $0x2c] sm:$0xf]
      %v3546 = vld [vmem:[#allocation2 + $0x30] sm:$0xf]
      %v3547 = vld [vmem:[#allocation2 + $0x34] sm:$0xf]
      %v3548 = vld [vmem:[#allocation2 + $0x38] sm:$0xf]
      %v3549 = vld [vmem:[#allocation2 + $0x3c] sm:$0xf]
      %v3550 = vld [vmem:[#allocation2 + $0x40] sm:$0xf]
      %v3551 = vld [vmem:[#allocation2 + $0x44] sm:$0xf]
      %v3552 = vld [vmem:[#allocation2 + $0x48] sm:$0xf]
      %v3553 = vld [vmem:[#allocation2 + $0x4c] sm:$0xf]
      %v3554 = vld [vmem:[#allocation2 + $0x50] sm:$0xf]
      %v3555 = vld [vmem:[#allocation2 + $0x54] sm:$0xf]
      %v3556 = vld [vmem:[#allocation2 + $0x58] sm:$0xf]
      %v3557 = vld [vmem:[#allocation2 + $0x5c] sm:$0xf]
      %v3558 = vld [vmem:[#allocation2 + $0x60] sm:$0xf]
      %v3559 = vld [vmem:[#allocation2 + $0x64] sm:$0xf]
      %v3560 = vld [vmem:[#allocation2 + $0x68] sm:$0xf]
      %v3561 = vld [vmem:[#allocation2 + $0x6c] sm:$0xf]
      %v3562 = vld [vmem:[#allocation2 + $0x70] sm:$0xf]
      %v3563 = vld [vmem:[#allocation2 + $0x74] sm:$0xf]
      %v3564 = vld [vmem:[#allocation2 + $0x78] sm:$0xf]
      %v3565 = vld [vmem:[#allocation2 + $0x7c] sm:$0xf]
      %v3566 = vld [vmem:[#allocation2 + $0x80] sm:$0xf]
      %v3567 = vld [vmem:[#allocation2 + $0x84] sm:$0xf]
      %v3568 = vld [vmem:[#allocation2 + $0x88] sm:$0xf]
      %v3569 = vld [vmem:[#allocation2 + $0x8c] sm:$0xf]
      %v3570 = vld [vmem:[#allocation2 + $0x90] sm:$0xf]
      %v3571 = vld [vmem:[#allocation2 + $0x94] sm:$0xf]
      %v3572 = vld [vmem:[#allocation2 + $0x98] sm:$0xf]
      %v3573 = vld [vmem:[#allocation2 + $0x9c] sm:$0xf]
      %v3574 = vld [vmem:[#allocation2 + $0xa0] sm:$0x3]
      %v3575 = vld [vmem:[%s3] sm:$0xf]
      %v3576 = vld [vmem:[%s3 + $0x4] sm:$0xf]
      %v3577 = vld [vmem:[%s3 + $0x8] sm:$0xf]
      %v3578 = vld [vmem:[%s3 + $0xc] sm:$0xf]
      %v3579 = vld [vmem:[%s3 + $0x10] sm:$0xf]
      %v3580 = vld [vmem:[%s3 + $0x14] sm:$0xf]
      %v3581 = vld [vmem:[%s3 + $0x18] sm:$0xf]
      %v3582 = vld [vmem:[%s3 + $0x1c] sm:$0xf]
      %v3583 = vld [vmem:[%s3 + $0x20] sm:$0xf]
      %v3625 = vunpack.c.l.b16 %v3534
      %v3626 = vunpack.c.l.b16 %v3535
      %v3627 = vunpack.c.l.b16 %v3536
      %v3628 = vunpack.c.l.b16 %v3537
      %v3629 = vunpack.c.l.b16 %v3538
      %v3630 = vunpack.c.l.b16 %v3539
      %v3631 = vunpack.c.l.b16 %v3540
      %v3632 = vunpack.c.l.b16 %v3541
      %v3633 = vunpack.c.l.b16 %v3542
      %v3634 = vunpack.c.l.b16 %v3543
      %v3635 = vunpack.c.l.b16 %v3544
      %v3636 = vunpack.c.l.b16 %v3545
      %v3637 = vunpack.c.l.b16 %v3546
      %v3638 = vunpack.c.l.b16 %v3547
      %v3639 = vunpack.c.l.b16 %v3548
      %v3640 = vunpack.c.l.b16 %v3549
      %v3641 = vunpack.c.l.b16 %v3550
      %v3642 = vunpack.c.l.b16 %v3551
      %v3643 = vunpack.c.l.b16 %v3552
      %v3644 = vunpack.c.l.b16 %v3553
      %v3645 = vunpack.c.l.b16 %v3554
      %v3646 = vunpack.c.l.b16 %v3555
      %v3647 = vunpack.c.l.b16 %v3556
      %v3648 = vunpack.c.l.b16 %v3557
      %v3649 = vunpack.c.l.b16 %v3558
      %v3650 = vunpack.c.l.b16 %v3559
      %v3651 = vunpack.c.l.b16 %v3560
      %v3652 = vunpack.c.l.b16 %v3561
      %v3653 = vunpack.c.l.b16 %v3562
      %v3654 = vunpack.c.l.b16 %v3563
      %v3655 = vunpack.c.l.b16 %v3564
      %v3656 = vunpack.c.l.b16 %v3565
      %v3657 = vunpack.c.l.b16 %v3566
      %v3658 = vunpack.c.l.b16 %v3567
      %v3659 = vunpack.c.l.b16 %v3568
      %v3660 = vunpack.c.l.b16 %v3569
      %v3661 = vunpack.c.l.b16 %v3570
      %v3662 = vunpack.c.l.b16 %v3571
      %v3663 = vunpack.c.l.b16 %v3572
      %v3664 = vunpack.c.l.b16 %v3573
      %v3665 = vunpack.c.l.b16 %v3574
      %v3666 = vpack.c.b16 %v3626, %v3625
      %v3667 = vpack.c.b16 %v3628, %v3627
      %v3668 = vpack.c.b16 %v3630, %v3629
      %v3669 = vpack.c.b16 %v3632, %v3631
      %v3670 = vpack.c.b16 %v3634, %v3633
      %v3671 = vpack.c.b16 %v3636, %v3635
      %v3672 = vpack.c.b16 %v3638, %v3637
      %v3673 = vpack.c.b16 %v3640, %v3639
      %v3674 = vpack.c.b16 %v3642, %v3641
      %v3675 = vpack.c.b16 %v3644, %v3643
      %v3676 = vpack.c.b16 %v3646, %v3645
      %v3677 = vpack.c.b16 %v3648, %v3647
      %v3678 = vpack.c.b16 %v3650, %v3649
      %v3679 = vpack.c.b16 %v3652, %v3651
      %v3680 = vpack.c.b16 %v3654, %v3653
      %v3681 = vpack.c.b16 %v3656, %v3655
      %v3682 = vpack.c.b16 %v3658, %v3657
      %v3683 = vpack.c.b16 %v3660, %v3659
      %v3684 = vpack.c.b16 %v3662, %v3661
      %v3685 = vpack.c.b16 %v3664, %v3663
      %v3686 = vpack.c.b16 %v3665, %v3665
      %v3696 = vunpack.c.l.b16 %v3575
      %v3697 = vunpack.c.l.b16 %v3576
      %v3698 = vunpack.c.l.b16 %v3577
      %v3699 = vunpack.c.l.b16 %v3578
      %v3700 = vunpack.c.l.b16 %v3579
      %v3701 = vunpack.c.l.b16 %v3580
      %v3702 = vunpack.c.l.b16 %v3581
      %v3703 = vunpack.c.l.b16 %v3582
      %v3704 = vunpack.c.l.b16 %v3583
      %v3705 = vpack.c.b16 %v3697, %v3696
      %v3706 = vpack.c.b16 %v3699, %v3698
      %v3707 = vpack.c.b16 %v3701, %v3700
      %v3708 = vpack.c.b16 %v3703, %v3702
      %v3709 = vpack.c.b16 %v3704, %v3704
      %vm3714 = vcmask 588800
      %v3716 = vsel %vm3714, %v3666, 0
      %v3719 = vsel %vm3714, %v3667, 0
      %v3722 = vsel %vm3714, %v3668, 0
      %v3725 = vsel %vm3714, %v3669, 0
      %v3728 = vsel %vm3714, %v3670, 0
      %v3731 = vsel %vm3714, %v3671, 0
      %v3734 = vsel %vm3714, %v3672, 0
      %v3737 = vsel %vm3714, %v3673, 0
      %v3740 = vsel %vm3714, %v3674, 0
      %v3743 = vsel %vm3714, %v3675, 0
      %v3746 = vsel %vm3714, %v3676, 0
      %v3749 = vsel %vm3714, %v3677, 0
      %v3752 = vsel %vm3714, %v3678, 0
      %v3755 = vsel %vm3714, %v3679, 0
      %v3758 = vsel %vm3714, %v3680, 0
      %v3761 = vsel %vm3714, %v3681, 0
      %v3764 = vsel %vm3714, %v3682, 0
      %v3767 = vsel %vm3714, %v3683, 0
      %v3770 = vsel %vm3714, %v3684, 0
      %v3773 = vsel %vm3714, %v3685, 0
      %v3776 = vsel %vm3714, %v3686, 0
      %vm3778 = vcmask 1043456
      %v3780 = vsel %vm3778, %v3709, 0
      %3782 = vmatprep.subr.bf16.mxu0 0
      %3783 = vmatpush1.bf16.msra.mxu0 %v3705
      %3784 = vmatprep.subr.bf16.mxu0 0
      %3785 = vmatpush1.bf16.msra.mxu0 %v3706
      %3786 = vmatprep.subr.bf16.mxu0 0
      %3787 = vmatpush1.bf16.msra.mxu0 %v3707
      %3788 = vmatprep.subr.bf16.mxu0 0
      %3789 = vmatpush1.bf16.msra.mxu0 %v3708
      %3790 = vmatprep.subr.bf16.mxu0 0
      %3791 = vmatpush1.bf16.msra.mxu0 %v3780
      %3792 = vmatprep.subr.bf16.mxu0 0
      %3793 = vmatpush1.bf16.msra.mxu0 0
      %3794 = vmatprep.subr.bf16.mxu0 0
      %3795 = vmatpush1.bf16.msra.mxu0 0
      %3796 = vmatprep.subr.bf16.mxu0 0
      %3797 = vmatpush1.bf16.msra.mxu0 0
      %3798 = vmatprep.subr.bf16.mxu0 0
      %3799 = vmatpush1.bf16.msra.mxu0 0
      %3800 = vmatprep.subr.bf16.mxu0 0
      %3801 = vmatpush1.bf16.msra.mxu0 0
      %3802 = vmatprep.subr.bf16.mxu0 0
      %3803 = vmatpush1.bf16.msra.mxu0 0
      %3804 = vmatprep.subr.bf16.mxu0 0
      %3805 = vmatpush1.bf16.msra.mxu0 0
      %3806 = vmatprep.subr.bf16.mxu0 0
      %3807 = vmatpush1.bf16.msra.mxu0 0
      %3808 = vmatprep.subr.bf16.mxu0 0
      %3809 = vmatpush1.bf16.msra.mxu0 0
      %3810 = vmatprep.subr.bf16.mxu0 0
      %3811 = vmatpush1.bf16.msra.mxu0 0
      %3812 = vmatprep.subr.bf16.mxu0 0
      %3813 = vmatpush1.bf16.msra.mxu0 0
      %3814 = vmatprep.mubr.bf16.mxu0 0
      %3815 = vmatmul.mubr.bf16.gmra.mrb[0].mxu0 %v3716
      %v3816 = vpop.f32.mrb[0].mxu0
      %v3817 = vadd.f32 0.0, %v3816
      %v3818 = vpop.f32.mrb[0].mxu0
      %v3819 = vpop.f32.mrb[0].mxu0
      %v3820 = vadd.f32 0.0, %v3819
      %v3821 = vpop.f32.mrb[0].mxu0
      %3822 = vmatprep.mubr.bf16.mxu0 0
      %3823 = vmatmul.mubr.bf16.gmra.mrb[0].mxu0 %v3719
      %v3824 = vpop.f32.mrb[0].mxu0
      %v3825 = vadd.f32 0.0, %v3824
      %v3826 = vpop.f32.mrb[0].mxu0
      %v3827 = vpop.f32.mrb[0].mxu0
      %v3828 = vadd.f32 0.0, %v3827
      %v3829 = vpop.f32.mrb[0].mxu0
      %3830 = vmatprep.mubr.bf16.mxu0 0
      %3831 = vmatmul.mubr.bf16.gmra.mrb[0].mxu0 %v3722
      %v3832 = vpop.f32.mrb[0].mxu0
      %v3833 = vadd.f32 0.0, %v3832
      %v3834 = vpop.f32.mrb[0].mxu0
      %v3835 = vpop.f32.mrb[0].mxu0
      %v3836 = vadd.f32 0.0, %v3835
      %v3837 = vpop.f32.mrb[0].mxu0
      %3838 = vmatprep.mubr.bf16.mxu0 0
      %3839 = vmatmul.mubr.bf16.gmra.mrb[0].mxu0 %v3725
      %v3840 = vpop.f32.mrb[0].mxu0
      %v3841 = vadd.f32 0.0, %v3840
      %v3842 = vpop.f32.mrb[0].mxu0
      %v3843 = vpop.f32.mrb[0].mxu0
      %v3844 = vadd.f32 0.0, %v3843
      %v3845 = vpop.f32.mrb[0].mxu0
      %3846 = vmatprep.mubr.bf16.mxu0 0
      %3847 = vmatmul.mubr.bf16.gmra.mrb[0].mxu0 %v3728
      %v3848 = vpop.f32.mrb[0].mxu0
      %v3849 = vadd.f32 0.0, %v3848
      %v3850 = vpop.f32.mrb[0].mxu0
      %v3851 = vpop.f32.mrb[0].mxu0
      %v3852 = vadd.f32 0.0, %v3851
      %v3853 = vpop.f32.mrb[0].mxu0
      %3854 = vmatprep.mubr.bf16.mxu0 0
      %3855 = vmatmul.mubr.bf16.gmra.mrb[0].mxu0 %v3731
      %v3856 = vpop.f32.mrb[0].mxu0
      %v3857 = vadd.f32 0.0, %v3856
      %v3858 = vpop.f32.mrb[0].mxu0
      %v3859 = vpop.f32.mrb[0].mxu0
      %v3860 = vadd.f32 0.0, %v3859
      %v3861 = vpop.f32.mrb[0].mxu0
      %3862 = vmatprep.mubr.bf16.mxu0 0
      %3863 = vmatmul.mubr.bf16.gmra.mrb[0].mxu0 %v3734
      %v3864 = vpop.f32.mrb[0].mxu0
      %v3865 = vadd.f32 0.0, %v3864
      %v3866 = vpop.f32.mrb[0].mxu0
      %v3867 = vpop.f32.mrb[0].mxu0
      %v3868 = vadd.f32 0.0, %v3867
      %v3869 = vpop.f32.mrb[0].mxu0
      %3870 = vmatprep.mubr.bf16.mxu0 0
      %3871 = vmatmul.mubr.bf16.gmra.mrb[0].mxu0 %v3737
      %v3872 = vpop.f32.mrb[0].mxu0
      %v3873 = vadd.f32 0.0, %v3872
      %v3874 = vpop.f32.mrb[0].mxu0
      %v3875 = vpop.f32.mrb[0].mxu0
      %v3876 = vadd.f32 0.0, %v3875
      %v3877 = vpop.f32.mrb[0].mxu0
      %3878 = vmatprep.mubr.bf16.mxu0 0
      %3879 = vmatmul.mubr.bf16.gmra.mrb[0].mxu0 %v3740
      %v3880 = vpop.f32.mrb[0].mxu0
      %v3881 = vadd.f32 0.0, %v3880
      %v3882 = vpop.f32.mrb[0].mxu0
      %v3883 = vpop.f32.mrb[0].mxu0
      %v3884 = vadd.f32 0.0, %v3883
      %v3885 = vpop.f32.mrb[0].mxu0
      %3886 = vmatprep.mubr.bf16.mxu0 0
      %3887 = vmatmul.mubr.bf16.gmra.mrb[0].mxu0 %v3743
      %v3888 = vpop.f32.mrb[0].mxu0
      %v3889 = vadd.f32 0.0, %v3888
      %v3890 = vpop.f32.mrb[0].mxu0
      %v3891 = vpop.f32.mrb[0].mxu0
      %v3892 = vadd.f32 0.0, %v3891
      %v3893 = vpop.f32.mrb[0].mxu0
      %3894 = vmatprep.mubr.bf16.mxu0 0
      %3895 = vmatmul.mubr.bf16.gmra.mrb[0].mxu0 %v3746
      %v3896 = vpop.f32.mrb[0].mxu0
      %v3897 = vadd.f32 0.0, %v3896
      %v3898 = vpop.f32.mrb[0].mxu0
      %v3899 = vpop.f32.mrb[0].mxu0
      %v3900 = vadd.f32 0.0, %v3899
      %v3901 = vpop.f32.mrb[0].mxu0
      %3902 = vmatprep.mubr.bf16.mxu0 0
      %3903 = vmatmul.mubr.bf16.gmra.mrb[0].mxu0 %v3749
      %v3904 = vpop.f32.mrb[0].mxu0
      %v3905 = vadd.f32 0.0, %v3904
      %v3906 = vpop.f32.mrb[0].mxu0
      %v3907 = vpop.f32.mrb[0].mxu0
      %v3908 = vadd.f32 0.0, %v3907
      %v3909 = vpop.f32.mrb[0].mxu0
      %3910 = vmatprep.mubr.bf16.mxu0 0
      %3911 = vmatmul.mubr.bf16.gmra.mrb[0].mxu0 %v3752
      %v3912 = vpop.f32.mrb[0].mxu0
      %v3913 = vadd.f32 0.0, %v3912
      %v3914 = vpop.f32.mrb[0].mxu0
      %v3915 = vpop.f32.mrb[0].mxu0
      %v3916 = vadd.f32 0.0, %v3915
      %v3917 = vpop.f32.mrb[0].mxu0
      %3918 = vmatprep.mubr.bf16.mxu0 0
      %3919 = vmatmul.mubr.bf16.gmra.mrb[0].mxu0 %v3755
      %v3920 = vpop.f32.mrb[0].mxu0
      %v3921 = vadd.f32 0.0, %v3920
      %v3922 = vpop.f32.mrb[0].mxu0
      %v3923 = vpop.f32.mrb[0].mxu0
      %v3924 = vadd.f32 0.0, %v3923
      %v3925 = vpop.f32.mrb[0].mxu0
      %3926 = vmatprep.mubr.bf16.mxu0 0
      %3927 = vmatmul.mubr.bf16.gmra.mrb[0].mxu0 %v3758
      %v3928 = vpop.f32.mrb[0].mxu0
      %v3929 = vadd.f32 0.0, %v3928
      %v3930 = vpop.f32.mrb[0].mxu0
      %v3931 = vpop.f32.mrb[0].mxu0
      %v3932 = vadd.f32 0.0, %v3931
      %v3933 = vpop.f32.mrb[0].mxu0
      %3934 = vmatprep.mubr.bf16.mxu0 0
      %3935 = vmatmul.mubr.bf16.gmra.mrb[0].mxu0 %v3761
      %v3936 = vpop.f32.mrb[0].mxu0
      %v3937 = vadd.f32 0.0, %v3936
      %v3938 = vpop.f32.mrb[0].mxu0
      %v3939 = vpop.f32.mrb[0].mxu0
      %v3940 = vadd.f32 0.0, %v3939
      %v3941 = vpop.f32.mrb[0].mxu0
      %3942 = vmatprep.mubr.bf16.mxu0 0
      %3943 = vmatmul.mubr.bf16.gmra.mrb[0].mxu0 %v3764
      %v3944 = vpop.f32.mrb[0].mxu0
      %v3945 = vadd.f32 0.0, %v3944
      %v3946 = vpop.f32.mrb[0].mxu0
      %v3947 = vpop.f32.mrb[0].mxu0
      %v3948 = vadd.f32 0.0, %v3947
      %v3949 = vpop.f32.mrb[0].mxu0
      %3950 = vmatprep.mubr.bf16.mxu0 0
      %3951 = vmatmul.mubr.bf16.gmra.mrb[0].mxu0 %v3767
      %v3952 = vpop.f32.mrb[0].mxu0
      %v3953 = vadd.f32 0.0, %v3952
      %v3954 = vpop.f32.mrb[0].mxu0
      %v3955 = vpop.f32.mrb[0].mxu0
      %v3956 = vadd.f32 0.0, %v3955
      %v3957 = vpop.f32.mrb[0].mxu0
      %3958 = vmatprep.mubr.bf16.mxu0 0
      %3959 = vmatmul.mubr.bf16.gmra.mrb[0].mxu0 %v3770
      %v3960 = vpop.f32.mrb[0].mxu0
      %v3961 = vadd.f32 0.0, %v3960
      %v3962 = vpop.f32.mrb[0].mxu0
      %v3963 = vpop.f32.mrb[0].mxu0
      %v3964 = vadd.f32 0.0, %v3963
      %v3965 = vpop.f32.mrb[0].mxu0
      %3966 = vmatprep.mubr.bf16.mxu0 0
      %3967 = vmatmul.mubr.bf16.gmra.mrb[0].mxu0 %v3773
      %v3968 = vpop.f32.mrb[0].mxu0
      %v3969 = vadd.f32 0.0, %v3968
      %v3970 = vpop.f32.mrb[0].mxu0
      %v3971 = vpop.f32.mrb[0].mxu0
      %v3972 = vadd.f32 0.0, %v3971
      %v3973 = vpop.f32.mrb[0].mxu0
      %3974 = vmatprep.mubr.bf16.mxu0 0
      %3975 = vmatmul.mubr.bf16.gmra.mrb[0].mxu0 %v3776
      %v3976 = vpop.f32.mrb[0].mxu0
      %v3977 = vadd.f32 0.0, %v3976
      %v3978 = vpop.f32.mrb[0].mxu0
      %v3979 = vpop.f32.mrb[0].mxu0
      %v3980 = vpop.f32.mrb[0].mxu0
      %3981 = vdwg.mxu0
      %v3982 = vpack.c.bf16 %v3820, %v3817
      %v3983 = vpack.c.bf16 %v3828, %v3825
      %v3984 = vpack.c.bf16 %v3836, %v3833
      %v3985 = vpack.c.bf16 %v3844, %v3841
      %v3986 = vpack.c.bf16 %v3852, %v3849
      %v3987 = vpack.c.bf16 %v3860, %v3857
      %v3988 = vpack.c.bf16 %v3868, %v3865
      %v3989 = vpack.c.bf16 %v3876, %v3873
      %v3990 = vpack.c.bf16 %v3884, %v3881
      %v3991 = vpack.c.bf16 %v3892, %v3889
      %v3992 = vpack.c.bf16 %v3900, %v3897
      %v3993 = vpack.c.bf16 %v3908, %v3905
      %v3994 = vpack.c.bf16 %v3916, %v3913
      %v3995 = vpack.c.bf16 %v3924, %v3921
      %v3996 = vpack.c.bf16 %v3932, %v3929
      %v3997 = vpack.c.bf16 %v3940, %v3937
      %v3998 = vpack.c.bf16 %v3948, %v3945
      %v3999 = vpack.c.bf16 %v3956, %v3953
      %v4000 = vpack.c.bf16 %v3964, %v3961
      %v4001 = vpack.c.bf16 %v3972, %v3969
      %v4002 = vpack.c.bf16 %v3977, %v3977
      %v4024 = vunpack.c.l.b16 %v3982
      %v4025 = vunpack.c.h.b16 %v3982
      %v4026 = vunpack.c.l.b16 %v3983
      %v4027 = vunpack.c.h.b16 %v3983
      %v4028 = vunpack.c.l.b16 %v3984
      %v4029 = vunpack.c.h.b16 %v3984
      %v4030 = vunpack.c.l.b16 %v3985
      %v4031 = vunpack.c.h.b16 %v3985
      %v4032 = vunpack.c.l.b16 %v3986
      %v4033 = vunpack.c.h.b16 %v3986
      %v4034 = vunpack.c.l.b16 %v3987
      %v4035 = vunpack.c.h.b16 %v3987
      %v4036 = vunpack.c.l.b16 %v3988
      %v4037 = vunpack.c.h.b16 %v3988
      %v4038 = vunpack.c.l.b16 %v3989
      %v4039 = vunpack.c.h.b16 %v3989
      %v4040 = vunpack.c.l.b16 %v3990
      %v4041 = vunpack.c.h.b16 %v3990
      %v4042 = vunpack.c.l.b16 %v3991
      %v4043 = vunpack.c.h.b16 %v3991
      %v4044 = vunpack.c.l.b16 %v3992
      %v4045 = vunpack.c.h.b16 %v3992
      %v4046 = vunpack.c.l.b16 %v3993
      %v4047 = vunpack.c.h.b16 %v3993
      %v4048 = vunpack.c.l.b16 %v3994
      %v4049 = vunpack.c.h.b16 %v3994
      %v4050 = vunpack.c.l.b16 %v3995
      %v4051 = vunpack.c.h.b16 %v3995
      %v4052 = vunpack.c.l.b16 %v3996
      %v4053 = vunpack.c.h.b16 %v3996
      %v4054 = vunpack.c.l.b16 %v3997
      %v4055 = vunpack.c.h.b16 %v3997
      %v4056 = vunpack.c.l.b16 %v3998
      %v4057 = vunpack.c.h.b16 %v3998
      %v4058 = vunpack.c.l.b16 %v3999
      %v4059 = vunpack.c.h.b16 %v3999
      %v4060 = vunpack.c.l.b16 %v4000
      %v4061 = vunpack.c.h.b16 %v4000
      %v4062 = vunpack.c.l.b16 %v4001
      %v4063 = vunpack.c.h.b16 %v4001
      %v4064 = vunpack.c.l.b16 %v4002
      %v4065 = vpack.c.b16 %v4024, %v4024
      %v4066 = vpack.c.b16 %v4025, %v4025
      %v4067 = vpack.c.b16 %v4026, %v4026
      %v4068 = vpack.c.b16 %v4027, %v4027
      %v4069 = vpack.c.b16 %v4028, %v4028
      %v4070 = vpack.c.b16 %v4029, %v4029
      %v4071 = vpack.c.b16 %v4030, %v4030
      %v4072 = vpack.c.b16 %v4031, %v4031
      %v4073 = vpack.c.b16 %v4032, %v4032
      %v4074 = vpack.c.b16 %v4033, %v4033
      %v4075 = vpack.c.b16 %v4034, %v4034
      %v4076 = vpack.c.b16 %v4035, %v4035
      %v4077 = vpack.c.b16 %v4036, %v4036
      %v4078 = vpack.c.b16 %v4037, %v4037
      %v4079 = vpack.c.b16 %v4038, %v4038
      %v4080 = vpack.c.b16 %v4039, %v4039
      %v4081 = vpack.c.b16 %v4040, %v4040
      %v4082 = vpack.c.b16 %v4041, %v4041
      %v4083 = vpack.c.b16 %v4042, %v4042
      %v4084 = vpack.c.b16 %v4043, %v4043
      %v4085 = vpack.c.b16 %v4044, %v4044
      %v4086 = vpack.c.b16 %v4045, %v4045
      %v4087 = vpack.c.b16 %v4046, %v4046
      %v4088 = vpack.c.b16 %v4047, %v4047
      %v4089 = vpack.c.b16 %v4048, %v4048
      %v4090 = vpack.c.b16 %v4049, %v4049
      %v4091 = vpack.c.b16 %v4050, %v4050
      %v4092 = vpack.c.b16 %v4051, %v4051
      %v4093 = vpack.c.b16 %v4052, %v4052
      %v4094 = vpack.c.b16 %v4053, %v4053
      %v4095 = vpack.c.b16 %v4054, %v4054
      %v4096 = vpack.c.b16 %v4055, %v4055
      %v4097 = vpack.c.b16 %v4056, %v4056
      %v4098 = vpack.c.b16 %v4057, %v4057
      %v4099 = vpack.c.b16 %v4058, %v4058
      %v4100 = vpack.c.b16 %v4059, %v4059
      %v4101 = vpack.c.b16 %v4060, %v4060
      %v4102 = vpack.c.b16 %v4061, %v4061
      %v4103 = vpack.c.b16 %v4062, %v4062
      %v4104 = vpack.c.b16 %v4063, %v4063
      %v4105 = vpack.c.b16 %v4064, %v4064
      %4147 = vst.msk [vmem:[%s258] sm:$0xf] %vm1364, %v4065
      %4148 = vst.msk [vmem:[%s258 + $0x4] sm:$0xf] %vm1364, %v4066
      %4149 = vst.msk [vmem:[%s258 + $0x8] sm:$0xf] %vm1364, %v4067
      %4150 = vst.msk [vmem:[%s258 + $0xc] sm:$0xf] %vm1364, %v4068
      %4151 = vst.msk [vmem:[%s258 + $0x10] sm:$0xf] %vm1364, %v4069
      %4152 = vst.msk [vmem:[%s258 + $0x14] sm:$0xf] %vm1364, %v4070
      %4153 = vst.msk [vmem:[%s258 + $0x18] sm:$0xf] %vm1364, %v4071
      %4154 = vst.msk [vmem:[%s258 + $0x1c] sm:$0xf] %vm1364, %v4072
      %4155 = vst.msk [vmem:[%s258 + $0x20] sm:$0xf] %vm1364, %v4073
      %4156 = vst.msk [vmem:[%s258 + $0x24] sm:$0xf] %vm1364, %v4074
      %4157 = vst.msk [vmem:[%s258 + $0x28] sm:$0xf] %vm1364, %v4075
      %4158 = vst.msk [vmem:[%s258 + $0x2c] sm:$0xf] %vm1364, %v4076
      %4159 = vst.msk [vmem:[%s258 + $0x30] sm:$0xf] %vm1364, %v4077
      %4160 = vst.msk [vmem:[%s258 + $0x34] sm:$0xf] %vm1364, %v4078
      %4161 = vst.msk [vmem:[%s258 + $0x38] sm:$0xf] %vm1364, %v4079
      %4162 = vst.msk [vmem:[%s258 + $0x3c] sm:$0xf] %vm1364, %v4080
      %4163 = vst.msk [vmem:[%s258 + $0x40] sm:$0xf] %vm1364, %v4081
      %4164 = vst.msk [vmem:[%s258 + $0x44] sm:$0xf] %vm1364, %v4082
      %4165 = vst.msk [vmem:[%s258 + $0x48] sm:$0xf] %vm1364, %v4083
      %4166 = vst.msk [vmem:[%s258 + $0x4c] sm:$0xf] %vm1364, %v4084
      %4167 = vst.msk [vmem:[%s258 + $0x50] sm:$0xf] %vm1364, %v4085
      %4168 = vst.msk [vmem:[%s258 + $0x54] sm:$0xf] %vm1364, %v4086
      %4169 = vst.msk [vmem:[%s258 + $0x58] sm:$0xf] %vm1364, %v4087
      %4170 = vst.msk [vmem:[%s258 + $0x5c] sm:$0xf] %vm1364, %v4088
      %4171 = vst.msk [vmem:[%s258 + $0x60] sm:$0xf] %vm1364, %v4089
      %4172 = vst.msk [vmem:[%s258 + $0x64] sm:$0xf] %vm1364, %v4090
      %4173 = vst.msk [vmem:[%s258 + $0x68] sm:$0xf] %vm1364, %v4091
      %4174 = vst.msk [vmem:[%s258 + $0x6c] sm:$0xf] %vm1364, %v4092
      %4175 = vst.msk [vmem:[%s258 + $0x70] sm:$0xf] %vm1364, %v4093
      %4176 = vst.msk [vmem:[%s258 + $0x74] sm:$0xf] %vm1364, %v4094
      %4177 = vst.msk [vmem:[%s258 + $0x78] sm:$0xf] %vm1364, %v4095
      %4178 = vst.msk [vmem:[%s258 + $0x7c] sm:$0xf] %vm1364, %v4096
      %4179 = vst.msk [vmem:[%s258 + $0x80] sm:$0xf] %vm1364, %v4097
      %4180 = vst.msk [vmem:[%s258 + $0x84] sm:$0xf] %vm1364, %v4098
      %4181 = vst.msk [vmem:[%s258 + $0x88] sm:$0xf] %vm1364, %v4099
      %4182 = vst.msk [vmem:[%s258 + $0x8c] sm:$0xf] %vm1364, %v4100
      %4183 = vst.msk [vmem:[%s258 + $0x90] sm:$0xf] %vm1364, %v4101
      %4184 = vst.msk [vmem:[%s258 + $0x94] sm:$0xf] %vm1364, %v4102
      %4185 = vst.msk [vmem:[%s258 + $0x98] sm:$0xf] %vm1364, %v4103
      %4186 = vst.msk [vmem:[%s258 + $0x9c] sm:$0xf] %vm1364, %v4104
      %4187 = vst.msk [vmem:[%s258 + $0xa0] sm:$0x3] %vm1402, %v4105
      %v4188 = vmul.f32 %v3817, %v527
      %v4189 = vmul.f32 %v3820, %v532
      %v4190 = vmul.f32 %v3825, %v537
      %v4191 = vmul.f32 %v3828, %v542
      %v4192 = vmul.f32 %v3833, %v547
      %v4193 = vmul.f32 %v3836, %v552
      %v4194 = vmul.f32 %v3841, %v557
      %v4195 = vmul.f32 %v3844, %v562
      %v4196 = vmul.f32 %v3849, %v567
      %v4197 = vmul.f32 %v3852, %v572
      %v4198 = vmul.f32 %v3857, %v577
      %v4199 = vmul.f32 %v3860, %v582
      %v4200 = vmul.f32 %v3865, %v587
      %v4201 = vmul.f32 %v3868, %v592
      %v4202 = vmul.f32 %v3873, %v597
      %v4203 = vmul.f32 %v3876, %v602
      %v4204 = vmul.f32 %v3881, %v607
      %v4205 = vmul.f32 %v3884, %v612
      %v4206 = vmul.f32 %v3889, %v617
      %v4207 = vmul.f32 %v3892, %v622
      %v4208 = vmul.f32 %v3897, %v627
      %v4209 = vmul.f32 %v3900, %v632
      %v4210 = vmul.f32 %v3905, %v637
      %v4211 = vmul.f32 %v3908, %v642
      %v4212 = vmul.f32 %v3913, %v647
      %v4213 = vmul.f32 %v3916, %v652
      %v4214 = vmul.f32 %v3921, %v657
      %v4215 = vmul.f32 %v3924, %v662
      %v4216 = vmul.f32 %v3929, %v667
      %v4217 = vmul.f32 %v3932, %v672
      %v4218 = vmul.f32 %v3937, %v677
      %v4219 = vmul.f32 %v3940, %v682
      %v4220 = vmul.f32 %v3945, %v687
      %v4221 = vmul.f32 %v3948, %v692
      %v4222 = vmul.f32 %v3953, %v697
      %v4223 = vmul.f32 %v3956, %v702
      %v4224 = vmul.f32 %v3961, %v707
      %v4225 = vmul.f32 %v3964, %v712
      %v4226 = vmul.f32 %v3969, %v717
      %v4227 = vmul.f32 %v3972, %v722
      %v4228 = vmul.f32 %v3977, %v727
      %vm4229 = vcmask 64512
      %v4230 = vsel %vm4229, %v4188, 0.0
      %v4231 = vsel %vm4229, %v4189, 0.0
      %v4232 = vadd.f32 %v4230, %v4231
      %v4233 = vsel %vm4229, %v4190, 0.0
      %v4234 = vadd.f32 %v4232, %v4233
      %v4235 = vsel %vm4229, %v4191, 0.0
      %v4236 = vadd.f32 %v4234, %v4235
      %v4237 = vsel %vm4229, %v4192, 0.0
      %v4238 = vadd.f32 %v4236, %v4237
      %v4239 = vsel %vm4229, %v4193, 0.0
      %v4240 = vadd.f32 %v4238, %v4239
      %v4241 = vsel %vm4229, %v4194, 0.0
      %v4242 = vadd.f32 %v4240, %v4241
      %v4243 = vsel %vm4229, %v4195, 0.0
      %v4244 = vadd.f32 %v4242, %v4243
      %v4245 = vsel %vm4229, %v4196, 0.0
      %v4246 = vadd.f32 %v4244, %v4245
      %v4247 = vsel %vm4229, %v4197, 0.0
      %v4248 = vadd.f32 %v4246, %v4247
      %v4249 = vsel %vm4229, %v4198, 0.0
      %v4250 = vadd.f32 %v4248, %v4249
      %v4251 = vsel %vm4229, %v4199, 0.0
      %v4252 = vadd.f32 %v4250, %v4251
      %v4253 = vsel %vm4229, %v4200, 0.0
      %v4254 = vadd.f32 %v4252, %v4253
      %v4255 = vsel %vm4229, %v4201, 0.0
      %v4256 = vadd.f32 %v4254, %v4255
      %v4257 = vsel %vm4229, %v4202, 0.0
      %v4258 = vadd.f32 %v4256, %v4257
      %v4259 = vsel %vm4229, %v4203, 0.0
      %v4260 = vadd.f32 %v4258, %v4259
      %v4261 = vsel %vm4229, %v4204, 0.0
      %v4262 = vadd.f32 %v4260, %v4261
      %v4263 = vsel %vm4229, %v4205, 0.0
      %v4264 = vadd.f32 %v4262, %v4263
      %v4265 = vsel %vm4229, %v4206, 0.0
      %v4266 = vadd.f32 %v4264, %v4265
      %v4267 = vsel %vm4229, %v4207, 0.0
      %v4268 = vadd.f32 %v4266, %v4267
      %v4269 = vsel %vm4229, %v4208, 0.0
      %v4270 = vadd.f32 %v4268, %v4269
      %v4271 = vsel %vm4229, %v4209, 0.0
      %v4272 = vadd.f32 %v4270, %v4271
      %v4273 = vsel %vm4229, %v4210, 0.0
      %v4274 = vadd.f32 %v4272, %v4273
      %v4275 = vsel %vm4229, %v4211, 0.0
      %v4276 = vadd.f32 %v4274, %v4275
      %v4277 = vsel %vm4229, %v4212, 0.0
      %v4278 = vadd.f32 %v4276, %v4277
      %v4279 = vsel %vm4229, %v4213, 0.0
      %v4280 = vadd.f32 %v4278, %v4279
      %v4281 = vsel %vm4229, %v4214, 0.0
      %v4282 = vadd.f32 %v4280, %v4281
      %v4283 = vsel %vm4229, %v4215, 0.0
      %v4284 = vadd.f32 %v4282, %v4283
      %v4285 = vsel %vm4229, %v4216, 0.0
      %v4286 = vadd.f32 %v4284, %v4285
      %v4287 = vsel %vm4229, %v4217, 0.0
      %v4288 = vadd.f32 %v4286, %v4287
      %v4289 = vsel %vm4229, %v4218, 0.0
      %v4290 = vadd.f32 %v4288, %v4289
      %v4291 = vsel %vm4229, %v4219, 0.0
      %v4292 = vadd.f32 %v4290, %v4291
      %v4293 = vsel %vm4229, %v4220, 0.0
      %v4294 = vadd.f32 %v4292, %v4293
      %v4295 = vsel %vm4229, %v4221, 0.0
      %v4296 = vadd.f32 %v4294, %v4295
      %v4297 = vsel %vm4229, %v4222, 0.0
      %v4298 = vadd.f32 %v4296, %v4297
      %v4299 = vsel %vm4229, %v4223, 0.0
      %v4300 = vadd.f32 %v4298, %v4299
      %v4301 = vsel %vm4229, %v4224, 0.0
      %v4302 = vadd.f32 %v4300, %v4301
      %v4303 = vsel %vm4229, %v4225, 0.0
      %v4304 = vadd.f32 %v4302, %v4303
      %v4305 = vsel %vm4229, %v4226, 0.0
      %v4306 = vadd.f32 %v4304, %v4305
      %v4307 = vsel %vm4229, %v4227, 0.0
      %v4308 = vadd.f32 %v4306, %v4307
      %v4309 = vsel %vm1364, %v4228, 0.0
      %v4310 = vadd.f32 %v4308, %v4309
      %v4311 = vrot.slane %v4310, 4
      %v4312 = vadd.f32 %v4310, %v4311
      %v4313 = vrot.slane %v4312, 2
      %v4314 = vadd.f32 %v4312, %v4313
      %v4315 = vrot.slane %v4314, 1
      %v4316 = vadd.f32 %v4314, %v4315
      %v4317 = vmul.f32 %v4188, %v3817
      %v4318 = vmul.f32 %v4189, %v3820
      %v4319 = vmul.f32 %v4190, %v3825
      %v4320 = vmul.f32 %v4191, %v3828
      %v4321 = vmul.f32 %v4192, %v3833
      %v4322 = vmul.f32 %v4193, %v3836
      %v4323 = vmul.f32 %v4194, %v3841
      %v4324 = vmul.f32 %v4195, %v3844
      %v4325 = vmul.f32 %v4196, %v3849
      %v4326 = vmul.f32 %v4197, %v3852
      %v4327 = vmul.f32 %v4198, %v3857
      %v4328 = vmul.f32 %v4199, %v3860
      %v4329 = vmul.f32 %v4200, %v3865
      %v4330 = vmul.f32 %v4201, %v3868
      %v4331 = vmul.f32 %v4202, %v3873
      %v4332 = vmul.f32 %v4203, %v3876
      %v4333 = vmul.f32 %v4204, %v3881
      %v4334 = vmul.f32 %v4205, %v3884
      %v4335 = vmul.f32 %v4206, %v3889
      %v4336 = vmul.f32 %v4207, %v3892
      %v4337 = vmul.f32 %v4208, %v3897
      %v4338 = vmul.f32 %v4209, %v3900
      %v4339 = vmul.f32 %v4210, %v3905
      %v4340 = vmul.f32 %v4211, %v3908
      %v4341 = vmul.f32 %v4212, %v3913
      %v4342 = vmul.f32 %v4213, %v3916
      %v4343 = vmul.f32 %v4214, %v3921
      %v4344 = vmul.f32 %v4215, %v3924
      %v4345 = vmul.f32 %v4216, %v3929
      %v4346 = vmul.f32 %v4217, %v3932
      %v4347 = vmul.f32 %v4218, %v3937
      %v4348 = vmul.f32 %v4219, %v3940
      %v4349 = vmul.f32 %v4220, %v3945
      %v4350 = vmul.f32 %v4221, %v3948
      %v4351 = vmul.f32 %v4222, %v3953
      %v4352 = vmul.f32 %v4223, %v3956
      %v4353 = vmul.f32 %v4224, %v3961
      %v4354 = vmul.f32 %v4225, %v3964
      %v4355 = vmul.f32 %v4226, %v3969
      %v4356 = vmul.f32 %v4227, %v3972
      %v4357 = vmul.f32 %v4228, %v3977
      %v4358 = vsel %vm4229, %v4317, 0.0
      %v4359 = vsel %vm4229, %v4318, 0.0
      %v4360 = vadd.f32 %v4358, %v4359
      %v4361 = vsel %vm4229, %v4319, 0.0
      %v4362 = vadd.f32 %v4360, %v4361
      %v4363 = vsel %vm4229, %v4320, 0.0
      %v4364 = vadd.f32 %v4362, %v4363
      %v4365 = vsel %vm4229, %v4321, 0.0
      %v4366 = vadd.f32 %v4364, %v4365
      %v4367 = vsel %vm4229, %v4322, 0.0
      %v4368 = vadd.f32 %v4366, %v4367
      %v4369 = vsel %vm4229, %v4323, 0.0
      %v4370 = vadd.f32 %v4368, %v4369
      %v4371 = vsel %vm4229, %v4324, 0.0
      %v4372 = vadd.f32 %v4370, %v4371
      %v4373 = vsel %vm4229, %v4325, 0.0
      %v4374 = vadd.f32 %v4372, %v4373
      %v4375 = vsel %vm4229, %v4326, 0.0
      %v4376 = vadd.f32 %v4374, %v4375
      %v4377 = vsel %vm4229, %v4327, 0.0
      %v4378 = vadd.f32 %v4376, %v4377
      %v4379 = vsel %vm4229, %v4328, 0.0
      %v4380 = vadd.f32 %v4378, %v4379
      %v4381 = vsel %vm4229, %v4329, 0.0
      %v4382 = vadd.f32 %v4380, %v4381
      %v4383 = vsel %vm4229, %v4330, 0.0
      %v4384 = vadd.f32 %v4382, %v4383
      %v4385 = vsel %vm4229, %v4331, 0.0
      %v4386 = vadd.f32 %v4384, %v4385
      %v4387 = vsel %vm4229, %v4332, 0.0
      %v4388 = vadd.f32 %v4386, %v4387
      %v4389 = vsel %vm4229, %v4333, 0.0
      %v4390 = vadd.f32 %v4388, %v4389
      %v4391 = vsel %vm4229, %v4334, 0.0
      %v4392 = vadd.f32 %v4390, %v4391
      %v4393 = vsel %vm4229, %v4335, 0.0
      %v4394 = vadd.f32 %v4392, %v4393
      %v4395 = vsel %vm4229, %v4336, 0.0
      %v4396 = vadd.f32 %v4394, %v4395
      %v4397 = vsel %vm4229, %v4337, 0.0
      %v4398 = vadd.f32 %v4396, %v4397
      %v4399 = vsel %vm4229, %v4338, 0.0
      %v4400 = vadd.f32 %v4398, %v4399
      %v4401 = vsel %vm4229, %v4339, 0.0
      %v4402 = vadd.f32 %v4400, %v4401
      %v4403 = vsel %vm4229, %v4340, 0.0
      %v4404 = vadd.f32 %v4402, %v4403
      %v4405 = vsel %vm4229, %v4341, 0.0
      %v4406 = vadd.f32 %v4404, %v4405
      %v4407 = vsel %vm4229, %v4342, 0.0
      %v4408 = vadd.f32 %v4406, %v4407
      %v4409 = vsel %vm4229, %v4343, 0.0
      %v4410 = vadd.f32 %v4408, %v4409
      %v4411 = vsel %vm4229, %v4344, 0.0
      %v4412 = vadd.f32 %v4410, %v4411
      %v4413 = vsel %vm4229, %v4345, 0.0
      %v4414 = vadd.f32 %v4412, %v4413
      %v4415 = vsel %vm4229, %v4346, 0.0
      %v4416 = vadd.f32 %v4414, %v4415
      %v4417 = vsel %vm4229, %v4347, 0.0
      %v4418 = vadd.f32 %v4416, %v4417
      %v4419 = vsel %vm4229, %v4348, 0.0
      %v4420 = vadd.f32 %v4418, %v4419
      %v4421 = vsel %vm4229, %v4349, 0.0
      %v4422 = vadd.f32 %v4420, %v4421
      %v4423 = vsel %vm4229, %v4350, 0.0
      %v4424 = vadd.f32 %v4422, %v4423
      %v4425 = vsel %vm4229, %v4351, 0.0
      %v4426 = vadd.f32 %v4424, %v4425
      %v4427 = vsel %vm4229, %v4352, 0.0
      %v4428 = vadd.f32 %v4426, %v4427
      %v4429 = vsel %vm4229, %v4353, 0.0
      %v4430 = vadd.f32 %v4428, %v4429
      %v4431 = vsel %vm4229, %v4354, 0.0
      %v4432 = vadd.f32 %v4430, %v4431
      %v4433 = vsel %vm4229, %v4355, 0.0
      %v4434 = vadd.f32 %v4432, %v4433
      %v4435 = vsel %vm4229, %v4356, 0.0
      %v4436 = vadd.f32 %v4434, %v4435
      %v4437 = vsel %vm1364, %v4357, 0.0
      %v4438 = vadd.f32 %v4436, %v4437
      %v4439 = vrot.slane %v4438, 4
      %v4440 = vadd.f32 %v4438, %v4439
      %v4441 = vrot.slane %v4440, 2
      %v4442 = vadd.f32 %v4440, %v4441
      %v4443 = vrot.slane %v4442, 1
      %v4444 = vadd.f32 %v4442, %v4443
      %vm4445 = vcmask 1040384
      %v4446 = vsel %vm4445, %v4316, %v4444
      %4447 = vst.msk [vmem:[%s262] sm:$0x3] %vm1402, %v4446
      %p4448 = scmp.lt.s32.totalorder %s18, 1
      %s4449 = scalar_select %p4448, %s18, 1
      %s4450 = smul.addr %s4449, 41
      %s4451 = smul.addr %s4450, 4
      %s4452 = scalar_lea.vmem %s5, %s4451
      %p4453 = scmp.lt.s32.totalorder %s18, 1
      %s4454 = scalar_select %p4453, %s18, 1
      %s4455 = smul.addr %s4454, 2
      %s4456 = scalar_lea.vmem %s6, %s4455
      // Predicated region
      $region41: #{residual_block_forward.4} parent=39 // pred_check
        %p4457 = pneg %p146
      $region42: #{residual_block_forward.4} parent=39 // pred_check_branch
        %4459 = sbr.rel (%p4457) target = $region44
      $region43: #{residual_block_forward.4} parent=39 // pred_region
        _
      $region44: #{residual_block_forward.4} parent=39 // pred_fallthru
        _
      // Predicated region
      $region45: #{residual_block_forward.4} parent=39 // pred_check
        %p4460 = pneg %p172
      $region46: #{residual_block_forward.4} parent=39 // pred_check_branch
        %4462 = sbr.rel (%p4460) target = $region48
      $region47: #{residual_block_forward.4} parent=39 // pred_region
        _
      $region48: #{residual_block_forward.4} parent=39 // pred_fallthru
        _
    $region40: #{residual_block_forward.4} parent=5 // pred_fallthru
      _
    %p4463 = scmp.le.s32.totalorder 2, %s13
    // Predicated region
    $region49: #{residual_block_forward.4} parent=5 // pred_check
      %p4464 = pneg %p4463
    $region50: #{residual_block_forward.4} parent=5 // pred_check_branch
      %4466 = sbr.rel (%p4464) target = $region52
    $region51: #{residual_block_forward.4} parent=5 // pred_region
      %s4467 = ssub.s32 %s13, 2
      // Predicated region
      $region53: #{residual_block_forward.4} parent=51 // pred_check
        %p4468 = pneg %p152
      $region54: #{residual_block_forward.4} parent=51 // pred_check_branch
        %4470 = sbr.rel (%p4468) target = $region56
      $region55: #{residual_block_forward.4} parent=51 // pred_region
        %p4471 = scmp.lt.s32.totalorder %s19, 1
        %s4472 = scalar_select %p4471, %s19, 1
        %s4473 = smul.addr %s4472, 41
        %s4474 = smul.addr %s4473, 4
        %s4475 = scalar_lea.vmem %s5, %s4474
      $region56: #{residual_block_forward.4} parent=51 // pred_fallthru
        _
      // Predicated region
      $region57: #{residual_block_forward.4} parent=51 // pred_check
        %p4476 = pneg %p178
      $region58: #{residual_block_forward.4} parent=51 // pred_check_branch
        %4478 = sbr.rel (%p4476) target = $region60
      $region59: #{residual_block_forward.4} parent=51 // pred_region
        %p4479 = scmp.lt.s32.totalorder %s19, 1
        %s4480 = scalar_select %p4479, %s19, 1
        %s4481 = smul.addr %s4480, 2
        %s4482 = scalar_lea.vmem %s6, %s4481
      $region60: #{residual_block_forward.4} parent=51 // pred_fallthru
        _
    $region52: #{residual_block_forward.4} parent=5 // pred_fallthru
      _
  $region6: #{residual_block_forward.4} parent=0 // loop_footer
    %s17 = sadd.s32 1, %s13
  $region7: #{residual_block_forward.4} parent=0 // loop_footer_branch
    %12 = sbr.rel target = $region3
  $region8: #{residual_block_forward.4} parent=0 // loop_exit
    _

</llo_original>
